<compile_context>
chip_gen: v7x
topology: tpu7x:2x2x1
jax: 0.10.0
libtpu: 0.0.40
codegen_flags: <defaults>
</compile_context>

<pallas_src>
import functools

import jax
import jax.numpy as jnp
from jax.experimental import pallas as pl
from jax.experimental.pallas import tpu as pltpu


VMEM_LIMIT = 48 * 1024 * 1024   # explicit scoped-VMEM cap (safe on v5e/v6e/v7x)


# ----------------------------------------------------------------------------
# In-kernel helpers
# ----------------------------------------------------------------------------

def _ln_f32(x, g, b, eps=1e-5):
    # LayerNorm over the last (lane) dim, statistics in f32.
    mu = jnp.mean(x, axis=-1, keepdims=True)
    var = jnp.mean(jnp.square(x - mu), axis=-1, keepdims=True)
    return (x - mu) * jax.lax.rsqrt(var + eps) * g + b


# ----------------------------------------------------------------------------
# Pallas kernels
# ----------------------------------------------------------------------------

def _prologue_kernel(fr_ref, fb_ref, g_ref, b_ref, w_ref, bias_ref, o_ref):
    # 128-row slab of frames [TM, win] -> "mel-like" feats -> LN -> projection.
    z = jnp.dot(fr_ref[...].astype(jnp.bfloat16), fb_ref[...],
                preferred_element_type=jnp.float32)
    feats = jnp.log(1.0 + jnp.maximum(z, 0.0))          # log-compression
    feats = _ln_f32(feats, g_ref[...], b_ref[...])
    y = jnp.dot(feats.astype(jnp.bfloat16), w_ref[...],
                preferred_element_type=jnp.float32) + bias_ref[...]
    o_ref[...] = y.astype(o_ref.dtype)                   # bf16 inter-kernel act


def _encoder_kernel(x_ref,
                    ln1g_ref, ln1b_ref, wqkv_ref, bqkv_ref, wo_ref, bo_ref,
                    ln2g_ref, ln2b_ref, w1_ref, b1_ref, w2_ref, b2_ref,
                    flng_ref, flnb_ref,
                    o_ref, act_ref, *, nh, dh, n_layers):
    # grid = (B, L): b = batch element (parallel), l = layer index (arbitrary).
    l = pl.program_id(1)

    # Layer 0: pull the bf16 prologue activations into the resident f32 buffer.
    @pl.when(l == 0)
    def _():
        act_ref[...] = x_ref[0].astype(jnp.float32)

    x = act_ref[...]                                     # [S, H] f32, VMEM-resident
    S, H = x.shape

    # ---- self-attention block --------------------------------------------
    h = _ln_f32(x, ln1g_ref[0], ln1b_ref[0])
    qkv = jnp.dot(h.astype(jnp.bfloat16), wqkv_ref[0],
                  preferred_element_type=jnp.float32) + bqkv_ref[0]   # [S, 3H]

    wo = wo_ref[0]                                       # [H, H] bf16
    attn = jnp.zeros((S, H), jnp.float32)
    # TODO(synk): at real nh=16 / S>=512 switch to lax.fori_loop over heads and
    # flash-style KV tiling; at nh=4, S=128 the full scores fit comfortably.
    for head in range(nh):                               # small static loop
        lo = head * dh
        # 1/sqrt(dh) already folded into the Q columns of wqkv at init time.
        qh = qkv[:, lo:lo + dh].astype(jnp.bfloat16)               # [S, dh]
        kh = qkv[:, H + lo:H + lo + dh].astype(jnp.bfloat16)       # [S, dh]
        vh = qkv[:, 2 * H + lo:2 * H + lo + dh].astype(jnp.bfloat16)
        # scores = qh @ kh^T without materializing the transpose
        s = jax.lax.dot_general(qh, kh, (((1,), (1,)), ((), ())),
                                preferred_element_type=jnp.float32)  # [S, S]
        m = jnp.max(s, axis=-1, keepdims=True)
        p = jnp.exp(s - m)
        p = p * pl.reciprocal(jnp.sum(p, axis=-1, keepdims=True), approx=True)
        ctx = jnp.dot(p.astype(jnp.bfloat16), vh,
                      preferred_element_type=jnp.float32)            # [S, dh]
        # Head merge folded into the out-projection: sublane row-slice of wo
        # (multiple of 8) + f32 accumulate -- no lane-axis concat.
        attn += jnp.dot(ctx.astype(jnp.bfloat16), wo[lo:lo + dh, :],
                        preferred_element_type=jnp.float32)          # [S, H]
    x = x + attn + bo_ref[0]                             # residual (in-kernel)

    # ---- feed-forward block (SiLU) -----------------------------------------
    h2 = _ln_f32(x, ln2g_ref[0], ln2b_ref[0])
    z = jnp.dot(h2.astype(jnp.bfloat16), w1_ref[0],
                preferred_element_type=jnp.float32) + b1_ref[0]
    z = z * jax.nn.sigmoid(z)                            # Swish, f32 elementwise
    y = jnp.dot(z.astype(jnp.bfloat16), w2_ref[0],
                preferred_element_type=jnp.float32) + b2_ref[0]
    x = x + y                                            # residual (in-kernel)

    act_ref[...] = x                                     # carry to next layer

    # ---- fused epilogue: final LayerNorm + mean over time (== mean(dim=1)) --
    @pl.when(l == n_layers - 1)
    def _():
        xn = _ln_f32(x, flng_ref[...], flnb_ref[...])    # [S, H]
        o_ref[0] = jnp.mean(xn, axis=0, keepdims=True)   # [1, H]


# ----------------------------------------------------------------------------
# pallas_call wrappers
# ----------------------------------------------------------------------------

def prologue(frames, params, *, row_tile=128):
    M, W = frames.shape                       # M == B * S (flattened rows)
    F = params["fbank"].shape[1]
    H = params["fp_w"].shape[1]
    tm = min(row_tile, M)
    assert M % tm == 0, (M, tm)
    return pl.pallas_call(
        _prologue_kernel,
        out_shape=jax.ShapeDtypeStruct((M, H), jnp.bfloat16),
        grid=(M // tm,),
        in_specs=[pl.BlockSpec((tm, W), lambda i: (i, 0)),
                  pl.BlockSpec((W, F), lambda i: (0, 0)),
                  pl.BlockSpec((1, F), lambda i: (0, 0)),
                  pl.BlockSpec((1, F), lambda i: (0, 0)),
                  pl.BlockSpec((F, H), lambda i: (0, 0)),
                  pl.BlockSpec((1, H), lambda i: (0, 0))],
        out_specs=pl.BlockSpec((tm, H), lambda i: (i, 0)),
        compiler_params=pltpu.CompilerParams(
            dimension_semantics=("parallel",),
            vmem_limit_bytes=VMEM_LIMIT),
    )(frames, params["fbank"], params["fp_ln_g"], params["fp_ln_b"],
      params["fp_w"], params["fp_b"])


def encoder_and_pool(x, params, cfg):
    """x [B, S, H] bf16 -> pooled [B, 1, H] f32 (whole encoder + final LN+mean)."""
    B, S, H = x.shape
    F = cfg["ffn_dim"]
    L = cfg["layers"]
    kern = functools.partial(_encoder_kernel, nh=cfg["heads"],
                             dh=cfg["head_dim"], n_layers=L)

    def lw(shape):     # per-layer weight stacked [L, ...]: pick layer-l block
        return pl.BlockSpec((1,) + shape, lambda b, l: (l,) + (0,) * len(shape))

    def shared(shape):  # constant weight (final LN): always block 0
        return pl.BlockSpec(shape, lambda b, l: (0,) * len(shape))

    return pl.pallas_call(
        kern,
        out_shape=jax.ShapeDtypeStruct((B, 1, H), jnp.float32),
        grid=(B, L),
        in_specs=[pl.BlockSpec((1, S, H), lambda b, l: (b, 0, 0)),  # activations
                  lw((1, H)), lw((1, H)),             # ln1 gamma/beta
                  lw((H, 3 * H)), lw((1, 3 * H)),     # fused QKV
                  lw((H, H)), lw((1, H)),             # out proj
                  lw((1, H)), lw((1, H)),             # ln2 gamma/beta
                  lw((H, F)), lw((1, F)),             # ffn in
                  lw((F, H)), lw((1, H)),             # ffn out
                  shared((1, H)), shared((1, H))],    # final LN gamma/beta
        out_specs=pl.BlockSpec((1, 1, H), lambda b, l: (b, 0, 0)),
        scratch_shapes=[pltpu.VMEM((S, H), jnp.float32)],  # resident activation
        compiler_params=pltpu.CompilerParams(
            dimension_semantics=("parallel", "arbitrary"),
            vmem_limit_bytes=VMEM_LIMIT),
    )(x,
      params["ln1_g"], params["ln1_b"],
      params["wqkv"], params["bqkv"],
      params["wo"], params["bo"],
      params["ln2_g"], params["ln2_b"],
      params["w1"], params["b1"],
      params["w2"], params["b2"],
      params["final_ln_g"], params["final_ln_b"])


# ----------------------------------------------------------------------------
# Model: parameters + forward
# ----------------------------------------------------------------------------

CFG = dict(
    win=128,        # samples per frame (feature-extractor window == hop)
    feat_dim=128,   # "mel-like" feature dim (real w2v-bert: 160 -> pad to 256)
    hidden=128,     # hidden_size (real: 1024); 128 keeps every store lane-dense
    heads=4,
    head_dim=32,
    ffn_dim=256,
    layers=4,       # stand-in for 24 conformer layers (layer index = grid axis)
)


def init_params(key, cfg):
    H, F, L = cfg["hidden"], cfg["ffn_dim"], cfg["layers"]
    q_scale = 1.0 / (cfg["head_dim"] ** 0.5)

    def dense(k, fan_in, shape):
        return jax.random.normal(k, shape, jnp.float32) / jnp.sqrt(float(fan_in))

    keys = iter(jax.random.split(key, 2 + 4 * L))

    wqkv, wo, w1, w2 = [], [], [], []
    for _ in range(L):
        w = dense(next(keys), H, (H, 3 * H))
        w = w.at[:, :H].multiply(q_scale)       # fold 1/sqrt(dh) into Q columns
        wqkv.append(w.astype(jnp.bfloat16))
        wo.append(dense(next(keys), H, (H, H)).astype(jnp.bfloat16))
        w1.append(dense(next(keys), H, (H, F)).astype(jnp.bfloat16))
        w2.append(dense(next(keys), F, (F, H)).astype(jnp.bfloat16))

    return {
        # prologue (feature extractor approximation + feature projection)
        "fbank": dense(next(keys), cfg["win"],
                       (cfg["win"], cfg["feat_dim"])).astype(jnp.bfloat16),
        "fp_ln_g": jnp.ones((1, cfg["feat_dim"]), jnp.float32),
        "fp_ln_b": jnp.zeros((1, cfg["feat_dim"]), jnp.float32),
        "fp_w": dense(next(keys), cfg["feat_dim"],
                      (cfg["feat_dim"], H)).astype(jnp.bfloat16),
        "fp_b": jnp.zeros((1, H), jnp.float32),
        # stacked per-layer encoder weights: leading dim = layer grid axis
        "ln1_g": jnp.ones((L, 1, H), jnp.float32),
        "ln1_b": jnp.zeros((L, 1, H), jnp.float32),
        "wqkv": jnp.stack(wqkv),                 # [L, H, 3H] bf16
        "bqkv": jnp.zeros((L, 1, 3 * H), jnp.float32),
        "wo": jnp.stack(wo),                     # [L, H, H]  bf16
        "bo": jnp.zeros((L, 1, H), jnp.float32),
        "ln2_g": jnp.ones((L, 1, H), jnp.float32),
        "ln2_b": jnp.zeros((L, 1, H), jnp.float32),
        "w1": jnp.stack(w1),                     # [L, H, F]  bf16
        "b1": jnp.zeros((L, 1, F), jnp.float32),
        "w2": jnp.stack(w2),                     # [L, F, H]  bf16
        "b2": jnp.zeros((L, 1, H), jnp.float32),
        # final LayerNorm (fused into the last layer-grid step)
        "final_ln_g": jnp.ones((1, H), jnp.float32),
        "final_ln_b": jnp.zeros((1, H), jnp.float32),
    }


def wav2vec2bert_hybrid_forward(params, waveforms, cfg):
    """waveforms [B, T] -> pooled embeddings [B, hidden] (== hidden.mean(dim=1))."""
    B, T = waveforms.shape
    win = cfg["win"]
    H = cfg["hidden"]
    S = T // win
    frames = waveforms[:, : S * win].reshape(B * S, win)    # framing (metadata)

    feats = prologue(frames, params)                        # [B*S, H] bf16
    h = feats.reshape(B, S, H)                              # free reshape

    pooled = encoder_and_pool(h, params, cfg)               # [B, 1, H] f32
    return pooled.reshape(B, H)


# ----------------------------------------------------------------------------
# Main
# ----------------------------------------------------------------------------

if __name__ == "__main__":
    key = jax.random.PRNGKey(0)
    k_param, k_wave = jax.random.split(key)

    params = init_params(k_param, CFG)

    B = 2
    S = 128                                  # frames per utterance
    T = S * CFG["win"]                       # 16384 samples (~1 s @ 16 kHz)
    waveforms = jax.random.normal(k_wave, (B, T), jnp.float32)

    fwd = jax.jit(functools.partial(wav2vec2bert_hybrid_forward, cfg=CFG))
    emb = jax.block_until_ready(fwd(params, waveforms))

    assert emb.shape == (B, CFG["hidden"]), emb.shape
    assert emb.dtype == jnp.float32
    assert bool(jnp.all(jnp.isfinite(emb)))
    print("KERNEL_OK")
</pallas_src>

<mosaic_0001>
module attributes {stable_mosaic.version = 11 : i64} {
  func.func @_prologue_kernel(%arg0: i32, %arg1: memref<128x128xf32, #tpu.memory_space<vmem>>, %arg2: memref<128x128xbf16, #tpu.memory_space<vmem>>, %arg3: memref<1x128xf32, #tpu.memory_space<vmem>>, %arg4: memref<1x128xf32, #tpu.memory_space<vmem>>, %arg5: memref<128x128xbf16, #tpu.memory_space<vmem>>, %arg6: memref<1x128xf32, #tpu.memory_space<vmem>>, %arg7: memref<128x128xbf16, #tpu.memory_space<vmem>>) attributes {dimension_semantics = [#tpu.dimension_semantics<parallel>], iteration_bounds = array<i64: 2>, scalar_prefetch = 0 : i64, scratch_operands = 0 : i64, tpu.core_type = #tpu.core_type<tc>, window_params = [{transform_indices = @transform_0, window_bounds = array<i64: 128, 128>}, {pipeline_mode = #tpu.pipeline_mode<synchronous>, transform_indices = @transform_1, window_bounds = array<i64: 128, 128>}, {pipeline_mode = #tpu.pipeline_mode<synchronous>, transform_indices = @transform_2, window_bounds = array<i64: 1, 128>}, {pipeline_mode = #tpu.pipeline_mode<synchronous>, transform_indices = @transform_3, window_bounds = array<i64: 1, 128>}, {pipeline_mode = #tpu.pipeline_mode<synchronous>, transform_indices = @transform_4, window_bounds = array<i64: 128, 128>}, {pipeline_mode = #tpu.pipeline_mode<synchronous>, transform_indices = @transform_5, window_bounds = array<i64: 1, 128>}, {transform_indices = @transform_6, window_bounds = array<i64: 128, 128>}]} {
    %c0 = arith.constant 0 : index
    %c0_0 = arith.constant 0 : index
    %0 = vector.load %arg1[%c0, %c0_0] : memref<128x128xf32, #tpu.memory_space<vmem>>, vector<128x128xf32>
    %1 = arith.truncf %0 : vector<128x128xf32> to vector<128x128xbf16>
    %c0_1 = arith.constant 0 : index
    %c0_2 = arith.constant 0 : index
    %2 = vector.load %arg2[%c0_1, %c0_2] : memref<128x128xbf16, #tpu.memory_space<vmem>>, vector<128x128xbf16>
    %cst = arith.constant dense<0.000000e+00> : vector<128x128xf32>
    %3 = tpu.matmul %1, %2, %cst {dimension_numbers = #tpu.dot_dimension_numbers<[1], [0], [0], [1], [0, 0, 1, 1], [], []>} : vector<128x128xbf16>, vector<128x128xbf16>, vector<128x128xf32> -> vector<128x128xf32>
    %cst_3 = arith.constant 0.000000e+00 : f32
    %4 = vector.broadcast %cst_3 : f32 to vector<128x128xf32>
    %5 = arith.maximumf %3, %4 : vector<128x128xf32>
    %cst_4 = arith.constant 1.000000e+00 : f32
    %6 = vector.broadcast %cst_4 : f32 to vector<128x128xf32>
    %7 = arith.addf %6, %5 : vector<128x128xf32>
    %8 = math.log %7 : vector<128x128xf32>
    %c0_5 = arith.constant 0 : index
    %c0_6 = arith.constant 0 : index
    %9 = vector.load %arg3[%c0_5, %c0_6] : memref<1x128xf32, #tpu.memory_space<vmem>>, vector<1x128xf32>
    %c0_7 = arith.constant 0 : index
    %c0_8 = arith.constant 0 : index
    %10 = vector.load %arg4[%c0_7, %c0_8] : memref<1x128xf32, #tpu.memory_space<vmem>>, vector<1x128xf32>
    %cst_9 = arith.constant dense<0.000000e+00> : vector<128xf32>
    %11 = vector.multi_reduction <add>, %8, %cst_9 [1] : vector<128x128xf32> to vector<128xf32>
    %12 = vector.shape_cast %11 : vector<128xf32> to vector<128x1xf32>
    %cst_10 = arith.constant 1.280000e+02 : f32
    %13 = vector.broadcast %cst_10 : f32 to vector<128x1xf32>
    %14 = arith.divf %12, %13 : vector<128x1xf32>
    %15 = vector.broadcast %14 : vector<128x1xf32> to vector<128x128xf32>
    %16 = arith.subf %8, %15 : vector<128x128xf32>
    %17 = arith.mulf %16, %16 : vector<128x128xf32>
    %cst_11 = arith.constant dense<0.000000e+00> : vector<128xf32>
    %18 = vector.multi_reduction <add>, %17, %cst_11 [1] : vector<128x128xf32> to vector<128xf32>
    %19 = vector.shape_cast %18 : vector<128xf32> to vector<128x1xf32>
    %cst_12 = arith.constant 1.280000e+02 : f32
    %20 = vector.broadcast %cst_12 : f32 to vector<128x1xf32>
    %21 = arith.divf %19, %20 : vector<128x1xf32>
    %22 = vector.broadcast %14 : vector<128x1xf32> to vector<128x128xf32>
    %23 = arith.subf %8, %22 : vector<128x128xf32>
    %cst_13 = arith.constant 9.99999974E-6 : f32
    %24 = vector.broadcast %cst_13 : f32 to vector<128x1xf32>
    %25 = arith.addf %21, %24 : vector<128x1xf32>
    %26 = math.rsqrt %25 : vector<128x1xf32>
    %27 = vector.broadcast %26 : vector<128x1xf32> to vector<128x128xf32>
    %28 = arith.mulf %23, %27 : vector<128x128xf32>
    %29 = vector.broadcast %9 : vector<1x128xf32> to vector<128x128xf32>
    %30 = arith.mulf %28, %29 : vector<128x128xf32>
    %31 = vector.broadcast %10 : vector<1x128xf32> to vector<128x128xf32>
    %32 = arith.addf %30, %31 : vector<128x128xf32>
    %33 = arith.truncf %32 : vector<128x128xf32> to vector<128x128xbf16>
    %c0_14 = arith.constant 0 : index
    %c0_15 = arith.constant 0 : index
    %34 = vector.load %arg5[%c0_14, %c0_15] : memref<128x128xbf16, #tpu.memory_space<vmem>>, vector<128x128xbf16>
    %cst_16 = arith.constant dense<0.000000e+00> : vector<128x128xf32>
    %35 = tpu.matmul %33, %34, %cst_16 {dimension_numbers = #tpu.dot_dimension_numbers<[1], [0], [0], [1], [0, 0, 1, 1], [], []>} : vector<128x128xbf16>, vector<128x128xbf16>, vector<128x128xf32> -> vector<128x128xf32>
    %c0_17 = arith.constant 0 : index
    %c0_18 = arith.constant 0 : index
    %36 = vector.load %arg6[%c0_17, %c0_18] : memref<1x128xf32, #tpu.memory_space<vmem>>, vector<1x128xf32>
    %37 = vector.broadcast %36 : vector<1x128xf32> to vector<128x128xf32>
    %38 = arith.addf %35, %37 : vector<128x128xf32>
    %39 = arith.truncf %38 : vector<128x128xf32> to vector<128x128xbf16>
    %c0_19 = arith.constant 0 : index
    %c0_20 = arith.constant 0 : index
    %40 = vector.load %arg7[%c0_19, %c0_20] : memref<128x128xbf16, #tpu.memory_space<vmem>>, vector<128x128xbf16>
    tpu.vector_store %arg7[%c0_19, %c0_20], %39 {strides = array<i32>} : memref<128x128xbf16, #tpu.memory_space<vmem>>, vector<128x128xbf16>,
    return
  }
  func.func @transform_0(%arg0: i32) -> (i32, i32) {
    %c0_i32 = arith.constant 0 : i32
    %c0_i32_0 = arith.constant 0 : i32
    return %arg0, %c0_i32 : i32, i32
  }
  func.func @transform_1(%arg0: i32) -> (i32, i32) {
    %c0_i32 = arith.constant 0 : i32
    %c0_i32_0 = arith.constant 0 : i32
    %c0_i32_1 = arith.constant 0 : i32
    return %c0_i32, %c0_i32_0 : i32, i32
  }
  func.func @transform_2(%arg0: i32) -> (i32, i32) {
    %c0_i32 = arith.constant 0 : i32
    %c0_i32_0 = arith.constant 0 : i32
    %c0_i32_1 = arith.constant 0 : i32
    return %c0_i32, %c0_i32_0 : i32, i32
  }
  func.func @transform_3(%arg0: i32) -> (i32, i32) {
    %c0_i32 = arith.constant 0 : i32
    %c0_i32_0 = arith.constant 0 : i32
    %c0_i32_1 = arith.constant 0 : i32
    return %c0_i32, %c0_i32_0 : i32, i32
  }
  func.func @transform_4(%arg0: i32) -> (i32, i32) {
    %c0_i32 = arith.constant 0 : i32
    %c0_i32_0 = arith.constant 0 : i32
    %c0_i32_1 = arith.constant 0 : i32
    return %c0_i32, %c0_i32_0 : i32, i32
  }
  func.func @transform_5(%arg0: i32) -> (i32, i32) {
    %c0_i32 = arith.constant 0 : i32
    %c0_i32_0 = arith.constant 0 : i32
    %c0_i32_1 = arith.constant 0 : i32
    return %c0_i32, %c0_i32_0 : i32, i32
  }
  func.func @transform_6(%arg0: i32) -> (i32, i32) {
    %c0_i32 = arith.constant 0 : i32
    %c0_i32_0 = arith.constant 0 : i32
    return %arg0, %c0_i32 : i32, i32
  }
}

module attributes {stable_mosaic.version = 11 : i64} {
  func.func @_encoder_kernel(%arg0: i32, %arg1: i32, %arg2: memref<1x128x128xbf16, #tpu.memory_space<vmem>>, %arg3: memref<1x1x128xf32, #tpu.memory_space<vmem>>, %arg4: memref<1x1x128xf32, #tpu.memory_space<vmem>>, %arg5: memref<1x128x384xbf16, #tpu.memory_space<vmem>>, %arg6: memref<1x1x384xf32, #tpu.memory_space<vmem>>, %arg7: memref<1x128x128xbf16, #tpu.memory_space<vmem>>, %arg8: memref<1x1x128xf32, #tpu.memory_space<vmem>>, %arg9: memref<1x1x128xf32, #tpu.memory_space<vmem>>, %arg10: memref<1x1x128xf32, #tpu.memory_space<vmem>>, %arg11: memref<1x128x256xbf16, #tpu.memory_space<vmem>>, %arg12: memref<1x1x256xf32, #tpu.memory_space<vmem>>, %arg13: memref<1x256x128xbf16, #tpu.memory_space<vmem>>, %arg14: memref<1x1x128xf32, #tpu.memory_space<vmem>>, %arg15: memref<1x128xf32, #tpu.memory_space<vmem>>, %arg16: memref<1x128xf32, #tpu.memory_space<vmem>>, %arg17: memref<1x1x128xf32, #tpu.memory_space<vmem>>, %arg18: memref<128x128xf32, #tpu.memory_space<vmem>>) attributes {dimension_semantics = [#tpu.dimension_semantics<parallel>, #tpu.dimension_semantics<arbitrary>], iteration_bounds = array<i64: 2, 4>, scalar_prefetch = 0 : i64, scratch_operands = 1 : i64, tpu.core_type = #tpu.core_type<tc>, window_params = [{transform_indices = @transform_0, window_bounds = array<i64: 1, 128, 128>}, {transform_indices = @transform_1, window_bounds = array<i64: 1, 1, 128>}, {transform_indices = @transform_2, window_bounds = array<i64: 1, 1, 128>}, {transform_indices = @transform_3, window_bounds = array<i64: 1, 128, 384>}, {transform_indices = @transform_4, window_bounds = array<i64: 1, 1, 384>}, {transform_indices = @transform_5, window_bounds = array<i64: 1, 128, 128>}, {transform_indices = @transform_6, window_bounds = array<i64: 1, 1, 128>}, {transform_indices = @transform_7, window_bounds = array<i64: 1, 1, 128>}, {transform_indices = @transform_8, window_bounds = array<i64: 1, 1, 128>}, {transform_indices = @transform_9, window_bounds = array<i64: 1, 128, 256>}, {transform_indices = @transform_10, window_bounds = array<i64: 1, 1, 256>}, {transform_indices = @transform_11, window_bounds = array<i64: 1, 256, 128>}, {transform_indices = @transform_12, window_bounds = array<i64: 1, 1, 128>}, {pipeline_mode = #tpu.pipeline_mode<synchronous>, transform_indices = @transform_13, window_bounds = array<i64: 1, 128>}, {pipeline_mode = #tpu.pipeline_mode<synchronous>, transform_indices = @transform_14, window_bounds = array<i64: 1, 128>}, {transform_indices = @transform_15, window_bounds = array<i64: 1, 1, 128>}]} {
    %c0_i32 = arith.constant 0 : i32
    %0 = arith.cmpi eq, %arg1, %c0_i32 : i32
    %1 = arith.extui %0 : i1 to i32
    %c0_i32_0 = arith.constant 0 : i32
    %2 = arith.cmpi ne, %1, %c0_i32_0 : i32
    scf.if %2 {
      %c0_75 = arith.constant 0 : index
      %c0_76 = arith.constant 0 : index
      %c0_77 = arith.constant 0 : index
      %191 = vector.load %arg2[%c0_75, %c0_76, %c0_77] : memref<1x128x128xbf16, #tpu.memory_space<vmem>>, vector<1x128x128xbf16>
      %192 = vector.shape_cast %191 : vector<1x128x128xbf16> to vector<128x128xbf16>
      %193 = arith.extf %192 : vector<128x128xbf16> to vector<128x128xf32>
      %c0_78 = arith.constant 0 : index
      %c0_79 = arith.constant 0 : index
      %194 = vector.load %arg18[%c0_78, %c0_79] : memref<128x128xf32, #tpu.memory_space<vmem>>, vector<128x128xf32>
      tpu.vector_store %arg18[%c0_78, %c0_79], %193 {strides = array<i32>} : memref<128x128xf32, #tpu.memory_space<vmem>>, vector<128x128xf32>,
    } else {
    }
    %c0 = arith.constant 0 : index
    %c0_1 = arith.constant 0 : index
    %3 = vector.load %arg18[%c0, %c0_1] : memref<128x128xf32, #tpu.memory_space<vmem>>, vector<128x128xf32>
    %c0_2 = arith.constant 0 : index
    %c0_3 = arith.constant 0 : index
    %c0_4 = arith.constant 0 : index
    %4 = vector.load %arg3[%c0_2, %c0_3, %c0_4] : memref<1x1x128xf32, #tpu.memory_space<vmem>>, vector<1x1x128xf32>
    %5 = vector.shape_cast %4 : vector<1x1x128xf32> to vector<1x128xf32>
    %c0_5 = arith.constant 0 : index
    %c0_6 = arith.constant 0 : index
    %c0_7 = arith.constant 0 : index
    %6 = vector.load %arg4[%c0_5, %c0_6, %c0_7] : memref<1x1x128xf32, #tpu.memory_space<vmem>>, vector<1x1x128xf32>
    %7 = vector.shape_cast %6 : vector<1x1x128xf32> to vector<1x128xf32>
    %cst = arith.constant dense<0.000000e+00> : vector<128xf32>
    %8 = vector.multi_reduction <add>, %3, %cst [1] : vector<128x128xf32> to vector<128xf32>
    %9 = vector.shape_cast %8 : vector<128xf32> to vector<128x1xf32>
    %cst_8 = arith.constant 1.280000e+02 : f32
    %10 = vector.broadcast %cst_8 : f32 to vector<128x1xf32>
    %11 = arith.divf %9, %10 : vector<128x1xf32>
    %12 = vector.broadcast %11 : vector<128x1xf32> to vector<128x128xf32>
    %13 = arith.subf %3, %12 : vector<128x128xf32>
    %14 = arith.mulf %13, %13 : vector<128x128xf32>
    %cst_9 = arith.constant dense<0.000000e+00> : vector<128xf32>
    %15 = vector.multi_reduction <add>, %14, %cst_9 [1] : vector<128x128xf32> to vector<128xf32>
    %16 = vector.shape_cast %15 : vector<128xf32> to vector<128x1xf32>
    %cst_10 = arith.constant 1.280000e+02 : f32
    %17 = vector.broadcast %cst_10 : f32 to vector<128x1xf32>
    %18 = arith.divf %16, %17 : vector<128x1xf32>
    %19 = vector.broadcast %11 : vector<128x1xf32> to vector<128x128xf32>
    %20 = arith.subf %3, %19 : vector<128x128xf32>
    %cst_11 = arith.constant 9.99999974E-6 : f32
    %21 = vector.broadcast %cst_11 : f32 to vector<128x1xf32>
    %22 = arith.addf %18, %21 : vector<128x1xf32>
    %23 = math.rsqrt %22 : vector<128x1xf32>
    %24 = vector.broadcast %23 : vector<128x1xf32> to vector<128x128xf32>
    %25 = arith.mulf %20, %24 : vector<128x128xf32>
    %26 = vector.broadcast %5 : vector<1x128xf32> to vector<128x128xf32>
    %27 = arith.mulf %25, %26 : vector<128x128xf32>
    %28 = vector.broadcast %7 : vector<1x128xf32> to vector<128x128xf32>
    %29 = arith.addf %27, %28 : vector<128x128xf32>
    %30 = arith.truncf %29 : vector<128x128xf32> to vector<128x128xbf16>
    %c0_12 = arith.constant 0 : index
    %c0_13 = arith.constant 0 : index
    %c0_14 = arith.constant 0 : index
    %31 = vector.load %arg5[%c0_12, %c0_13, %c0_14] : memref<1x128x384xbf16, #tpu.memory_space<vmem>>, vector<1x128x384xbf16>
    %32 = vector.shape_cast %31 : vector<1x128x384xbf16> to vector<128x384xbf16>
    %cst_15 = arith.constant dense<0.000000e+00> : vector<128x384xf32>
    %33 = tpu.matmul %30, %32, %cst_15 {dimension_numbers = #tpu.dot_dimension_numbers<[1], [0], [0], [1], [0, 0, 1, 1], [], []>} : vector<128x128xbf16>, vector<128x384xbf16>, vector<128x384xf32> -> vector<128x384xf32>
    %c0_16 = arith.constant 0 : index
    %c0_17 = arith.constant 0 : index
    %c0_18 = arith.constant 0 : index
    %34 = vector.load %arg6[%c0_16, %c0_17, %c0_18] : memref<1x1x384xf32, #tpu.memory_space<vmem>>, vector<1x1x384xf32>
    %35 = vector.shape_cast %34 : vector<1x1x384xf32> to vector<1x384xf32>
    %36 = vector.broadcast %35 : vector<1x384xf32> to vector<128x384xf32>
    %37 = arith.addf %33, %36 : vector<128x384xf32>
    %c0_19 = arith.constant 0 : index
    %c0_20 = arith.constant 0 : index
    %c0_21 = arith.constant 0 : index
    %38 = vector.load %arg7[%c0_19, %c0_20, %c0_21] : memref<1x128x128xbf16, #tpu.memory_space<vmem>>, vector<1x128x128xbf16>
    %39 = vector.shape_cast %38 : vector<1x128x128xbf16> to vector<128x128xbf16>
    %cst_22 = arith.constant 0.000000e+00 : f32
    %40 = vector.broadcast %cst_22 : f32 to vector<128x128xf32>
    %41 = vector.extract_strided_slice %37 {offsets = [0, 0], sizes = [128, 32], strides = [1, 1]} : vector<128x384xf32> to vector<128x32xf32>
    %42 = arith.truncf %41 : vector<128x32xf32> to vector<128x32xbf16>
    %43 = vector.extract_strided_slice %37 {offsets = [0, 128], sizes = [128, 32], strides = [1, 1]} : vector<128x384xf32> to vector<128x32xf32>
    %44 = arith.truncf %43 : vector<128x32xf32> to vector<128x32xbf16>
    %45 = vector.extract_strided_slice %37 {offsets = [0, 256], sizes = [128, 32], strides = [1, 1]} : vector<128x384xf32> to vector<128x32xf32>
    %46 = arith.truncf %45 : vector<128x32xf32> to vector<128x32xbf16>
    %cst_23 = arith.constant dense<0.000000e+00> : vector<128x128xf32>
    %47 = tpu.matmul %42, %44, %cst_23 {dimension_numbers = #tpu.dot_dimension_numbers<[1], [1], [0], [0], [0, 0, 1, 0], [], []>} : vector<128x32xbf16>, vector<128x32xbf16>, vector<128x128xf32> -> vector<128x128xf32>
    %cst_24 = arith.constant dense<0xFF800000> : vector<128xf32>
    %48 = vector.multi_reduction <maximumf>, %47, %cst_24 [1] : vector<128x128xf32> to vector<128xf32>
    %49 = vector.shape_cast %48 : vector<128xf32> to vector<128x1xf32>
    %50 = vector.broadcast %49 : vector<128x1xf32> to vector<128x128xf32>
    %51 = arith.subf %47, %50 : vector<128x128xf32>
    %52 = math.exp %51 : vector<128x128xf32>
    %cst_25 = arith.constant dense<0.000000e+00> : vector<128xf32>
    %53 = vector.multi_reduction <add>, %52, %cst_25 [1] : vector<128x128xf32> to vector<128xf32>
    %54 = vector.shape_cast %53 : vector<128xf32> to vector<128x1xf32>
    %55 = tpu.reciprocal %54 {approx = true} : vector<128x1xf32> -> vector<128x1xf32>
    %56 = vector.broadcast %55 : vector<128x1xf32> to vector<128x128xf32>
    %57 = arith.mulf %52, %56 : vector<128x128xf32>
    %58 = arith.truncf %57 : vector<128x128xf32> to vector<128x128xbf16>
    %cst_26 = arith.constant dense<0.000000e+00> : vector<128x32xf32>
    %59 = tpu.matmul %58, %46, %cst_26 {dimension_numbers = #tpu.dot_dimension_numbers<[1], [0], [0], [1], [0, 0, 1, 1], [], []>} : vector<128x128xbf16>, vector<128x32xbf16>, vector<128x32xf32> -> vector<128x32xf32>
    %60 = arith.truncf %59 : vector<128x32xf32> to vector<128x32xbf16>
    %61 = vector.extract_strided_slice %39 {offsets = [0, 0], sizes = [32, 128], strides = [1, 1]} : vector<128x128xbf16> to vector<32x128xbf16>
    %cst_27 = arith.constant dense<0.000000e+00> : vector<128x128xf32>
    %62 = tpu.matmul %60, %61, %cst_27 {dimension_numbers = #tpu.dot_dimension_numbers<[1], [0], [0], [1], [0, 0, 1, 1], [], []>} : vector<128x32xbf16>, vector<32x128xbf16>, vector<128x128xf32> -> vector<128x128xf32>
    %63 = arith.addf %40, %62 : vector<128x128xf32>
    %64 = vector.extract_strided_slice %37 {offsets = [0, 32], sizes = [128, 32], strides = [1, 1]} : vector<128x384xf32> to vector<128x32xf32>
    %65 = arith.truncf %64 : vector<128x32xf32> to vector<128x32xbf16>
    %66 = vector.extract_strided_slice %37 {offsets = [0, 160], sizes = [128, 32], strides = [1, 1]} : vector<128x384xf32> to vector<128x32xf32>
    %67 = arith.truncf %66 : vector<128x32xf32> to vector<128x32xbf16>
    %68 = vector.extract_strided_slice %37 {offsets = [0, 288], sizes = [128, 32], strides = [1, 1]} : vector<128x384xf32> to vector<128x32xf32>
    %69 = arith.truncf %68 : vector<128x32xf32> to vector<128x32xbf16>
    %cst_28 = arith.constant dense<0.000000e+00> : vector<128x128xf32>
    %70 = tpu.matmul %65, %67, %cst_28 {dimension_numbers = #tpu.dot_dimension_numbers<[1], [1], [0], [0], [0, 0, 1, 0], [], []>} : vector<128x32xbf16>, vector<128x32xbf16>, vector<128x128xf32> -> vector<128x128xf32>
    %cst_29 = arith.constant dense<0xFF800000> : vector<128xf32>
    %71 = vector.multi_reduction <maximumf>, %70, %cst_29 [1] : vector<128x128xf32> to vector<128xf32>
    %72 = vector.shape_cast %71 : vector<128xf32> to vector<128x1xf32>
    %73 = vector.broadcast %72 : vector<128x1xf32> to vector<128x128xf32>
    %74 = arith.subf %70, %73 : vector<128x128xf32>
    %75 = math.exp %74 : vector<128x128xf32>
    %cst_30 = arith.constant dense<0.000000e+00> : vector<128xf32>
    %76 = vector.multi_reduction <add>, %75, %cst_30 [1] : vector<128x128xf32> to vector<128xf32>
    %77 = vector.shape_cast %76 : vector<128xf32> to vector<128x1xf32>
    %78 = tpu.reciprocal %77 {approx = true} : vector<128x1xf32> -> vector<128x1xf32>
    %79 = vector.broadcast %78 : vector<128x1xf32> to vector<128x128xf32>
    %80 = arith.mulf %75, %79 : vector<128x128xf32>
    %81 = arith.truncf %80 : vector<128x128xf32> to vector<128x128xbf16>
    %cst_31 = arith.constant dense<0.000000e+00> : vector<128x32xf32>
    %82 = tpu.matmul %81, %69, %cst_31 {dimension_numbers = #tpu.dot_dimension_numbers<[1], [0], [0], [1], [0, 0, 1, 1], [], []>} : vector<128x128xbf16>, vector<128x32xbf16>, vector<128x32xf32> -> vector<128x32xf32>
    %83 = arith.truncf %82 : vector<128x32xf32> to vector<128x32xbf16>
    %84 = vector.extract_strided_slice %39 {offsets = [32, 0], sizes = [32, 128], strides = [1, 1]} : vector<128x128xbf16> to vector<32x128xbf16>
    %cst_32 = arith.constant dense<0.000000e+00> : vector<128x128xf32>
    %85 = tpu.matmul %83, %84, %cst_32 {dimension_numbers = #tpu.dot_dimension_numbers<[1], [0], [0], [1], [0, 0, 1, 1], [], []>} : vector<128x32xbf16>, vector<32x128xbf16>, vector<128x128xf32> -> vector<128x128xf32>
    %86 = arith.addf %63, %85 : vector<128x128xf32>
    %87 = vector.extract_strided_slice %37 {offsets = [0, 64], sizes = [128, 32], strides = [1, 1]} : vector<128x384xf32> to vector<128x32xf32>
    %88 = arith.truncf %87 : vector<128x32xf32> to vector<128x32xbf16>
    %89 = vector.extract_strided_slice %37 {offsets = [0, 192], sizes = [128, 32], strides = [1, 1]} : vector<128x384xf32> to vector<128x32xf32>
    %90 = arith.truncf %89 : vector<128x32xf32> to vector<128x32xbf16>
    %91 = vector.extract_strided_slice %37 {offsets = [0, 320], sizes = [128, 32], strides = [1, 1]} : vector<128x384xf32> to vector<128x32xf32>
    %92 = arith.truncf %91 : vector<128x32xf32> to vector<128x32xbf16>
    %cst_33 = arith.constant dense<0.000000e+00> : vector<128x128xf32>
    %93 = tpu.matmul %88, %90, %cst_33 {dimension_numbers = #tpu.dot_dimension_numbers<[1], [1], [0], [0], [0, 0, 1, 0], [], []>} : vector<128x32xbf16>, vector<128x32xbf16>, vector<128x128xf32> -> vector<128x128xf32>
    %cst_34 = arith.constant dense<0xFF800000> : vector<128xf32>
    %94 = vector.multi_reduction <maximumf>, %93, %cst_34 [1] : vector<128x128xf32> to vector<128xf32>
    %95 = vector.shape_cast %94 : vector<128xf32> to vector<128x1xf32>
    %96 = vector.broadcast %95 : vector<128x1xf32> to vector<128x128xf32>
    %97 = arith.subf %93, %96 : vector<128x128xf32>
    %98 = math.exp %97 : vector<128x128xf32>
    %cst_35 = arith.constant dense<0.000000e+00> : vector<128xf32>
    %99 = vector.multi_reduction <add>, %98, %cst_35 [1] : vector<128x128xf32> to vector<128xf32>
    %100 = vector.shape_cast %99 : vector<128xf32> to vector<128x1xf32>
    %101 = tpu.reciprocal %100 {approx = true} : vector<128x1xf32> -> vector<128x1xf32>
    %102 = vector.broadcast %101 : vector<128x1xf32> to vector<128x128xf32>
    %103 = arith.mulf %98, %102 : vector<128x128xf32>
    %104 = arith.truncf %103 : vector<128x128xf32> to vector<128x128xbf16>
    %cst_36 = arith.constant dense<0.000000e+00> : vector<128x32xf32>
    %105 = tpu.matmul %104, %92, %cst_36 {dimension_numbers = #tpu.dot_dimension_numbers<[1], [0], [0], [1], [0, 0, 1, 1], [], []>} : vector<128x128xbf16>, vector<128x32xbf16>, vector<128x32xf32> -> vector<128x32xf32>
    %106 = arith.truncf %105 : vector<128x32xf32> to vector<128x32xbf16>
    %107 = vector.extract_strided_slice %39 {offsets = [64, 0], sizes = [32, 128], strides = [1, 1]} : vector<128x128xbf16> to vector<32x128xbf16>
    %cst_37 = arith.constant dense<0.000000e+00> : vector<128x128xf32>
    %108 = tpu.matmul %106, %107, %cst_37 {dimension_numbers = #tpu.dot_dimension_numbers<[1], [0], [0], [1], [0, 0, 1, 1], [], []>} : vector<128x32xbf16>, vector<32x128xbf16>, vector<128x128xf32> -> vector<128x128xf32>
    %109 = arith.addf %86, %108 : vector<128x128xf32>
    %110 = vector.extract_strided_slice %37 {offsets = [0, 96], sizes = [128, 32], strides = [1, 1]} : vector<128x384xf32> to vector<128x32xf32>
    %111 = arith.truncf %110 : vector<128x32xf32> to vector<128x32xbf16>
    %112 = vector.extract_strided_slice %37 {offsets = [0, 224], sizes = [128, 32], strides = [1, 1]} : vector<128x384xf32> to vector<128x32xf32>
    %113 = arith.truncf %112 : vector<128x32xf32> to vector<128x32xbf16>
    %114 = vector.extract_strided_slice %37 {offsets = [0, 352], sizes = [128, 32], strides = [1, 1]} : vector<128x384xf32> to vector<128x32xf32>
    %115 = arith.truncf %114 : vector<128x32xf32> to vector<128x32xbf16>
    %cst_38 = arith.constant dense<0.000000e+00> : vector<128x128xf32>
    %116 = tpu.matmul %111, %113, %cst_38 {dimension_numbers = #tpu.dot_dimension_numbers<[1], [1], [0], [0], [0, 0, 1, 0], [], []>} : vector<128x32xbf16>, vector<128x32xbf16>, vector<128x128xf32> -> vector<128x128xf32>
    %cst_39 = arith.constant dense<0xFF800000> : vector<128xf32>
    %117 = vector.multi_reduction <maximumf>, %116, %cst_39 [1] : vector<128x128xf32> to vector<128xf32>
    %118 = vector.shape_cast %117 : vector<128xf32> to vector<128x1xf32>
    %119 = vector.broadcast %118 : vector<128x1xf32> to vector<128x128xf32>
    %120 = arith.subf %116, %119 : vector<128x128xf32>
    %121 = math.exp %120 : vector<128x128xf32>
    %cst_40 = arith.constant dense<0.000000e+00> : vector<128xf32>
    %122 = vector.multi_reduction <add>, %121, %cst_40 [1] : vector<128x128xf32> to vector<128xf32>
    %123 = vector.shape_cast %122 : vector<128xf32> to vector<128x1xf32>
    %124 = tpu.reciprocal %123 {approx = true} : vector<128x1xf32> -> vector<128x1xf32>
    %125 = vector.broadcast %124 : vector<128x1xf32> to vector<128x128xf32>
    %126 = arith.mulf %121, %125 : vector<128x128xf32>
    %127 = arith.truncf %126 : vector<128x128xf32> to vector<128x128xbf16>
    %cst_41 = arith.constant dense<0.000000e+00> : vector<128x32xf32>
    %128 = tpu.matmul %127, %115, %cst_41 {dimension_numbers = #tpu.dot_dimension_numbers<[1], [0], [0], [1], [0, 0, 1, 1], [], []>} : vector<128x128xbf16>, vector<128x32xbf16>, vector<128x32xf32> -> vector<128x32xf32>
    %129 = arith.truncf %128 : vector<128x32xf32> to vector<128x32xbf16>
    %130 = vector.extract_strided_slice %39 {offsets = [96, 0], sizes = [32, 128], strides = [1, 1]} : vector<128x128xbf16> to vector<32x128xbf16>
    %cst_42 = arith.constant dense<0.000000e+00> : vector<128x128xf32>
    %131 = tpu.matmul %129, %130, %cst_42 {dimension_numbers = #tpu.dot_dimension_numbers<[1], [0], [0], [1], [0, 0, 1, 1], [], []>} : vector<128x32xbf16>, vector<32x128xbf16>, vector<128x128xf32> -> vector<128x128xf32>
    %132 = arith.addf %109, %131 : vector<128x128xf32>
    %133 = arith.addf %3, %132 : vector<128x128xf32>
    %c0_43 = arith.constant 0 : index
    %c0_44 = arith.constant 0 : index
    %c0_45 = arith.constant 0 : index
    %134 = vector.load %arg8[%c0_43, %c0_44, %c0_45] : memref<1x1x128xf32, #tpu.memory_space<vmem>>, vector<1x1x128xf32>
    %135 = vector.shape_cast %134 : vector<1x1x128xf32> to vector<1x128xf32>
    %136 = vector.broadcast %135 : vector<1x128xf32> to vector<128x128xf32>
    %137 = arith.addf %133, %136 : vector<128x128xf32>
    %c0_46 = arith.constant 0 : index
    %c0_47 = arith.constant 0 : index
    %c0_48 = arith.constant 0 : index
    %138 = vector.load %arg9[%c0_46, %c0_47, %c0_48] : memref<1x1x128xf32, #tpu.memory_space<vmem>>, vector<1x1x128xf32>
    %139 = vector.shape_cast %138 : vector<1x1x128xf32> to vector<1x128xf32>
    %c0_49 = arith.constant 0 : index
    %c0_50 = arith.constant 0 : index
    %c0_51 = arith.constant 0 : index
    %140 = vector.load %arg10[%c0_49, %c0_50, %c0_51] : memref<1x1x128xf32, #tpu.memory_space<vmem>>, vector<1x1x128xf32>
    %141 = vector.shape_cast %140 : vector<1x1x128xf32> to vector<1x128xf32>
    %cst_52 = arith.constant dense<0.000000e+00> : vector<128xf32>
    %142 = vector.multi_reduction <add>, %137, %cst_52 [1] : vector<128x128xf32> to vector<128xf32>
    %143 = vector.shape_cast %142 : vector<128xf32> to vector<128x1xf32>
    %cst_53 = arith.constant 1.280000e+02 : f32
    %144 = vector.broadcast %cst_53 : f32 to vector<128x1xf32>
    %145 = arith.divf %143, %144 : vector<128x1xf32>
    %146 = vector.broadcast %145 : vector<128x1xf32> to vector<128x128xf32>
    %147 = arith.subf %137, %146 : vector<128x128xf32>
    %148 = arith.mulf %147, %147 : vector<128x128xf32>
    %cst_54 = arith.constant dense<0.000000e+00> : vector<128xf32>
    %149 = vector.multi_reduction <add>, %148, %cst_54 [1] : vector<128x128xf32> to vector<128xf32>
    %150 = vector.shape_cast %149 : vector<128xf32> to vector<128x1xf32>
    %cst_55 = arith.constant 1.280000e+02 : f32
    %151 = vector.broadcast %cst_55 : f32 to vector<128x1xf32>
    %152 = arith.divf %150, %151 : vector<128x1xf32>
    %153 = vector.broadcast %145 : vector<128x1xf32> to vector<128x128xf32>
    %154 = arith.subf %137, %153 : vector<128x128xf32>
    %cst_56 = arith.constant 9.99999974E-6 : f32
    %155 = vector.broadcast %cst_56 : f32 to vector<128x1xf32>
    %156 = arith.addf %152, %155 : vector<128x1xf32>
    %157 = math.rsqrt %156 : vector<128x1xf32>
    %158 = vector.broadcast %157 : vector<128x1xf32> to vector<128x128xf32>
    %159 = arith.mulf %154, %158 : vector<128x128xf32>
    %160 = vector.broadcast %139 : vector<1x128xf32> to vector<128x128xf32>
    %161 = arith.mulf %159, %160 : vector<128x128xf32>
    %162 = vector.broadcast %141 : vector<1x128xf32> to vector<128x128xf32>
    %163 = arith.addf %161, %162 : vector<128x128xf32>
    %164 = arith.truncf %163 : vector<128x128xf32> to vector<128x128xbf16>
    %c0_57 = arith.constant 0 : index
    %c0_58 = arith.constant 0 : index
    %c0_59 = arith.constant 0 : index
    %165 = vector.load %arg11[%c0_57, %c0_58, %c0_59] : memref<1x128x256xbf16, #tpu.memory_space<vmem>>, vector<1x128x256xbf16>
    %166 = vector.shape_cast %165 : vector<1x128x256xbf16> to vector<128x256xbf16>
    %cst_60 = arith.constant dense<0.000000e+00> : vector<128x256xf32>
    %167 = tpu.matmul %164, %166, %cst_60 {dimension_numbers = #tpu.dot_dimension_numbers<[1], [0], [0], [1], [0, 0, 1, 1], [], []>} : vector<128x128xbf16>, vector<128x256xbf16>, vector<128x256xf32> -> vector<128x256xf32>
    %c0_61 = arith.constant 0 : index
    %c0_62 = arith.constant 0 : index
    %c0_63 = arith.constant 0 : index
    %168 = vector.load %arg12[%c0_61, %c0_62, %c0_63] : memref<1x1x256xf32, #tpu.memory_space<vmem>>, vector<1x1x256xf32>
    %169 = vector.shape_cast %168 : vector<1x1x256xf32> to vector<1x256xf32>
    %170 = vector.broadcast %169 : vector<1x256xf32> to vector<128x256xf32>
    %171 = arith.addf %167, %170 : vector<128x256xf32>
    %172 = arith.negf %171 : vector<128x256xf32>
    %173 = math.exp %172 : vector<128x256xf32>
    %cst_64 = arith.constant 1.000000e+00 : f32
    %174 = vector.broadcast %cst_64 : f32 to vector<128x256xf32>
    %175 = arith.addf %174, %173 : vector<128x256xf32>
    %176 = arith.divf %174, %175 : vector<128x256xf32>
    %177 = arith.mulf %171, %176 : vector<128x256xf32>
    %178 = arith.truncf %177 : vector<128x256xf32> to vector<128x256xbf16>
    %c0_65 = arith.constant 0 : index
    %c0_66 = arith.constant 0 : index
    %c0_67 = arith.constant 0 : index
    %179 = vector.load %arg13[%c0_65, %c0_66, %c0_67] : memref<1x256x128xbf16, #tpu.memory_space<vmem>>, vector<1x256x128xbf16>
    %180 = vector.shape_cast %179 : vector<1x256x128xbf16> to vector<256x128xbf16>
    %cst_68 = arith.constant dense<0.000000e+00> : vector<128x128xf32>
    %181 = tpu.matmul %178, %180, %cst_68 {dimension_numbers = #tpu.dot_dimension_numbers<[1], [0], [0], [1], [0, 0, 1, 1], [], []>} : vector<128x256xbf16>, vector<256x128xbf16>, vector<128x128xf32> -> vector<128x128xf32>
    %c0_69 = arith.constant 0 : index
    %c0_70 = arith.constant 0 : index
    %c0_71 = arith.constant 0 : index
    %182 = vector.load %arg14[%c0_69, %c0_70, %c0_71] : memref<1x1x128xf32, #tpu.memory_space<vmem>>, vector<1x1x128xf32>
    %183 = vector.shape_cast %182 : vector<1x1x128xf32> to vector<1x128xf32>
    %184 = vector.broadcast %183 : vector<1x128xf32> to vector<128x128xf32>
    %185 = arith.addf %181, %184 : vector<128x128xf32>
    %186 = arith.addf %137, %185 : vector<128x128xf32>
    %c0_72 = arith.constant 0 : index
    %c0_73 = arith.constant 0 : index
    %187 = vector.load %arg18[%c0_72, %c0_73] : memref<128x128xf32, #tpu.memory_space<vmem>>, vector<128x128xf32>
    tpu.vector_store %arg18[%c0_72, %c0_73], %186 {strides = array<i32>} : memref<128x128xf32, #tpu.memory_space<vmem>>, vector<128x128xf32>,
    %c3_i32 = arith.constant 3 : i32
    %188 = arith.cmpi eq, %arg1, %c3_i32 : i32
    %189 = arith.extui %188 : i1 to i32
    %c0_i32_74 = arith.constant 0 : i32
    %190 = arith.cmpi ne, %189, %c0_i32_74 : i32
    scf.if %190 {
      %c0_75 = arith.constant 0 : index
      %c0_76 = arith.constant 0 : index
      %191 = vector.load %arg15[%c0_75, %c0_76] : memref<1x128xf32, #tpu.memory_space<vmem>>, vector<1x128xf32>
      %c0_77 = arith.constant 0 : index
      %c0_78 = arith.constant 0 : index
      %192 = vector.load %arg16[%c0_77, %c0_78] : memref<1x128xf32, #tpu.memory_space<vmem>>, vector<1x128xf32>
      %cst_79 = arith.constant dense<0.000000e+00> : vector<128xf32>
      %193 = vector.multi_reduction <add>, %186, %cst_79 [1] : vector<128x128xf32> to vector<128xf32>
      %194 = vector.shape_cast %193 : vector<128xf32> to vector<128x1xf32>
      %cst_80 = arith.constant 1.280000e+02 : f32
      %195 = vector.broadcast %cst_80 : f32 to vector<128x1xf32>
      %196 = arith.divf %194, %195 : vector<128x1xf32>
      %197 = vector.broadcast %196 : vector<128x1xf32> to vector<128x128xf32>
      %198 = arith.subf %186, %197 : vector<128x128xf32>
      %199 = arith.mulf %198, %198 : vector<128x128xf32>
      %cst_81 = arith.constant dense<0.000000e+00> : vector<128xf32>
      %200 = vector.multi_reduction <add>, %199, %cst_81 [1] : vector<128x128xf32> to vector<128xf32>
      %201 = vector.shape_cast %200 : vector<128xf32> to vector<128x1xf32>
      %cst_82 = arith.constant 1.280000e+02 : f32
      %202 = vector.broadcast %cst_82 : f32 to vector<128x1xf32>
      %203 = arith.divf %201, %202 : vector<128x1xf32>
      %204 = vector.broadcast %196 : vector<128x1xf32> to vector<128x128xf32>
      %205 = arith.subf %186, %204 : vector<128x128xf32>
      %cst_83 = arith.constant 9.99999974E-6 : f32
      %206 = vector.broadcast %cst_83 : f32 to vector<128x1xf32>
      %207 = arith.addf %203, %206 : vector<128x1xf32>
      %208 = math.rsqrt %207 : vector<128x1xf32>
      %209 = vector.broadcast %208 : vector<128x1xf32> to vector<128x128xf32>
      %210 = arith.mulf %205, %209 : vector<128x128xf32>
      %211 = vector.broadcast %191 : vector<1x128xf32> to vector<128x128xf32>
      %212 = arith.mulf %210, %211 : vector<128x128xf32>
      %213 = vector.broadcast %192 : vector<1x128xf32> to vector<128x128xf32>
      %214 = arith.addf %212, %213 : vector<128x128xf32>
      %cst_84 = arith.constant dense<0.000000e+00> : vector<128xf32>
      %215 = vector.multi_reduction <add>, %214, %cst_84 [0] : vector<128x128xf32> to vector<128xf32>
      %216 = vector.shape_cast %215 : vector<128xf32> to vector<1x128xf32>
      %cst_85 = arith.constant 1.280000e+02 : f32
      %217 = vector.broadcast %cst_85 : f32 to vector<1x128xf32>
      %218 = arith.divf %216, %217 : vector<1x128xf32>
      %c0_86 = arith.constant 0 : index
      %c0_87 = arith.constant 0 : index
      %c0_88 = arith.constant 0 : index
      %219 = vector.load %arg17[%c0_86, %c0_87, %c0_88] : memref<1x1x128xf32, #tpu.memory_space<vmem>>, vector<1x1x128xf32>
      %220 = vector.shape_cast %219 : vector<1x1x128xf32> to vector<1x128xf32>
      %221 = vector.shape_cast %218 : vector<1x128xf32> to vector<1x1x128xf32>
      tpu.vector_store %arg17[%c0_86, %c0_87, %c0_88], %221 {strides = array<i32>} : memref<1x1x128xf32, #tpu.memory_space<vmem>>, vector<1x1x128xf32>,
    } else {
    }
    return
  }
  func.func @transform_0(%arg0: i32, %arg1: i32) -> (i32, i32, i32) {
    %c0_i32 = arith.constant 0 : i32
    %c0_i32_0 = arith.constant 0 : i32
    %c0_i32_1 = arith.constant 0 : i32
    return %arg0, %c0_i32, %c0_i32_0 : i32, i32, i32
  }
  func.func @transform_1(%arg0: i32, %arg1: i32) -> (i32, i32, i32) {
    %c0_i32 = arith.constant 0 : i32
    %c0_i32_0 = arith.constant 0 : i32
    %c0_i32_1 = arith.constant 0 : i32
    return %arg1, %c0_i32, %c0_i32_0 : i32, i32, i32
  }
  func.func @transform_2(%arg0: i32, %arg1: i32) -> (i32, i32, i32) {
    %c0_i32 = arith.constant 0 : i32
    %c0_i32_0 = arith.constant 0 : i32
    %c0_i32_1 = arith.constant 0 : i32
    return %arg1, %c0_i32, %c0_i32_0 : i32, i32, i32
  }
  func.func @transform_3(%arg0: i32, %arg1: i32) -> (i32, i32, i32) {
    %c0_i32 = arith.constant 0 : i32
    %c0_i32_0 = arith.constant 0 : i32
    %c0_i32_1 = arith.constant 0 : i32
    return %arg1, %c0_i32, %c0_i32_0 : i32, i32, i32
  }
  func.func @transform_4(%arg0: i32, %arg1: i32) -> (i32, i32, i32) {
    %c0_i32 = arith.constant 0 : i32
    %c0_i32_0 = arith.constant 0 : i32
    %c0_i32_1 = arith.constant 0 : i32
    return %arg1, %c0_i32, %c0_i32_0 : i32, i32, i32
  }
  func.func @transform_5(%arg0: i32, %arg1: i32) -> (i32, i32, i32) {
    %c0_i32 = arith.constant 0 : i32
    %c0_i32_0 = arith.constant 0 : i32
    %c0_i32_1 = arith.constant 0 : i32
    return %arg1, %c0_i32, %c0_i32_0 : i32, i32, i32
  }
  func.func @transform_6(%arg0: i32, %arg1: i32) -> (i32, i32, i32) {
    %c0_i32 = arith.constant 0 : i32
    %c0_i32_0 = arith.constant 0 : i32
    %c0_i32_1 = arith.constant 0 : i32
    return %arg1, %c0_i32, %c0_i32_0 : i32, i32, i32
  }
  func.func @transform_7(%arg0: i32, %arg1: i32) -> (i32, i32, i32) {
    %c0_i32 = arith.constant 0 : i32
    %c0_i32_0 = arith.constant 0 : i32
    %c0_i32_1 = arith.constant 0 : i32
    return %arg1, %c0_i32, %c0_i32_0 : i32, i32, i32
  }
  func.func @transform_8(%arg0: i32, %arg1: i32) -> (i32, i32, i32) {
    %c0_i32 = arith.constant 0 : i32
    %c0_i32_0 = arith.constant 0 : i32
    %c0_i32_1 = arith.constant 0 : i32
    return %arg1, %c0_i32, %c0_i32_0 : i32, i32, i32
  }
  func.func @transform_9(%arg0: i32, %arg1: i32) -> (i32, i32, i32) {
    %c0_i32 = arith.constant 0 : i32
    %c0_i32_0 = arith.constant 0 : i32
    %c0_i32_1 = arith.constant 0 : i32
    return %arg1, %c0_i32, %c0_i32_0 : i32, i32, i32
  }
  func.func @transform_10(%arg0: i32, %arg1: i32) -> (i32, i32, i32) {
    %c0_i32 = arith.constant 0 : i32
    %c0_i32_0 = arith.constant 0 : i32
    %c0_i32_1 = arith.constant 0 : i32
    return %arg1, %c0_i32, %c0_i32_0 : i32, i32, i32
  }
  func.func @transform_11(%arg0: i32, %arg1: i32) -> (i32, i32, i32) {
    %c0_i32 = arith.constant 0 : i32
    %c0_i32_0 = arith.constant 0 : i32
    %c0_i32_1 = arith.constant 0 : i32
    return %arg1, %c0_i32, %c0_i32_0 : i32, i32, i32
  }
  func.func @transform_12(%arg0: i32, %arg1: i32) -> (i32, i32, i32) {
    %c0_i32 = arith.constant 0 : i32
    %c0_i32_0 = arith.constant 0 : i32
    %c0_i32_1 = arith.constant 0 : i32
    return %arg1, %c0_i32, %c0_i32_0 : i32, i32, i32
  }
  func.func @transform_13(%arg0: i32, %arg1: i32) -> (i32, i32) {
    %c0_i32 = arith.constant 0 : i32
    %c0_i32_0 = arith.constant 0 : i32
    %c0_i32_1 = arith.constant 0 : i32
    return %c0_i32, %c0_i32_0 : i32, i32
  }
  func.func @transform_14(%arg0: i32, %arg1: i32) -> (i32, i32) {
    %c0_i32 = arith.constant 0 : i32
    %c0_i32_0 = arith.constant 0 : i32
    %c0_i32_1 = arith.constant 0 : i32
    return %c0_i32, %c0_i32_0 : i32, i32
  }
  func.func @transform_15(%arg0: i32, %arg1: i32) -> (i32, i32, i32) {
    %c0_i32 = arith.constant 0 : i32
    %c0_i32_0 = arith.constant 0 : i32
    %c0_i32_1 = arith.constant 0 : i32
    return %arg0, %c0_i32, %c0_i32_0 : i32, i32, i32
  }
}

</mosaic_0001>

<llo_original>
// kernel: wav2vec2bert_hybrid_forward.2
$region0: #{wav2vec2bert_hybrid_forward.2}
  #allocation0 [shape = 'u32[]', space=smem, size = 0x4, offset = 0x4, fixed_abs, tag = 'smem constant byte address 0x4 - core index']
  #allocation1 [shape = 'u32[144,128]{1,0:T(1,128)}', space=vmem, size = 0x12000, scoped, tag = 'internal scratch']
  %s0 = inlined_call_operand.vmem [shape: f32[256,128], index: 0, kind: input, shape index: {}]
  %s1 = inlined_call_operand.hbm [shape: bf16[128,128], index: 1, kind: input, shape index: {}]
  %s2 = inlined_call_operand.hbm [shape: f32[1,128], index: 2, kind: input, shape index: {}]
  %s3 = inlined_call_operand.hbm [shape: f32[1,128], index: 3, kind: input, shape index: {}]
  %s4 = inlined_call_operand.hbm [shape: bf16[128,128], index: 4, kind: input, shape index: {}]
  %s5 = inlined_call_operand.hbm [shape: f32[1,128], index: 5, kind: input, shape index: {}]
  %s6 = inlined_call_operand.vmem [shape: bf16[256,128], index: 6, kind: output, shape index: {}]
  %s7 = sld [smem:[#allocation0]]
  $region77: #{wav2vec2bert_hybrid_forward.2} parent=0
    _
  %s9 = ssub.s32 1, %s7
  %s10 = scalar_select 0, %s9, %s7
  $region1: #{wav2vec2bert_hybrid_forward.2} parent=0
    #allocation2 [shape = 'u8[32768]{0}', space=vmem, size = 0x8000, scoped, tag = 'input window, operand 1, single buffered']
    #allocation3 [shape = 's32[2]{0}', space=sflag, size = 0x8, scoped, tag = 'scoped memory for wav2vec2bert_hybrid_forward.2']
    #allocation4 [shape = 'u8[512]{0}', space=vmem, size = 0x400, scoped, tag = 'input window, operand 2, single buffered']
    #allocation5 [shape = 's32[1]{0}', space=sflag, size = 0x4, scoped, tag = 'scoped memory for wav2vec2bert_hybrid_forward.2']
    #allocation6 [shape = 'u8[512]{0}', space=vmem, size = 0x400, scoped, tag = 'input window, operand 3, single buffered']
    #allocation7 [shape = 'u8[32768]{0}', space=vmem, size = 0x8000, scoped, tag = 'input window, operand 4, single buffered']
    #allocation8 [shape = 's32[1]{0}', space=sflag, size = 0x4, scoped, tag = 'scoped memory for wav2vec2bert_hybrid_forward.2']
    #allocation9 [shape = 'u8[512]{0}', space=vmem, size = 0x400, scoped, tag = 'input window, operand 5, single buffered']
    %11 = vsyncpa [#allocation3], 0
    %12 = vsyncpa [#allocation5], 0
    %13 = vsyncpa [#allocation8], 0
    loop: start=0, step=1, limit=4
    $region2: #{wav2vec2bert_hybrid_forward.2} parent=1 // loop_pre_header
      _
    $region3: #{wav2vec2bert_hybrid_forward.2} parent=1 // loop_header
      %s15 = sphi 0, %s19
      %p16 = scmp.ge.s32.totalorder %s15, 4
      %s25 = sphi 0, %s27
      %s28 = sphi 0, %s25
      %s29 = sphi 0, %s28
      %s45 = sphi 0, %s29
      %s49 = sphi 0, %s49
      %s51 = sphi 0, %s49
      %s52 = sphi 0, %s51
      %s66 = sphi 0, %s52
      %s70 = sphi 0, %s70
      %s72 = sphi 0, %s70
      %s73 = sphi 0, %s72
      %s87 = sphi 0, %s73
      %s91 = sphi 0, %s91
      %s93 = sphi 0, %s91
      %s94 = sphi 0, %s93
      %s108 = sphi 0, %s94
      %s112 = sphi 0, %s112
      %s114 = sphi 0, %s112
      %s115 = sphi 0, %s114
      %s129 = sphi 0, %s115
      %s133 = sphi 0, %s133
      %s135 = sphi 0, %s133
      %s136 = sphi 0, %s135
      %s150 = sphi 0, %s136
      %s156 = sphi 0, %s158
      %s159 = sphi 0, %s156
      %s160 = sphi 0, %s159
      %s176 = sphi 0, %s160
    $region4: #{wav2vec2bert_hybrid_forward.2} parent=1 // loop_header_branch
      %18 = sbr.rel (%p16) target = $region8
    $region5: #{wav2vec2bert_hybrid_forward.2} parent=1 // loop_body
      %s20 = ssub.s32 %s15, 1
      %s21 = ssub.s32 %s15, 2
      %s22 = sadd.s32 %s15, 1
      %s23 = ssub.s32 %s15, %s22
      %p24 = scmp.eq.s32.totalorder %s23, 0
      %s26 = sadd.s32 %s25, 1
      %s27 = scalar_select %p24, %s25, %s26
      %p30 = pneg %p24
      %p31 = scmp.eq.s32.totalorder %s15, 1
      %p32 = por %p30, %p31
      %p33 = scmp.ne.s32.totalorder %s25, %s28
      %p34 = scmp.eq.s32.totalorder %s15, 0
      %p35 = por %p33, %p34
      %p36 = scmp.ne.s32.totalorder %s25, %s28
      %p37 = scmp.eq.s32.totalorder %s20, 1
      %p38 = por %p36, %p37
      %p39 = scmp.ne.s32.totalorder %s28, %s29
      %p40 = scmp.eq.s32.totalorder %s20, 0
      %p41 = por %p39, %p40
      %p42 = scmp.ne.s32.totalorder %s28, %s29
      %p43 = scmp.eq.s32.totalorder %s21, 1
      %p44 = por %p42, %p43
      %p46 = scmp.ne.s32.totalorder %s29, %s45
      %p47 = scmp.eq.s32.totalorder %s21, 0
      %p48 = por %p46, %p47
      %s50 = sadd.s32 %s49, 1
      %p53 = scmp.eq.s32.totalorder %s15, 1
      %p54 = scmp.ne.s32.totalorder %s49, %s51
      %p55 = scmp.eq.s32.totalorder %s15, 0
      %p56 = por %p54, %p55
      %p57 = scmp.ne.s32.totalorder %s49, %s51
      %p58 = scmp.eq.s32.totalorder %s20, 1
      %p59 = por %p57, %p58
      %p60 = scmp.ne.s32.totalorder %s51, %s52
      %p61 = scmp.eq.s32.totalorder %s20, 0
      %p62 = por %p60, %p61
      %p63 = scmp.ne.s32.totalorder %s51, %s52
      %p64 = scmp.eq.s32.totalorder %s21, 1
      %p65 = por %p63, %p64
      %p67 = scmp.ne.s32.totalorder %s52, %s66
      %p68 = scmp.eq.s32.totalorder %s21, 0
      %p69 = por %p67, %p68
      %s71 = sadd.s32 %s70, 1
      %p74 = scmp.eq.s32.totalorder %s15, 1
      %p75 = scmp.ne.s32.totalorder %s70, %s72
      %p76 = scmp.eq.s32.totalorder %s15, 0
      %p77 = por %p75, %p76
      %p78 = scmp.ne.s32.totalorder %s70, %s72
      %p79 = scmp.eq.s32.totalorder %s20, 1
      %p80 = por %p78, %p79
      %p81 = scmp.ne.s32.totalorder %s72, %s73
      %p82 = scmp.eq.s32.totalorder %s20, 0
      %p83 = por %p81, %p82
      %p84 = scmp.ne.s32.totalorder %s72, %s73
      %p85 = scmp.eq.s32.totalorder %s21, 1
      %p86 = por %p84, %p85
      %p88 = scmp.ne.s32.totalorder %s73, %s87
      %p89 = scmp.eq.s32.totalorder %s21, 0
      %p90 = por %p88, %p89
      %s92 = sadd.s32 %s91, 1
      %p95 = scmp.eq.s32.totalorder %s15, 1
      %p96 = scmp.ne.s32.totalorder %s91, %s93
      %p97 = scmp.eq.s32.totalorder %s15, 0
      %p98 = por %p96, %p97
      %p99 = scmp.ne.s32.totalorder %s91, %s93
      %p100 = scmp.eq.s32.totalorder %s20, 1
      %p101 = por %p99, %p100
      %p102 = scmp.ne.s32.totalorder %s93, %s94
      %p103 = scmp.eq.s32.totalorder %s20, 0
      %p104 = por %p102, %p103
      %p105 = scmp.ne.s32.totalorder %s93, %s94
      %p106 = scmp.eq.s32.totalorder %s21, 1
      %p107 = por %p105, %p106
      %p109 = scmp.ne.s32.totalorder %s94, %s108
      %p110 = scmp.eq.s32.totalorder %s21, 0
      %p111 = por %p109, %p110
      %s113 = sadd.s32 %s112, 1
      %p116 = scmp.eq.s32.totalorder %s15, 1
      %p117 = scmp.ne.s32.totalorder %s112, %s114
      %p118 = scmp.eq.s32.totalorder %s15, 0
      %p119 = por %p117, %p118
      %p120 = scmp.ne.s32.totalorder %s112, %s114
      %p121 = scmp.eq.s32.totalorder %s20, 1
      %p122 = por %p120, %p121
      %p123 = scmp.ne.s32.totalorder %s114, %s115
      %p124 = scmp.eq.s32.totalorder %s20, 0
      %p125 = por %p123, %p124
      %p126 = scmp.ne.s32.totalorder %s114, %s115
      %p127 = scmp.eq.s32.totalorder %s21, 1
      %p128 = por %p126, %p127
      %p130 = scmp.ne.s32.totalorder %s115, %s129
      %p131 = scmp.eq.s32.totalorder %s21, 0
      %p132 = por %p130, %p131
      %s134 = sadd.s32 %s133, 1
      %p137 = scmp.eq.s32.totalorder %s15, 1
      %p138 = scmp.ne.s32.totalorder %s133, %s135
      %p139 = scmp.eq.s32.totalorder %s15, 0
      %p140 = por %p138, %p139
      %p141 = scmp.ne.s32.totalorder %s133, %s135
      %p142 = scmp.eq.s32.totalorder %s20, 1
      %p143 = por %p141, %p142
      %p144 = scmp.ne.s32.totalorder %s135, %s136
      %p145 = scmp.eq.s32.totalorder %s20, 0
      %p146 = por %p144, %p145
      %p147 = scmp.ne.s32.totalorder %s135, %s136
      %p148 = scmp.eq.s32.totalorder %s21, 1
      %p149 = por %p147, %p148
      %p151 = scmp.ne.s32.totalorder %s136, %s150
      %p152 = scmp.eq.s32.totalorder %s21, 0
      %p153 = por %p151, %p152
      %s154 = ssub.s32 %s15, %s22
      %p155 = scmp.eq.s32.totalorder %s154, 0
      %s157 = sadd.s32 %s156, 1
      %s158 = scalar_select %p155, %s156, %s157
      %p161 = pneg %p155
      %p162 = scmp.eq.s32.totalorder %s15, 1
      %p163 = por %p161, %p162
      %p164 = scmp.ne.s32.totalorder %s156, %s159
      %p165 = scmp.eq.s32.totalorder %s15, 0
      %p166 = por %p164, %p165
      %p167 = scmp.ne.s32.totalorder %s156, %s159
      %p168 = scmp.eq.s32.totalorder %s20, 1
      %p169 = por %p167, %p168
      %p170 = scmp.ne.s32.totalorder %s159, %s160
      %p171 = scmp.eq.s32.totalorder %s20, 0
      %p172 = por %p170, %p171
      %p173 = scmp.ne.s32.totalorder %s159, %s160
      %p174 = scmp.eq.s32.totalorder %s21, 1
      %p175 = por %p173, %p174
      %p177 = scmp.ne.s32.totalorder %s160, %s176
      %p178 = scmp.eq.s32.totalorder %s21, 0
      %p179 = por %p177, %p178
      %p180 = scmp.le.s32.totalorder 1, %s15
      %p181 = scmp.lt.s32.totalorder %s15, 3
      %p182 = pnand %p180, %p181
      %p183 = pneg %p182
      // Predicated region
      $region9: #{wav2vec2bert_hybrid_forward.2} parent=5 // pred_check
        _
      $region10: #{wav2vec2bert_hybrid_forward.2} parent=5 // pred_check_branch
        %185 = sbr.rel (%p182) target = $region12
      $region11: #{wav2vec2bert_hybrid_forward.2} parent=5 // pred_region
        %s186 = ssub.s32 %s15, 1
        // Predicated region
        $region13: #{wav2vec2bert_hybrid_forward.2} parent=11 // pred_check
          %p187 = pneg %p62
        $region14: #{wav2vec2bert_hybrid_forward.2} parent=11 // pred_check_branch
          %189 = sbr.rel (%p187) target = $region16
        $region15: #{wav2vec2bert_hybrid_forward.2} parent=11 // pred_region
          %s191 = ssub.s32 1024, 1024
          %192 = vsyncadd [#allocation3], %s191
          %s193 = sshll.u32 [#allocation2], 4
          %s194 = int_to_ptr.vmem [resolvable:$true] %s193
          %199 = dma.hbm_to_vmem [thread:$0]  %s1, 1024, %s194, [#allocation3], 64, 64, 4
        $region16: #{wav2vec2bert_hybrid_forward.2} parent=11 // pred_fallthru
          _
        // Predicated region
        $region17: #{wav2vec2bert_hybrid_forward.2} parent=11 // pred_check
          %p200 = pneg %p83
        $region18: #{wav2vec2bert_hybrid_forward.2} parent=11 // pred_check_branch
          %202 = sbr.rel (%p200) target = $region20
        $region19: #{wav2vec2bert_hybrid_forward.2} parent=11 // pred_region
          %s204 = ssub.s32 16, 16
          %205 = vsyncadd [#allocation5], %s204
          %s207 = sshll.u32 [#allocation4], 4
          %s208 = int_to_ptr.vmem [resolvable:$true] %s207
          %210 = dma.hbm_to_vmem [thread:$0]  %s2, 16, %s208, [#allocation5]
        $region20: #{wav2vec2bert_hybrid_forward.2} parent=11 // pred_fallthru
          _
        // Predicated region
        $region21: #{wav2vec2bert_hybrid_forward.2} parent=11 // pred_check
          %p211 = pneg %p104
        $region22: #{wav2vec2bert_hybrid_forward.2} parent=11 // pred_check_branch
          %213 = sbr.rel (%p211) target = $region24
        $region23: #{wav2vec2bert_hybrid_forward.2} parent=11 // pred_region
          %s215 = ssub.s32 16, 16
          %216 = vsyncadd [#allocation5], %s215
          %s218 = sshll.u32 [#allocation6], 4
          %s219 = int_to_ptr.vmem [resolvable:$true] %s218
          %221 = dma.hbm_to_vmem [thread:$0]  %s3, 16, %s219, [#allocation5]
        $region24: #{wav2vec2bert_hybrid_forward.2} parent=11 // pred_fallthru
          _
        // Predicated region
        $region25: #{wav2vec2bert_hybrid_forward.2} parent=11 // pred_check
          %p222 = pneg %p125
        $region26: #{wav2vec2bert_hybrid_forward.2} parent=11 // pred_check_branch
          %224 = sbr.rel (%p222) target = $region28
        $region27: #{wav2vec2bert_hybrid_forward.2} parent=11 // pred_region
          %s226 = ssub.s32 1024, 1024
          %227 = vsyncadd [#allocation8], %s226
          %s228 = sshll.u32 [#allocation7], 4
          %s229 = int_to_ptr.vmem [resolvable:$true] %s228
          %234 = dma.hbm_to_vmem [thread:$0]  %s4, 1024, %s229, [#allocation8], 64, 64, 4
        $region28: #{wav2vec2bert_hybrid_forward.2} parent=11 // pred_fallthru
          _
        // Predicated region
        $region29: #{wav2vec2bert_hybrid_forward.2} parent=11 // pred_check
          %p235 = pneg %p146
        $region30: #{wav2vec2bert_hybrid_forward.2} parent=11 // pred_check_branch
          %237 = sbr.rel (%p235) target = $region32
        $region31: #{wav2vec2bert_hybrid_forward.2} parent=11 // pred_region
          %s239 = ssub.s32 16, 16
          %240 = vsyncadd [#allocation8], %s239
          %s242 = sshll.u32 [#allocation9], 4
          %s243 = int_to_ptr.vmem [resolvable:$true] %s242
          %245 = dma.hbm_to_vmem [thread:$0]  %s5, 16, %s243, [#allocation8]
        $region32: #{wav2vec2bert_hybrid_forward.2} parent=11 // pred_fallthru
          _
      $region12: #{wav2vec2bert_hybrid_forward.2} parent=5 // pred_fallthru
        _
      %p246 = scmp.lt.s32.totalorder %s15, 2
      // Predicated region
      $region33: #{wav2vec2bert_hybrid_forward.2} parent=5 // pred_check
        %p247 = pneg %p246
      $region34: #{wav2vec2bert_hybrid_forward.2} parent=5 // pred_check_branch
        %249 = sbr.rel (%p247) target = $region36
      $region35: #{wav2vec2bert_hybrid_forward.2} parent=5 // pred_region
        // Predicated region
        $region37: #{wav2vec2bert_hybrid_forward.2} parent=35 // pred_check
          %p250 = pneg %p35
        $region38: #{wav2vec2bert_hybrid_forward.2} parent=35 // pred_check_branch
          %252 = sbr.rel (%p250) target = $region40
        $region39: #{wav2vec2bert_hybrid_forward.2} parent=35 // pred_region
          %s253 = smul.u32 16, %s15
          %p254 = scmp.lt.s32.totalorder %s253, 31
          %s255 = scalar_select %p254, %s253, 31
          %s256 = smul.addr %s255, 8
          %s257 = scalar_lea.vmem %s0, %s256
          %s258 = smul.u32 16, %s15
        $region40: #{wav2vec2bert_hybrid_forward.2} parent=35 // pred_fallthru
          _
      $region36: #{wav2vec2bert_hybrid_forward.2} parent=5 // pred_fallthru
        _
      %p259 = scmp.le.s32.totalorder 1, %s15
      %p260 = scmp.lt.s32.totalorder %s15, 3
      %p261 = pnand %p259, %p260
      %p262 = pneg %p261
      // Predicated region
      $region41: #{wav2vec2bert_hybrid_forward.2} parent=5 // pred_check
        _
      $region42: #{wav2vec2bert_hybrid_forward.2} parent=5 // pred_check_branch
        %264 = sbr.rel (%p261) target = $region44
      $region43: #{wav2vec2bert_hybrid_forward.2} parent=5 // pred_region
        %s265 = ssub.s32 %s15, 1
        // Predicated region
        $region45: #{wav2vec2bert_hybrid_forward.2} parent=43 // pred_check
          %p266 = pneg %p62
        $region46: #{wav2vec2bert_hybrid_forward.2} parent=43 // pred_check_branch
          %268 = sbr.rel (%p266) target = $region48
        $region47: #{wav2vec2bert_hybrid_forward.2} parent=43 // pred_region
          %269 = dma.done [#allocation3], 1024
        $region48: #{wav2vec2bert_hybrid_forward.2} parent=43 // pred_fallthru
          _
        // Predicated region
        $region49: #{wav2vec2bert_hybrid_forward.2} parent=43 // pred_check
          %p270 = pneg %p83
        $region50: #{wav2vec2bert_hybrid_forward.2} parent=43 // pred_check_branch
          %272 = sbr.rel (%p270) target = $region52
        $region51: #{wav2vec2bert_hybrid_forward.2} parent=43 // pred_region
          %273 = dma.done [#allocation5], 16
        $region52: #{wav2vec2bert_hybrid_forward.2} parent=43 // pred_fallthru
          _
        // Predicated region
        $region53: #{wav2vec2bert_hybrid_forward.2} parent=43 // pred_check
          %p274 = pneg %p104
        $region54: #{wav2vec2bert_hybrid_forward.2} parent=43 // pred_check_branch
          %276 = sbr.rel (%p274) target = $region56
        $region55: #{wav2vec2bert_hybrid_forward.2} parent=43 // pred_region
          %277 = dma.done [#allocation5], 16
        $region56: #{wav2vec2bert_hybrid_forward.2} parent=43 // pred_fallthru
          _
        // Predicated region
        $region57: #{wav2vec2bert_hybrid_forward.2} parent=43 // pred_check
          %p278 = pneg %p125
        $region58: #{wav2vec2bert_hybrid_forward.2} parent=43 // pred_check_branch
          %280 = sbr.rel (%p278) target = $region60
        $region59: #{wav2vec2bert_hybrid_forward.2} parent=43 // pred_region
          %281 = dma.done [#allocation8], 1024
        $region60: #{wav2vec2bert_hybrid_forward.2} parent=43 // pred_fallthru
          _
        // Predicated region
        $region61: #{wav2vec2bert_hybrid_forward.2} parent=43 // pred_check
          %p282 = pneg %p146
        $region62: #{wav2vec2bert_hybrid_forward.2} parent=43 // pred_check_branch
          %284 = sbr.rel (%p282) target = $region64
        $region63: #{wav2vec2bert_hybrid_forward.2} parent=43 // pred_region
          %285 = dma.done [#allocation8], 16
        $region64: #{wav2vec2bert_hybrid_forward.2} parent=43 // pred_fallthru
          _
        %s286 = smul.u32 16, %s20
        %p287 = scmp.lt.s32.totalorder %s286, 31
        %s288 = scalar_select %p287, %s286, 31
        %s289 = smul.addr %s288, 8
        %s290 = scalar_lea.vmem %s0, %s289
        %p291 = pneg %p41
        %p292 = pneg %p38
        %p293 = pneg %p62
        %p294 = pneg %p59
        %p295 = pneg %p83
        %p296 = pneg %p80
        %p297 = pneg %p104
        %p298 = pneg %p101
        %p299 = pneg %p125
        %p300 = pneg %p122
        %p301 = pneg %p146
        %p302 = pneg %p143
        %p303 = pneg %p172
        %p304 = pneg %p169
        %s305 = smul.u32 16, %s20
        %p306 = scmp.lt.s32.totalorder %s305, 31
        %s307 = scalar_select %p306, %s305, 31
        %s308 = smul.addr %s307, 4
        %s309 = scalar_lea.vmem %s6, %s308
        %s310 = smul.u32 16, %s20
        %p311 = scmp.lt.s32.totalorder %s310, 31
        %s312 = scalar_select %p311, %s310, 31
        %s313 = smul.addr %s312, 8
        %s314 = scalar_lea.vmem %s0, %s313
        %s315 = smul.u32 16, %s20
        %s316 = smul.u32 16, %s20
        %p317 = scmp.lt.s32.totalorder %s316, 31
        %s318 = scalar_select %p317, %s316, 31
        %s319 = smul.addr %s318, 4
        %s320 = scalar_lea.vmem %s6, %s319
        %s321 = smul.u32 16, %s20
        %v323 = vld [vmem:[%s314] sm:$0xff]
        %v324 = vld [vmem:[%s314 + $0x8] sm:$0xff]
        %v325 = vld [vmem:[%s314 + $0x10] sm:$0xff]
        %v326 = vld [vmem:[%s314 + $0x18] sm:$0xff]
        %v327 = vld [vmem:[%s314 + $0x20] sm:$0xff]
        %v328 = vld [vmem:[%s314 + $0x28] sm:$0xff]
        %v329 = vld [vmem:[%s314 + $0x30] sm:$0xff]
        %v330 = vld [vmem:[%s314 + $0x38] sm:$0xff]
        %v331 = vld [vmem:[%s314 + $0x40] sm:$0xff]
        %v332 = vld [vmem:[%s314 + $0x48] sm:$0xff]
        %v333 = vld [vmem:[%s314 + $0x50] sm:$0xff]
        %v334 = vld [vmem:[%s314 + $0x58] sm:$0xff]
        %v335 = vld [vmem:[%s314 + $0x60] sm:$0xff]
        %v336 = vld [vmem:[%s314 + $0x68] sm:$0xff]
        %v337 = vld [vmem:[%s314 + $0x70] sm:$0xff]
        %v338 = vld [vmem:[%s314 + $0x78] sm:$0xff]
        %v339 = vpack.c.bf16 %v324, %v323
        %v340 = vpack.c.bf16 %v326, %v325
        %v341 = vpack.c.bf16 %v328, %v327
        %v342 = vpack.c.bf16 %v330, %v329
        %v343 = vpack.c.bf16 %v332, %v331
        %v344 = vpack.c.bf16 %v334, %v333
        %v345 = vpack.c.bf16 %v336, %v335
        %v346 = vpack.c.bf16 %v338, %v337
        %v347 = vld [vmem:[#allocation2] sm:$0xf]
        %v348 = vld [vmem:[#allocation2 + $0x4] sm:$0xf]
        %v349 = vld [vmem:[#allocation2 + $0x8] sm:$0xf]
        %v350 = vld [vmem:[#allocation2 + $0xc] sm:$0xf]
        %v351 = vld [vmem:[#allocation2 + $0x10] sm:$0xf]
        %v352 = vld [vmem:[#allocation2 + $0x14] sm:$0xf]
        %v353 = vld [vmem:[#allocation2 + $0x18] sm:$0xf]
        %v354 = vld [vmem:[#allocation2 + $0x1c] sm:$0xf]
        %v355 = vld [vmem:[#allocation2 + $0x20] sm:$0xf]
        %v356 = vld [vmem:[#allocation2 + $0x24] sm:$0xf]
        %v357 = vld [vmem:[#allocation2 + $0x28] sm:$0xf]
        %v358 = vld [vmem:[#allocation2 + $0x2c] sm:$0xf]
        %v359 = vld [vmem:[#allocation2 + $0x30] sm:$0xf]
        %v360 = vld [vmem:[#allocation2 + $0x34] sm:$0xf]
        %v361 = vld [vmem:[#allocation2 + $0x38] sm:$0xf]
        %v362 = vld [vmem:[#allocation2 + $0x3c] sm:$0xf]
        %v379 = vunpack.c.l.b16 %v347
        %v380 = vunpack.c.l.b16 %v348
        %v381 = vunpack.c.l.b16 %v349
        %v382 = vunpack.c.l.b16 %v350
        %v383 = vunpack.c.l.b16 %v351
        %v384 = vunpack.c.l.b16 %v352
        %v385 = vunpack.c.l.b16 %v353
        %v386 = vunpack.c.l.b16 %v354
        %v387 = vunpack.c.l.b16 %v355
        %v388 = vunpack.c.l.b16 %v356
        %v389 = vunpack.c.l.b16 %v357
        %v390 = vunpack.c.l.b16 %v358
        %v391 = vunpack.c.l.b16 %v359
        %v392 = vunpack.c.l.b16 %v360
        %v393 = vunpack.c.l.b16 %v361
        %v394 = vunpack.c.l.b16 %v362
        %v395 = vpack.c.b16 %v380, %v379
        %v396 = vpack.c.b16 %v382, %v381
        %v397 = vpack.c.b16 %v384, %v383
        %v398 = vpack.c.b16 %v386, %v385
        %v399 = vpack.c.b16 %v388, %v387
        %v400 = vpack.c.b16 %v390, %v389
        %v401 = vpack.c.b16 %v392, %v391
        %v402 = vpack.c.b16 %v394, %v393
        %411 = vmatprep.subr.bf16.mxu0 0
        %412 = vmatpush1.bf16.msra.mxu0 %v395
        %413 = vmatprep.subr.bf16.mxu0 0
        %414 = vmatpush1.bf16.msra.mxu0 %v396
        %415 = vmatprep.subr.bf16.mxu0 0
        %416 = vmatpush1.bf16.msra.mxu0 %v397
        %417 = vmatprep.subr.bf16.mxu0 0
        %418 = vmatpush1.bf16.msra.mxu0 %v398
        %419 = vmatprep.subr.bf16.mxu0 0
        %420 = vmatpush1.bf16.msra.mxu0 %v399
        %421 = vmatprep.subr.bf16.mxu0 0
        %422 = vmatpush1.bf16.msra.mxu0 %v400
        %423 = vmatprep.subr.bf16.mxu0 0
        %424 = vmatpush1.bf16.msra.mxu0 %v401
        %425 = vmatprep.subr.bf16.mxu0 0
        %426 = vmatpush1.bf16.msra.mxu0 %v402
        %427 = vmatprep.subr.bf16.mxu0 0
        %428 = vmatpush1.bf16.msra.mxu0 0
        %429 = vmatprep.subr.bf16.mxu0 0
        %430 = vmatpush1.bf16.msra.mxu0 0
        %431 = vmatprep.subr.bf16.mxu0 0
        %432 = vmatpush1.bf16.msra.mxu0 0
        %433 = vmatprep.subr.bf16.mxu0 0
        %434 = vmatpush1.bf16.msra.mxu0 0
        %435 = vmatprep.subr.bf16.mxu0 0
        %436 = vmatpush1.bf16.msra.mxu0 0
        %437 = vmatprep.subr.bf16.mxu0 0
        %438 = vmatpush1.bf16.msra.mxu0 0
        %439 = vmatprep.subr.bf16.mxu0 0
        %440 = vmatpush1.bf16.msra.mxu0 0
        %441 = vmatprep.subr.bf16.mxu0 0
        %442 = vmatpush1.bf16.msra.mxu0 0
        %443 = vmatprep.mubr.bf16.mxu0 0
        %444 = vmatmul.mubr.bf16.gmra.mrb[0].mxu0 %v339
        %v445 = vpop.f32.mrb[0].mxu0
        %v446 = vadd.f32 0.0, %v445
        %v447 = vpop.f32.mrb[0].mxu0
        %v448 = vpop.f32.mrb[0].mxu0
        %v449 = vadd.f32 0.0, %v448
        %v450 = vpop.f32.mrb[0].mxu0
        %451 = vmatprep.mubr.bf16.mxu0 0
        %452 = vmatmul.mubr.bf16.gmra.mrb[0].mxu0 %v340
        %v453 = vpop.f32.mrb[0].mxu0
        %v454 = vadd.f32 0.0, %v453
        %v455 = vpop.f32.mrb[0].mxu0
        %v456 = vpop.f32.mrb[0].mxu0
        %v457 = vadd.f32 0.0, %v456
        %v458 = vpop.f32.mrb[0].mxu0
        %459 = vmatprep.mubr.bf16.mxu0 0
        %460 = vmatmul.mubr.bf16.gmra.mrb[0].mxu0 %v341
        %v461 = vpop.f32.mrb[0].mxu0
        %v462 = vadd.f32 0.0, %v461
        %v463 = vpop.f32.mrb[0].mxu0
        %v464 = vpop.f32.mrb[0].mxu0
        %v465 = vadd.f32 0.0, %v464
        %v466 = vpop.f32.mrb[0].mxu0
        %467 = vmatprep.mubr.bf16.mxu0 0
        %468 = vmatmul.mubr.bf16.gmra.mrb[0].mxu0 %v342
        %v469 = vpop.f32.mrb[0].mxu0
        %v470 = vadd.f32 0.0, %v469
        %v471 = vpop.f32.mrb[0].mxu0
        %v472 = vpop.f32.mrb[0].mxu0
        %v473 = vadd.f32 0.0, %v472
        %v474 = vpop.f32.mrb[0].mxu0
        %475 = vmatprep.mubr.bf16.mxu0 0
        %476 = vmatmul.mubr.bf16.gmra.mrb[0].mxu0 %v343
        %v477 = vpop.f32.mrb[0].mxu0
        %v478 = vadd.f32 0.0, %v477
        %v479 = vpop.f32.mrb[0].mxu0
        %v480 = vpop.f32.mrb[0].mxu0
        %v481 = vadd.f32 0.0, %v480
        %v482 = vpop.f32.mrb[0].mxu0
        %483 = vmatprep.mubr.bf16.mxu0 0
        %484 = vmatmul.mubr.bf16.gmra.mrb[0].mxu0 %v344
        %v485 = vpop.f32.mrb[0].mxu0
        %v486 = vadd.f32 0.0, %v485
        %v487 = vpop.f32.mrb[0].mxu0
        %v488 = vpop.f32.mrb[0].mxu0
        %v489 = vadd.f32 0.0, %v488
        %v490 = vpop.f32.mrb[0].mxu0
        %491 = vmatprep.mubr.bf16.mxu0 0
        %492 = vmatmul.mubr.bf16.gmra.mrb[0].mxu0 %v345
        %v493 = vpop.f32.mrb[0].mxu0
        %v494 = vadd.f32 0.0, %v493
        %v495 = vpop.f32.mrb[0].mxu0
        %v496 = vpop.f32.mrb[0].mxu0
        %v497 = vadd.f32 0.0, %v496
        %v498 = vpop.f32.mrb[0].mxu0
        %499 = vmatprep.mubr.bf16.mxu0 0
        %500 = vmatmul.mubr.bf16.gmra.mrb[0].mxu0 %v346
        %v501 = vpop.f32.mrb[0].mxu0
        %v502 = vadd.f32 0.0, %v501
        %v503 = vpop.f32.mrb[0].mxu0
        %v504 = vpop.f32.mrb[0].mxu0
        %v505 = vadd.f32 0.0, %v504
        %v506 = vpop.f32.mrb[0].mxu0
        %507 = vdwg.mxu0
        %v508 = vmax.f32 %v446, 0.0
        %v509 = vmax.f32 %v449, 0.0
        %v510 = vmax.f32 %v454, 0.0
        %v511 = vmax.f32 %v457, 0.0
        %v512 = vmax.f32 %v462, 0.0
        %v513 = vmax.f32 %v465, 0.0
        %v514 = vmax.f32 %v470, 0.0
        %v515 = vmax.f32 %v473, 0.0
        %v516 = vmax.f32 %v478, 0.0
        %v517 = vmax.f32 %v481, 0.0
        %v518 = vmax.f32 %v486, 0.0
        %v519 = vmax.f32 %v489, 0.0
        %v520 = vmax.f32 %v494, 0.0
        %v521 = vmax.f32 %v497, 0.0
        %v522 = vmax.f32 %v502, 0.0
        %v523 = vmax.f32 %v505, 0.0
        %v524 = vadd.f32 %v508, 1.0
        %v525 = vadd.f32 %v509, 1.0
        %v526 = vadd.f32 %v510, 1.0
        %v527 = vadd.f32 %v511, 1.0
        %v528 = vadd.f32 %v512, 1.0
        %v529 = vadd.f32 %v513, 1.0
        %v530 = vadd.f32 %v514, 1.0
        %v531 = vadd.f32 %v515, 1.0
        %v532 = vadd.f32 %v516, 1.0
        %v533 = vadd.f32 %v517, 1.0
        %v534 = vadd.f32 %v518, 1.0
        %v535 = vadd.f32 %v519, 1.0
        %v536 = vadd.f32 %v520, 1.0
        %v537 = vadd.f32 %v521, 1.0
        %v538 = vadd.f32 %v522, 1.0
        %v539 = vadd.f32 %v523, 1.0
        %v540 = vlog2.pop %v524
        %v541 = vmul.f32 %v540, 0.6931472
        %v542 = vlog2.pop %v525
        %v543 = vmul.f32 %v542, 0.6931472
        %v544 = vlog2.pop %v526
        %v545 = vmul.f32 %v544, 0.6931472
        %v546 = vlog2.pop %v527
        %v547 = vmul.f32 %v546, 0.6931472
        %v548 = vlog2.pop %v528
        %v549 = vmul.f32 %v548, 0.6931472
        %v550 = vlog2.pop %v529
        %v551 = vmul.f32 %v550, 0.6931472
        %v552 = vlog2.pop %v530
        %v553 = vmul.f32 %v552, 0.6931472
        %v554 = vlog2.pop %v531
        %v555 = vmul.f32 %v554, 0.6931472
        %v556 = vlog2.pop %v532
        %v557 = vmul.f32 %v556, 0.6931472
        %v558 = vlog2.pop %v533
        %v559 = vmul.f32 %v558, 0.6931472
        %v560 = vlog2.pop %v534
        %v561 = vmul.f32 %v560, 0.6931472
        %v562 = vlog2.pop %v535
        %v563 = vmul.f32 %v562, 0.6931472
        %v564 = vlog2.pop %v536
        %v565 = vmul.f32 %v564, 0.6931472
        %v566 = vlog2.pop %v537
        %v567 = vmul.f32 %v566, 0.6931472
        %v568 = vlog2.pop %v538
        %v569 = vmul.f32 %v568, 0.6931472
        %v570 = vlog2.pop %v539
        %v571 = vmul.f32 %v570, 0.6931472
        %v572 = vld [vmem:[#allocation4] sm:$0x1]
        %v573 = vld [vmem:[#allocation6] sm:$0x1]
        %574 = vadd.xlane.f32.xlu0 %v541
        %v575 = vpop.xlane.xlu0 %574
        %576 = vadd.xlane.f32.xlu0 %v543
        %v577 = vpop.xlane.xlu0 %576
        %578 = vadd.xlane.f32.xlu0 %v545
        %v579 = vpop.xlane.xlu0 %578
        %580 = vadd.xlane.f32.xlu0 %v547
        %v581 = vpop.xlane.xlu0 %580
        %582 = vadd.xlane.f32.xlu0 %v549
        %v583 = vpop.xlane.xlu0 %582
        %584 = vadd.xlane.f32.xlu0 %v551
        %v585 = vpop.xlane.xlu0 %584
        %586 = vadd.xlane.f32.xlu0 %v553
        %v587 = vpop.xlane.xlu0 %586
        %588 = vadd.xlane.f32.xlu0 %v555
        %v589 = vpop.xlane.xlu0 %588
        %590 = vadd.xlane.f32.xlu0 %v557
        %v591 = vpop.xlane.xlu0 %590
        %592 = vadd.xlane.f32.xlu0 %v559
        %v593 = vpop.xlane.xlu0 %592
        %594 = vadd.xlane.f32.xlu0 %v561
        %v595 = vpop.xlane.xlu0 %594
        %596 = vadd.xlane.f32.xlu0 %v563
        %v597 = vpop.xlane.xlu0 %596
        %598 = vadd.xlane.f32.xlu0 %v565
        %v599 = vpop.xlane.xlu0 %598
        %600 = vadd.xlane.f32.xlu0 %v567
        %v601 = vpop.xlane.xlu0 %600
        %602 = vadd.xlane.f32.xlu0 %v569
        %v603 = vpop.xlane.xlu0 %602
        %604 = vadd.xlane.f32.xlu0 %v571
        %v605 = vpop.xlane.xlu0 %604
        %v606 = vrcp.pop 128.0
        %v607 = vmul.f32 %v575, %v606
        %v608 = vmul.f32 %v577, %v606
        %v609 = vmul.f32 %v579, %v606
        %v610 = vmul.f32 %v581, %v606
        %v611 = vmul.f32 %v583, %v606
        %v612 = vmul.f32 %v585, %v606
        %v613 = vmul.f32 %v587, %v606
        %v614 = vmul.f32 %v589, %v606
        %v615 = vmul.f32 %v591, %v606
        %v616 = vmul.f32 %v593, %v606
        %v617 = vmul.f32 %v595, %v606
        %v618 = vmul.f32 %v597, %v606
        %v619 = vmul.f32 %v599, %v606
        %v620 = vmul.f32 %v601, %v606
        %v621 = vmul.f32 %v603, %v606
        %v622 = vmul.f32 %v605, %v606
        %v623 = vsub.f32 %v541, %v607
        %v624 = vsub.f32 %v543, %v608
        %v625 = vsub.f32 %v545, %v609
        %v626 = vsub.f32 %v547, %v610
        %v627 = vsub.f32 %v549, %v611
        %v628 = vsub.f32 %v551, %v612
        %v629 = vsub.f32 %v553, %v613
        %v630 = vsub.f32 %v555, %v614
        %v631 = vsub.f32 %v557, %v615
        %v632 = vsub.f32 %v559, %v616
        %v633 = vsub.f32 %v561, %v617
        %v634 = vsub.f32 %v563, %v618
        %v635 = vsub.f32 %v565, %v619
        %v636 = vsub.f32 %v567, %v620
        %v637 = vsub.f32 %v569, %v621
        %v638 = vsub.f32 %v571, %v622
        %v639 = vmul.f32 %v623, %v623
        %v640 = vmul.f32 %v624, %v624
        %v641 = vmul.f32 %v625, %v625
        %v642 = vmul.f32 %v626, %v626
        %v643 = vmul.f32 %v627, %v627
        %v644 = vmul.f32 %v628, %v628
        %v645 = vmul.f32 %v629, %v629
        %v646 = vmul.f32 %v630, %v630
        %v647 = vmul.f32 %v631, %v631
        %v648 = vmul.f32 %v632, %v632
        %v649 = vmul.f32 %v633, %v633
        %v650 = vmul.f32 %v634, %v634
        %v651 = vmul.f32 %v635, %v635
        %v652 = vmul.f32 %v636, %v636
        %v653 = vmul.f32 %v637, %v637
        %v654 = vmul.f32 %v638, %v638
        %655 = vadd.xlane.f32.xlu0 %v639
        %v656 = vpop.xlane.xlu0 %655
        %657 = vadd.xlane.f32.xlu0 %v640
        %v658 = vpop.xlane.xlu0 %657
        %659 = vadd.xlane.f32.xlu0 %v641
        %v660 = vpop.xlane.xlu0 %659
        %661 = vadd.xlane.f32.xlu0 %v642
        %v662 = vpop.xlane.xlu0 %661
        %663 = vadd.xlane.f32.xlu0 %v643
        %v664 = vpop.xlane.xlu0 %663
        %665 = vadd.xlane.f32.xlu0 %v644
        %v666 = vpop.xlane.xlu0 %665
        %667 = vadd.xlane.f32.xlu0 %v645
        %v668 = vpop.xlane.xlu0 %667
        %669 = vadd.xlane.f32.xlu0 %v646
        %v670 = vpop.xlane.xlu0 %669
        %671 = vadd.xlane.f32.xlu0 %v647
        %v672 = vpop.xlane.xlu0 %671
        %673 = vadd.xlane.f32.xlu0 %v648
        %v674 = vpop.xlane.xlu0 %673
        %675 = vadd.xlane.f32.xlu0 %v649
        %v676 = vpop.xlane.xlu0 %675
        %677 = vadd.xlane.f32.xlu0 %v650
        %v678 = vpop.xlane.xlu0 %677
        %679 = vadd.xlane.f32.xlu0 %v651
        %v680 = vpop.xlane.xlu0 %679
        %681 = vadd.xlane.f32.xlu0 %v652
        %v682 = vpop.xlane.xlu0 %681
        %683 = vadd.xlane.f32.xlu0 %v653
        %v684 = vpop.xlane.xlu0 %683
        %685 = vadd.xlane.f32.xlu0 %v654
        %v686 = vpop.xlane.xlu0 %685
        %v687 = vmul.f32 %v656, %v606
        %v688 = vmul.f32 %v658, %v606
        %v689 = vmul.f32 %v660, %v606
        %v690 = vmul.f32 %v662, %v606
        %v691 = vmul.f32 %v664, %v606
        %v692 = vmul.f32 %v666, %v606
        %v693 = vmul.f32 %v668, %v606
        %v694 = vmul.f32 %v670, %v606
        %v695 = vmul.f32 %v672, %v606
        %v696 = vmul.f32 %v674, %v606
        %v697 = vmul.f32 %v676, %v606
        %v698 = vmul.f32 %v678, %v606
        %v699 = vmul.f32 %v680, %v606
        %v700 = vmul.f32 %v682, %v606
        %v701 = vmul.f32 %v684, %v606
        %v702 = vmul.f32 %v686, %v606
        %v703 = vadd.f32 %v687, 1e-05
        %v704 = vadd.f32 %v688, 1e-05
        %v705 = vadd.f32 %v689, 1e-05
        %v706 = vadd.f32 %v690, 1e-05
        %v707 = vadd.f32 %v691, 1e-05
        %v708 = vadd.f32 %v692, 1e-05
        %v709 = vadd.f32 %v693, 1e-05
        %v710 = vadd.f32 %v694, 1e-05
        %v711 = vadd.f32 %v695, 1e-05
        %v712 = vadd.f32 %v696, 1e-05
        %v713 = vadd.f32 %v697, 1e-05
        %v714 = vadd.f32 %v698, 1e-05
        %v715 = vadd.f32 %v699, 1e-05
        %v716 = vadd.f32 %v700, 1e-05
        %v717 = vadd.f32 %v701, 1e-05
        %v718 = vadd.f32 %v702, 1e-05
        %v719 = vrsqrt.pop %v703
        %v720 = vrsqrt.pop %v704
        %v721 = vrsqrt.pop %v705
        %v722 = vrsqrt.pop %v706
        %v723 = vrsqrt.pop %v707
        %v724 = vrsqrt.pop %v708
        %v725 = vrsqrt.pop %v709
        %v726 = vrsqrt.pop %v710
        %v727 = vrsqrt.pop %v711
        %v728 = vrsqrt.pop %v712
        %v729 = vrsqrt.pop %v713
        %v730 = vrsqrt.pop %v714
        %v731 = vrsqrt.pop %v715
        %v732 = vrsqrt.pop %v716
        %v733 = vrsqrt.pop %v717
        %v734 = vrsqrt.pop %v718
        %v735 = vmul.f32 %v623, %v719
        %v736 = vmul.f32 %v624, %v720
        %v737 = vmul.f32 %v625, %v721
        %v738 = vmul.f32 %v626, %v722
        %v739 = vmul.f32 %v627, %v723
        %v740 = vmul.f32 %v628, %v724
        %v741 = vmul.f32 %v629, %v725
        %v742 = vmul.f32 %v630, %v726
        %v743 = vmul.f32 %v631, %v727
        %v744 = vmul.f32 %v632, %v728
        %v745 = vmul.f32 %v633, %v729
        %v746 = vmul.f32 %v634, %v730
        %v747 = vmul.f32 %v635, %v731
        %v748 = vmul.f32 %v636, %v732
        %v749 = vmul.f32 %v637, %v733
        %v750 = vmul.f32 %v638, %v734
        %v752 = vlaneseq
        %v753 = vshrl.u32 %v752, 7
        %v754 = vsub.s32 0, %v753
        %v755 = vrot.slane %v572, %v754
        %v757 = vmul.f32 %v735, %v755
        %v758 = vmul.f32 %v736, %v755
        %v759 = vmul.f32 %v737, %v755
        %v760 = vmul.f32 %v738, %v755
        %v761 = vmul.f32 %v739, %v755
        %v762 = vmul.f32 %v740, %v755
        %v763 = vmul.f32 %v741, %v755
        %v764 = vmul.f32 %v742, %v755
        %v765 = vmul.f32 %v743, %v755
        %v766 = vmul.f32 %v744, %v755
        %v767 = vmul.f32 %v745, %v755
        %v768 = vmul.f32 %v746, %v755
        %v769 = vmul.f32 %v747, %v755
        %v770 = vmul.f32 %v748, %v755
        %v771 = vmul.f32 %v749, %v755
        %v772 = vmul.f32 %v750, %v755
        %v774 = vlaneseq
        %v775 = vshrl.u32 %v774, 7
        %v776 = vsub.s32 0, %v775
        %v777 = vrot.slane %v573, %v776
        %v779 = vadd.f32 %v757, %v777
        %v780 = vadd.f32 %v758, %v777
        %v781 = vadd.f32 %v759, %v777
        %v782 = vadd.f32 %v760, %v777
        %v783 = vadd.f32 %v761, %v777
        %v784 = vadd.f32 %v762, %v777
        %v785 = vadd.f32 %v763, %v777
        %v786 = vadd.f32 %v764, %v777
        %v787 = vadd.f32 %v765, %v777
        %v788 = vadd.f32 %v766, %v777
        %v789 = vadd.f32 %v767, %v777
        %v790 = vadd.f32 %v768, %v777
        %v791 = vadd.f32 %v769, %v777
        %v792 = vadd.f32 %v770, %v777
        %v793 = vadd.f32 %v771, %v777
        %v794 = vadd.f32 %v772, %v777
        %v795 = vpack.c.bf16 %v780, %v779
        %v796 = vpack.c.bf16 %v782, %v781
        %v797 = vpack.c.bf16 %v784, %v783
        %v798 = vpack.c.bf16 %v786, %v785
        %v799 = vpack.c.bf16 %v788, %v787
        %v800 = vpack.c.bf16 %v790, %v789
        %v801 = vpack.c.bf16 %v792, %v791
        %v802 = vpack.c.bf16 %v794, %v793
        %v803 = vld [vmem:[#allocation7] sm:$0xf]
        %v804 = vld [vmem:[#allocation7 + $0x4] sm:$0xf]
        %v805 = vld [vmem:[#allocation7 + $0x8] sm:$0xf]
        %v806 = vld [vmem:[#allocation7 + $0xc] sm:$0xf]
        %v807 = vld [vmem:[#allocation7 + $0x10] sm:$0xf]
        %v808 = vld [vmem:[#allocation7 + $0x14] sm:$0xf]
        %v809 = vld [vmem:[#allocation7 + $0x18] sm:$0xf]
        %v810 = vld [vmem:[#allocation7 + $0x1c] sm:$0xf]
        %v811 = vld [vmem:[#allocation7 + $0x20] sm:$0xf]
        %v812 = vld [vmem:[#allocation7 + $0x24] sm:$0xf]
        %v813 = vld [vmem:[#allocation7 + $0x28] sm:$0xf]
        %v814 = vld [vmem:[#allocation7 + $0x2c] sm:$0xf]
        %v815 = vld [vmem:[#allocation7 + $0x30] sm:$0xf]
        %v816 = vld [vmem:[#allocation7 + $0x34] sm:$0xf]
        %v817 = vld [vmem:[#allocation7 + $0x38] sm:$0xf]
        %v818 = vld [vmem:[#allocation7 + $0x3c] sm:$0xf]
        %v819 = vld [vmem:[#allocation9] sm:$0x1]
        %v821 = vlaneseq
        %v822 = vshrl.u32 %v821, 7
        %v823 = vsub.s32 0, %v822
        %v824 = vrot.slane %v819, %v823
        %v842 = vunpack.c.l.b16 %v803
        %v843 = vunpack.c.l.b16 %v804
        %v844 = vunpack.c.l.b16 %v805
        %v845 = vunpack.c.l.b16 %v806
        %v846 = vunpack.c.l.b16 %v807
        %v847 = vunpack.c.l.b16 %v808
        %v848 = vunpack.c.l.b16 %v809
        %v849 = vunpack.c.l.b16 %v810
        %v850 = vunpack.c.l.b16 %v811
        %v851 = vunpack.c.l.b16 %v812
        %v852 = vunpack.c.l.b16 %v813
        %v853 = vunpack.c.l.b16 %v814
        %v854 = vunpack.c.l.b16 %v815
        %v855 = vunpack.c.l.b16 %v816
        %v856 = vunpack.c.l.b16 %v817
        %v857 = vunpack.c.l.b16 %v818
        %v858 = vpack.c.b16 %v843, %v842
        %v859 = vpack.c.b16 %v845, %v844
        %v860 = vpack.c.b16 %v847, %v846
        %v861 = vpack.c.b16 %v849, %v848
        %v862 = vpack.c.b16 %v851, %v850
        %v863 = vpack.c.b16 %v853, %v852
        %v864 = vpack.c.b16 %v855, %v854
        %v865 = vpack.c.b16 %v857, %v856
        %874 = vmatprep.subr.bf16.mxu0 0
        %875 = vmatpush1.bf16.msra.mxu0 %v858
        %876 = vmatprep.subr.bf16.mxu0 0
        %877 = vmatpush1.bf16.msra.mxu0 %v859
        %878 = vmatprep.subr.bf16.mxu0 0
        %879 = vmatpush1.bf16.msra.mxu0 %v860
        %880 = vmatprep.subr.bf16.mxu0 0
        %881 = vmatpush1.bf16.msra.mxu0 %v861
        %882 = vmatprep.subr.bf16.mxu0 0
        %883 = vmatpush1.bf16.msra.mxu0 %v862
        %884 = vmatprep.subr.bf16.mxu0 0
        %885 = vmatpush1.bf16.msra.mxu0 %v863
        %886 = vmatprep.subr.bf16.mxu0 0
        %887 = vmatpush1.bf16.msra.mxu0 %v864
        %888 = vmatprep.subr.bf16.mxu0 0
        %889 = vmatpush1.bf16.msra.mxu0 %v865
        %890 = vmatprep.subr.bf16.mxu0 0
        %891 = vmatpush1.bf16.msra.mxu0 0
        %892 = vmatprep.subr.bf16.mxu0 0
        %893 = vmatpush1.bf16.msra.mxu0 0
        %894 = vmatprep.subr.bf16.mxu0 0
        %895 = vmatpush1.bf16.msra.mxu0 0
        %896 = vmatprep.subr.bf16.mxu0 0
        %897 = vmatpush1.bf16.msra.mxu0 0
        %898 = vmatprep.subr.bf16.mxu0 0
        %899 = vmatpush1.bf16.msra.mxu0 0
        %900 = vmatprep.subr.bf16.mxu0 0
        %901 = vmatpush1.bf16.msra.mxu0 0
        %902 = vmatprep.subr.bf16.mxu0 0
        %903 = vmatpush1.bf16.msra.mxu0 0
        %904 = vmatprep.subr.bf16.mxu0 0
        %905 = vmatpush1.bf16.msra.mxu0 0
        %906 = vmatprep.mubr.bf16.mxu0 0
        %907 = vmatmul.mubr.bf16.gmra.mrb[0].mxu0 %v795
        %v908 = vpop.f32.mrb[0].mxu0
        %v909 = vadd.f32 %v824, %v908
        %v910 = vpop.f32.mrb[0].mxu0
        %v911 = vpop.f32.mrb[0].mxu0
        %v912 = vadd.f32 %v824, %v911
        %v913 = vpop.f32.mrb[0].mxu0
        %914 = vmatprep.mubr.bf16.mxu0 0
        %915 = vmatmul.mubr.bf16.gmra.mrb[0].mxu0 %v796
        %v916 = vpop.f32.mrb[0].mxu0
        %v917 = vadd.f32 %v824, %v916
        %v918 = vpop.f32.mrb[0].mxu0
        %v919 = vpop.f32.mrb[0].mxu0
        %v920 = vadd.f32 %v824, %v919
        %v921 = vpop.f32.mrb[0].mxu0
        %922 = vmatprep.mubr.bf16.mxu0 0
        %923 = vmatmul.mubr.bf16.gmra.mrb[0].mxu0 %v797
        %v924 = vpop.f32.mrb[0].mxu0
        %v925 = vadd.f32 %v824, %v924
        %v926 = vpop.f32.mrb[0].mxu0
        %v927 = vpop.f32.mrb[0].mxu0
        %v928 = vadd.f32 %v824, %v927
        %v929 = vpop.f32.mrb[0].mxu0
        %930 = vmatprep.mubr.bf16.mxu0 0
        %931 = vmatmul.mubr.bf16.gmra.mrb[0].mxu0 %v798
        %v932 = vpop.f32.mrb[0].mxu0
        %v933 = vadd.f32 %v824, %v932
        %v934 = vpop.f32.mrb[0].mxu0
        %v935 = vpop.f32.mrb[0].mxu0
        %v936 = vadd.f32 %v824, %v935
        %v937 = vpop.f32.mrb[0].mxu0
        %938 = vmatprep.mubr.bf16.mxu0 0
        %939 = vmatmul.mubr.bf16.gmra.mrb[0].mxu0 %v799
        %v940 = vpop.f32.mrb[0].mxu0
        %v941 = vadd.f32 %v824, %v940
        %v942 = vpop.f32.mrb[0].mxu0
        %v943 = vpop.f32.mrb[0].mxu0
        %v944 = vadd.f32 %v824, %v943
        %v945 = vpop.f32.mrb[0].mxu0
        %946 = vmatprep.mubr.bf16.mxu0 0
        %947 = vmatmul.mubr.bf16.gmra.mrb[0].mxu0 %v800
        %v948 = vpop.f32.mrb[0].mxu0
        %v949 = vadd.f32 %v824, %v948
        %v950 = vpop.f32.mrb[0].mxu0
        %v951 = vpop.f32.mrb[0].mxu0
        %v952 = vadd.f32 %v824, %v951
        %v953 = vpop.f32.mrb[0].mxu0
        %954 = vmatprep.mubr.bf16.mxu0 0
        %955 = vmatmul.mubr.bf16.gmra.mrb[0].mxu0 %v801
        %v956 = vpop.f32.mrb[0].mxu0
        %v957 = vadd.f32 %v824, %v956
        %v958 = vpop.f32.mrb[0].mxu0
        %v959 = vpop.f32.mrb[0].mxu0
        %v960 = vadd.f32 %v824, %v959
        %v961 = vpop.f32.mrb[0].mxu0
        %962 = vmatprep.mubr.bf16.mxu0 0
        %963 = vmatmul.mubr.bf16.gmra.mrb[0].mxu0 %v802
        %v964 = vpop.f32.mrb[0].mxu0
        %v965 = vadd.f32 %v824, %v964
        %v966 = vpop.f32.mrb[0].mxu0
        %v967 = vpop.f32.mrb[0].mxu0
        %v968 = vadd.f32 %v824, %v967
        %v969 = vpop.f32.mrb[0].mxu0
        %970 = vdwg.mxu0
        %v971 = vpack.c.bf16 %v912, %v909
        %v972 = vpack.c.bf16 %v920, %v917
        %v973 = vpack.c.bf16 %v928, %v925
        %v974 = vpack.c.bf16 %v936, %v933
        %v975 = vpack.c.bf16 %v944, %v941
        %v976 = vpack.c.bf16 %v952, %v949
        %v977 = vpack.c.bf16 %v960, %v957
        %v978 = vpack.c.bf16 %v968, %v965
        %v987 = vunpack.c.l.b16 %v971
        %v988 = vunpack.c.h.b16 %v971
        %v989 = vunpack.c.l.b16 %v972
        %v990 = vunpack.c.h.b16 %v972
        %v991 = vunpack.c.l.b16 %v973
        %v992 = vunpack.c.h.b16 %v973
        %v993 = vunpack.c.l.b16 %v974
        %v994 = vunpack.c.h.b16 %v974
        %v995 = vunpack.c.l.b16 %v975
        %v996 = vunpack.c.h.b16 %v975
        %v997 = vunpack.c.l.b16 %v976
        %v998 = vunpack.c.h.b16 %v976
        %v999 = vunpack.c.l.b16 %v977
        %v1000 = vunpack.c.h.b16 %v977
        %v1001 = vunpack.c.l.b16 %v978
        %v1002 = vunpack.c.h.b16 %v978
        %v1003 = vpack.c.b16 %v987, %v987
        %v1004 = vpack.c.b16 %v988, %v988
        %v1005 = vpack.c.b16 %v989, %v989
        %v1006 = vpack.c.b16 %v990, %v990
        %v1007 = vpack.c.b16 %v991, %v991
        %v1008 = vpack.c.b16 %v992, %v992
        %v1009 = vpack.c.b16 %v993, %v993
        %v1010 = vpack.c.b16 %v994, %v994
        %v1011 = vpack.c.b16 %v995, %v995
        %v1012 = vpack.c.b16 %v996, %v996
        %v1013 = vpack.c.b16 %v997, %v997
        %v1014 = vpack.c.b16 %v998, %v998
        %v1015 = vpack.c.b16 %v999, %v999
        %v1016 = vpack.c.b16 %v1000, %v1000
        %v1017 = vpack.c.b16 %v1001, %v1001
        %v1018 = vpack.c.b16 %v1002, %v1002
        %1035 = vst [vmem:[%s320] sm:$0xf] %v1003
        %1036 = vst [vmem:[%s320 + $0x4] sm:$0xf] %v1004
        %1037 = vst [vmem:[%s320 + $0x8] sm:$0xf] %v1005
        %1038 = vst [vmem:[%s320 + $0xc] sm:$0xf] %v1006
        %1039 = vst [vmem:[%s320 + $0x10] sm:$0xf] %v1007
        %1040 = vst [vmem:[%s320 + $0x14] sm:$0xf] %v1008
        %1041 = vst [vmem:[%s320 + $0x18] sm:$0xf] %v1009
        %1042 = vst [vmem:[%s320 + $0x1c] sm:$0xf] %v1010
        %1043 = vst [vmem:[%s320 + $0x20] sm:$0xf] %v1011
        %1044 = vst [vmem:[%s320 + $0x24] sm:$0xf] %v1012
        %1045 = vst [vmem:[%s320 + $0x28] sm:$0xf] %v1013
        %1046 = vst [vmem:[%s320 + $0x2c] sm:$0xf] %v1014
        %1047 = vst [vmem:[%s320 + $0x30] sm:$0xf] %v1015
        %1048 = vst [vmem:[%s320 + $0x34] sm:$0xf] %v1016
        %1049 = vst [vmem:[%s320 + $0x38] sm:$0xf] %v1017
        %1050 = vst [vmem:[%s320 + $0x3c] sm:$0xf] %v1018
        %s1051 = smul.u32 16, %s20
        %p1052 = scmp.lt.s32.totalorder %s1051, 31
        %s1053 = scalar_select %p1052, %s1051, 31
        %s1054 = smul.addr %s1053, 4
        %s1055 = scalar_lea.vmem %s6, %s1054
        // Predicated region
        $region65: #{wav2vec2bert_hybrid_forward.2} parent=43 // pred_check
          %p1056 = pneg %p169
        $region66: #{wav2vec2bert_hybrid_forward.2} parent=43 // pred_check_branch
          %1058 = sbr.rel (%p1056) target = $region68
        $region67: #{wav2vec2bert_hybrid_forward.2} parent=43 // pred_region
          %s1059 = smul.u32 16, %s20
        $region68: #{wav2vec2bert_hybrid_forward.2} parent=43 // pred_fallthru
          _
      $region44: #{wav2vec2bert_hybrid_forward.2} parent=5 // pred_fallthru
        _
      %p1060 = scmp.le.s32.totalorder 2, %s15
      // Predicated region
      $region69: #{wav2vec2bert_hybrid_forward.2} parent=5 // pred_check
        %p1061 = pneg %p1060
      $region70: #{wav2vec2bert_hybrid_forward.2} parent=5 // pred_check_branch
        %1063 = sbr.rel (%p1061) target = $region72
      $region71: #{wav2vec2bert_hybrid_forward.2} parent=5 // pred_region
        %s1064 = ssub.s32 %s15, 2
        // Predicated region
        $region73: #{wav2vec2bert_hybrid_forward.2} parent=71 // pred_check
          %p1065 = pneg %p175
        $region74: #{wav2vec2bert_hybrid_forward.2} parent=71 // pred_check_branch
          %1067 = sbr.rel (%p1065) target = $region76
        $region75: #{wav2vec2bert_hybrid_forward.2} parent=71 // pred_region
          %s1068 = smul.u32 16, %s21
          %p1069 = scmp.lt.s32.totalorder %s1068, 31
          %s1070 = scalar_select %p1069, %s1068, 31
          %s1071 = smul.addr %s1070, 4
          %s1072 = scalar_lea.vmem %s6, %s1071
        $region76: #{wav2vec2bert_hybrid_forward.2} parent=71 // pred_fallthru
          _
      $region72: #{wav2vec2bert_hybrid_forward.2} parent=5 // pred_fallthru
        _
    $region6: #{wav2vec2bert_hybrid_forward.2} parent=1 // loop_footer
      %s19 = sadd.s32 1, %s15
    $region7: #{wav2vec2bert_hybrid_forward.2} parent=1 // loop_footer_branch
      %14 = sbr.rel target = $region3
    $region8: #{wav2vec2bert_hybrid_forward.2} parent=1 // loop_exit
      _
    %1073 = vsyncpa [#allocation3], 1
    %s1074 = scalar_lea.sflag [#allocation3], 1
    %1075 = vsyncpa %s1074, 1
    %1076 = vsyncpa [#allocation5], 1
    %1077 = vsyncpa [#allocation8], 1

// kernel: wav2vec2bert_hybrid_forward.3
$region0: #{wav2vec2bert_hybrid_forward.3}
  #allocation0 [shape = 'u32[]', space=smem, size = 0x4, offset = 0x4, fixed_abs, tag = 'smem constant byte address 0x4 - core index']
  #allocation1 [shape = 'u32[144,128]{1,0:T(1,128)}', space=vmem, size = 0x12000, scoped, tag = 'internal scratch']
  #allocation2 [shape = 'f32[128,128]{1,0:T(8,128)}', space=vmem, size = 0x10000, scoped, tag = 'scratch operand']
  %s0 = inlined_call_operand.vmem [shape: bf16[2,128,128], index: 0, kind: input, shape index: {}]
  %s1 = inlined_call_operand.vmem [shape: f32[4,1,128], index: 1, kind: input, shape index: {}]
  %s2 = inlined_call_operand.vmem [shape: f32[4,1,128], index: 2, kind: input, shape index: {}]
  %s3 = inlined_call_operand.vmem [shape: bf16[4,128,384], index: 3, kind: input, shape index: {}]
  %s4 = inlined_call_operand.vmem [shape: f32[4,1,384], index: 4, kind: input, shape index: {}]
  %s5 = inlined_call_operand.vmem [shape: bf16[4,128,128], index: 5, kind: input, shape index: {}]
  %s6 = inlined_call_operand.vmem [shape: f32[4,1,128], index: 6, kind: input, shape index: {}]
  %s7 = inlined_call_operand.vmem [shape: f32[4,1,128], index: 7, kind: input, shape index: {}]
  %s8 = inlined_call_operand.vmem [shape: f32[4,1,128], index: 8, kind: input, shape index: {}]
  %s9 = inlined_call_operand.hbm [shape: bf16[4,128,256], index: 9, kind: input, shape index: {}]
  %s10 = inlined_call_operand.vmem [shape: f32[4,1,256], index: 10, kind: input, shape index: {}]
  %s11 = inlined_call_operand.hbm [shape: bf16[4,256,128], index: 11, kind: input, shape index: {}]
  %s12 = inlined_call_operand.vmem [shape: f32[4,1,128], index: 12, kind: input, shape index: {}]
  %s13 = inlined_call_operand.vmem [shape: f32[1,128], index: 13, kind: input, shape index: {}]
  %s14 = inlined_call_operand.vmem [shape: f32[1,128], index: 14, kind: input, shape index: {}]
  %s15 = inlined_call_operand.hbm [shape: f32[2,1,128], index: 15, kind: output, shape index: {}]
  %s16 = sld [smem:[#allocation0]]
  $region109: #{wav2vec2bert_hybrid_forward.3} parent=0
    _
  %s18 = ssub.s32 1, %s16
  %s19 = scalar_select 0, %s18, %s16
  $region1: #{wav2vec2bert_hybrid_forward.3} parent=0
    #allocation3 [shape = 'u8[131072]{0}', space=vmem, size = 0x20000, scoped, tag = 'input window, operand 9']
    #allocation4 [shape = 's32[2]{0}', space=sflag, size = 0x8, scoped, tag = 'scoped memory for wav2vec2bert_hybrid_forward.3']
    #allocation5 [shape = 's32[2]{0}', space=sflag, size = 0x8, scoped, tag = 'scoped memory for wav2vec2bert_hybrid_forward.3']
    #allocation6 [shape = 'u8[131072]{0}', space=vmem, size = 0x20000, scoped, tag = 'input window, operand 11']
    #allocation7 [shape = 's32[2]{0}', space=sflag, size = 0x8, scoped, tag = 'scoped memory for wav2vec2bert_hybrid_forward.3']
    #allocation8 [shape = 'u8[1024]{0}', space=vmem, size = 0x400, scoped, tag = 'output window, operand 0']
    %20 = vsyncpa [#allocation4], 0
    %s21 = scalar_lea.sflag [#allocation4], 1
    %22 = vsyncpa %s21, 0
    %23 = vsyncpa [#allocation7], 0
    %s24 = scalar_lea.sflag [#allocation7], 1
    %25 = vsyncpa %s24, 0
    %26 = vsyncpa [#allocation5], 0
    %s27 = scalar_lea.sflag [#allocation5], 1
    %28 = vsyncpa %s27, 0
    loop: start=0, step=1, limit=10
    $region2: #{wav2vec2bert_hybrid_forward.3} parent=1 // loop_pre_header
      _
    $region3: #{wav2vec2bert_hybrid_forward.3} parent=1 // loop_header
      %s30 = sphi 0, %s34
      %p31 = scmp.ge.s32.totalorder %s30, 10
      %s37 = sphi 0, %s49
      %s38 = sphi 0, %s45
      %s39 = sphi 0, %s37
      %s40 = sphi 0, %s38
      %s41 = sphi 0, %s39
      %s42 = sphi 0, %s40
      %s52 = sphi 0, %s54
      %s55 = sphi 0, %s52
      %s56 = sphi 0, %s55
      %s72 = sphi 0, %s56
      %s78 = sphi 0, %s80
      %s81 = sphi 0, %s78
      %s82 = sphi 0, %s81
      %s98 = sphi 0, %s82
      %s104 = sphi 0, %s106
      %s107 = sphi 0, %s104
      %s108 = sphi 0, %s107
      %s124 = sphi 0, %s108
      %s130 = sphi 0, %s132
      %s133 = sphi 0, %s130
      %s134 = sphi 0, %s133
      %s150 = sphi 0, %s134
      %s156 = sphi 0, %s158
      %s159 = sphi 0, %s156
      %s160 = sphi 0, %s159
      %s176 = sphi 0, %s160
      %s182 = sphi 0, %s184
      %s185 = sphi 0, %s182
      %s186 = sphi 0, %s185
      %s202 = sphi 0, %s186
      %s208 = sphi 0, %s210
      %s211 = sphi 0, %s208
      %s212 = sphi 0, %s211
      %s228 = sphi 0, %s212
      %s234 = sphi 0, %s236
      %s237 = sphi 0, %s234
      %s238 = sphi 0, %s237
      %s254 = sphi 0, %s238
      %s260 = sphi 0, %s262
      %s263 = sphi 0, %s260
      %s264 = sphi 0, %s263
      %s280 = sphi 0, %s264
      %s286 = sphi 0, %s288
      %s289 = sphi 0, %s286
      %s290 = sphi 0, %s289
      %s306 = sphi 0, %s290
      %s312 = sphi 0, %s314
      %s315 = sphi 0, %s312
      %s316 = sphi 0, %s315
      %s332 = sphi 0, %s316
      %s338 = sphi 0, %s340
      %s341 = sphi 0, %s338
      %s342 = sphi 0, %s341
      %s358 = sphi 0, %s342
      %s364 = sphi 0, %s366
      %s367 = sphi 0, %s364
      %s368 = sphi 0, %s367
      %s384 = sphi 0, %s368
      %s388 = sphi 0, %s388
      %s390 = sphi 0, %s388
      %s391 = sphi 0, %s390
      %s405 = sphi 0, %s391
      %s409 = sphi 0, %s409
      %s411 = sphi 0, %s409
      %s412 = sphi 0, %s411
      %s426 = sphi 0, %s412
      %s432 = sphi 0, %s434
      %s435 = sphi 0, %s432
      %s436 = sphi 0, %s435
      %s452 = sphi 0, %s436
    $region4: #{wav2vec2bert_hybrid_forward.3} parent=1 // loop_header_branch
      %33 = sbr.rel (%p31) target = $region8
    $region5: #{wav2vec2bert_hybrid_forward.3} parent=1 // loop_body
      %s35 = ssub.s32 %s30, 1
      %s36 = ssub.s32 %s30, 2
      %s43 = sadd.s32 1, %s38
      %p44 = scmp.ge.s32.totalorder %s43, 4
      %s45 = scalar_select %p44, 0, %s43
      %s46 = sadd.s32 1, %s37
      %s47 = scalar_select %p44, %s46, %s37
      %p48 = scmp.ge.s32.totalorder %s47, 2
      %s49 = scalar_select %p48, 0, %s47
      %s50 = ssub.s32 %s37, %s49
      %p51 = scmp.eq.s32.totalorder %s50, 0
      %s53 = sadd.s32 %s52, 1
      %s54 = scalar_select %p51, %s52, %s53
      %p57 = pneg %p51
      %p58 = scmp.eq.s32.totalorder %s30, 7
      %p59 = por %p57, %p58
      %p60 = scmp.ne.s32.totalorder %s52, %s55
      %p61 = scmp.eq.s32.totalorder %s30, 0
      %p62 = por %p60, %p61
      %p63 = scmp.ne.s32.totalorder %s52, %s55
      %p64 = scmp.eq.s32.totalorder %s35, 7
      %p65 = por %p63, %p64
      %p66 = scmp.ne.s32.totalorder %s55, %s56
      %p67 = scmp.eq.s32.totalorder %s35, 0
      %p68 = por %p66, %p67
      %p69 = scmp.ne.s32.totalorder %s55, %s56
      %p70 = scmp.eq.s32.totalorder %s36, 7
      %p71 = por %p69, %p70
      %p73 = scmp.ne.s32.totalorder %s56, %s72
      %p74 = scmp.eq.s32.totalorder %s36, 0
      %p75 = por %p73, %p74
      %s76 = ssub.s32 %s38, %s45
      %p77 = scmp.eq.s32.totalorder %s76, 0
      %s79 = sadd.s32 %s78, 1
      %s80 = scalar_select %p77, %s78, %s79
      %p83 = pneg %p77
      %p84 = scmp.eq.s32.totalorder %s30, 7
      %p85 = por %p83, %p84
      %p86 = scmp.ne.s32.totalorder %s78, %s81
      %p87 = scmp.eq.s32.totalorder %s30, 0
      %p88 = por %p86, %p87
      %p89 = scmp.ne.s32.totalorder %s78, %s81
      %p90 = scmp.eq.s32.totalorder %s35, 7
      %p91 = por %p89, %p90
      %p92 = scmp.ne.s32.totalorder %s81, %s82
      %p93 = scmp.eq.s32.totalorder %s35, 0
      %p94 = por %p92, %p93
      %p95 = scmp.ne.s32.totalorder %s81, %s82
      %p96 = scmp.eq.s32.totalorder %s36, 7
      %p97 = por %p95, %p96
      %p99 = scmp.ne.s32.totalorder %s82, %s98
      %p100 = scmp.eq.s32.totalorder %s36, 0
      %p101 = por %p99, %p100
      %s102 = ssub.s32 %s38, %s45
      %p103 = scmp.eq.s32.totalorder %s102, 0
      %s105 = sadd.s32 %s104, 1
      %s106 = scalar_select %p103, %s104, %s105
      %p109 = pneg %p103
      %p110 = scmp.eq.s32.totalorder %s30, 7
      %p111 = por %p109, %p110
      %p112 = scmp.ne.s32.totalorder %s104, %s107
      %p113 = scmp.eq.s32.totalorder %s30, 0
      %p114 = por %p112, %p113
      %p115 = scmp.ne.s32.totalorder %s104, %s107
      %p116 = scmp.eq.s32.totalorder %s35, 7
      %p117 = por %p115, %p116
      %p118 = scmp.ne.s32.totalorder %s107, %s108
      %p119 = scmp.eq.s32.totalorder %s35, 0
      %p120 = por %p118, %p119
      %p121 = scmp.ne.s32.totalorder %s107, %s108
      %p122 = scmp.eq.s32.totalorder %s36, 7
      %p123 = por %p121, %p122
      %p125 = scmp.ne.s32.totalorder %s108, %s124
      %p126 = scmp.eq.s32.totalorder %s36, 0
      %p127 = por %p125, %p126
      %s128 = ssub.s32 %s38, %s45
      %p129 = scmp.eq.s32.totalorder %s128, 0
      %s131 = sadd.s32 %s130, 1
      %s132 = scalar_select %p129, %s130, %s131
      %p135 = pneg %p129
      %p136 = scmp.eq.s32.totalorder %s30, 7
      %p137 = por %p135, %p136
      %p138 = scmp.ne.s32.totalorder %s130, %s133
      %p139 = scmp.eq.s32.totalorder %s30, 0
      %p140 = por %p138, %p139
      %p141 = scmp.ne.s32.totalorder %s130, %s133
      %p142 = scmp.eq.s32.totalorder %s35, 7
      %p143 = por %p141, %p142
      %p144 = scmp.ne.s32.totalorder %s133, %s134
      %p145 = scmp.eq.s32.totalorder %s35, 0
      %p146 = por %p144, %p145
      %p147 = scmp.ne.s32.totalorder %s133, %s134
      %p148 = scmp.eq.s32.totalorder %s36, 7
      %p149 = por %p147, %p148
      %p151 = scmp.ne.s32.totalorder %s134, %s150
      %p152 = scmp.eq.s32.totalorder %s36, 0
      %p153 = por %p151, %p152
      %s154 = ssub.s32 %s38, %s45
      %p155 = scmp.eq.s32.totalorder %s154, 0
      %s157 = sadd.s32 %s156, 1
      %s158 = scalar_select %p155, %s156, %s157
      %p161 = pneg %p155
      %p162 = scmp.eq.s32.totalorder %s30, 7
      %p163 = por %p161, %p162
      %p164 = scmp.ne.s32.totalorder %s156, %s159
      %p165 = scmp.eq.s32.totalorder %s30, 0
      %p166 = por %p164, %p165
      %p167 = scmp.ne.s32.totalorder %s156, %s159
      %p168 = scmp.eq.s32.totalorder %s35, 7
      %p169 = por %p167, %p168
      %p170 = scmp.ne.s32.totalorder %s159, %s160
      %p171 = scmp.eq.s32.totalorder %s35, 0
      %p172 = por %p170, %p171
      %p173 = scmp.ne.s32.totalorder %s159, %s160
      %p174 = scmp.eq.s32.totalorder %s36, 7
      %p175 = por %p173, %p174
      %p177 = scmp.ne.s32.totalorder %s160, %s176
      %p178 = scmp.eq.s32.totalorder %s36, 0
      %p179 = por %p177, %p178
      %s180 = ssub.s32 %s38, %s45
      %p181 = scmp.eq.s32.totalorder %s180, 0
      %s183 = sadd.s32 %s182, 1
      %s184 = scalar_select %p181, %s182, %s183
      %p187 = pneg %p181
      %p188 = scmp.eq.s32.totalorder %s30, 7
      %p189 = por %p187, %p188
      %p190 = scmp.ne.s32.totalorder %s182, %s185
      %p191 = scmp.eq.s32.totalorder %s30, 0
      %p192 = por %p190, %p191
      %p193 = scmp.ne.s32.totalorder %s182, %s185
      %p194 = scmp.eq.s32.totalorder %s35, 7
      %p195 = por %p193, %p194
      %p196 = scmp.ne.s32.totalorder %s185, %s186
      %p197 = scmp.eq.s32.totalorder %s35, 0
      %p198 = por %p196, %p197
      %p199 = scmp.ne.s32.totalorder %s185, %s186
      %p200 = scmp.eq.s32.totalorder %s36, 7
      %p201 = por %p199, %p200
      %p203 = scmp.ne.s32.totalorder %s186, %s202
      %p204 = scmp.eq.s32.totalorder %s36, 0
      %p205 = por %p203, %p204
      %s206 = ssub.s32 %s38, %s45
      %p207 = scmp.eq.s32.totalorder %s206, 0
      %s209 = sadd.s32 %s208, 1
      %s210 = scalar_select %p207, %s208, %s209
      %p213 = pneg %p207
      %p214 = scmp.eq.s32.totalorder %s30, 7
      %p215 = por %p213, %p214
      %p216 = scmp.ne.s32.totalorder %s208, %s211
      %p217 = scmp.eq.s32.totalorder %s30, 0
      %p218 = por %p216, %p217
      %p219 = scmp.ne.s32.totalorder %s208, %s211
      %p220 = scmp.eq.s32.totalorder %s35, 7
      %p221 = por %p219, %p220
      %p222 = scmp.ne.s32.totalorder %s211, %s212
      %p223 = scmp.eq.s32.totalorder %s35, 0
      %p224 = por %p222, %p223
      %p225 = scmp.ne.s32.totalorder %s211, %s212
      %p226 = scmp.eq.s32.totalorder %s36, 7
      %p227 = por %p225, %p226
      %p229 = scmp.ne.s32.totalorder %s212, %s228
      %p230 = scmp.eq.s32.totalorder %s36, 0
      %p231 = por %p229, %p230
      %s232 = ssub.s32 %s38, %s45
      %p233 = scmp.eq.s32.totalorder %s232, 0
      %s235 = sadd.s32 %s234, 1
      %s236 = scalar_select %p233, %s234, %s235
      %p239 = pneg %p233
      %p240 = scmp.eq.s32.totalorder %s30, 7
      %p241 = por %p239, %p240
      %p242 = scmp.ne.s32.totalorder %s234, %s237
      %p243 = scmp.eq.s32.totalorder %s30, 0
      %p244 = por %p242, %p243
      %p245 = scmp.ne.s32.totalorder %s234, %s237
      %p246 = scmp.eq.s32.totalorder %s35, 7
      %p247 = por %p245, %p246
      %p248 = scmp.ne.s32.totalorder %s237, %s238
      %p249 = scmp.eq.s32.totalorder %s35, 0
      %p250 = por %p248, %p249
      %p251 = scmp.ne.s32.totalorder %s237, %s238
      %p252 = scmp.eq.s32.totalorder %s36, 7
      %p253 = por %p251, %p252
      %p255 = scmp.ne.s32.totalorder %s238, %s254
      %p256 = scmp.eq.s32.totalorder %s36, 0
      %p257 = por %p255, %p256
      %s258 = ssub.s32 %s38, %s45
      %p259 = scmp.eq.s32.totalorder %s258, 0
      %s261 = sadd.s32 %s260, 1
      %s262 = scalar_select %p259, %s260, %s261
      %p265 = pneg %p259
      %p266 = scmp.eq.s32.totalorder %s30, 7
      %p267 = por %p265, %p266
      %p268 = scmp.ne.s32.totalorder %s260, %s263
      %p269 = scmp.eq.s32.totalorder %s30, 0
      %p270 = por %p268, %p269
      %p271 = scmp.ne.s32.totalorder %s260, %s263
      %p272 = scmp.eq.s32.totalorder %s35, 7
      %p273 = por %p271, %p272
      %p274 = scmp.ne.s32.totalorder %s263, %s264
      %p275 = scmp.eq.s32.totalorder %s35, 0
      %p276 = por %p274, %p275
      %p277 = scmp.ne.s32.totalorder %s263, %s264
      %p278 = scmp.eq.s32.totalorder %s36, 7
      %p279 = por %p277, %p278
      %p281 = scmp.ne.s32.totalorder %s264, %s280
      %p282 = scmp.eq.s32.totalorder %s36, 0
      %p283 = por %p281, %p282
      %s284 = ssub.s32 %s38, %s45
      %p285 = scmp.eq.s32.totalorder %s284, 0
      %s287 = sadd.s32 %s286, 1
      %s288 = scalar_select %p285, %s286, %s287
      %p291 = pneg %p285
      %p292 = scmp.eq.s32.totalorder %s30, 7
      %p293 = por %p291, %p292
      %p294 = scmp.ne.s32.totalorder %s286, %s289
      %p295 = scmp.eq.s32.totalorder %s30, 0
      %p296 = por %p294, %p295
      %p297 = scmp.ne.s32.totalorder %s286, %s289
      %p298 = scmp.eq.s32.totalorder %s35, 7
      %p299 = por %p297, %p298
      %p300 = scmp.ne.s32.totalorder %s289, %s290
      %p301 = scmp.eq.s32.totalorder %s35, 0
      %p302 = por %p300, %p301
      %p303 = scmp.ne.s32.totalorder %s289, %s290
      %p304 = scmp.eq.s32.totalorder %s36, 7
      %p305 = por %p303, %p304
      %p307 = scmp.ne.s32.totalorder %s290, %s306
      %p308 = scmp.eq.s32.totalorder %s36, 0
      %p309 = por %p307, %p308
      %s310 = ssub.s32 %s38, %s45
      %p311 = scmp.eq.s32.totalorder %s310, 0
      %s313 = sadd.s32 %s312, 1
      %s314 = scalar_select %p311, %s312, %s313
      %p317 = pneg %p311
      %p318 = scmp.eq.s32.totalorder %s30, 7
      %p319 = por %p317, %p318
      %p320 = scmp.ne.s32.totalorder %s312, %s315
      %p321 = scmp.eq.s32.totalorder %s30, 0
      %p322 = por %p320, %p321
      %p323 = scmp.ne.s32.totalorder %s312, %s315
      %p324 = scmp.eq.s32.totalorder %s35, 7
      %p325 = por %p323, %p324
      %p326 = scmp.ne.s32.totalorder %s315, %s316
      %p327 = scmp.eq.s32.totalorder %s35, 0
      %p328 = por %p326, %p327
      %p329 = scmp.ne.s32.totalorder %s315, %s316
      %p330 = scmp.eq.s32.totalorder %s36, 7
      %p331 = por %p329, %p330
      %p333 = scmp.ne.s32.totalorder %s316, %s332
      %p334 = scmp.eq.s32.totalorder %s36, 0
      %p335 = por %p333, %p334
      %s336 = ssub.s32 %s38, %s45
      %p337 = scmp.eq.s32.totalorder %s336, 0
      %s339 = sadd.s32 %s338, 1
      %s340 = scalar_select %p337, %s338, %s339
      %p343 = pneg %p337
      %p344 = scmp.eq.s32.totalorder %s30, 7
      %p345 = por %p343, %p344
      %p346 = scmp.ne.s32.totalorder %s338, %s341
      %p347 = scmp.eq.s32.totalorder %s30, 0
      %p348 = por %p346, %p347
      %p349 = scmp.ne.s32.totalorder %s338, %s341
      %p350 = scmp.eq.s32.totalorder %s35, 7
      %p351 = por %p349, %p350
      %p352 = scmp.ne.s32.totalorder %s341, %s342
      %p353 = scmp.eq.s32.totalorder %s35, 0
      %p354 = por %p352, %p353
      %p355 = scmp.ne.s32.totalorder %s341, %s342
      %p356 = scmp.eq.s32.totalorder %s36, 7
      %p357 = por %p355, %p356
      %p359 = scmp.ne.s32.totalorder %s342, %s358
      %p360 = scmp.eq.s32.totalorder %s36, 0
      %p361 = por %p359, %p360
      %s362 = ssub.s32 %s38, %s45
      %p363 = scmp.eq.s32.totalorder %s362, 0
      %s365 = sadd.s32 %s364, 1
      %s366 = scalar_select %p363, %s364, %s365
      %p369 = pneg %p363
      %p370 = scmp.eq.s32.totalorder %s30, 7
      %p371 = por %p369, %p370
      %p372 = scmp.ne.s32.totalorder %s364, %s367
      %p373 = scmp.eq.s32.totalorder %s30, 0
      %p374 = por %p372, %p373
      %p375 = scmp.ne.s32.totalorder %s364, %s367
      %p376 = scmp.eq.s32.totalorder %s35, 7
      %p377 = por %p375, %p376
      %p378 = scmp.ne.s32.totalorder %s367, %s368
      %p379 = scmp.eq.s32.totalorder %s35, 0
      %p380 = por %p378, %p379
      %p381 = scmp.ne.s32.totalorder %s367, %s368
      %p382 = scmp.eq.s32.totalorder %s36, 7
      %p383 = por %p381, %p382
      %p385 = scmp.ne.s32.totalorder %s368, %s384
      %p386 = scmp.eq.s32.totalorder %s36, 0
      %p387 = por %p385, %p386
      %s389 = sadd.s32 %s388, 1
      %p392 = scmp.eq.s32.totalorder %s30, 7
      %p393 = scmp.ne.s32.totalorder %s388, %s390
      %p394 = scmp.eq.s32.totalorder %s30, 0
      %p395 = por %p393, %p394
      %p396 = scmp.ne.s32.totalorder %s388, %s390
      %p397 = scmp.eq.s32.totalorder %s35, 7
      %p398 = por %p396, %p397
      %p399 = scmp.ne.s32.totalorder %s390, %s391
      %p400 = scmp.eq.s32.totalorder %s35, 0
      %p401 = por %p399, %p400
      %p402 = scmp.ne.s32.totalorder %s390, %s391
      %p403 = scmp.eq.s32.totalorder %s36, 7
      %p404 = por %p402, %p403
      %p406 = scmp.ne.s32.totalorder %s391, %s405
      %p407 = scmp.eq.s32.totalorder %s36, 0
      %p408 = por %p406, %p407
      %s410 = sadd.s32 %s409, 1
      %p413 = scmp.eq.s32.totalorder %s30, 7
      %p414 = scmp.ne.s32.totalorder %s409, %s411
      %p415 = scmp.eq.s32.totalorder %s30, 0
      %p416 = por %p414, %p415
      %p417 = scmp.ne.s32.totalorder %s409, %s411
      %p418 = scmp.eq.s32.totalorder %s35, 7
      %p419 = por %p417, %p418
      %p420 = scmp.ne.s32.totalorder %s411, %s412
      %p421 = scmp.eq.s32.totalorder %s35, 0
      %p422 = por %p420, %p421
      %p423 = scmp.ne.s32.totalorder %s411, %s412
      %p424 = scmp.eq.s32.totalorder %s36, 7
      %p425 = por %p423, %p424
      %p427 = scmp.ne.s32.totalorder %s412, %s426
      %p428 = scmp.eq.s32.totalorder %s36, 0
      %p429 = por %p427, %p428
      %s430 = ssub.s32 %s37, %s49
      %p431 = scmp.eq.s32.totalorder %s430, 0
      %s433 = sadd.s32 %s432, 1
      %s434 = scalar_select %p431, %s432, %s433
      %p437 = pneg %p431
      %p438 = scmp.eq.s32.totalorder %s30, 7
      %p439 = por %p437, %p438
      %p440 = scmp.ne.s32.totalorder %s432, %s435
      %p441 = scmp.eq.s32.totalorder %s30, 0
      %p442 = por %p440, %p441
      %p443 = scmp.ne.s32.totalorder %s432, %s435
      %p444 = scmp.eq.s32.totalorder %s35, 7
      %p445 = por %p443, %p444
      %p446 = scmp.ne.s32.totalorder %s435, %s436
      %p447 = scmp.eq.s32.totalorder %s35, 0
      %p448 = por %p446, %p447
      %p449 = scmp.ne.s32.totalorder %s435, %s436
      %p450 = scmp.eq.s32.totalorder %s36, 7
      %p451 = por %p449, %p450
      %p453 = scmp.ne.s32.totalorder %s436, %s452
      %p454 = scmp.eq.s32.totalorder %s36, 0
      %p455 = por %p453, %p454
      %p456 = scmp.le.s32.totalorder 1, %s30
      %p457 = scmp.lt.s32.totalorder %s30, 9
      %p458 = pnand %p456, %p457
      %p459 = pneg %p458
      // Predicated region
      $region9: #{wav2vec2bert_hybrid_forward.3} parent=5 // pred_check
        _
      $region10: #{wav2vec2bert_hybrid_forward.3} parent=5 // pred_check_branch
        %461 = sbr.rel (%p458) target = $region12
      $region11: #{wav2vec2bert_hybrid_forward.3} parent=5 // pred_region
        %s462 = ssub.s32 %s30, 1
        // Predicated region
        $region13: #{wav2vec2bert_hybrid_forward.3} parent=11 // pred_check
          %p463 = pneg %p401
        $region14: #{wav2vec2bert_hybrid_forward.3} parent=11 // pred_check_branch
          %465 = sbr.rel (%p463) target = $region16
        $region15: #{wav2vec2bert_hybrid_forward.3} parent=11 // pred_region
          _
        $region16: #{wav2vec2bert_hybrid_forward.3} parent=11 // pred_fallthru
          _
        // Predicated region
        $region17: #{wav2vec2bert_hybrid_forward.3} parent=11 // pred_check
          %p466 = pneg %p422
        $region18: #{wav2vec2bert_hybrid_forward.3} parent=11 // pred_check_branch
          %468 = sbr.rel (%p466) target = $region20
        $region19: #{wav2vec2bert_hybrid_forward.3} parent=11 // pred_region
          _
        $region20: #{wav2vec2bert_hybrid_forward.3} parent=11 // pred_fallthru
          _
      $region12: #{wav2vec2bert_hybrid_forward.3} parent=5 // pred_fallthru
        _
      %p469 = scmp.lt.s32.totalorder %s30, 8
      // Predicated region
      $region21: #{wav2vec2bert_hybrid_forward.3} parent=5 // pred_check
        %p470 = pneg %p469
      $region22: #{wav2vec2bert_hybrid_forward.3} parent=5 // pred_check_branch
        %472 = sbr.rel (%p470) target = $region24
      $region23: #{wav2vec2bert_hybrid_forward.3} parent=5 // pred_region
        // Predicated region
        $region25: #{wav2vec2bert_hybrid_forward.3} parent=23 // pred_check
          %p473 = pneg %p62
        $region26: #{wav2vec2bert_hybrid_forward.3} parent=23 // pred_check_branch
          %475 = sbr.rel (%p473) target = $region28
        $region27: #{wav2vec2bert_hybrid_forward.3} parent=23 // pred_region
          %p476 = scmp.lt.s32.totalorder %s37, 1
          %s477 = scalar_select %p476, %s37, 1
          %s478 = smul.addr %s477, 16
          %s479 = smul.addr %s478, 4
          %s480 = scalar_lea.vmem %s0, %s479
        $region28: #{wav2vec2bert_hybrid_forward.3} parent=23 // pred_fallthru
          _
        // Predicated region
        $region29: #{wav2vec2bert_hybrid_forward.3} parent=23 // pred_check
          %p481 = pneg %p88
        $region30: #{wav2vec2bert_hybrid_forward.3} parent=23 // pred_check_branch
          %483 = sbr.rel (%p481) target = $region32
        $region31: #{wav2vec2bert_hybrid_forward.3} parent=23 // pred_region
          %p484 = scmp.lt.s32.totalorder %s38, 3
          %s485 = scalar_select %p484, %s38, 3
          %s486 = scalar_lea.vmem %s1, %s485
        $region32: #{wav2vec2bert_hybrid_forward.3} parent=23 // pred_fallthru
          _
        // Predicated region
        $region33: #{wav2vec2bert_hybrid_forward.3} parent=23 // pred_check
          %p487 = pneg %p114
        $region34: #{wav2vec2bert_hybrid_forward.3} parent=23 // pred_check_branch
          %489 = sbr.rel (%p487) target = $region36
        $region35: #{wav2vec2bert_hybrid_forward.3} parent=23 // pred_region
          %p490 = scmp.lt.s32.totalorder %s38, 3
          %s491 = scalar_select %p490, %s38, 3
          %s492 = scalar_lea.vmem %s2, %s491
        $region36: #{wav2vec2bert_hybrid_forward.3} parent=23 // pred_fallthru
          _
        // Predicated region
        $region37: #{wav2vec2bert_hybrid_forward.3} parent=23 // pred_check
          %p493 = pneg %p140
        $region38: #{wav2vec2bert_hybrid_forward.3} parent=23 // pred_check_branch
          %495 = sbr.rel (%p493) target = $region40
        $region39: #{wav2vec2bert_hybrid_forward.3} parent=23 // pred_region
          %p496 = scmp.lt.s32.totalorder %s38, 3
          %s497 = scalar_select %p496, %s38, 3
          %s498 = smul.addr %s497, 48
          %s499 = smul.addr %s498, 4
          %s500 = scalar_lea.vmem %s3, %s499
        $region40: #{wav2vec2bert_hybrid_forward.3} parent=23 // pred_fallthru
          _
        // Predicated region
        $region41: #{wav2vec2bert_hybrid_forward.3} parent=23 // pred_check
          %p501 = pneg %p166
        $region42: #{wav2vec2bert_hybrid_forward.3} parent=23 // pred_check_branch
          %503 = sbr.rel (%p501) target = $region44
        $region43: #{wav2vec2bert_hybrid_forward.3} parent=23 // pred_region
          %p504 = scmp.lt.s32.totalorder %s38, 3
          %s505 = scalar_select %p504, %s38, 3
          %s506 = smul.addr %s505, 3
          %s507 = scalar_lea.vmem %s4, %s506
        $region44: #{wav2vec2bert_hybrid_forward.3} parent=23 // pred_fallthru
          _
        // Predicated region
        $region45: #{wav2vec2bert_hybrid_forward.3} parent=23 // pred_check
          %p508 = pneg %p192
        $region46: #{wav2vec2bert_hybrid_forward.3} parent=23 // pred_check_branch
          %510 = sbr.rel (%p508) target = $region48
        $region47: #{wav2vec2bert_hybrid_forward.3} parent=23 // pred_region
          %p511 = scmp.lt.s32.totalorder %s38, 3
          %s512 = scalar_select %p511, %s38, 3
          %s513 = smul.addr %s512, 16
          %s514 = smul.addr %s513, 4
          %s515 = scalar_lea.vmem %s5, %s514
        $region48: #{wav2vec2bert_hybrid_forward.3} parent=23 // pred_fallthru
          _
        // Predicated region
        $region49: #{wav2vec2bert_hybrid_forward.3} parent=23 // pred_check
          %p516 = pneg %p218
        $region50: #{wav2vec2bert_hybrid_forward.3} parent=23 // pred_check_branch
          %518 = sbr.rel (%p516) target = $region52
        $region51: #{wav2vec2bert_hybrid_forward.3} parent=23 // pred_region
          %p519 = scmp.lt.s32.totalorder %s38, 3
          %s520 = scalar_select %p519, %s38, 3
          %s521 = scalar_lea.vmem %s6, %s520
        $region52: #{wav2vec2bert_hybrid_forward.3} parent=23 // pred_fallthru
          _
        // Predicated region
        $region53: #{wav2vec2bert_hybrid_forward.3} parent=23 // pred_check
          %p522 = pneg %p244
        $region54: #{wav2vec2bert_hybrid_forward.3} parent=23 // pred_check_branch
          %524 = sbr.rel (%p522) target = $region56
        $region55: #{wav2vec2bert_hybrid_forward.3} parent=23 // pred_region
          %p525 = scmp.lt.s32.totalorder %s38, 3
          %s526 = scalar_select %p525, %s38, 3
          %s527 = scalar_lea.vmem %s7, %s526
        $region56: #{wav2vec2bert_hybrid_forward.3} parent=23 // pred_fallthru
          _
        // Predicated region
        $region57: #{wav2vec2bert_hybrid_forward.3} parent=23 // pred_check
          %p528 = pneg %p270
        $region58: #{wav2vec2bert_hybrid_forward.3} parent=23 // pred_check_branch
          %530 = sbr.rel (%p528) target = $region60
        $region59: #{wav2vec2bert_hybrid_forward.3} parent=23 // pred_region
          %p531 = scmp.lt.s32.totalorder %s38, 3
          %s532 = scalar_select %p531, %s38, 3
          %s533 = scalar_lea.vmem %s8, %s532
        $region60: #{wav2vec2bert_hybrid_forward.3} parent=23 // pred_fallthru
          _
        // Predicated region
        $region61: #{wav2vec2bert_hybrid_forward.3} parent=23 // pred_check
          %p534 = pneg %p296
        $region62: #{wav2vec2bert_hybrid_forward.3} parent=23 // pred_check_branch
          %536 = sbr.rel (%p534) target = $region64
        $region63: #{wav2vec2bert_hybrid_forward.3} parent=23 // pred_region
          %s537 = sand.u32 %s286, 1
          %s538 = scalar_lea.sflag [#allocation4], %s537
          %s539 = sand.u32 %s286, 1
          %s540 = smul.addr %s539, 128
          %s541 = scalar_lea.vmem [#allocation3], %s540
          %s543 = ssub.s32 2048, 2048
          %544 = vsyncadd %s538, %s543
          %s545 = smul.addr %s38, 32
          %s546 = smul.addr %s545, 64
          %s547 = scalar_lea.hbm %s9, %s546
          %s548 = sshll.u32 %s541, 4
          %s549 = int_to_ptr.vmem [resolvable:$true] %s548
          %554 = dma.hbm_to_vmem [thread:$0]  %s547, 2048, %s549, %s538, 128, 128, 8
        $region64: #{wav2vec2bert_hybrid_forward.3} parent=23 // pred_fallthru
          _
        // Predicated region
        $region65: #{wav2vec2bert_hybrid_forward.3} parent=23 // pred_check
          %p555 = pneg %p322
        $region66: #{wav2vec2bert_hybrid_forward.3} parent=23 // pred_check_branch
          %557 = sbr.rel (%p555) target = $region68
        $region67: #{wav2vec2bert_hybrid_forward.3} parent=23 // pred_region
          %p558 = scmp.lt.s32.totalorder %s38, 3
          %s559 = scalar_select %p558, %s38, 3
          %s560 = smul.addr %s559, 2
          %s561 = scalar_lea.vmem %s10, %s560
        $region68: #{wav2vec2bert_hybrid_forward.3} parent=23 // pred_fallthru
          _
        // Predicated region
        $region69: #{wav2vec2bert_hybrid_forward.3} parent=23 // pred_check
          %p562 = pneg %p348
        $region70: #{wav2vec2bert_hybrid_forward.3} parent=23 // pred_check_branch
          %564 = sbr.rel (%p562) target = $region72
        $region71: #{wav2vec2bert_hybrid_forward.3} parent=23 // pred_region
          %s565 = sand.u32 %s338, 1
          %s566 = scalar_lea.sflag [#allocation7], %s565
          %s567 = sand.u32 %s338, 1
          %s568 = smul.addr %s567, 128
          %s569 = scalar_lea.vmem [#allocation6], %s568
          %s571 = ssub.s32 2048, 2048
          %572 = vsyncadd %s566, %s571
          %s573 = smul.addr %s38, 32
          %s574 = smul.addr %s573, 64
          %s575 = scalar_lea.hbm %s11, %s574
          %s576 = sshll.u32 %s569, 4
          %s577 = int_to_ptr.vmem [resolvable:$true] %s576
          %582 = dma.hbm_to_vmem [thread:$0]  %s575, 2048, %s577, %s566, 64, 64, 4
        $region72: #{wav2vec2bert_hybrid_forward.3} parent=23 // pred_fallthru
          _
        // Predicated region
        $region73: #{wav2vec2bert_hybrid_forward.3} parent=23 // pred_check
          %p583 = pneg %p374
        $region74: #{wav2vec2bert_hybrid_forward.3} parent=23 // pred_check_branch
          %585 = sbr.rel (%p583) target = $region76
        $region75: #{wav2vec2bert_hybrid_forward.3} parent=23 // pred_region
          %p586 = scmp.lt.s32.totalorder %s38, 3
          %s587 = scalar_select %p586, %s38, 3
          %s588 = scalar_lea.vmem %s12, %s587
        $region76: #{wav2vec2bert_hybrid_forward.3} parent=23 // pred_fallthru
          _
      $region24: #{wav2vec2bert_hybrid_forward.3} parent=5 // pred_fallthru
        _
      %p589 = scmp.le.s32.totalorder 1, %s30
      %p590 = scmp.lt.s32.totalorder %s30, 9
      %p591 = pnand %p589, %p590
      %p592 = pneg %p591
      // Predicated region
      $region77: #{wav2vec2bert_hybrid_forward.3} parent=5 // pred_check
        _
      $region78: #{wav2vec2bert_hybrid_forward.3} parent=5 // pred_check_branch
        %594 = sbr.rel (%p591) target = $region80
      $region79: #{wav2vec2bert_hybrid_forward.3} parent=5 // pred_region
        %s595 = ssub.s32 %s30, 1
        %s596 = sand.u32 %s289, 1
        %s597 = scalar_lea.sflag [#allocation4], %s596
        %s598 = sand.u32 %s289, 1
        %s599 = smul.addr %s598, 128
        %s600 = scalar_lea.vmem [#allocation3], %s599
        // Predicated region
        $region81: #{wav2vec2bert_hybrid_forward.3} parent=79 // pred_check
          %p601 = pneg %p302
        $region82: #{wav2vec2bert_hybrid_forward.3} parent=79 // pred_check_branch
          %603 = sbr.rel (%p601) target = $region84
        $region83: #{wav2vec2bert_hybrid_forward.3} parent=79 // pred_region
          %604 = dma.done %s597, 2048
        $region84: #{wav2vec2bert_hybrid_forward.3} parent=79 // pred_fallthru
          _
        %s605 = sand.u32 %s341, 1
        %s606 = scalar_lea.sflag [#allocation7], %s605
        %s607 = sand.u32 %s341, 1
        %s608 = smul.addr %s607, 128
        %s609 = scalar_lea.vmem [#allocation6], %s608
        // Predicated region
        $region85: #{wav2vec2bert_hybrid_forward.3} parent=79 // pred_check
          %p610 = pneg %p354
        $region86: #{wav2vec2bert_hybrid_forward.3} parent=79 // pred_check_branch
          %612 = sbr.rel (%p610) target = $region88
        $region87: #{wav2vec2bert_hybrid_forward.3} parent=79 // pred_region
          %613 = dma.done %s606, 2048
        $region88: #{wav2vec2bert_hybrid_forward.3} parent=79 // pred_fallthru
          _
        %p614 = scmp.lt.s32.totalorder %s39, 1
        %s615 = scalar_select %p614, %s39, 1
        %s616 = smul.addr %s615, 16
        %s617 = smul.addr %s616, 4
        %s618 = scalar_lea.vmem %s0, %s617
        %p619 = pneg %p68
        %p620 = pneg %p65
        %p621 = scmp.lt.s32.totalorder %s40, 3
        %s622 = scalar_select %p621, %s40, 3
        %s623 = scalar_lea.vmem %s1, %s622
        %p624 = pneg %p94
        %p625 = pneg %p91
        %p626 = scmp.lt.s32.totalorder %s40, 3
        %s627 = scalar_select %p626, %s40, 3
        %s628 = scalar_lea.vmem %s2, %s627
        %p629 = pneg %p120
        %p630 = pneg %p117
        %p631 = scmp.lt.s32.totalorder %s40, 3
        %s632 = scalar_select %p631, %s40, 3
        %s633 = smul.addr %s632, 48
        %s634 = smul.addr %s633, 4
        %s635 = scalar_lea.vmem %s3, %s634
        %p636 = pneg %p146
        %p637 = pneg %p143
        %p638 = scmp.lt.s32.totalorder %s40, 3
        %s639 = scalar_select %p638, %s40, 3
        %s640 = smul.addr %s639, 3
        %s641 = scalar_lea.vmem %s4, %s640
        %p642 = pneg %p172
        %p643 = pneg %p169
        %p644 = scmp.lt.s32.totalorder %s40, 3
        %s645 = scalar_select %p644, %s40, 3
        %s646 = smul.addr %s645, 16
        %s647 = smul.addr %s646, 4
        %s648 = scalar_lea.vmem %s5, %s647
        %p649 = pneg %p198
        %p650 = pneg %p195
        %p651 = scmp.lt.s32.totalorder %s40, 3
        %s652 = scalar_select %p651, %s40, 3
        %s653 = scalar_lea.vmem %s6, %s652
        %p654 = pneg %p224
        %p655 = pneg %p221
        %p656 = scmp.lt.s32.totalorder %s40, 3
        %s657 = scalar_select %p656, %s40, 3
        %s658 = scalar_lea.vmem %s7, %s657
        %p659 = pneg %p250
        %p660 = pneg %p247
        %p661 = scmp.lt.s32.totalorder %s40, 3
        %s662 = scalar_select %p661, %s40, 3
        %s663 = scalar_lea.vmem %s8, %s662
        %p664 = pneg %p276
        %p665 = pneg %p273
        %s666 = sand.u32 %s289, 1
        %s667 = scalar_lea.sflag [#allocation4], %s666
        %s668 = sand.u32 %s289, 1
        %s669 = smul.addr %s668, 128
        %s670 = scalar_lea.vmem [#allocation3], %s669
        %p671 = pneg %p302
        %p672 = pneg %p299
        %p673 = scmp.lt.s32.totalorder %s40, 3
        %s674 = scalar_select %p673, %s40, 3
        %s675 = smul.addr %s674, 2
        %s676 = scalar_lea.vmem %s10, %s675
        %p677 = pneg %p328
        %p678 = pneg %p325
        %s679 = sand.u32 %s341, 1
        %s680 = scalar_lea.sflag [#allocation7], %s679
        %s681 = sand.u32 %s341, 1
        %s682 = smul.addr %s681, 128
        %s683 = scalar_lea.vmem [#allocation6], %s682
        %p684 = pneg %p354
        %p685 = pneg %p351
        %p686 = scmp.lt.s32.totalorder %s40, 3
        %s687 = scalar_select %p686, %s40, 3
        %s688 = scalar_lea.vmem %s12, %s687
        %p689 = pneg %p380
        %p690 = pneg %p377
        %p691 = pneg %p401
        %p692 = pneg %p398
        %p693 = pneg %p422
        %p694 = pneg %p419
        %p695 = pneg %p448
        %p696 = pneg %p445
        %s697 = sand.u32 %s435, 1
        %s698 = scalar_lea.sflag [#allocation5], %s697
        %s699 = sand.u32 %s435, 1
        %s700 = scalar_lea.vmem [#allocation8], %s699
        %p701 = scmp.lt.s32.totalorder %s39, 1
        %s702 = scalar_select %p701, %s39, 1
        %s703 = smul.addr %s702, 16
        %s704 = smul.addr %s703, 4
        %s705 = scalar_lea.vmem %s0, %s704
        %p706 = scmp.lt.s32.totalorder %s40, 3
        %s707 = scalar_select %p706, %s40, 3
        %s708 = scalar_lea.vmem %s1, %s707
        %p709 = scmp.lt.s32.totalorder %s40, 3
        %s710 = scalar_select %p709, %s40, 3
        %s711 = scalar_lea.vmem %s2, %s710
        %p712 = scmp.lt.s32.totalorder %s40, 3
        %s713 = scalar_select %p712, %s40, 3
        %s714 = smul.addr %s713, 48
        %s715 = smul.addr %s714, 4
        %s716 = scalar_lea.vmem %s3, %s715
        %p717 = scmp.lt.s32.totalorder %s40, 3
        %s718 = scalar_select %p717, %s40, 3
        %s719 = smul.addr %s718, 3
        %s720 = scalar_lea.vmem %s4, %s719
        %p721 = scmp.lt.s32.totalorder %s40, 3
        %s722 = scalar_select %p721, %s40, 3
        %s723 = smul.addr %s722, 16
        %s724 = smul.addr %s723, 4
        %s725 = scalar_lea.vmem %s5, %s724
        %p726 = scmp.lt.s32.totalorder %s40, 3
        %s727 = scalar_select %p726, %s40, 3
        %s728 = scalar_lea.vmem %s6, %s727
        %p729 = scmp.lt.s32.totalorder %s40, 3
        %s730 = scalar_select %p729, %s40, 3
        %s731 = scalar_lea.vmem %s7, %s730
        %p732 = scmp.lt.s32.totalorder %s40, 3
        %s733 = scalar_select %p732, %s40, 3
        %s734 = scalar_lea.vmem %s8, %s733
        %p735 = scmp.lt.s32.totalorder %s40, 3
        %s736 = scalar_select %p735, %s40, 3
        %s737 = smul.addr %s736, 2
        %s738 = scalar_lea.vmem %s10, %s737
        %p739 = scmp.lt.s32.totalorder %s40, 3
        %s740 = scalar_select %p739, %s40, 3
        %s741 = scalar_lea.vmem %s12, %s740
        %p743 = scmp.eq.s32.totalorder %s40, 0
        // Predicated region
        $region89: #{wav2vec2bert_hybrid_forward.3} parent=79 // pred_check
          %p744 = pneg %p743
        $region90: #{wav2vec2bert_hybrid_forward.3} parent=79 // pred_check_branch
          %746 = sbr.rel (%p744) target = $region92
        $region91: #{wav2vec2bert_hybrid_forward.3} parent=79 // pred_region
          %v747 = vld [vmem:[%s705] sm:$0xf]
          %v748 = vld [vmem:[%s705 + $0x4] sm:$0xf]
          %v749 = vld [vmem:[%s705 + $0x8] sm:$0xf]
          %v750 = vld [vmem:[%s705 + $0xc] sm:$0xf]
          %v751 = vld [vmem:[%s705 + $0x10] sm:$0xf]
          %v752 = vld [vmem:[%s705 + $0x14] sm:$0xf]
          %v753 = vld [vmem:[%s705 + $0x18] sm:$0xf]
          %v754 = vld [vmem:[%s705 + $0x1c] sm:$0xf]
          %v755 = vld [vmem:[%s705 + $0x20] sm:$0xf]
          %v756 = vld [vmem:[%s705 + $0x24] sm:$0xf]
          %v757 = vld [vmem:[%s705 + $0x28] sm:$0xf]
          %v758 = vld [vmem:[%s705 + $0x2c] sm:$0xf]
          %v759 = vld [vmem:[%s705 + $0x30] sm:$0xf]
          %v760 = vld [vmem:[%s705 + $0x34] sm:$0xf]
          %v761 = vld [vmem:[%s705 + $0x38] sm:$0xf]
          %v762 = vld [vmem:[%s705 + $0x3c] sm:$0xf]
          %v763 = vunpack.c.l.bf16 %v747
          %v764 = vunpack.c.l.bf16 %v748
          %v765 = vunpack.c.l.bf16 %v749
          %v766 = vunpack.c.l.bf16 %v750
          %v767 = vunpack.c.l.bf16 %v751
          %v768 = vunpack.c.l.bf16 %v752
          %v769 = vunpack.c.l.bf16 %v753
          %v770 = vunpack.c.l.bf16 %v754
          %v771 = vunpack.c.l.bf16 %v755
          %v772 = vunpack.c.l.bf16 %v756
          %v773 = vunpack.c.l.bf16 %v757
          %v774 = vunpack.c.l.bf16 %v758
          %v775 = vunpack.c.l.bf16 %v759
          %v776 = vunpack.c.l.bf16 %v760
          %v777 = vunpack.c.l.bf16 %v761
          %v778 = vunpack.c.l.bf16 %v762
          %779 = vst [vmem:[#allocation2] sm:$0xff] %v763
          %780 = vst [vmem:[#allocation2 + $0x8] sm:$0xff] %v764
          %781 = vst [vmem:[#allocation2 + $0x10] sm:$0xff] %v765
          %782 = vst [vmem:[#allocation2 + $0x18] sm:$0xff] %v766
          %783 = vst [vmem:[#allocation2 + $0x20] sm:$0xff] %v767
          %784 = vst [vmem:[#allocation2 + $0x28] sm:$0xff] %v768
          %785 = vst [vmem:[#allocation2 + $0x30] sm:$0xff] %v769
          %786 = vst [vmem:[#allocation2 + $0x38] sm:$0xff] %v770
          %787 = vst [vmem:[#allocation2 + $0x40] sm:$0xff] %v771
          %788 = vst [vmem:[#allocation2 + $0x48] sm:$0xff] %v772
          %789 = vst [vmem:[#allocation2 + $0x50] sm:$0xff] %v773
          %790 = vst [vmem:[#allocation2 + $0x58] sm:$0xff] %v774
          %791 = vst [vmem:[#allocation2 + $0x60] sm:$0xff] %v775
          %792 = vst [vmem:[#allocation2 + $0x68] sm:$0xff] %v776
          %793 = vst [vmem:[#allocation2 + $0x70] sm:$0xff] %v777
          %794 = vst [vmem:[#allocation2 + $0x78] sm:$0xff] %v778
        $region92: #{wav2vec2bert_hybrid_forward.3} parent=79 // pred_fallthru
          _
        %v795 = vld [vmem:[#allocation2] sm:$0xff]
        %v796 = vld [vmem:[#allocation2 + $0x8] sm:$0xff]
        %v797 = vld [vmem:[#allocation2 + $0x10] sm:$0xff]
        %v798 = vld [vmem:[#allocation2 + $0x18] sm:$0xff]
        %v799 = vld [vmem:[#allocation2 + $0x20] sm:$0xff]
        %v800 = vld [vmem:[#allocation2 + $0x28] sm:$0xff]
        %v801 = vld [vmem:[#allocation2 + $0x30] sm:$0xff]
        %v802 = vld [vmem:[#allocation2 + $0x38] sm:$0xff]
        %v803 = vld [vmem:[#allocation2 + $0x40] sm:$0xff]
        %v804 = vld [vmem:[#allocation2 + $0x48] sm:$0xff]
        %v805 = vld [vmem:[#allocation2 + $0x50] sm:$0xff]
        %v806 = vld [vmem:[#allocation2 + $0x58] sm:$0xff]
        %v807 = vld [vmem:[#allocation2 + $0x60] sm:$0xff]
        %v808 = vld [vmem:[#allocation2 + $0x68] sm:$0xff]
        %v809 = vld [vmem:[#allocation2 + $0x70] sm:$0xff]
        %v810 = vld [vmem:[#allocation2 + $0x78] sm:$0xff]
        %v811 = vld [vmem:[%s708] sm:$0x1]
        %v812 = vld [vmem:[%s711] sm:$0x1]
        %813 = vadd.xlane.f32.xlu0 %v795
        %v814 = vpop.xlane.xlu0 %813
        %815 = vadd.xlane.f32.xlu0 %v796
        %v816 = vpop.xlane.xlu0 %815
        %817 = vadd.xlane.f32.xlu0 %v797
        %v818 = vpop.xlane.xlu0 %817
        %819 = vadd.xlane.f32.xlu0 %v798
        %v820 = vpop.xlane.xlu0 %819
        %821 = vadd.xlane.f32.xlu0 %v799
        %v822 = vpop.xlane.xlu0 %821
        %823 = vadd.xlane.f32.xlu0 %v800
        %v824 = vpop.xlane.xlu0 %823
        %825 = vadd.xlane.f32.xlu0 %v801
        %v826 = vpop.xlane.xlu0 %825
        %827 = vadd.xlane.f32.xlu0 %v802
        %v828 = vpop.xlane.xlu0 %827
        %829 = vadd.xlane.f32.xlu0 %v803
        %v830 = vpop.xlane.xlu0 %829
        %831 = vadd.xlane.f32.xlu0 %v804
        %v832 = vpop.xlane.xlu0 %831
        %833 = vadd.xlane.f32.xlu0 %v805
        %v834 = vpop.xlane.xlu0 %833
        %835 = vadd.xlane.f32.xlu0 %v806
        %v836 = vpop.xlane.xlu0 %835
        %837 = vadd.xlane.f32.xlu0 %v807
        %v838 = vpop.xlane.xlu0 %837
        %839 = vadd.xlane.f32.xlu0 %v808
        %v840 = vpop.xlane.xlu0 %839
        %841 = vadd.xlane.f32.xlu0 %v809
        %v842 = vpop.xlane.xlu0 %841
        %843 = vadd.xlane.f32.xlu0 %v810
        %v844 = vpop.xlane.xlu0 %843
        %v845 = vrcp.pop 128.0
        %v846 = vmul.f32 %v814, %v845
        %v847 = vmul.f32 %v816, %v845
        %v848 = vmul.f32 %v818, %v845
        %v849 = vmul.f32 %v820, %v845
        %v850 = vmul.f32 %v822, %v845
        %v851 = vmul.f32 %v824, %v845
        %v852 = vmul.f32 %v826, %v845
        %v853 = vmul.f32 %v828, %v845
        %v854 = vmul.f32 %v830, %v845
        %v855 = vmul.f32 %v832, %v845
        %v856 = vmul.f32 %v834, %v845
        %v857 = vmul.f32 %v836, %v845
        %v858 = vmul.f32 %v838, %v845
        %v859 = vmul.f32 %v840, %v845
        %v860 = vmul.f32 %v842, %v845
        %v861 = vmul.f32 %v844, %v845
        %v862 = vsub.f32 %v795, %v846
        %v863 = vsub.f32 %v796, %v847
        %v864 = vsub.f32 %v797, %v848
        %v865 = vsub.f32 %v798, %v849
        %v866 = vsub.f32 %v799, %v850
        %v867 = vsub.f32 %v800, %v851
        %v868 = vsub.f32 %v801, %v852
        %v869 = vsub.f32 %v802, %v853
        %v870 = vsub.f32 %v803, %v854
        %v871 = vsub.f32 %v804, %v855
        %v872 = vsub.f32 %v805, %v856
        %v873 = vsub.f32 %v806, %v857
        %v874 = vsub.f32 %v807, %v858
        %v875 = vsub.f32 %v808, %v859
        %v876 = vsub.f32 %v809, %v860
        %v877 = vsub.f32 %v810, %v861
        %v878 = vmul.f32 %v862, %v862
        %v879 = vmul.f32 %v863, %v863
        %v880 = vmul.f32 %v864, %v864
        %v881 = vmul.f32 %v865, %v865
        %v882 = vmul.f32 %v866, %v866
        %v883 = vmul.f32 %v867, %v867
        %v884 = vmul.f32 %v868, %v868
        %v885 = vmul.f32 %v869, %v869
        %v886 = vmul.f32 %v870, %v870
        %v887 = vmul.f32 %v871, %v871
        %v888 = vmul.f32 %v872, %v872
        %v889 = vmul.f32 %v873, %v873
        %v890 = vmul.f32 %v874, %v874
        %v891 = vmul.f32 %v875, %v875
        %v892 = vmul.f32 %v876, %v876
        %v893 = vmul.f32 %v877, %v877
        %894 = vadd.xlane.f32.xlu0 %v878
        %v895 = vpop.xlane.xlu0 %894
        %896 = vadd.xlane.f32.xlu0 %v879
        %v897 = vpop.xlane.xlu0 %896
        %898 = vadd.xlane.f32.xlu0 %v880
        %v899 = vpop.xlane.xlu0 %898
        %900 = vadd.xlane.f32.xlu0 %v881
        %v901 = vpop.xlane.xlu0 %900
        %902 = vadd.xlane.f32.xlu0 %v882
        %v903 = vpop.xlane.xlu0 %902
        %904 = vadd.xlane.f32.xlu0 %v883
        %v905 = vpop.xlane.xlu0 %904
        %906 = vadd.xlane.f32.xlu0 %v884
        %v907 = vpop.xlane.xlu0 %906
        %908 = vadd.xlane.f32.xlu0 %v885
        %v909 = vpop.xlane.xlu0 %908
        %910 = vadd.xlane.f32.xlu0 %v886
        %v911 = vpop.xlane.xlu0 %910
        %912 = vadd.xlane.f32.xlu0 %v887
        %v913 = vpop.xlane.xlu0 %912
        %914 = vadd.xlane.f32.xlu0 %v888
        %v915 = vpop.xlane.xlu0 %914
        %916 = vadd.xlane.f32.xlu0 %v889
        %v917 = vpop.xlane.xlu0 %916
        %918 = vadd.xlane.f32.xlu0 %v890
        %v919 = vpop.xlane.xlu0 %918
        %920 = vadd.xlane.f32.xlu0 %v891
        %v921 = vpop.xlane.xlu0 %920
        %922 = vadd.xlane.f32.xlu0 %v892
        %v923 = vpop.xlane.xlu0 %922
        %924 = vadd.xlane.f32.xlu0 %v893
        %v925 = vpop.xlane.xlu0 %924
        %v926 = vmul.f32 %v895, %v845
        %v927 = vmul.f32 %v897, %v845
        %v928 = vmul.f32 %v899, %v845
        %v929 = vmul.f32 %v901, %v845
        %v930 = vmul.f32 %v903, %v845
        %v931 = vmul.f32 %v905, %v845
        %v932 = vmul.f32 %v907, %v845
        %v933 = vmul.f32 %v909, %v845
        %v934 = vmul.f32 %v911, %v845
        %v935 = vmul.f32 %v913, %v845
        %v936 = vmul.f32 %v915, %v845
        %v937 = vmul.f32 %v917, %v845
        %v938 = vmul.f32 %v919, %v845
        %v939 = vmul.f32 %v921, %v845
        %v940 = vmul.f32 %v923, %v845
        %v941 = vmul.f32 %v925, %v845
        %v942 = vadd.f32 %v926, 1e-05
        %v943 = vadd.f32 %v927, 1e-05
        %v944 = vadd.f32 %v928, 1e-05
        %v945 = vadd.f32 %v929, 1e-05
        %v946 = vadd.f32 %v930, 1e-05
        %v947 = vadd.f32 %v931, 1e-05
        %v948 = vadd.f32 %v932, 1e-05
        %v949 = vadd.f32 %v933, 1e-05
        %v950 = vadd.f32 %v934, 1e-05
        %v951 = vadd.f32 %v935, 1e-05
        %v952 = vadd.f32 %v936, 1e-05
        %v953 = vadd.f32 %v937, 1e-05
        %v954 = vadd.f32 %v938, 1e-05
        %v955 = vadd.f32 %v939, 1e-05
        %v956 = vadd.f32 %v940, 1e-05
        %v957 = vadd.f32 %v941, 1e-05
        %v958 = vrsqrt.pop %v942
        %v959 = vrsqrt.pop %v943
        %v960 = vrsqrt.pop %v944
        %v961 = vrsqrt.pop %v945
        %v962 = vrsqrt.pop %v946
        %v963 = vrsqrt.pop %v947
        %v964 = vrsqrt.pop %v948
        %v965 = vrsqrt.pop %v949
        %v966 = vrsqrt.pop %v950
        %v967 = vrsqrt.pop %v951
        %v968 = vrsqrt.pop %v952
        %v969 = vrsqrt.pop %v953
        %v970 = vrsqrt.pop %v954
        %v971 = vrsqrt.pop %v955
        %v972 = vrsqrt.pop %v956
        %v973 = vrsqrt.pop %v957
        %v974 = vmul.f32 %v862, %v958
        %v975 = vmul.f32 %v863, %v959
        %v976 = vmul.f32 %v864, %v960
        %v977 = vmul.f32 %v865, %v961
        %v978 = vmul.f32 %v866, %v962
        %v979 = vmul.f32 %v867, %v963
        %v980 = vmul.f32 %v868, %v964
        %v981 = vmul.f32 %v869, %v965
        %v982 = vmul.f32 %v870, %v966
        %v983 = vmul.f32 %v871, %v967
        %v984 = vmul.f32 %v872, %v968
        %v985 = vmul.f32 %v873, %v969
        %v986 = vmul.f32 %v874, %v970
        %v987 = vmul.f32 %v875, %v971
        %v988 = vmul.f32 %v876, %v972
        %v989 = vmul.f32 %v877, %v973
        %v991 = vlaneseq
        %v992 = vshrl.u32 %v991, 7
        %v993 = vsub.s32 0, %v992
        %v994 = vrot.slane %v811, %v993
        %v996 = vmul.f32 %v974, %v994
        %v997 = vmul.f32 %v975, %v994
        %v998 = vmul.f32 %v976, %v994
        %v999 = vmul.f32 %v977, %v994
        %v1000 = vmul.f32 %v978, %v994
        %v1001 = vmul.f32 %v979, %v994
        %v1002 = vmul.f32 %v980, %v994
        %v1003 = vmul.f32 %v981, %v994
        %v1004 = vmul.f32 %v982, %v994
        %v1005 = vmul.f32 %v983, %v994
        %v1006 = vmul.f32 %v984, %v994
        %v1007 = vmul.f32 %v985, %v994
        %v1008 = vmul.f32 %v986, %v994
        %v1009 = vmul.f32 %v987, %v994
        %v1010 = vmul.f32 %v988, %v994
        %v1011 = vmul.f32 %v989, %v994
        %v1013 = vlaneseq
        %v1014 = vshrl.u32 %v1013, 7
        %v1015 = vsub.s32 0, %v1014
        %v1016 = vrot.slane %v812, %v1015
        %v1018 = vadd.f32 %v996, %v1016
        %v1019 = vadd.f32 %v997, %v1016
        %v1020 = vadd.f32 %v998, %v1016
        %v1021 = vadd.f32 %v999, %v1016
        %v1022 = vadd.f32 %v1000, %v1016
        %v1023 = vadd.f32 %v1001, %v1016
        %v1024 = vadd.f32 %v1002, %v1016
        %v1025 = vadd.f32 %v1003, %v1016
        %v1026 = vadd.f32 %v1004, %v1016
        %v1027 = vadd.f32 %v1005, %v1016
        %v1028 = vadd.f32 %v1006, %v1016
        %v1029 = vadd.f32 %v1007, %v1016
        %v1030 = vadd.f32 %v1008, %v1016
        %v1031 = vadd.f32 %v1009, %v1016
        %v1032 = vadd.f32 %v1010, %v1016
        %v1033 = vadd.f32 %v1011, %v1016
        %v1034 = vpack.c.bf16 %v1019, %v1018
        %v1035 = vpack.c.bf16 %v1021, %v1020
        %v1036 = vpack.c.bf16 %v1023, %v1022
        %v1037 = vpack.c.bf16 %v1025, %v1024
        %v1038 = vpack.c.bf16 %v1027, %v1026
        %v1039 = vpack.c.bf16 %v1029, %v1028
        %v1040 = vpack.c.bf16 %v1031, %v1030
        %v1041 = vpack.c.bf16 %v1033, %v1032
        %v1042 = vld [vmem:[%s716] sm:$0xff]
        %v1043 = vld [vmem:[%s716 + $0x8] sm:$0xf]
        %v1044 = vld [vmem:[%s716 + $0xc] sm:$0xff]
        %v1045 = vld [vmem:[%s716 + $0x14] sm:$0xf]
        %v1046 = vld [vmem:[%s716 + $0x18] sm:$0xff]
        %v1047 = vld [vmem:[%s716 + $0x20] sm:$0xf]
        %v1048 = vld [vmem:[%s716 + $0x24] sm:$0xff]
        %v1049 = vld [vmem:[%s716 + $0x2c] sm:$0xf]
        %v1050 = vld [vmem:[%s716 + $0x30] sm:$0xff]
        %v1051 = vld [vmem:[%s716 + $0x38] sm:$0xf]
        %v1052 = vld [vmem:[%s716 + $0x3c] sm:$0xff]
        %v1053 = vld [vmem:[%s716 + $0x44] sm:$0xf]
        %v1054 = vld [vmem:[%s716 + $0x48] sm:$0xff]
        %v1055 = vld [vmem:[%s716 + $0x50] sm:$0xf]
        %v1056 = vld [vmem:[%s716 + $0x54] sm:$0xff]
        %v1057 = vld [vmem:[%s716 + $0x5c] sm:$0xf]
        %v1058 = vld [vmem:[%s716 + $0x60] sm:$0xff]
        %v1059 = vld [vmem:[%s716 + $0x68] sm:$0xf]
        %v1060 = vld [vmem:[%s716 + $0x6c] sm:$0xff]
        %v1061 = vld [vmem:[%s716 + $0x74] sm:$0xf]
        %v1062 = vld [vmem:[%s716 + $0x78] sm:$0xff]
        %v1063 = vld [vmem:[%s716 + $0x80] sm:$0xf]
        %v1064 = vld [vmem:[%s716 + $0x84] sm:$0xff]
        %v1065 = vld [vmem:[%s716 + $0x8c] sm:$0xf]
        %v1066 = vld [vmem:[%s716 + $0x90] sm:$0xff]
        %v1067 = vld [vmem:[%s716 + $0x98] sm:$0xf]
        %v1068 = vld [vmem:[%s716 + $0x9c] sm:$0xff]
        %v1069 = vld [vmem:[%s716 + $0xa4] sm:$0xf]
        %v1070 = vld [vmem:[%s716 + $0xa8] sm:$0xff]
        %v1071 = vld [vmem:[%s716 + $0xb0] sm:$0xf]
        %v1072 = vld [vmem:[%s716 + $0xb4] sm:$0xff]
        %v1073 = vld [vmem:[%s716 + $0xbc] sm:$0xf]
        %v1074 = vld [vmem:[%s720] sm:$0x7]
        %v1076 = vlaneseq
        %v1077 = vshrl.u32 %v1076, 7
        %v1078 = vsub.s32 0, %v1077
        %v1079 = vrot.slane %v1074, %v1078
        %v1080 = vlaneseq
        %v1081 = vshrl.u32 %v1080, 7
        %v1082 = vsub.s32 1, %v1081
        %v1083 = vrot.slane %v1074, %v1082
        %v1084 = vlaneseq
        %v1085 = vshrl.u32 %v1084, 7
        %v1086 = vsub.s32 2, %v1085
        %v1087 = vrot.slane %v1074, %v1086
        %v1123 = vunpack.c.l.b16 %v1042
        %v1124 = vunpack.c.h.b16 %v1042
        %v1125 = vunpack.c.l.b16 %v1043
        %v1126 = vunpack.c.l.b16 %v1044
        %v1127 = vunpack.c.h.b16 %v1044
        %v1128 = vunpack.c.l.b16 %v1045
        %v1129 = vunpack.c.l.b16 %v1046
        %v1130 = vunpack.c.h.b16 %v1046
        %v1131 = vunpack.c.l.b16 %v1047
        %v1132 = vunpack.c.l.b16 %v1048
        %v1133 = vunpack.c.h.b16 %v1048
        %v1134 = vunpack.c.l.b16 %v1049
        %v1135 = vunpack.c.l.b16 %v1050
        %v1136 = vunpack.c.h.b16 %v1050
        %v1137 = vunpack.c.l.b16 %v1051
        %v1138 = vunpack.c.l.b16 %v1052
        %v1139 = vunpack.c.h.b16 %v1052
        %v1140 = vunpack.c.l.b16 %v1053
        %v1141 = vunpack.c.l.b16 %v1054
        %v1142 = vunpack.c.h.b16 %v1054
        %v1143 = vunpack.c.l.b16 %v1055
        %v1144 = vunpack.c.l.b16 %v1056
        %v1145 = vunpack.c.h.b16 %v1056
        %v1146 = vunpack.c.l.b16 %v1057
        %v1147 = vunpack.c.l.b16 %v1058
        %v1148 = vunpack.c.h.b16 %v1058
        %v1149 = vunpack.c.l.b16 %v1059
        %v1150 = vunpack.c.l.b16 %v1060
        %v1151 = vunpack.c.h.b16 %v1060
        %v1152 = vunpack.c.l.b16 %v1061
        %v1153 = vunpack.c.l.b16 %v1062
        %v1154 = vunpack.c.h.b16 %v1062
        %v1155 = vunpack.c.l.b16 %v1063
        %v1156 = vunpack.c.l.b16 %v1064
        %v1157 = vunpack.c.h.b16 %v1064
        %v1158 = vunpack.c.l.b16 %v1065
        %v1159 = vunpack.c.l.b16 %v1066
        %v1160 = vunpack.c.h.b16 %v1066
        %v1161 = vunpack.c.l.b16 %v1067
        %v1162 = vunpack.c.l.b16 %v1068
        %v1163 = vunpack.c.h.b16 %v1068
        %v1164 = vunpack.c.l.b16 %v1069
        %v1165 = vunpack.c.l.b16 %v1070
        %v1166 = vunpack.c.h.b16 %v1070
        %v1167 = vunpack.c.l.b16 %v1071
        %v1168 = vunpack.c.l.b16 %v1072
        %v1169 = vunpack.c.h.b16 %v1072
        %v1170 = vunpack.c.l.b16 %v1073
        %v1171 = vpack.c.b16 %v1126, %v1123
        %v1172 = vpack.c.b16 %v1127, %v1124
        %v1173 = vpack.c.b16 %v1128, %v1125
        %v1174 = vpack.c.b16 %v1132, %v1129
        %v1175 = vpack.c.b16 %v1133, %v1130
        %v1176 = vpack.c.b16 %v1134, %v1131
        %v1177 = vpack.c.b16 %v1138, %v1135
        %v1178 = vpack.c.b16 %v1139, %v1136
        %v1179 = vpack.c.b16 %v1140, %v1137
        %v1180 = vpack.c.b16 %v1144, %v1141
        %v1181 = vpack.c.b16 %v1145, %v1142
        %v1182 = vpack.c.b16 %v1146, %v1143
        %v1183 = vpack.c.b16 %v1150, %v1147
        %v1184 = vpack.c.b16 %v1151, %v1148
        %v1185 = vpack.c.b16 %v1152, %v1149
        %v1186 = vpack.c.b16 %v1156, %v1153
        %v1187 = vpack.c.b16 %v1157, %v1154
        %v1188 = vpack.c.b16 %v1158, %v1155
        %v1189 = vpack.c.b16 %v1162, %v1159
        %v1190 = vpack.c.b16 %v1163, %v1160
        %v1191 = vpack.c.b16 %v1164, %v1161
        %v1192 = vpack.c.b16 %v1168, %v1165
        %v1193 = vpack.c.b16 %v1169, %v1166
        %v1194 = vpack.c.b16 %v1170, %v1167
        %1219 = vmatprep.subr.bf16.mxu0 %v1172
        %1220 = vmatpush1.bf16.msra.mxu0 %v1171
        %1221 = vmatprep.subr.bf16.mxu0 %v1175
        %1222 = vmatpush1.bf16.msra.mxu0 %v1174
        %1223 = vmatprep.subr.bf16.mxu0 %v1178
        %1224 = vmatpush1.bf16.msra.mxu0 %v1177
        %1225 = vmatprep.subr.bf16.mxu0 %v1181
        %1226 = vmatpush1.bf16.msra.mxu0 %v1180
        %1227 = vmatprep.subr.bf16.mxu0 %v1184
        %1228 = vmatpush1.bf16.msra.mxu0 %v1183
        %1229 = vmatprep.subr.bf16.mxu0 %v1187
        %1230 = vmatpush1.bf16.msra.mxu0 %v1186
        %1231 = vmatprep.subr.bf16.mxu0 %v1190
        %1232 = vmatpush1.bf16.msra.mxu0 %v1189
        %1233 = vmatprep.subr.bf16.mxu0 %v1193
        %1234 = vmatpush1.bf16.msra.mxu0 %v1192
        %1235 = vmatprep.subr.bf16.mxu0 0
        %1236 = vmatpush1.bf16.msra.mxu0 0
        %1237 = vmatprep.subr.bf16.mxu0 0
        %1238 = vmatpush1.bf16.msra.mxu0 0
        %1239 = vmatprep.subr.bf16.mxu0 0
        %1240 = vmatpush1.bf16.msra.mxu0 0
        %1241 = vmatprep.subr.bf16.mxu0 0
        %1242 = vmatpush1.bf16.msra.mxu0 0
        %1243 = vmatprep.subr.bf16.mxu0 0
        %1244 = vmatpush1.bf16.msra.mxu0 0
        %1245 = vmatprep.subr.bf16.mxu0 0
        %1246 = vmatpush1.bf16.msra.mxu0 0
        %1247 = vmatprep.subr.bf16.mxu0 0
        %1248 = vmatpush1.bf16.msra.mxu0 0
        %1249 = vmatprep.subr.bf16.mxu0 0
        %1250 = vmatpush1.bf16.msra.mxu0 0
        %1251 = vmatprep.mubr.bf16.mxu0 0
        %1252 = vmatmul.mubr.bf16.gmra.mrb[0].mxu0 %v1034
        %v1253 = vpop.f32.mrb[0].mxu0
        %v1254 = vadd.f32 %v1079, %v1253
        %v1255 = vpop.f32.mrb[0].mxu0
        %v1256 = vadd.f32 %v1083, %v1255
        %v1257 = vpop.f32.mrb[0].mxu0
        %v1258 = vadd.f32 %v1079, %v1257
        %v1259 = vpop.f32.mrb[0].mxu0
        %v1260 = vadd.f32 %v1083, %v1259
        %1261 = vmatprep.mubr.bf16.mxu0 0
        %1262 = vmatmul.mubr.bf16.gmra.mrb[0].mxu0 %v1035
        %v1263 = vpop.f32.mrb[0].mxu0
        %v1264 = vadd.f32 %v1079, %v1263
        %v1265 = vpop.f32.mrb[0].mxu0
        %v1266 = vadd.f32 %v1083, %v1265
        %v1267 = vpop.f32.mrb[0].mxu0
        %v1268 = vadd.f32 %v1079, %v1267
        %v1269 = vpop.f32.mrb[0].mxu0
        %v1270 = vadd.f32 %v1083, %v1269
        %1271 = vmatprep.mubr.bf16.mxu0 0
        %1272 = vmatmul.mubr.bf16.gmra.mrb[0].mxu0 %v1036
        %v1273 = vpop.f32.mrb[0].mxu0
        %v1274 = vadd.f32 %v1079, %v1273
        %v1275 = vpop.f32.mrb[0].mxu0
        %v1276 = vadd.f32 %v1083, %v1275
        %v1277 = vpop.f32.mrb[0].mxu0
        %v1278 = vadd.f32 %v1079, %v1277
        %v1279 = vpop.f32.mrb[0].mxu0
        %v1280 = vadd.f32 %v1083, %v1279
        %1281 = vmatprep.mubr.bf16.mxu0 0
        %1282 = vmatmul.mubr.bf16.gmra.mrb[0].mxu0 %v1037
        %v1283 = vpop.f32.mrb[0].mxu0
        %v1284 = vadd.f32 %v1079, %v1283
        %v1285 = vpop.f32.mrb[0].mxu0
        %v1286 = vadd.f32 %v1083, %v1285
        %v1287 = vpop.f32.mrb[0].mxu0
        %v1288 = vadd.f32 %v1079, %v1287
        %v1289 = vpop.f32.mrb[0].mxu0
        %v1290 = vadd.f32 %v1083, %v1289
        %1291 = vmatprep.mubr.bf16.mxu0 0
        %1292 = vmatmul.mubr.bf16.gmra.mrb[0].mxu0 %v1038
        %v1293 = vpop.f32.mrb[0].mxu0
        %v1294 = vadd.f32 %v1079, %v1293
        %v1295 = vpop.f32.mrb[0].mxu0
        %v1296 = vadd.f32 %v1083, %v1295
        %v1297 = vpop.f32.mrb[0].mxu0
        %v1298 = vadd.f32 %v1079, %v1297
        %v1299 = vpop.f32.mrb[0].mxu0
        %v1300 = vadd.f32 %v1083, %v1299
        %1301 = vmatprep.mubr.bf16.mxu0 0
        %1302 = vmatmul.mubr.bf16.gmra.mrb[0].mxu0 %v1039
        %v1303 = vpop.f32.mrb[0].mxu0
        %v1304 = vadd.f32 %v1079, %v1303
        %v1305 = vpop.f32.mrb[0].mxu0
        %v1306 = vadd.f32 %v1083, %v1305
        %v1307 = vpop.f32.mrb[0].mxu0
        %v1308 = vadd.f32 %v1079, %v1307
        %v1309 = vpop.f32.mrb[0].mxu0
        %v1310 = vadd.f32 %v1083, %v1309
        %1311 = vmatprep.mubr.bf16.mxu0 0
        %1312 = vmatmul.mubr.bf16.gmra.mrb[0].mxu0 %v1040
        %v1313 = vpop.f32.mrb[0].mxu0
        %v1314 = vadd.f32 %v1079, %v1313
        %v1315 = vpop.f32.mrb[0].mxu0
        %v1316 = vadd.f32 %v1083, %v1315
        %v1317 = vpop.f32.mrb[0].mxu0
        %v1318 = vadd.f32 %v1079, %v1317
        %v1319 = vpop.f32.mrb[0].mxu0
        %v1320 = vadd.f32 %v1083, %v1319
        %1321 = vmatprep.mubr.bf16.mxu0 0
        %1322 = vmatmul.mubr.bf16.gmra.mrb[0].mxu0 %v1041
        %v1323 = vpop.f32.mrb[0].mxu0
        %v1324 = vadd.f32 %v1079, %v1323
        %v1325 = vpop.f32.mrb[0].mxu0
        %v1326 = vadd.f32 %v1083, %v1325
        %v1327 = vpop.f32.mrb[0].mxu0
        %v1328 = vadd.f32 %v1079, %v1327
        %v1329 = vpop.f32.mrb[0].mxu0
        %v1330 = vadd.f32 %v1083, %v1329
        %1331 = vdwg.mxu0
        %1332 = vmatprep.subr.bf16.mxu0 0
        %1333 = vmatpush1.bf16.msra.mxu0 %v1173
        %1334 = vmatprep.subr.bf16.mxu0 0
        %1335 = vmatpush1.bf16.msra.mxu0 %v1176
        %1336 = vmatprep.subr.bf16.mxu0 0
        %1337 = vmatpush1.bf16.msra.mxu0 %v1179
        %1338 = vmatprep.subr.bf16.mxu0 0
        %1339 = vmatpush1.bf16.msra.mxu0 %v1182
        %1340 = vmatprep.subr.bf16.mxu0 0
        %1341 = vmatpush1.bf16.msra.mxu0 %v1185
        %1342 = vmatprep.subr.bf16.mxu0 0
        %1343 = vmatpush1.bf16.msra.mxu0 %v1188
        %1344 = vmatprep.subr.bf16.mxu0 0
        %1345 = vmatpush1.bf16.msra.mxu0 %v1191
        %1346 = vmatprep.subr.bf16.mxu0 0
        %1347 = vmatpush1.bf16.msra.mxu0 %v1194
        %1348 = vmatprep.subr.bf16.mxu0 0
        %1349 = vmatpush1.bf16.msra.mxu0 0
        %1350 = vmatprep.subr.bf16.mxu0 0
        %1351 = vmatpush1.bf16.msra.mxu0 0
        %1352 = vmatprep.subr.bf16.mxu0 0
        %1353 = vmatpush1.bf16.msra.mxu0 0
        %1354 = vmatprep.subr.bf16.mxu0 0
        %1355 = vmatpush1.bf16.msra.mxu0 0
        %1356 = vmatprep.subr.bf16.mxu0 0
        %1357 = vmatpush1.bf16.msra.mxu0 0
        %1358 = vmatprep.subr.bf16.mxu0 0
        %1359 = vmatpush1.bf16.msra.mxu0 0
        %1360 = vmatprep.subr.bf16.mxu0 0
        %1361 = vmatpush1.bf16.msra.mxu0 0
        %1362 = vmatprep.subr.bf16.mxu0 0
        %1363 = vmatpush1.bf16.msra.mxu0 0
        %1364 = vmatprep.mubr.bf16.mxu0 0
        %1365 = vmatmul.mubr.bf16.gmra.mrb[0].mxu0 %v1034
        %v1366 = vpop.f32.mrb[0].mxu0
        %v1367 = vadd.f32 %v1087, %v1366
        %v1368 = vpop.f32.mrb[0].mxu0
        %v1369 = vpop.f32.mrb[0].mxu0
        %v1370 = vadd.f32 %v1087, %v1369
        %v1371 = vpop.f32.mrb[0].mxu0
        %1372 = vmatprep.mubr.bf16.mxu0 0
        %1373 = vmatmul.mubr.bf16.gmra.mrb[0].mxu0 %v1035
        %v1374 = vpop.f32.mrb[0].mxu0
        %v1375 = vadd.f32 %v1087, %v1374
        %v1376 = vpop.f32.mrb[0].mxu0
        %v1377 = vpop.f32.mrb[0].mxu0
        %v1378 = vadd.f32 %v1087, %v1377
        %v1379 = vpop.f32.mrb[0].mxu0
        %1380 = vmatprep.mubr.bf16.mxu0 0
        %1381 = vmatmul.mubr.bf16.gmra.mrb[0].mxu0 %v1036
        %v1382 = vpop.f32.mrb[0].mxu0
        %v1383 = vadd.f32 %v1087, %v1382
        %v1384 = vpop.f32.mrb[0].mxu0
        %v1385 = vpop.f32.mrb[0].mxu0
        %v1386 = vadd.f32 %v1087, %v1385
        %v1387 = vpop.f32.mrb[0].mxu0
        %1388 = vmatprep.mubr.bf16.mxu0 0
        %1389 = vmatmul.mubr.bf16.gmra.mrb[0].mxu0 %v1037
        %v1390 = vpop.f32.mrb[0].mxu0
        %v1391 = vadd.f32 %v1087, %v1390
        %v1392 = vpop.f32.mrb[0].mxu0
        %v1393 = vpop.f32.mrb[0].mxu0
        %v1394 = vadd.f32 %v1087, %v1393
        %v1395 = vpop.f32.mrb[0].mxu0
        %1396 = vmatprep.mubr.bf16.mxu0 0
        %1397 = vmatmul.mubr.bf16.gmra.mrb[0].mxu0 %v1038
        %v1398 = vpop.f32.mrb[0].mxu0
        %v1399 = vadd.f32 %v1087, %v1398
        %v1400 = vpop.f32.mrb[0].mxu0
        %v1401 = vpop.f32.mrb[0].mxu0
        %v1402 = vadd.f32 %v1087, %v1401
        %v1403 = vpop.f32.mrb[0].mxu0
        %1404 = vmatprep.mubr.bf16.mxu0 0
        %1405 = vmatmul.mubr.bf16.gmra.mrb[0].mxu0 %v1039
        %v1406 = vpop.f32.mrb[0].mxu0
        %v1407 = vadd.f32 %v1087, %v1406
        %v1408 = vpop.f32.mrb[0].mxu0
        %v1409 = vpop.f32.mrb[0].mxu0
        %v1410 = vadd.f32 %v1087, %v1409
        %v1411 = vpop.f32.mrb[0].mxu0
        %1412 = vmatprep.mubr.bf16.mxu0 0
        %1413 = vmatmul.mubr.bf16.gmra.mrb[0].mxu0 %v1040
        %v1414 = vpop.f32.mrb[0].mxu0
        %v1415 = vadd.f32 %v1087, %v1414
        %v1416 = vpop.f32.mrb[0].mxu0
        %v1417 = vpop.f32.mrb[0].mxu0
        %v1418 = vadd.f32 %v1087, %v1417
        %v1419 = vpop.f32.mrb[0].mxu0
        %1420 = vmatprep.mubr.bf16.mxu0 0
        %1421 = vmatmul.mubr.bf16.gmra.mrb[0].mxu0 %v1041
        %v1422 = vpop.f32.mrb[0].mxu0
        %v1423 = vadd.f32 %v1087, %v1422
        %v1424 = vpop.f32.mrb[0].mxu0
        %v1425 = vpop.f32.mrb[0].mxu0
        %v1426 = vadd.f32 %v1087, %v1425
        %v1427 = vpop.f32.mrb[0].mxu0
        %1428 = vdwg.mxu0
        %v1429 = vld [vmem:[%s725] sm:$0xf]
        %v1430 = vld [vmem:[%s725 + $0x4] sm:$0xf]
        %v1431 = vld [vmem:[%s725 + $0x8] sm:$0xf]
        %v1432 = vld [vmem:[%s725 + $0xc] sm:$0xf]
        %v1433 = vld [vmem:[%s725 + $0x10] sm:$0xf]
        %v1434 = vld [vmem:[%s725 + $0x14] sm:$0xf]
        %v1435 = vld [vmem:[%s725 + $0x18] sm:$0xf]
        %v1436 = vld [vmem:[%s725 + $0x1c] sm:$0xf]
        %v1437 = vld [vmem:[%s725 + $0x20] sm:$0xf]
        %v1438 = vld [vmem:[%s725 + $0x24] sm:$0xf]
        %v1439 = vld [vmem:[%s725 + $0x28] sm:$0xf]
        %v1440 = vld [vmem:[%s725 + $0x2c] sm:$0xf]
        %v1441 = vld [vmem:[%s725 + $0x30] sm:$0xf]
        %v1442 = vld [vmem:[%s725 + $0x34] sm:$0xf]
        %v1443 = vld [vmem:[%s725 + $0x38] sm:$0xf]
        %v1444 = vld [vmem:[%s725 + $0x3c] sm:$0xf]
        %v1445 = vpack.c.bf16 %v1258, %v1254
        %v1446 = vpack.c.bf16 %v1268, %v1264
        %v1447 = vpack.c.bf16 %v1278, %v1274
        %v1448 = vpack.c.bf16 %v1288, %v1284
        %v1449 = vpack.c.bf16 %v1298, %v1294
        %v1450 = vpack.c.bf16 %v1308, %v1304
        %v1451 = vpack.c.bf16 %v1318, %v1314
        %v1452 = vpack.c.bf16 %v1328, %v1324
        %v1453 = vpack.c.bf16 %v1260, %v1256
        %v1454 = vpack.c.bf16 %v1270, %v1266
        %v1455 = vpack.c.bf16 %v1280, %v1276
        %v1456 = vpack.c.bf16 %v1290, %v1286
        %v1457 = vpack.c.bf16 %v1300, %v1296
        %v1458 = vpack.c.bf16 %v1310, %v1306
        %v1459 = vpack.c.bf16 %v1320, %v1316
        %v1460 = vpack.c.bf16 %v1330, %v1326
        %v1461 = vpack.c.bf16 %v1370, %v1367
        %v1462 = vpack.c.bf16 %v1378, %v1375
        %v1463 = vpack.c.bf16 %v1386, %v1383
        %v1464 = vpack.c.bf16 %v1394, %v1391
        %v1465 = vpack.c.bf16 %v1402, %v1399
        %v1466 = vpack.c.bf16 %v1410, %v1407
        %v1467 = vpack.c.bf16 %v1418, %v1415
        %v1468 = vpack.c.bf16 %v1426, %v1423
        %vm1469 = vcmask 261120
        %v1471 = vsel %vm1469, %v1445, 0
        %v1474 = vsel %vm1469, %v1446, 0
        %v1477 = vsel %vm1469, %v1447, 0
        %v1480 = vsel %vm1469, %v1448, 0
        %v1483 = vsel %vm1469, %v1449, 0
        %v1486 = vsel %vm1469, %v1450, 0
        %v1489 = vsel %vm1469, %v1451, 0
        %v1492 = vsel %vm1469, %v1452, 0
        %v1495 = vsel %vm1469, %v1453, 0
        %v1498 = vsel %vm1469, %v1454, 0
        %v1501 = vsel %vm1469, %v1455, 0
        %v1504 = vsel %vm1469, %v1456, 0
        %v1507 = vsel %vm1469, %v1457, 0
        %v1510 = vsel %vm1469, %v1458, 0
        %v1513 = vsel %vm1469, %v1459, 0
        %v1516 = vsel %vm1469, %v1460, 0
        %1518 = vmatprep.subr.bf16.mxu0 0
        %1519 = vmatpush1.bf16.xpose.msra.mxu0 %v1495
        %1520 = vmatprep.subr.bf16.mxu0 0
        %1521 = vmatpush1.bf16.xpose.msra.mxu0 %v1498
        %1522 = vmatprep.subr.bf16.mxu0 0
        %1523 = vmatpush1.bf16.xpose.msra.mxu0 %v1501
        %1524 = vmatprep.subr.bf16.mxu0 0
        %1525 = vmatpush1.bf16.xpose.msra.mxu0 %v1504
        %1526 = vmatprep.subr.bf16.mxu0 0
        %1527 = vmatpush1.bf16.xpose.msra.mxu0 %v1507
        %1528 = vmatprep.subr.bf16.mxu0 0
        %1529 = vmatpush1.bf16.xpose.msra.mxu0 %v1510
        %1530 = vmatprep.subr.bf16.mxu0 0
        %1531 = vmatpush1.bf16.xpose.msra.mxu0 %v1513
        %1532 = vmatprep.subr.bf16.mxu0 0
        %1533 = vmatpush1.bf16.xpose.msra.mxu0 %v1516
        %1534 = vmatprep.subr.bf16.mxu0 0
        %1535 = vmatpush1.bf16.xpose.msra.mxu0 0
        %1536 = vmatprep.subr.bf16.mxu0 0
        %1537 = vmatpush1.bf16.xpose.msra.mxu0 0
        %1538 = vmatprep.subr.bf16.mxu0 0
        %1539 = vmatpush1.bf16.xpose.msra.mxu0 0
        %1540 = vmatprep.subr.bf16.mxu0 0
        %1541 = vmatpush1.bf16.xpose.msra.mxu0 0
        %1542 = vmatprep.subr.bf16.mxu0 0
        %1543 = vmatpush1.bf16.xpose.msra.mxu0 0
        %1544 = vmatprep.subr.bf16.mxu0 0
        %1545 = vmatpush1.bf16.xpose.msra.mxu0 0
        %1546 = vmatprep.subr.bf16.mxu0 0
        %1547 = vmatpush1.bf16.xpose.msra.mxu0 0
        %1548 = vmatprep.subr.bf16.mxu0 0
        %1549 = vmatpush1.bf16.xpose.msra.mxu0 0
        %1550 = vmatprep.mubr.bf16.mxu0 0
        %1551 = vmatmul.mubr.bf16.gmra.mrb[0].mxu0 %v1471
        %v1552 = vpop.f32.mrb[0].mxu0
        %v1553 = vadd.f32 0.0, %v1552
        %v1554 = vpop.f32.mrb[0].mxu0
        %v1555 = vpop.f32.mrb[0].mxu0
        %v1556 = vadd.f32 0.0, %v1555
        %v1557 = vpop.f32.mrb[0].mxu0
        %1558 = vmatprep.mubr.bf16.mxu0 0
        %1559 = vmatmul.mubr.bf16.gmra.mrb[0].mxu0 %v1474
        %v1560 = vpop.f32.mrb[0].mxu0
        %v1561 = vadd.f32 0.0, %v1560
        %v1562 = vpop.f32.mrb[0].mxu0
        %v1563 = vpop.f32.mrb[0].mxu0
        %v1564 = vadd.f32 0.0, %v1563
        %v1565 = vpop.f32.mrb[0].mxu0
        %1566 = vmatprep.mubr.bf16.mxu0 0
        %1567 = vmatmul.mubr.bf16.gmra.mrb[0].mxu0 %v1477
        %v1568 = vpop.f32.mrb[0].mxu0
        %v1569 = vadd.f32 0.0, %v1568
        %v1570 = vpop.f32.mrb[0].mxu0
        %v1571 = vpop.f32.mrb[0].mxu0
        %v1572 = vadd.f32 0.0, %v1571
        %v1573 = vpop.f32.mrb[0].mxu0
        %1574 = vmatprep.mubr.bf16.mxu0 0
        %1575 = vmatmul.mubr.bf16.gmra.mrb[0].mxu0 %v1480
        %v1576 = vpop.f32.mrb[0].mxu0
        %v1577 = vadd.f32 0.0, %v1576
        %v1578 = vpop.f32.mrb[0].mxu0
        %v1579 = vpop.f32.mrb[0].mxu0
        %v1580 = vadd.f32 0.0, %v1579
        %v1581 = vpop.f32.mrb[0].mxu0
        %1582 = vmatprep.mubr.bf16.mxu0 0
        %1583 = vmatmul.mubr.bf16.gmra.mrb[0].mxu0 %v1483
        %v1584 = vpop.f32.mrb[0].mxu0
        %v1585 = vadd.f32 0.0, %v1584
        %v1586 = vpop.f32.mrb[0].mxu0
        %v1587 = vpop.f32.mrb[0].mxu0
        %v1588 = vadd.f32 0.0, %v1587
        %v1589 = vpop.f32.mrb[0].mxu0
        %1590 = vmatprep.mubr.bf16.mxu0 0
        %1591 = vmatmul.mubr.bf16.gmra.mrb[0].mxu0 %v1486
        %v1592 = vpop.f32.mrb[0].mxu0
        %v1593 = vadd.f32 0.0, %v1592
        %v1594 = vpop.f32.mrb[0].mxu0
        %v1595 = vpop.f32.mrb[0].mxu0
        %v1596 = vadd.f32 0.0, %v1595
        %v1597 = vpop.f32.mrb[0].mxu0
        %1598 = vmatprep.mubr.bf16.mxu0 0
        %1599 = vmatmul.mubr.bf16.gmra.mrb[0].mxu0 %v1489
        %v1600 = vpop.f32.mrb[0].mxu0
        %v1601 = vadd.f32 0.0, %v1600
        %v1602 = vpop.f32.mrb[0].mxu0
        %v1603 = vpop.f32.mrb[0].mxu0
        %v1604 = vadd.f32 0.0, %v1603
        %v1605 = vpop.f32.mrb[0].mxu0
        %1606 = vmatprep.mubr.bf16.mxu0 0
        %1607 = vmatmul.mubr.bf16.gmra.mrb[0].mxu0 %v1492
        %v1608 = vpop.f32.mrb[0].mxu0
        %v1609 = vadd.f32 0.0, %v1608
        %v1610 = vpop.f32.mrb[0].mxu0
        %v1611 = vpop.f32.mrb[0].mxu0
        %v1612 = vadd.f32 0.0, %v1611
        %v1613 = vpop.f32.mrb[0].mxu0
        %1614 = vdwg.mxu0
        %1615 = vmax.xlane.f32.xlu0 %v1553
        %v1616 = vpop.xlane.xlu0 %1615
        %1617 = vmax.xlane.f32.xlu0 %v1556
        %v1618 = vpop.xlane.xlu0 %1617
        %1619 = vmax.xlane.f32.xlu0 %v1561
        %v1620 = vpop.xlane.xlu0 %1619
        %1621 = vmax.xlane.f32.xlu0 %v1564
        %v1622 = vpop.xlane.xlu0 %1621
        %1623 = vmax.xlane.f32.xlu0 %v1569
        %v1624 = vpop.xlane.xlu0 %1623
        %1625 = vmax.xlane.f32.xlu0 %v1572
        %v1626 = vpop.xlane.xlu0 %1625
        %1627 = vmax.xlane.f32.xlu0 %v1577
        %v1628 = vpop.xlane.xlu0 %1627
        %1629 = vmax.xlane.f32.xlu0 %v1580
        %v1630 = vpop.xlane.xlu0 %1629
        %1631 = vmax.xlane.f32.xlu0 %v1585
        %v1632 = vpop.xlane.xlu0 %1631
        %1633 = vmax.xlane.f32.xlu0 %v1588
        %v1634 = vpop.xlane.xlu0 %1633
        %1635 = vmax.xlane.f32.xlu0 %v1593
        %v1636 = vpop.xlane.xlu0 %1635
        %1637 = vmax.xlane.f32.xlu0 %v1596
        %v1638 = vpop.xlane.xlu0 %1637
        %1639 = vmax.xlane.f32.xlu0 %v1601
        %v1640 = vpop.xlane.xlu0 %1639
        %1641 = vmax.xlane.f32.xlu0 %v1604
        %v1642 = vpop.xlane.xlu0 %1641
        %1643 = vmax.xlane.f32.xlu0 %v1609
        %v1644 = vpop.xlane.xlu0 %1643
        %1645 = vmax.xlane.f32.xlu0 %v1612
        %v1646 = vpop.xlane.xlu0 %1645
        %v1647 = vsub.f32 %v1553, %v1616
        %v1648 = vsub.f32 %v1556, %v1618
        %v1649 = vsub.f32 %v1561, %v1620
        %v1650 = vsub.f32 %v1564, %v1622
        %v1651 = vsub.f32 %v1569, %v1624
        %v1652 = vsub.f32 %v1572, %v1626
        %v1653 = vsub.f32 %v1577, %v1628
        %v1654 = vsub.f32 %v1580, %v1630
        %v1655 = vsub.f32 %v1585, %v1632
        %v1656 = vsub.f32 %v1588, %v1634
        %v1657 = vsub.f32 %v1593, %v1636
        %v1658 = vsub.f32 %v1596, %v1638
        %v1659 = vsub.f32 %v1601, %v1640
        %v1660 = vsub.f32 %v1604, %v1642
        %v1661 = vsub.f32 %v1609, %v1644
        %v1662 = vsub.f32 %v1612, %v1646
        %v1663 = vmul.f32 %v1647, 1.442695
        %v1664 = vpow.pop %v1663
        %v1665 = vmul.f32 %v1648, 1.442695
        %v1666 = vpow.pop %v1665
        %v1667 = vmul.f32 %v1649, 1.442695
        %v1668 = vpow.pop %v1667
        %v1669 = vmul.f32 %v1650, 1.442695
        %v1670 = vpow.pop %v1669
        %v1671 = vmul.f32 %v1651, 1.442695
        %v1672 = vpow.pop %v1671
        %v1673 = vmul.f32 %v1652, 1.442695
        %v1674 = vpow.pop %v1673
        %v1675 = vmul.f32 %v1653, 1.442695
        %v1676 = vpow.pop %v1675
        %v1677 = vmul.f32 %v1654, 1.442695
        %v1678 = vpow.pop %v1677
        %v1679 = vmul.f32 %v1655, 1.442695
        %v1680 = vpow.pop %v1679
        %v1681 = vmul.f32 %v1656, 1.442695
        %v1682 = vpow.pop %v1681
        %v1683 = vmul.f32 %v1657, 1.442695
        %v1684 = vpow.pop %v1683
        %v1685 = vmul.f32 %v1658, 1.442695
        %v1686 = vpow.pop %v1685
        %v1687 = vmul.f32 %v1659, 1.442695
        %v1688 = vpow.pop %v1687
        %v1689 = vmul.f32 %v1660, 1.442695
        %v1690 = vpow.pop %v1689
        %v1691 = vmul.f32 %v1661, 1.442695
        %v1692 = vpow.pop %v1691
        %v1693 = vmul.f32 %v1662, 1.442695
        %v1694 = vpow.pop %v1693
        %1695 = vadd.xlane.f32.xlu0 %v1664
        %v1696 = vpop.xlane.xlu0 %1695
        %1697 = vadd.xlane.f32.xlu0 %v1666
        %v1698 = vpop.xlane.xlu0 %1697
        %1699 = vadd.xlane.f32.xlu0 %v1668
        %v1700 = vpop.xlane.xlu0 %1699
        %1701 = vadd.xlane.f32.xlu0 %v1670
        %v1702 = vpop.xlane.xlu0 %1701
        %1703 = vadd.xlane.f32.xlu0 %v1672
        %v1704 = vpop.xlane.xlu0 %1703
        %1705 = vadd.xlane.f32.xlu0 %v1674
        %v1706 = vpop.xlane.xlu0 %1705
        %1707 = vadd.xlane.f32.xlu0 %v1676
        %v1708 = vpop.xlane.xlu0 %1707
        %1709 = vadd.xlane.f32.xlu0 %v1678
        %v1710 = vpop.xlane.xlu0 %1709
        %1711 = vadd.xlane.f32.xlu0 %v1680
        %v1712 = vpop.xlane.xlu0 %1711
        %1713 = vadd.xlane.f32.xlu0 %v1682
        %v1714 = vpop.xlane.xlu0 %1713
        %1715 = vadd.xlane.f32.xlu0 %v1684
        %v1716 = vpop.xlane.xlu0 %1715
        %1717 = vadd.xlane.f32.xlu0 %v1686
        %v1718 = vpop.xlane.xlu0 %1717
        %1719 = vadd.xlane.f32.xlu0 %v1688
        %v1720 = vpop.xlane.xlu0 %1719
        %1721 = vadd.xlane.f32.xlu0 %v1690
        %v1722 = vpop.xlane.xlu0 %1721
        %1723 = vadd.xlane.f32.xlu0 %v1692
        %v1724 = vpop.xlane.xlu0 %1723
        %1725 = vadd.xlane.f32.xlu0 %v1694
        %v1726 = vpop.xlane.xlu0 %1725
        %v1727 = vrcp.pop %v1696
        %v1728 = vrcp.pop %v1698
        %v1729 = vrcp.pop %v1700
        %v1730 = vrcp.pop %v1702
        %v1731 = vrcp.pop %v1704
        %v1732 = vrcp.pop %v1706
        %v1733 = vrcp.pop %v1708
        %v1734 = vrcp.pop %v1710
        %v1735 = vrcp.pop %v1712
        %v1736 = vrcp.pop %v1714
        %v1737 = vrcp.pop %v1716
        %v1738 = vrcp.pop %v1718
        %v1739 = vrcp.pop %v1720
        %v1740 = vrcp.pop %v1722
        %v1741 = vrcp.pop %v1724
        %v1742 = vrcp.pop %v1726
        %v1743 = vmul.f32 %v1664, %v1727
        %v1744 = vmul.f32 %v1666, %v1728
        %v1745 = vmul.f32 %v1668, %v1729
        %v1746 = vmul.f32 %v1670, %v1730
        %v1747 = vmul.f32 %v1672, %v1731
        %v1748 = vmul.f32 %v1674, %v1732
        %v1749 = vmul.f32 %v1676, %v1733
        %v1750 = vmul.f32 %v1678, %v1734
        %v1751 = vmul.f32 %v1680, %v1735
        %v1752 = vmul.f32 %v1682, %v1736
        %v1753 = vmul.f32 %v1684, %v1737
        %v1754 = vmul.f32 %v1686, %v1738
        %v1755 = vmul.f32 %v1688, %v1739
        %v1756 = vmul.f32 %v1690, %v1740
        %v1757 = vmul.f32 %v1692, %v1741
        %v1758 = vmul.f32 %v1694, %v1742
        %v1759 = vpack.c.bf16 %v1744, %v1743
        %v1760 = vpack.c.bf16 %v1746, %v1745
        %v1761 = vpack.c.bf16 %v1748, %v1747
        %v1762 = vpack.c.bf16 %v1750, %v1749
        %v1763 = vpack.c.bf16 %v1752, %v1751
        %v1764 = vpack.c.bf16 %v1754, %v1753
        %v1765 = vpack.c.bf16 %v1756, %v1755
        %v1766 = vpack.c.bf16 %v1758, %v1757
        %1767 = vmatprep.subr.bf16.mxu0 0
        %1768 = vmatpush1.bf16.msra.mxu0 %v1461
        %1769 = vmatprep.subr.bf16.mxu0 0
        %1770 = vmatpush1.bf16.msra.mxu0 %v1462
        %1771 = vmatprep.subr.bf16.mxu0 0
        %1772 = vmatpush1.bf16.msra.mxu0 %v1463
        %1773 = vmatprep.subr.bf16.mxu0 0
        %1774 = vmatpush1.bf16.msra.mxu0 %v1464
        %1775 = vmatprep.subr.bf16.mxu0 0
        %1776 = vmatpush1.bf16.msra.mxu0 %v1465
        %1777 = vmatprep.subr.bf16.mxu0 0
        %1778 = vmatpush1.bf16.msra.mxu0 %v1466
        %1779 = vmatprep.subr.bf16.mxu0 0
        %1780 = vmatpush1.bf16.msra.mxu0 %v1467
        %1781 = vmatprep.subr.bf16.mxu0 0
        %1782 = vmatpush1.bf16.msra.mxu0 %v1468
        %1783 = vmatprep.subr.bf16.mxu0 0
        %1784 = vmatpush1.bf16.msra.mxu0 0
        %1785 = vmatprep.subr.bf16.mxu0 0
        %1786 = vmatpush1.bf16.msra.mxu0 0
        %1787 = vmatprep.subr.bf16.mxu0 0
        %1788 = vmatpush1.bf16.msra.mxu0 0
        %1789 = vmatprep.subr.bf16.mxu0 0
        %1790 = vmatpush1.bf16.msra.mxu0 0
        %1791 = vmatprep.subr.bf16.mxu0 0
        %1792 = vmatpush1.bf16.msra.mxu0 0
        %1793 = vmatprep.subr.bf16.mxu0 0
        %1794 = vmatpush1.bf16.msra.mxu0 0
        %1795 = vmatprep.subr.bf16.mxu0 0
        %1796 = vmatpush1.bf16.msra.mxu0 0
        %1797 = vmatprep.subr.bf16.mxu0 0
        %1798 = vmatpush1.bf16.msra.mxu0 0
        %1799 = vmatprep.mubr.bf16.mxu0 0
        %1800 = vmatmul.mubr.bf16.gmra.mrb[0].mxu0 %v1759
        %v1801 = vpop.f32.mrb[0].mxu0
        %v1802 = vadd.f32 0.0, %v1801
        %v1803 = vpop.f32.mrb[0].mxu0
        %v1804 = vpop.f32.mrb[0].mxu0
        %v1805 = vadd.f32 0.0, %v1804
        %v1806 = vpop.f32.mrb[0].mxu0
        %1807 = vmatprep.mubr.bf16.mxu0 0
        %1808 = vmatmul.mubr.bf16.gmra.mrb[0].mxu0 %v1760
        %v1809 = vpop.f32.mrb[0].mxu0
        %v1810 = vadd.f32 0.0, %v1809
        %v1811 = vpop.f32.mrb[0].mxu0
        %v1812 = vpop.f32.mrb[0].mxu0
        %v1813 = vadd.f32 0.0, %v1812
        %v1814 = vpop.f32.mrb[0].mxu0
        %1815 = vmatprep.mubr.bf16.mxu0 0
        %1816 = vmatmul.mubr.bf16.gmra.mrb[0].mxu0 %v1761
        %v1817 = vpop.f32.mrb[0].mxu0
        %v1818 = vadd.f32 0.0, %v1817
        %v1819 = vpop.f32.mrb[0].mxu0
        %v1820 = vpop.f32.mrb[0].mxu0
        %v1821 = vadd.f32 0.0, %v1820
        %v1822 = vpop.f32.mrb[0].mxu0
        %1823 = vmatprep.mubr.bf16.mxu0 0
        %1824 = vmatmul.mubr.bf16.gmra.mrb[0].mxu0 %v1762
        %v1825 = vpop.f32.mrb[0].mxu0
        %v1826 = vadd.f32 0.0, %v1825
        %v1827 = vpop.f32.mrb[0].mxu0
        %v1828 = vpop.f32.mrb[0].mxu0
        %v1829 = vadd.f32 0.0, %v1828
        %v1830 = vpop.f32.mrb[0].mxu0
        %1831 = vmatprep.mubr.bf16.mxu0 0
        %1832 = vmatmul.mubr.bf16.gmra.mrb[0].mxu0 %v1763
        %v1833 = vpop.f32.mrb[0].mxu0
        %v1834 = vadd.f32 0.0, %v1833
        %v1835 = vpop.f32.mrb[0].mxu0
        %v1836 = vpop.f32.mrb[0].mxu0
        %v1837 = vadd.f32 0.0, %v1836
        %v1838 = vpop.f32.mrb[0].mxu0
        %1839 = vmatprep.mubr.bf16.mxu0 0
        %1840 = vmatmul.mubr.bf16.gmra.mrb[0].mxu0 %v1764
        %v1841 = vpop.f32.mrb[0].mxu0
        %v1842 = vadd.f32 0.0, %v1841
        %v1843 = vpop.f32.mrb[0].mxu0
        %v1844 = vpop.f32.mrb[0].mxu0
        %v1845 = vadd.f32 0.0, %v1844
        %v1846 = vpop.f32.mrb[0].mxu0
        %1847 = vmatprep.mubr.bf16.mxu0 0
        %1848 = vmatmul.mubr.bf16.gmra.mrb[0].mxu0 %v1765
        %v1849 = vpop.f32.mrb[0].mxu0
        %v1850 = vadd.f32 0.0, %v1849
        %v1851 = vpop.f32.mrb[0].mxu0
        %v1852 = vpop.f32.mrb[0].mxu0
        %v1853 = vadd.f32 0.0, %v1852
        %v1854 = vpop.f32.mrb[0].mxu0
        %1855 = vmatprep.mubr.bf16.mxu0 0
        %1856 = vmatmul.mubr.bf16.gmra.mrb[0].mxu0 %v1766
        %v1857 = vpop.f32.mrb[0].mxu0
        %v1858 = vadd.f32 0.0, %v1857
        %v1859 = vpop.f32.mrb[0].mxu0
        %v1860 = vpop.f32.mrb[0].mxu0
        %v1861 = vadd.f32 0.0, %v1860
        %v1862 = vpop.f32.mrb[0].mxu0
        %1863 = vdwg.mxu0
        %v1864 = vpack.c.bf16 %v1805, %v1802
        %v1865 = vpack.c.bf16 %v1813, %v1810
        %v1866 = vpack.c.bf16 %v1821, %v1818
        %v1867 = vpack.c.bf16 %v1829, %v1826
        %v1868 = vpack.c.bf16 %v1837, %v1834
        %v1869 = vpack.c.bf16 %v1845, %v1842
        %v1870 = vpack.c.bf16 %v1853, %v1850
        %v1871 = vpack.c.bf16 %v1861, %v1858
        %1880 = vrot.lane.b32.xlu0 %v1445, 96
        %v1881 = vpop.permute.xlu0 %1880
        %1882 = vrot.lane.b32.xlu0 %v1446, 96
        %v1883 = vpop.permute.xlu0 %1882
        %1884 = vrot.lane.b32.xlu0 %v1447, 96
        %v1885 = vpop.permute.xlu0 %1884
        %1886 = vrot.lane.b32.xlu0 %v1448, 96
        %v1887 = vpop.permute.xlu0 %1886
        %1888 = vrot.lane.b32.xlu0 %v1449, 96
        %v1889 = vpop.permute.xlu0 %1888
        %1890 = vrot.lane.b32.xlu0 %v1450, 96
        %v1891 = vpop.permute.xlu0 %1890
        %1892 = vrot.lane.b32.xlu0 %v1451, 96
        %v1893 = vpop.permute.xlu0 %1892
        %1894 = vrot.lane.b32.xlu0 %v1452, 96
        %v1895 = vpop.permute.xlu0 %1894
        %1904 = vrot.lane.b32.xlu0 %v1453, 96
        %v1905 = vpop.permute.xlu0 %1904
        %1906 = vrot.lane.b32.xlu0 %v1454, 96
        %v1907 = vpop.permute.xlu0 %1906
        %1908 = vrot.lane.b32.xlu0 %v1455, 96
        %v1909 = vpop.permute.xlu0 %1908
        %1910 = vrot.lane.b32.xlu0 %v1456, 96
        %v1911 = vpop.permute.xlu0 %1910
        %1912 = vrot.lane.b32.xlu0 %v1457, 96
        %v1913 = vpop.permute.xlu0 %1912
        %1914 = vrot.lane.b32.xlu0 %v1458, 96
        %v1915 = vpop.permute.xlu0 %1914
        %1916 = vrot.lane.b32.xlu0 %v1459, 96
        %v1917 = vpop.permute.xlu0 %1916
        %1918 = vrot.lane.b32.xlu0 %v1460, 96
        %v1919 = vpop.permute.xlu0 %1918
        %v1921 = vsel %vm1469, %v1881, 0
        %v1924 = vsel %vm1469, %v1883, 0
        %v1927 = vsel %vm1469, %v1885, 0
        %v1930 = vsel %vm1469, %v1887, 0
        %v1933 = vsel %vm1469, %v1889, 0
        %v1936 = vsel %vm1469, %v1891, 0
        %v1939 = vsel %vm1469, %v1893, 0
        %v1942 = vsel %vm1469, %v1895, 0
        %v1945 = vsel %vm1469, %v1905, 0
        %v1948 = vsel %vm1469, %v1907, 0
        %v1951 = vsel %vm1469, %v1909, 0
        %v1954 = vsel %vm1469, %v1911, 0
        %v1957 = vsel %vm1469, %v1913, 0
        %v1960 = vsel %vm1469, %v1915, 0
        %v1963 = vsel %vm1469, %v1917, 0
        %v1966 = vsel %vm1469, %v1919, 0
        %1968 = vmatprep.subr.bf16.mxu0 0
        %1969 = vmatpush1.bf16.xpose.msra.mxu0 %v1945
        %1970 = vmatprep.subr.bf16.mxu0 0
        %1971 = vmatpush1.bf16.xpose.msra.mxu0 %v1948
        %1972 = vmatprep.subr.bf16.mxu0 0
        %1973 = vmatpush1.bf16.xpose.msra.mxu0 %v1951
        %1974 = vmatprep.subr.bf16.mxu0 0
        %1975 = vmatpush1.bf16.xpose.msra.mxu0 %v1954
        %1976 = vmatprep.subr.bf16.mxu0 0
        %1977 = vmatpush1.bf16.xpose.msra.mxu0 %v1957
        %1978 = vmatprep.subr.bf16.mxu0 0
        %1979 = vmatpush1.bf16.xpose.msra.mxu0 %v1960
        %1980 = vmatprep.subr.bf16.mxu0 0
        %1981 = vmatpush1.bf16.xpose.msra.mxu0 %v1963
        %1982 = vmatprep.subr.bf16.mxu0 0
        %1983 = vmatpush1.bf16.xpose.msra.mxu0 %v1966
        %1984 = vmatprep.subr.bf16.mxu0 0
        %1985 = vmatpush1.bf16.xpose.msra.mxu0 0
        %1986 = vmatprep.subr.bf16.mxu0 0
        %1987 = vmatpush1.bf16.xpose.msra.mxu0 0
        %1988 = vmatprep.subr.bf16.mxu0 0
        %1989 = vmatpush1.bf16.xpose.msra.mxu0 0
        %1990 = vmatprep.subr.bf16.mxu0 0
        %1991 = vmatpush1.bf16.xpose.msra.mxu0 0
        %1992 = vmatprep.subr.bf16.mxu0 0
        %1993 = vmatpush1.bf16.xpose.msra.mxu0 0
        %1994 = vmatprep.subr.bf16.mxu0 0
        %1995 = vmatpush1.bf16.xpose.msra.mxu0 0
        %1996 = vmatprep.subr.bf16.mxu0 0
        %1997 = vmatpush1.bf16.xpose.msra.mxu0 0
        %1998 = vmatprep.subr.bf16.mxu0 0
        %1999 = vmatpush1.bf16.xpose.msra.mxu0 0
        %2000 = vmatprep.mubr.bf16.mxu0 0
        %2001 = vmatmul.mubr.bf16.gmra.mrb[0].mxu0 %v1921
        %v2002 = vpop.f32.mrb[0].mxu0
        %v2003 = vadd.f32 0.0, %v2002
        %v2004 = vpop.f32.mrb[0].mxu0
        %v2005 = vpop.f32.mrb[0].mxu0
        %v2006 = vadd.f32 0.0, %v2005
        %v2007 = vpop.f32.mrb[0].mxu0
        %2008 = vmatprep.mubr.bf16.mxu0 0
        %2009 = vmatmul.mubr.bf16.gmra.mrb[0].mxu0 %v1924
        %v2010 = vpop.f32.mrb[0].mxu0
        %v2011 = vadd.f32 0.0, %v2010
        %v2012 = vpop.f32.mrb[0].mxu0
        %v2013 = vpop.f32.mrb[0].mxu0
        %v2014 = vadd.f32 0.0, %v2013
        %v2015 = vpop.f32.mrb[0].mxu0
        %2016 = vmatprep.mubr.bf16.mxu0 0
        %2017 = vmatmul.mubr.bf16.gmra.mrb[0].mxu0 %v1927
        %v2018 = vpop.f32.mrb[0].mxu0
        %v2019 = vadd.f32 0.0, %v2018
        %v2020 = vpop.f32.mrb[0].mxu0
        %v2021 = vpop.f32.mrb[0].mxu0
        %v2022 = vadd.f32 0.0, %v2021
        %v2023 = vpop.f32.mrb[0].mxu0
        %2024 = vmatprep.mubr.bf16.mxu0 0
        %2025 = vmatmul.mubr.bf16.gmra.mrb[0].mxu0 %v1930
        %v2026 = vpop.f32.mrb[0].mxu0
        %v2027 = vadd.f32 0.0, %v2026
        %v2028 = vpop.f32.mrb[0].mxu0
        %v2029 = vpop.f32.mrb[0].mxu0
        %v2030 = vadd.f32 0.0, %v2029
        %v2031 = vpop.f32.mrb[0].mxu0
        %2032 = vmatprep.mubr.bf16.mxu0 0
        %2033 = vmatmul.mubr.bf16.gmra.mrb[0].mxu0 %v1933
        %v2034 = vpop.f32.mrb[0].mxu0
        %v2035 = vadd.f32 0.0, %v2034
        %v2036 = vpop.f32.mrb[0].mxu0
        %v2037 = vpop.f32.mrb[0].mxu0
        %v2038 = vadd.f32 0.0, %v2037
        %v2039 = vpop.f32.mrb[0].mxu0
        %2040 = vmatprep.mubr.bf16.mxu0 0
        %2041 = vmatmul.mubr.bf16.gmra.mrb[0].mxu0 %v1936
        %v2042 = vpop.f32.mrb[0].mxu0
        %v2043 = vadd.f32 0.0, %v2042
        %v2044 = vpop.f32.mrb[0].mxu0
        %v2045 = vpop.f32.mrb[0].mxu0
        %v2046 = vadd.f32 0.0, %v2045
        %v2047 = vpop.f32.mrb[0].mxu0
        %2048 = vmatprep.mubr.bf16.mxu0 0
        %2049 = vmatmul.mubr.bf16.gmra.mrb[0].mxu0 %v1939
        %v2050 = vpop.f32.mrb[0].mxu0
        %v2051 = vadd.f32 0.0, %v2050
        %v2052 = vpop.f32.mrb[0].mxu0
        %v2053 = vpop.f32.mrb[0].mxu0
        %v2054 = vadd.f32 0.0, %v2053
        %v2055 = vpop.f32.mrb[0].mxu0
        %2056 = vmatprep.mubr.bf16.mxu0 0
        %2057 = vmatmul.mubr.bf16.gmra.mrb[0].mxu0 %v1942
        %v2058 = vpop.f32.mrb[0].mxu0
        %v2059 = vadd.f32 0.0, %v2058
        %v2060 = vpop.f32.mrb[0].mxu0
        %v2061 = vpop.f32.mrb[0].mxu0
        %v2062 = vadd.f32 0.0, %v2061
        %v2063 = vpop.f32.mrb[0].mxu0
        %2064 = vdwg.mxu0
        %2065 = vmax.xlane.f32.xlu0 %v2003
        %v2066 = vpop.xlane.xlu0 %2065
        %2067 = vmax.xlane.f32.xlu0 %v2006
        %v2068 = vpop.xlane.xlu0 %2067
        %2069 = vmax.xlane.f32.xlu0 %v2011
        %v2070 = vpop.xlane.xlu0 %2069
        %2071 = vmax.xlane.f32.xlu0 %v2014
        %v2072 = vpop.xlane.xlu0 %2071
        %2073 = vmax.xlane.f32.xlu0 %v2019
        %v2074 = vpop.xlane.xlu0 %2073
        %2075 = vmax.xlane.f32.xlu0 %v2022
        %v2076 = vpop.xlane.xlu0 %2075
        %2077 = vmax.xlane.f32.xlu0 %v2027
        %v2078 = vpop.xlane.xlu0 %2077
        %2079 = vmax.xlane.f32.xlu0 %v2030
        %v2080 = vpop.xlane.xlu0 %2079
        %2081 = vmax.xlane.f32.xlu0 %v2035
        %v2082 = vpop.xlane.xlu0 %2081
        %2083 = vmax.xlane.f32.xlu0 %v2038
        %v2084 = vpop.xlane.xlu0 %2083
        %2085 = vmax.xlane.f32.xlu0 %v2043
        %v2086 = vpop.xlane.xlu0 %2085
        %2087 = vmax.xlane.f32.xlu0 %v2046
        %v2088 = vpop.xlane.xlu0 %2087
        %2089 = vmax.xlane.f32.xlu0 %v2051
        %v2090 = vpop.xlane.xlu0 %2089
        %2091 = vmax.xlane.f32.xlu0 %v2054
        %v2092 = vpop.xlane.xlu0 %2091
        %2093 = vmax.xlane.f32.xlu0 %v2059
        %v2094 = vpop.xlane.xlu0 %2093
        %2095 = vmax.xlane.f32.xlu0 %v2062
        %v2096 = vpop.xlane.xlu0 %2095
        %v2097 = vsub.f32 %v2003, %v2066
        %v2098 = vsub.f32 %v2006, %v2068
        %v2099 = vsub.f32 %v2011, %v2070
        %v2100 = vsub.f32 %v2014, %v2072
        %v2101 = vsub.f32 %v2019, %v2074
        %v2102 = vsub.f32 %v2022, %v2076
        %v2103 = vsub.f32 %v2027, %v2078
        %v2104 = vsub.f32 %v2030, %v2080
        %v2105 = vsub.f32 %v2035, %v2082
        %v2106 = vsub.f32 %v2038, %v2084
        %v2107 = vsub.f32 %v2043, %v2086
        %v2108 = vsub.f32 %v2046, %v2088
        %v2109 = vsub.f32 %v2051, %v2090
        %v2110 = vsub.f32 %v2054, %v2092
        %v2111 = vsub.f32 %v2059, %v2094
        %v2112 = vsub.f32 %v2062, %v2096
        %v2113 = vmul.f32 %v2097, 1.442695
        %v2114 = vpow.pop %v2113
        %v2115 = vmul.f32 %v2098, 1.442695
        %v2116 = vpow.pop %v2115
        %v2117 = vmul.f32 %v2099, 1.442695
        %v2118 = vpow.pop %v2117
        %v2119 = vmul.f32 %v2100, 1.442695
        %v2120 = vpow.pop %v2119
        %v2121 = vmul.f32 %v2101, 1.442695
        %v2122 = vpow.pop %v2121
        %v2123 = vmul.f32 %v2102, 1.442695
        %v2124 = vpow.pop %v2123
        %v2125 = vmul.f32 %v2103, 1.442695
        %v2126 = vpow.pop %v2125
        %v2127 = vmul.f32 %v2104, 1.442695
        %v2128 = vpow.pop %v2127
        %v2129 = vmul.f32 %v2105, 1.442695
        %v2130 = vpow.pop %v2129
        %v2131 = vmul.f32 %v2106, 1.442695
        %v2132 = vpow.pop %v2131
        %v2133 = vmul.f32 %v2107, 1.442695
        %v2134 = vpow.pop %v2133
        %v2135 = vmul.f32 %v2108, 1.442695
        %v2136 = vpow.pop %v2135
        %v2137 = vmul.f32 %v2109, 1.442695
        %v2138 = vpow.pop %v2137
        %v2139 = vmul.f32 %v2110, 1.442695
        %v2140 = vpow.pop %v2139
        %v2141 = vmul.f32 %v2111, 1.442695
        %v2142 = vpow.pop %v2141
        %v2143 = vmul.f32 %v2112, 1.442695
        %v2144 = vpow.pop %v2143
        %2145 = vadd.xlane.f32.xlu0 %v2114
        %v2146 = vpop.xlane.xlu0 %2145
        %2147 = vadd.xlane.f32.xlu0 %v2116
        %v2148 = vpop.xlane.xlu0 %2147
        %2149 = vadd.xlane.f32.xlu0 %v2118
        %v2150 = vpop.xlane.xlu0 %2149
        %2151 = vadd.xlane.f32.xlu0 %v2120
        %v2152 = vpop.xlane.xlu0 %2151
        %2153 = vadd.xlane.f32.xlu0 %v2122
        %v2154 = vpop.xlane.xlu0 %2153
        %2155 = vadd.xlane.f32.xlu0 %v2124
        %v2156 = vpop.xlane.xlu0 %2155
        %2157 = vadd.xlane.f32.xlu0 %v2126
        %v2158 = vpop.xlane.xlu0 %2157
        %2159 = vadd.xlane.f32.xlu0 %v2128
        %v2160 = vpop.xlane.xlu0 %2159
        %2161 = vadd.xlane.f32.xlu0 %v2130
        %v2162 = vpop.xlane.xlu0 %2161
        %2163 = vadd.xlane.f32.xlu0 %v2132
        %v2164 = vpop.xlane.xlu0 %2163
        %2165 = vadd.xlane.f32.xlu0 %v2134
        %v2166 = vpop.xlane.xlu0 %2165
        %2167 = vadd.xlane.f32.xlu0 %v2136
        %v2168 = vpop.xlane.xlu0 %2167
        %2169 = vadd.xlane.f32.xlu0 %v2138
        %v2170 = vpop.xlane.xlu0 %2169
        %2171 = vadd.xlane.f32.xlu0 %v2140
        %v2172 = vpop.xlane.xlu0 %2171
        %2173 = vadd.xlane.f32.xlu0 %v2142
        %v2174 = vpop.xlane.xlu0 %2173
        %2175 = vadd.xlane.f32.xlu0 %v2144
        %v2176 = vpop.xlane.xlu0 %2175
        %v2177 = vrcp.pop %v2146
        %v2178 = vrcp.pop %v2148
        %v2179 = vrcp.pop %v2150
        %v2180 = vrcp.pop %v2152
        %v2181 = vrcp.pop %v2154
        %v2182 = vrcp.pop %v2156
        %v2183 = vrcp.pop %v2158
        %v2184 = vrcp.pop %v2160
        %v2185 = vrcp.pop %v2162
        %v2186 = vrcp.pop %v2164
        %v2187 = vrcp.pop %v2166
        %v2188 = vrcp.pop %v2168
        %v2189 = vrcp.pop %v2170
        %v2190 = vrcp.pop %v2172
        %v2191 = vrcp.pop %v2174
        %v2192 = vrcp.pop %v2176
        %v2193 = vmul.f32 %v2114, %v2177
        %v2194 = vmul.f32 %v2116, %v2178
        %v2195 = vmul.f32 %v2118, %v2179
        %v2196 = vmul.f32 %v2120, %v2180
        %v2197 = vmul.f32 %v2122, %v2181
        %v2198 = vmul.f32 %v2124, %v2182
        %v2199 = vmul.f32 %v2126, %v2183
        %v2200 = vmul.f32 %v2128, %v2184
        %v2201 = vmul.f32 %v2130, %v2185
        %v2202 = vmul.f32 %v2132, %v2186
        %v2203 = vmul.f32 %v2134, %v2187
        %v2204 = vmul.f32 %v2136, %v2188
        %v2205 = vmul.f32 %v2138, %v2189
        %v2206 = vmul.f32 %v2140, %v2190
        %v2207 = vmul.f32 %v2142, %v2191
        %v2208 = vmul.f32 %v2144, %v2192
        %v2209 = vpack.c.bf16 %v2194, %v2193
        %v2210 = vpack.c.bf16 %v2196, %v2195
        %v2211 = vpack.c.bf16 %v2198, %v2197
        %v2212 = vpack.c.bf16 %v2200, %v2199
        %v2213 = vpack.c.bf16 %v2202, %v2201
        %v2214 = vpack.c.bf16 %v2204, %v2203
        %v2215 = vpack.c.bf16 %v2206, %v2205
        %v2216 = vpack.c.bf16 %v2208, %v2207
        %2225 = vrot.lane.b32.xlu0 %v1461, 96
        %v2226 = vpop.permute.xlu0 %2225
        %2227 = vrot.lane.b32.xlu0 %v1462, 96
        %v2228 = vpop.permute.xlu0 %2227
        %2229 = vrot.lane.b32.xlu0 %v1463, 96
        %v2230 = vpop.permute.xlu0 %2229
        %2231 = vrot.lane.b32.xlu0 %v1464, 96
        %v2232 = vpop.permute.xlu0 %2231
        %2233 = vrot.lane.b32.xlu0 %v1465, 96
        %v2234 = vpop.permute.xlu0 %2233
        %2235 = vrot.lane.b32.xlu0 %v1466, 96
        %v2236 = vpop.permute.xlu0 %2235
        %2237 = vrot.lane.b32.xlu0 %v1467, 96
        %v2238 = vpop.permute.xlu0 %2237
        %2239 = vrot.lane.b32.xlu0 %v1468, 96
        %v2240 = vpop.permute.xlu0 %2239
        %2249 = vmatprep.subr.bf16.mxu0 0
        %2250 = vmatpush1.bf16.msra.mxu0 %v2226
        %2251 = vmatprep.subr.bf16.mxu0 0
        %2252 = vmatpush1.bf16.msra.mxu0 %v2228
        %2253 = vmatprep.subr.bf16.mxu0 0
        %2254 = vmatpush1.bf16.msra.mxu0 %v2230
        %2255 = vmatprep.subr.bf16.mxu0 0
        %2256 = vmatpush1.bf16.msra.mxu0 %v2232
        %2257 = vmatprep.subr.bf16.mxu0 0
        %2258 = vmatpush1.bf16.msra.mxu0 %v2234
        %2259 = vmatprep.subr.bf16.mxu0 0
        %2260 = vmatpush1.bf16.msra.mxu0 %v2236
        %2261 = vmatprep.subr.bf16.mxu0 0
        %2262 = vmatpush1.bf16.msra.mxu0 %v2238
        %2263 = vmatprep.subr.bf16.mxu0 0
        %2264 = vmatpush1.bf16.msra.mxu0 %v2240
        %2265 = vmatprep.subr.bf16.mxu0 0
        %2266 = vmatpush1.bf16.msra.mxu0 0
        %2267 = vmatprep.subr.bf16.mxu0 0
        %2268 = vmatpush1.bf16.msra.mxu0 0
        %2269 = vmatprep.subr.bf16.mxu0 0
        %2270 = vmatpush1.bf16.msra.mxu0 0
        %2271 = vmatprep.subr.bf16.mxu0 0
        %2272 = vmatpush1.bf16.msra.mxu0 0
        %2273 = vmatprep.subr.bf16.mxu0 0
        %2274 = vmatpush1.bf16.msra.mxu0 0
        %2275 = vmatprep.subr.bf16.mxu0 0
        %2276 = vmatpush1.bf16.msra.mxu0 0
        %2277 = vmatprep.subr.bf16.mxu0 0
        %2278 = vmatpush1.bf16.msra.mxu0 0
        %2279 = vmatprep.subr.bf16.mxu0 0
        %2280 = vmatpush1.bf16.msra.mxu0 0
        %2281 = vmatprep.mubr.bf16.mxu0 0
        %2282 = vmatmul.mubr.bf16.gmra.mrb[0].mxu0 %v2209
        %v2283 = vpop.f32.mrb[0].mxu0
        %v2284 = vadd.f32 0.0, %v2283
        %v2285 = vpop.f32.mrb[0].mxu0
        %v2286 = vpop.f32.mrb[0].mxu0
        %v2287 = vadd.f32 0.0, %v2286
        %v2288 = vpop.f32.mrb[0].mxu0
        %2289 = vmatprep.mubr.bf16.mxu0 0
        %2290 = vmatmul.mubr.bf16.gmra.mrb[0].mxu0 %v2210
        %v2291 = vpop.f32.mrb[0].mxu0
        %v2292 = vadd.f32 0.0, %v2291
        %v2293 = vpop.f32.mrb[0].mxu0
        %v2294 = vpop.f32.mrb[0].mxu0
        %v2295 = vadd.f32 0.0, %v2294
        %v2296 = vpop.f32.mrb[0].mxu0
        %2297 = vmatprep.mubr.bf16.mxu0 0
        %2298 = vmatmul.mubr.bf16.gmra.mrb[0].mxu0 %v2211
        %v2299 = vpop.f32.mrb[0].mxu0
        %v2300 = vadd.f32 0.0, %v2299
        %v2301 = vpop.f32.mrb[0].mxu0
        %v2302 = vpop.f32.mrb[0].mxu0
        %v2303 = vadd.f32 0.0, %v2302
        %v2304 = vpop.f32.mrb[0].mxu0
        %2305 = vmatprep.mubr.bf16.mxu0 0
        %2306 = vmatmul.mubr.bf16.gmra.mrb[0].mxu0 %v2212
        %v2307 = vpop.f32.mrb[0].mxu0
        %v2308 = vadd.f32 0.0, %v2307
        %v2309 = vpop.f32.mrb[0].mxu0
        %v2310 = vpop.f32.mrb[0].mxu0
        %v2311 = vadd.f32 0.0, %v2310
        %v2312 = vpop.f32.mrb[0].mxu0
        %2313 = vmatprep.mubr.bf16.mxu0 0
        %2314 = vmatmul.mubr.bf16.gmra.mrb[0].mxu0 %v2213
        %v2315 = vpop.f32.mrb[0].mxu0
        %v2316 = vadd.f32 0.0, %v2315
        %v2317 = vpop.f32.mrb[0].mxu0
        %v2318 = vpop.f32.mrb[0].mxu0
        %v2319 = vadd.f32 0.0, %v2318
        %v2320 = vpop.f32.mrb[0].mxu0
        %2321 = vmatprep.mubr.bf16.mxu0 0
        %2322 = vmatmul.mubr.bf16.gmra.mrb[0].mxu0 %v2214
        %v2323 = vpop.f32.mrb[0].mxu0
        %v2324 = vadd.f32 0.0, %v2323
        %v2325 = vpop.f32.mrb[0].mxu0
        %v2326 = vpop.f32.mrb[0].mxu0
        %v2327 = vadd.f32 0.0, %v2326
        %v2328 = vpop.f32.mrb[0].mxu0
        %2329 = vmatprep.mubr.bf16.mxu0 0
        %2330 = vmatmul.mubr.bf16.gmra.mrb[0].mxu0 %v2215
        %v2331 = vpop.f32.mrb[0].mxu0
        %v2332 = vadd.f32 0.0, %v2331
        %v2333 = vpop.f32.mrb[0].mxu0
        %v2334 = vpop.f32.mrb[0].mxu0
        %v2335 = vadd.f32 0.0, %v2334
        %v2336 = vpop.f32.mrb[0].mxu0
        %2337 = vmatprep.mubr.bf16.mxu0 0
        %2338 = vmatmul.mubr.bf16.gmra.mrb[0].mxu0 %v2216
        %v2339 = vpop.f32.mrb[0].mxu0
        %v2340 = vadd.f32 0.0, %v2339
        %v2341 = vpop.f32.mrb[0].mxu0
        %v2342 = vpop.f32.mrb[0].mxu0
        %v2343 = vadd.f32 0.0, %v2342
        %v2344 = vpop.f32.mrb[0].mxu0
        %2345 = vdwg.mxu0
        %v2346 = vpack.c.bf16 %v2287, %v2284
        %v2347 = vpack.c.bf16 %v2295, %v2292
        %v2348 = vpack.c.bf16 %v2303, %v2300
        %v2349 = vpack.c.bf16 %v2311, %v2308
        %v2350 = vpack.c.bf16 %v2319, %v2316
        %v2351 = vpack.c.bf16 %v2327, %v2324
        %v2352 = vpack.c.bf16 %v2335, %v2332
        %v2353 = vpack.c.bf16 %v2343, %v2340
        %v2358 = vunpack.c.l.b16 %v1433
        %v2359 = vunpack.c.l.b16 %v1434
        %v2360 = vunpack.c.l.b16 %v1435
        %v2361 = vunpack.c.l.b16 %v1436
        %v2362 = vpack.c.b16 %v2359, %v2358
        %v2363 = vpack.c.b16 %v2361, %v2360
        %v2367 = vsel %vm1469, %v2346, 0
        %v2370 = vsel %vm1469, %v2347, 0
        %v2373 = vsel %vm1469, %v2348, 0
        %v2376 = vsel %vm1469, %v2349, 0
        %v2379 = vsel %vm1469, %v2350, 0
        %v2382 = vsel %vm1469, %v2351, 0
        %v2385 = vsel %vm1469, %v2352, 0
        %v2388 = vsel %vm1469, %v2353, 0
        %2390 = vmatprep.subr.bf16.mxu0 0
        %2391 = vmatpush1.bf16.msra.mxu0 %v2362
        %2392 = vmatprep.subr.bf16.mxu0 0
        %2393 = vmatpush1.bf16.msra.mxu0 %v2363
        %2394 = vmatprep.subr.bf16.mxu0 0
        %2395 = vmatpush1.bf16.msra.mxu0 0
        %2396 = vmatprep.subr.bf16.mxu0 0
        %2397 = vmatpush1.bf16.msra.mxu0 0
        %2398 = vmatprep.subr.bf16.mxu0 0
        %2399 = vmatpush1.bf16.msra.mxu0 0
        %2400 = vmatprep.subr.bf16.mxu0 0
        %2401 = vmatpush1.bf16.msra.mxu0 0
        %2402 = vmatprep.subr.bf16.mxu0 0
        %2403 = vmatpush1.bf16.msra.mxu0 0
        %2404 = vmatprep.subr.bf16.mxu0 0
        %2405 = vmatpush1.bf16.msra.mxu0 0
        %2406 = vmatprep.subr.bf16.mxu0 0
        %2407 = vmatpush1.bf16.msra.mxu0 0
        %2408 = vmatprep.subr.bf16.mxu0 0
        %2409 = vmatpush1.bf16.msra.mxu0 0
        %2410 = vmatprep.subr.bf16.mxu0 0
        %2411 = vmatpush1.bf16.msra.mxu0 0
        %2412 = vmatprep.subr.bf16.mxu0 0
        %2413 = vmatpush1.bf16.msra.mxu0 0
        %2414 = vmatprep.subr.bf16.mxu0 0
        %2415 = vmatpush1.bf16.msra.mxu0 0
        %2416 = vmatprep.subr.bf16.mxu0 0
        %2417 = vmatpush1.bf16.msra.mxu0 0
        %2418 = vmatprep.subr.bf16.mxu0 0
        %2419 = vmatpush1.bf16.msra.mxu0 0
        %2420 = vmatprep.subr.bf16.mxu0 0
        %2421 = vmatpush1.bf16.msra.mxu0 0
        %2422 = vmatprep.mubr.bf16.mxu0 0
        %2423 = vmatmul.mubr.bf16.gmra.mrb[0].mxu0 %v2367
        %v2424 = vpop.f32.mrb[0].mxu0
        %v2425 = vadd.f32 0.0, %v2424
        %v2426 = vpop.f32.mrb[0].mxu0
        %v2427 = vpop.f32.mrb[0].mxu0
        %v2428 = vadd.f32 0.0, %v2427
        %v2429 = vpop.f32.mrb[0].mxu0
        %2430 = vmatprep.mubr.bf16.mxu0 0
        %2431 = vmatmul.mubr.bf16.gmra.mrb[0].mxu0 %v2370
        %v2432 = vpop.f32.mrb[0].mxu0
        %v2433 = vadd.f32 0.0, %v2432
        %v2434 = vpop.f32.mrb[0].mxu0
        %v2435 = vpop.f32.mrb[0].mxu0
        %v2436 = vadd.f32 0.0, %v2435
        %v2437 = vpop.f32.mrb[0].mxu0
        %2438 = vmatprep.mubr.bf16.mxu0 0
        %2439 = vmatmul.mubr.bf16.gmra.mrb[0].mxu0 %v2373
        %v2440 = vpop.f32.mrb[0].mxu0
        %v2441 = vadd.f32 0.0, %v2440
        %v2442 = vpop.f32.mrb[0].mxu0
        %v2443 = vpop.f32.mrb[0].mxu0
        %v2444 = vadd.f32 0.0, %v2443
        %v2445 = vpop.f32.mrb[0].mxu0
        %2446 = vmatprep.mubr.bf16.mxu0 0
        %2447 = vmatmul.mubr.bf16.gmra.mrb[0].mxu0 %v2376
        %v2448 = vpop.f32.mrb[0].mxu0
        %v2449 = vadd.f32 0.0, %v2448
        %v2450 = vpop.f32.mrb[0].mxu0
        %v2451 = vpop.f32.mrb[0].mxu0
        %v2452 = vadd.f32 0.0, %v2451
        %v2453 = vpop.f32.mrb[0].mxu0
        %2454 = vmatprep.mubr.bf16.mxu0 0
        %2455 = vmatmul.mubr.bf16.gmra.mrb[0].mxu0 %v2379
        %v2456 = vpop.f32.mrb[0].mxu0
        %v2457 = vadd.f32 0.0, %v2456
        %v2458 = vpop.f32.mrb[0].mxu0
        %v2459 = vpop.f32.mrb[0].mxu0
        %v2460 = vadd.f32 0.0, %v2459
        %v2461 = vpop.f32.mrb[0].mxu0
        %2462 = vmatprep.mubr.bf16.mxu0 0
        %2463 = vmatmul.mubr.bf16.gmra.mrb[0].mxu0 %v2382
        %v2464 = vpop.f32.mrb[0].mxu0
        %v2465 = vadd.f32 0.0, %v2464
        %v2466 = vpop.f32.mrb[0].mxu0
        %v2467 = vpop.f32.mrb[0].mxu0
        %v2468 = vadd.f32 0.0, %v2467
        %v2469 = vpop.f32.mrb[0].mxu0
        %2470 = vmatprep.mubr.bf16.mxu0 0
        %2471 = vmatmul.mubr.bf16.gmra.mrb[0].mxu0 %v2385
        %v2472 = vpop.f32.mrb[0].mxu0
        %v2473 = vadd.f32 0.0, %v2472
        %v2474 = vpop.f32.mrb[0].mxu0
        %v2475 = vpop.f32.mrb[0].mxu0
        %v2476 = vadd.f32 0.0, %v2475
        %v2477 = vpop.f32.mrb[0].mxu0
        %2478 = vmatprep.mubr.bf16.mxu0 0
        %2479 = vmatmul.mubr.bf16.gmra.mrb[0].mxu0 %v2388
        %v2480 = vpop.f32.mrb[0].mxu0
        %v2481 = vadd.f32 0.0, %v2480
        %v2482 = vpop.f32.mrb[0].mxu0
        %v2483 = vpop.f32.mrb[0].mxu0
        %v2484 = vadd.f32 0.0, %v2483
        %v2485 = vpop.f32.mrb[0].mxu0
        %2486 = vdwg.mxu0
        %v2491 = vunpack.c.l.b16 %v1429
        %v2492 = vunpack.c.l.b16 %v1430
        %v2493 = vunpack.c.l.b16 %v1431
        %v2494 = vunpack.c.l.b16 %v1432
        %v2495 = vpack.c.b16 %v2492, %v2491
        %v2496 = vpack.c.b16 %v2494, %v2493
        %v2500 = vsel %vm1469, %v1864, 0
        %v2503 = vsel %vm1469, %v1865, 0
        %v2506 = vsel %vm1469, %v1866, 0
        %v2509 = vsel %vm1469, %v1867, 0
        %v2512 = vsel %vm1469, %v1868, 0
        %v2515 = vsel %vm1469, %v1869, 0
        %v2518 = vsel %vm1469, %v1870, 0
        %v2521 = vsel %vm1469, %v1871, 0
        %2523 = vmatprep.subr.bf16.mxu0 0
        %2524 = vmatpush1.bf16.msra.mxu0 %v2495
        %2525 = vmatprep.subr.bf16.mxu0 0
        %2526 = vmatpush1.bf16.msra.mxu0 %v2496
        %2527 = vmatprep.subr.bf16.mxu0 0
        %2528 = vmatpush1.bf16.msra.mxu0 0
        %2529 = vmatprep.subr.bf16.mxu0 0
        %2530 = vmatpush1.bf16.msra.mxu0 0
        %2531 = vmatprep.subr.bf16.mxu0 0
        %2532 = vmatpush1.bf16.msra.mxu0 0
        %2533 = vmatprep.subr.bf16.mxu0 0
        %2534 = vmatpush1.bf16.msra.mxu0 0
        %2535 = vmatprep.subr.bf16.mxu0 0
        %2536 = vmatpush1.bf16.msra.mxu0 0
        %2537 = vmatprep.subr.bf16.mxu0 0
        %2538 = vmatpush1.bf16.msra.mxu0 0
        %2539 = vmatprep.subr.bf16.mxu0 0
        %2540 = vmatpush1.bf16.msra.mxu0 0
        %2541 = vmatprep.subr.bf16.mxu0 0
        %2542 = vmatpush1.bf16.msra.mxu0 0
        %2543 = vmatprep.subr.bf16.mxu0 0
        %2544 = vmatpush1.bf16.msra.mxu0 0
        %2545 = vmatprep.subr.bf16.mxu0 0
        %2546 = vmatpush1.bf16.msra.mxu0 0
        %2547 = vmatprep.subr.bf16.mxu0 0
        %2548 = vmatpush1.bf16.msra.mxu0 0
        %2549 = vmatprep.subr.bf16.mxu0 0
        %2550 = vmatpush1.bf16.msra.mxu0 0
        %2551 = vmatprep.subr.bf16.mxu0 0
        %2552 = vmatpush1.bf16.msra.mxu0 0
        %2553 = vmatprep.subr.bf16.mxu0 0
        %2554 = vmatpush1.bf16.msra.mxu0 0
        %2555 = vmatprep.mubr.bf16.mxu0 0
        %2556 = vmatmul.mubr.bf16.gmra.mrb[0].mxu0 %v2500
        %v2557 = vpop.f32.mrb[0].mxu0
        %v2558 = vadd.f32 %v2425, %v2557
        %v2559 = vpop.f32.mrb[0].mxu0
        %v2560 = vpop.f32.mrb[0].mxu0
        %v2561 = vadd.f32 %v2428, %v2560
        %v2562 = vpop.f32.mrb[0].mxu0
        %2563 = vmatprep.mubr.bf16.mxu0 0
        %2564 = vmatmul.mubr.bf16.gmra.mrb[0].mxu0 %v2503
        %v2565 = vpop.f32.mrb[0].mxu0
        %v2566 = vadd.f32 %v2433, %v2565
        %v2567 = vpop.f32.mrb[0].mxu0
        %v2568 = vpop.f32.mrb[0].mxu0
        %v2569 = vadd.f32 %v2436, %v2568
        %v2570 = vpop.f32.mrb[0].mxu0
        %2571 = vmatprep.mubr.bf16.mxu0 0
        %2572 = vmatmul.mubr.bf16.gmra.mrb[0].mxu0 %v2506
        %v2573 = vpop.f32.mrb[0].mxu0
        %v2574 = vadd.f32 %v2441, %v2573
        %v2575 = vpop.f32.mrb[0].mxu0
        %v2576 = vpop.f32.mrb[0].mxu0
        %v2577 = vadd.f32 %v2444, %v2576
        %v2578 = vpop.f32.mrb[0].mxu0
        %2579 = vmatprep.mubr.bf16.mxu0 0
        %2580 = vmatmul.mubr.bf16.gmra.mrb[0].mxu0 %v2509
        %v2581 = vpop.f32.mrb[0].mxu0
        %v2582 = vadd.f32 %v2449, %v2581
        %v2583 = vpop.f32.mrb[0].mxu0
        %v2584 = vpop.f32.mrb[0].mxu0
        %v2585 = vadd.f32 %v2452, %v2584
        %v2586 = vpop.f32.mrb[0].mxu0
        %2587 = vmatprep.mubr.bf16.mxu0 0
        %2588 = vmatmul.mubr.bf16.gmra.mrb[0].mxu0 %v2512
        %v2589 = vpop.f32.mrb[0].mxu0
        %v2590 = vadd.f32 %v2457, %v2589
        %v2591 = vpop.f32.mrb[0].mxu0
        %v2592 = vpop.f32.mrb[0].mxu0
        %v2593 = vadd.f32 %v2460, %v2592
        %v2594 = vpop.f32.mrb[0].mxu0
        %2595 = vmatprep.mubr.bf16.mxu0 0
        %2596 = vmatmul.mubr.bf16.gmra.mrb[0].mxu0 %v2515
        %v2597 = vpop.f32.mrb[0].mxu0
        %v2598 = vadd.f32 %v2465, %v2597
        %v2599 = vpop.f32.mrb[0].mxu0
        %v2600 = vpop.f32.mrb[0].mxu0
        %v2601 = vadd.f32 %v2468, %v2600
        %v2602 = vpop.f32.mrb[0].mxu0
        %2603 = vmatprep.mubr.bf16.mxu0 0
        %2604 = vmatmul.mubr.bf16.gmra.mrb[0].mxu0 %v2518
        %v2605 = vpop.f32.mrb[0].mxu0
        %v2606 = vadd.f32 %v2473, %v2605
        %v2607 = vpop.f32.mrb[0].mxu0
        %v2608 = vpop.f32.mrb[0].mxu0
        %v2609 = vadd.f32 %v2476, %v2608
        %v2610 = vpop.f32.mrb[0].mxu0
        %2611 = vmatprep.mubr.bf16.mxu0 0
        %2612 = vmatmul.mubr.bf16.gmra.mrb[0].mxu0 %v2521
        %v2613 = vpop.f32.mrb[0].mxu0
        %v2614 = vadd.f32 %v2481, %v2613
        %v2615 = vpop.f32.mrb[0].mxu0
        %v2616 = vpop.f32.mrb[0].mxu0
        %v2617 = vadd.f32 %v2484, %v2616
        %v2618 = vpop.f32.mrb[0].mxu0
        %2619 = vdwg.mxu0
        %2620 = vrot.lane.b32.xlu0 %v1445, 64
        %v2621 = vpop.permute.xlu0 %2620
        %2622 = vrot.lane.b32.xlu0 %v1446, 64
        %v2623 = vpop.permute.xlu0 %2622
        %2624 = vrot.lane.b32.xlu0 %v1447, 64
        %v2625 = vpop.permute.xlu0 %2624
        %2626 = vrot.lane.b32.xlu0 %v1448, 64
        %v2627 = vpop.permute.xlu0 %2626
        %2628 = vrot.lane.b32.xlu0 %v1449, 64
        %v2629 = vpop.permute.xlu0 %2628
        %2630 = vrot.lane.b32.xlu0 %v1450, 64
        %v2631 = vpop.permute.xlu0 %2630
        %2632 = vrot.lane.b32.xlu0 %v1451, 64
        %v2633 = vpop.permute.xlu0 %2632
        %2634 = vrot.lane.b32.xlu0 %v1452, 64
        %v2635 = vpop.permute.xlu0 %2634
        %2636 = vrot.lane.b32.xlu0 %v1453, 64
        %v2637 = vpop.permute.xlu0 %2636
        %2638 = vrot.lane.b32.xlu0 %v1454, 64
        %v2639 = vpop.permute.xlu0 %2638
        %2640 = vrot.lane.b32.xlu0 %v1455, 64
        %v2641 = vpop.permute.xlu0 %2640
        %2642 = vrot.lane.b32.xlu0 %v1456, 64
        %v2643 = vpop.permute.xlu0 %2642
        %2644 = vrot.lane.b32.xlu0 %v1457, 64
        %v2645 = vpop.permute.xlu0 %2644
        %2646 = vrot.lane.b32.xlu0 %v1458, 64
        %v2647 = vpop.permute.xlu0 %2646
        %2648 = vrot.lane.b32.xlu0 %v1459, 64
        %v2649 = vpop.permute.xlu0 %2648
        %2650 = vrot.lane.b32.xlu0 %v1460, 64
        %v2651 = vpop.permute.xlu0 %2650
        %v2653 = vsel %vm1469, %v2621, 0
        %v2656 = vsel %vm1469, %v2623, 0
        %v2659 = vsel %vm1469, %v2625, 0
        %v2662 = vsel %vm1469, %v2627, 0
        %v2665 = vsel %vm1469, %v2629, 0
        %v2668 = vsel %vm1469, %v2631, 0
        %v2671 = vsel %vm1469, %v2633, 0
        %v2674 = vsel %vm1469, %v2635, 0
        %v2677 = vsel %vm1469, %v2637, 0
        %v2680 = vsel %vm1469, %v2639, 0
        %v2683 = vsel %vm1469, %v2641, 0
        %v2686 = vsel %vm1469, %v2643, 0
        %v2689 = vsel %vm1469, %v2645, 0
        %v2692 = vsel %vm1469, %v2647, 0
        %v2695 = vsel %vm1469, %v2649, 0
        %v2698 = vsel %vm1469, %v2651, 0
        %2700 = vmatprep.subr.bf16.mxu0 0
        %2701 = vmatpush1.bf16.xpose.msra.mxu0 %v2677
        %2702 = vmatprep.subr.bf16.mxu0 0
        %2703 = vmatpush1.bf16.xpose.msra.mxu0 %v2680
        %2704 = vmatprep.subr.bf16.mxu0 0
        %2705 = vmatpush1.bf16.xpose.msra.mxu0 %v2683
        %2706 = vmatprep.subr.bf16.mxu0 0
        %2707 = vmatpush1.bf16.xpose.msra.mxu0 %v2686
        %2708 = vmatprep.subr.bf16.mxu0 0
        %2709 = vmatpush1.bf16.xpose.msra.mxu0 %v2689
        %2710 = vmatprep.subr.bf16.mxu0 0
        %2711 = vmatpush1.bf16.xpose.msra.mxu0 %v2692
        %2712 = vmatprep.subr.bf16.mxu0 0
        %2713 = vmatpush1.bf16.xpose.msra.mxu0 %v2695
        %2714 = vmatprep.subr.bf16.mxu0 0
        %2715 = vmatpush1.bf16.xpose.msra.mxu0 %v2698
        %2716 = vmatprep.subr.bf16.mxu0 0
        %2717 = vmatpush1.bf16.xpose.msra.mxu0 0
        %2718 = vmatprep.subr.bf16.mxu0 0
        %2719 = vmatpush1.bf16.xpose.msra.mxu0 0
        %2720 = vmatprep.subr.bf16.mxu0 0
        %2721 = vmatpush1.bf16.xpose.msra.mxu0 0
        %2722 = vmatprep.subr.bf16.mxu0 0
        %2723 = vmatpush1.bf16.xpose.msra.mxu0 0
        %2724 = vmatprep.subr.bf16.mxu0 0
        %2725 = vmatpush1.bf16.xpose.msra.mxu0 0
        %2726 = vmatprep.subr.bf16.mxu0 0
        %2727 = vmatpush1.bf16.xpose.msra.mxu0 0
        %2728 = vmatprep.subr.bf16.mxu0 0
        %2729 = vmatpush1.bf16.xpose.msra.mxu0 0
        %2730 = vmatprep.subr.bf16.mxu0 0
        %2731 = vmatpush1.bf16.xpose.msra.mxu0 0
        %2732 = vmatprep.mubr.bf16.mxu0 0
        %2733 = vmatmul.mubr.bf16.gmra.mrb[0].mxu0 %v2653
        %v2734 = vpop.f32.mrb[0].mxu0
        %v2735 = vadd.f32 0.0, %v2734
        %v2736 = vpop.f32.mrb[0].mxu0
        %v2737 = vpop.f32.mrb[0].mxu0
        %v2738 = vadd.f32 0.0, %v2737
        %v2739 = vpop.f32.mrb[0].mxu0
        %2740 = vmatprep.mubr.bf16.mxu0 0
        %2741 = vmatmul.mubr.bf16.gmra.mrb[0].mxu0 %v2656
        %v2742 = vpop.f32.mrb[0].mxu0
        %v2743 = vadd.f32 0.0, %v2742
        %v2744 = vpop.f32.mrb[0].mxu0
        %v2745 = vpop.f32.mrb[0].mxu0
        %v2746 = vadd.f32 0.0, %v2745
        %v2747 = vpop.f32.mrb[0].mxu0
        %2748 = vmatprep.mubr.bf16.mxu0 0
        %2749 = vmatmul.mubr.bf16.gmra.mrb[0].mxu0 %v2659
        %v2750 = vpop.f32.mrb[0].mxu0
        %v2751 = vadd.f32 0.0, %v2750
        %v2752 = vpop.f32.mrb[0].mxu0
        %v2753 = vpop.f32.mrb[0].mxu0
        %v2754 = vadd.f32 0.0, %v2753
        %v2755 = vpop.f32.mrb[0].mxu0
        %2756 = vmatprep.mubr.bf16.mxu0 0
        %2757 = vmatmul.mubr.bf16.gmra.mrb[0].mxu0 %v2662
        %v2758 = vpop.f32.mrb[0].mxu0
        %v2759 = vadd.f32 0.0, %v2758
        %v2760 = vpop.f32.mrb[0].mxu0
        %v2761 = vpop.f32.mrb[0].mxu0
        %v2762 = vadd.f32 0.0, %v2761
        %v2763 = vpop.f32.mrb[0].mxu0
        %2764 = vmatprep.mubr.bf16.mxu0 0
        %2765 = vmatmul.mubr.bf16.gmra.mrb[0].mxu0 %v2665
        %v2766 = vpop.f32.mrb[0].mxu0
        %v2767 = vadd.f32 0.0, %v2766
        %v2768 = vpop.f32.mrb[0].mxu0
        %v2769 = vpop.f32.mrb[0].mxu0
        %v2770 = vadd.f32 0.0, %v2769
        %v2771 = vpop.f32.mrb[0].mxu0
        %2772 = vmatprep.mubr.bf16.mxu0 0
        %2773 = vmatmul.mubr.bf16.gmra.mrb[0].mxu0 %v2668
        %v2774 = vpop.f32.mrb[0].mxu0
        %v2775 = vadd.f32 0.0, %v2774
        %v2776 = vpop.f32.mrb[0].mxu0
        %v2777 = vpop.f32.mrb[0].mxu0
        %v2778 = vadd.f32 0.0, %v2777
        %v2779 = vpop.f32.mrb[0].mxu0
        %2780 = vmatprep.mubr.bf16.mxu0 0
        %2781 = vmatmul.mubr.bf16.gmra.mrb[0].mxu0 %v2671
        %v2782 = vpop.f32.mrb[0].mxu0
        %v2783 = vadd.f32 0.0, %v2782
        %v2784 = vpop.f32.mrb[0].mxu0
        %v2785 = vpop.f32.mrb[0].mxu0
        %v2786 = vadd.f32 0.0, %v2785
        %v2787 = vpop.f32.mrb[0].mxu0
        %2788 = vmatprep.mubr.bf16.mxu0 0
        %2789 = vmatmul.mubr.bf16.gmra.mrb[0].mxu0 %v2674
        %v2790 = vpop.f32.mrb[0].mxu0
        %v2791 = vadd.f32 0.0, %v2790
        %v2792 = vpop.f32.mrb[0].mxu0
        %v2793 = vpop.f32.mrb[0].mxu0
        %v2794 = vadd.f32 0.0, %v2793
        %v2795 = vpop.f32.mrb[0].mxu0
        %2796 = vdwg.mxu0
        %2797 = vmax.xlane.f32.xlu0 %v2735
        %v2798 = vpop.xlane.xlu0 %2797
        %2799 = vmax.xlane.f32.xlu0 %v2738
        %v2800 = vpop.xlane.xlu0 %2799
        %2801 = vmax.xlane.f32.xlu0 %v2743
        %v2802 = vpop.xlane.xlu0 %2801
        %2803 = vmax.xlane.f32.xlu0 %v2746
        %v2804 = vpop.xlane.xlu0 %2803
        %2805 = vmax.xlane.f32.xlu0 %v2751
        %v2806 = vpop.xlane.xlu0 %2805
        %2807 = vmax.xlane.f32.xlu0 %v2754
        %v2808 = vpop.xlane.xlu0 %2807
        %2809 = vmax.xlane.f32.xlu0 %v2759
        %v2810 = vpop.xlane.xlu0 %2809
        %2811 = vmax.xlane.f32.xlu0 %v2762
        %v2812 = vpop.xlane.xlu0 %2811
        %2813 = vmax.xlane.f32.xlu0 %v2767
        %v2814 = vpop.xlane.xlu0 %2813
        %2815 = vmax.xlane.f32.xlu0 %v2770
        %v2816 = vpop.xlane.xlu0 %2815
        %2817 = vmax.xlane.f32.xlu0 %v2775
        %v2818 = vpop.xlane.xlu0 %2817
        %2819 = vmax.xlane.f32.xlu0 %v2778
        %v2820 = vpop.xlane.xlu0 %2819
        %2821 = vmax.xlane.f32.xlu0 %v2783
        %v2822 = vpop.xlane.xlu0 %2821
        %2823 = vmax.xlane.f32.xlu0 %v2786
        %v2824 = vpop.xlane.xlu0 %2823
        %2825 = vmax.xlane.f32.xlu0 %v2791
        %v2826 = vpop.xlane.xlu0 %2825
        %2827 = vmax.xlane.f32.xlu0 %v2794
        %v2828 = vpop.xlane.xlu0 %2827
        %v2829 = vsub.f32 %v2735, %v2798
        %v2830 = vsub.f32 %v2738, %v2800
        %v2831 = vsub.f32 %v2743, %v2802
        %v2832 = vsub.f32 %v2746, %v2804
        %v2833 = vsub.f32 %v2751, %v2806
        %v2834 = vsub.f32 %v2754, %v2808
        %v2835 = vsub.f32 %v2759, %v2810
        %v2836 = vsub.f32 %v2762, %v2812
        %v2837 = vsub.f32 %v2767, %v2814
        %v2838 = vsub.f32 %v2770, %v2816
        %v2839 = vsub.f32 %v2775, %v2818
        %v2840 = vsub.f32 %v2778, %v2820
        %v2841 = vsub.f32 %v2783, %v2822
        %v2842 = vsub.f32 %v2786, %v2824
        %v2843 = vsub.f32 %v2791, %v2826
        %v2844 = vsub.f32 %v2794, %v2828
        %v2845 = vmul.f32 %v2829, 1.442695
        %v2846 = vpow.pop %v2845
        %v2847 = vmul.f32 %v2830, 1.442695
        %v2848 = vpow.pop %v2847
        %v2849 = vmul.f32 %v2831, 1.442695
        %v2850 = vpow.pop %v2849
        %v2851 = vmul.f32 %v2832, 1.442695
        %v2852 = vpow.pop %v2851
        %v2853 = vmul.f32 %v2833, 1.442695
        %v2854 = vpow.pop %v2853
        %v2855 = vmul.f32 %v2834, 1.442695
        %v2856 = vpow.pop %v2855
        %v2857 = vmul.f32 %v2835, 1.442695
        %v2858 = vpow.pop %v2857
        %v2859 = vmul.f32 %v2836, 1.442695
        %v2860 = vpow.pop %v2859
        %v2861 = vmul.f32 %v2837, 1.442695
        %v2862 = vpow.pop %v2861
        %v2863 = vmul.f32 %v2838, 1.442695
        %v2864 = vpow.pop %v2863
        %v2865 = vmul.f32 %v2839, 1.442695
        %v2866 = vpow.pop %v2865
        %v2867 = vmul.f32 %v2840, 1.442695
        %v2868 = vpow.pop %v2867
        %v2869 = vmul.f32 %v2841, 1.442695
        %v2870 = vpow.pop %v2869
        %v2871 = vmul.f32 %v2842, 1.442695
        %v2872 = vpow.pop %v2871
        %v2873 = vmul.f32 %v2843, 1.442695
        %v2874 = vpow.pop %v2873
        %v2875 = vmul.f32 %v2844, 1.442695
        %v2876 = vpow.pop %v2875
        %2877 = vadd.xlane.f32.xlu0 %v2846
        %v2878 = vpop.xlane.xlu0 %2877
        %2879 = vadd.xlane.f32.xlu0 %v2848
        %v2880 = vpop.xlane.xlu0 %2879
        %2881 = vadd.xlane.f32.xlu0 %v2850
        %v2882 = vpop.xlane.xlu0 %2881
        %2883 = vadd.xlane.f32.xlu0 %v2852
        %v2884 = vpop.xlane.xlu0 %2883
        %2885 = vadd.xlane.f32.xlu0 %v2854
        %v2886 = vpop.xlane.xlu0 %2885
        %2887 = vadd.xlane.f32.xlu0 %v2856
        %v2888 = vpop.xlane.xlu0 %2887
        %2889 = vadd.xlane.f32.xlu0 %v2858
        %v2890 = vpop.xlane.xlu0 %2889
        %2891 = vadd.xlane.f32.xlu0 %v2860
        %v2892 = vpop.xlane.xlu0 %2891
        %2893 = vadd.xlane.f32.xlu0 %v2862
        %v2894 = vpop.xlane.xlu0 %2893
        %2895 = vadd.xlane.f32.xlu0 %v2864
        %v2896 = vpop.xlane.xlu0 %2895
        %2897 = vadd.xlane.f32.xlu0 %v2866
        %v2898 = vpop.xlane.xlu0 %2897
        %2899 = vadd.xlane.f32.xlu0 %v2868
        %v2900 = vpop.xlane.xlu0 %2899
        %2901 = vadd.xlane.f32.xlu0 %v2870
        %v2902 = vpop.xlane.xlu0 %2901
        %2903 = vadd.xlane.f32.xlu0 %v2872
        %v2904 = vpop.xlane.xlu0 %2903
        %2905 = vadd.xlane.f32.xlu0 %v2874
        %v2906 = vpop.xlane.xlu0 %2905
        %2907 = vadd.xlane.f32.xlu0 %v2876
        %v2908 = vpop.xlane.xlu0 %2907
        %v2909 = vrcp.pop %v2878
        %v2910 = vrcp.pop %v2880
        %v2911 = vrcp.pop %v2882
        %v2912 = vrcp.pop %v2884
        %v2913 = vrcp.pop %v2886
        %v2914 = vrcp.pop %v2888
        %v2915 = vrcp.pop %v2890
        %v2916 = vrcp.pop %v2892
        %v2917 = vrcp.pop %v2894
        %v2918 = vrcp.pop %v2896
        %v2919 = vrcp.pop %v2898
        %v2920 = vrcp.pop %v2900
        %v2921 = vrcp.pop %v2902
        %v2922 = vrcp.pop %v2904
        %v2923 = vrcp.pop %v2906
        %v2924 = vrcp.pop %v2908
        %v2925 = vmul.f32 %v2846, %v2909
        %v2926 = vmul.f32 %v2848, %v2910
        %v2927 = vmul.f32 %v2850, %v2911
        %v2928 = vmul.f32 %v2852, %v2912
        %v2929 = vmul.f32 %v2854, %v2913
        %v2930 = vmul.f32 %v2856, %v2914
        %v2931 = vmul.f32 %v2858, %v2915
        %v2932 = vmul.f32 %v2860, %v2916
        %v2933 = vmul.f32 %v2862, %v2917
        %v2934 = vmul.f32 %v2864, %v2918
        %v2935 = vmul.f32 %v2866, %v2919
        %v2936 = vmul.f32 %v2868, %v2920
        %v2937 = vmul.f32 %v2870, %v2921
        %v2938 = vmul.f32 %v2872, %v2922
        %v2939 = vmul.f32 %v2874, %v2923
        %v2940 = vmul.f32 %v2876, %v2924
        %v2941 = vpack.c.bf16 %v2926, %v2925
        %v2942 = vpack.c.bf16 %v2928, %v2927
        %v2943 = vpack.c.bf16 %v2930, %v2929
        %v2944 = vpack.c.bf16 %v2932, %v2931
        %v2945 = vpack.c.bf16 %v2934, %v2933
        %v2946 = vpack.c.bf16 %v2936, %v2935
        %v2947 = vpack.c.bf16 %v2938, %v2937
        %v2948 = vpack.c.bf16 %v2940, %v2939
        %2949 = vrot.lane.b32.xlu0 %v1461, 64
        %v2950 = vpop.permute.xlu0 %2949
        %2951 = vrot.lane.b32.xlu0 %v1462, 64
        %v2952 = vpop.permute.xlu0 %2951
        %2953 = vrot.lane.b32.xlu0 %v1463, 64
        %v2954 = vpop.permute.xlu0 %2953
        %2955 = vrot.lane.b32.xlu0 %v1464, 64
        %v2956 = vpop.permute.xlu0 %2955
        %2957 = vrot.lane.b32.xlu0 %v1465, 64
        %v2958 = vpop.permute.xlu0 %2957
        %2959 = vrot.lane.b32.xlu0 %v1466, 64
        %v2960 = vpop.permute.xlu0 %2959
        %2961 = vrot.lane.b32.xlu0 %v1467, 64
        %v2962 = vpop.permute.xlu0 %2961
        %2963 = vrot.lane.b32.xlu0 %v1468, 64
        %v2964 = vpop.permute.xlu0 %2963
        %2973 = vmatprep.subr.bf16.mxu0 0
        %2974 = vmatpush1.bf16.msra.mxu0 %v2950
        %2975 = vmatprep.subr.bf16.mxu0 0
        %2976 = vmatpush1.bf16.msra.mxu0 %v2952
        %2977 = vmatprep.subr.bf16.mxu0 0
        %2978 = vmatpush1.bf16.msra.mxu0 %v2954
        %2979 = vmatprep.subr.bf16.mxu0 0
        %2980 = vmatpush1.bf16.msra.mxu0 %v2956
        %2981 = vmatprep.subr.bf16.mxu0 0
        %2982 = vmatpush1.bf16.msra.mxu0 %v2958
        %2983 = vmatprep.subr.bf16.mxu0 0
        %2984 = vmatpush1.bf16.msra.mxu0 %v2960
        %2985 = vmatprep.subr.bf16.mxu0 0
        %2986 = vmatpush1.bf16.msra.mxu0 %v2962
        %2987 = vmatprep.subr.bf16.mxu0 0
        %2988 = vmatpush1.bf16.msra.mxu0 %v2964
        %2989 = vmatprep.subr.bf16.mxu0 0
        %2990 = vmatpush1.bf16.msra.mxu0 0
        %2991 = vmatprep.subr.bf16.mxu0 0
        %2992 = vmatpush1.bf16.msra.mxu0 0
        %2993 = vmatprep.subr.bf16.mxu0 0
        %2994 = vmatpush1.bf16.msra.mxu0 0
        %2995 = vmatprep.subr.bf16.mxu0 0
        %2996 = vmatpush1.bf16.msra.mxu0 0
        %2997 = vmatprep.subr.bf16.mxu0 0
        %2998 = vmatpush1.bf16.msra.mxu0 0
        %2999 = vmatprep.subr.bf16.mxu0 0
        %3000 = vmatpush1.bf16.msra.mxu0 0
        %3001 = vmatprep.subr.bf16.mxu0 0
        %3002 = vmatpush1.bf16.msra.mxu0 0
        %3003 = vmatprep.subr.bf16.mxu0 0
        %3004 = vmatpush1.bf16.msra.mxu0 0
        %3005 = vmatprep.mubr.bf16.mxu0 0
        %3006 = vmatmul.mubr.bf16.gmra.mrb[0].mxu0 %v2941
        %v3007 = vpop.f32.mrb[0].mxu0
        %v3008 = vadd.f32 0.0, %v3007
        %v3009 = vpop.f32.mrb[0].mxu0
        %v3010 = vpop.f32.mrb[0].mxu0
        %v3011 = vadd.f32 0.0, %v3010
        %v3012 = vpop.f32.mrb[0].mxu0
        %3013 = vmatprep.mubr.bf16.mxu0 0
        %3014 = vmatmul.mubr.bf16.gmra.mrb[0].mxu0 %v2942
        %v3015 = vpop.f32.mrb[0].mxu0
        %v3016 = vadd.f32 0.0, %v3015
        %v3017 = vpop.f32.mrb[0].mxu0
        %v3018 = vpop.f32.mrb[0].mxu0
        %v3019 = vadd.f32 0.0, %v3018
        %v3020 = vpop.f32.mrb[0].mxu0
        %3021 = vmatprep.mubr.bf16.mxu0 0
        %3022 = vmatmul.mubr.bf16.gmra.mrb[0].mxu0 %v2943
        %v3023 = vpop.f32.mrb[0].mxu0
        %v3024 = vadd.f32 0.0, %v3023
        %v3025 = vpop.f32.mrb[0].mxu0
        %v3026 = vpop.f32.mrb[0].mxu0
        %v3027 = vadd.f32 0.0, %v3026
        %v3028 = vpop.f32.mrb[0].mxu0
        %3029 = vmatprep.mubr.bf16.mxu0 0
        %3030 = vmatmul.mubr.bf16.gmra.mrb[0].mxu0 %v2944
        %v3031 = vpop.f32.mrb[0].mxu0
        %v3032 = vadd.f32 0.0, %v3031
        %v3033 = vpop.f32.mrb[0].mxu0
        %v3034 = vpop.f32.mrb[0].mxu0
        %v3035 = vadd.f32 0.0, %v3034
        %v3036 = vpop.f32.mrb[0].mxu0
        %3037 = vmatprep.mubr.bf16.mxu0 0
        %3038 = vmatmul.mubr.bf16.gmra.mrb[0].mxu0 %v2945
        %v3039 = vpop.f32.mrb[0].mxu0
        %v3040 = vadd.f32 0.0, %v3039
        %v3041 = vpop.f32.mrb[0].mxu0
        %v3042 = vpop.f32.mrb[0].mxu0
        %v3043 = vadd.f32 0.0, %v3042
        %v3044 = vpop.f32.mrb[0].mxu0
        %3045 = vmatprep.mubr.bf16.mxu0 0
        %3046 = vmatmul.mubr.bf16.gmra.mrb[0].mxu0 %v2946
        %v3047 = vpop.f32.mrb[0].mxu0
        %v3048 = vadd.f32 0.0, %v3047
        %v3049 = vpop.f32.mrb[0].mxu0
        %v3050 = vpop.f32.mrb[0].mxu0
        %v3051 = vadd.f32 0.0, %v3050
        %v3052 = vpop.f32.mrb[0].mxu0
        %3053 = vmatprep.mubr.bf16.mxu0 0
        %3054 = vmatmul.mubr.bf16.gmra.mrb[0].mxu0 %v2947
        %v3055 = vpop.f32.mrb[0].mxu0
        %v3056 = vadd.f32 0.0, %v3055
        %v3057 = vpop.f32.mrb[0].mxu0
        %v3058 = vpop.f32.mrb[0].mxu0
        %v3059 = vadd.f32 0.0, %v3058
        %v3060 = vpop.f32.mrb[0].mxu0
        %3061 = vmatprep.mubr.bf16.mxu0 0
        %3062 = vmatmul.mubr.bf16.gmra.mrb[0].mxu0 %v2948
        %v3063 = vpop.f32.mrb[0].mxu0
        %v3064 = vadd.f32 0.0, %v3063
        %v3065 = vpop.f32.mrb[0].mxu0
        %v3066 = vpop.f32.mrb[0].mxu0
        %v3067 = vadd.f32 0.0, %v3066
        %v3068 = vpop.f32.mrb[0].mxu0
        %3069 = vdwg.mxu0
        %v3070 = vpack.c.bf16 %v3011, %v3008
        %v3071 = vpack.c.bf16 %v3019, %v3016
        %v3072 = vpack.c.bf16 %v3027, %v3024
        %v3073 = vpack.c.bf16 %v3035, %v3032
        %v3074 = vpack.c.bf16 %v3043, %v3040
        %v3075 = vpack.c.bf16 %v3051, %v3048
        %v3076 = vpack.c.bf16 %v3059, %v3056
        %v3077 = vpack.c.bf16 %v3067, %v3064
        %v3082 = vunpack.c.l.b16 %v1437
        %v3083 = vunpack.c.l.b16 %v1438
        %v3084 = vunpack.c.l.b16 %v1439
        %v3085 = vunpack.c.l.b16 %v1440
        %v3086 = vpack.c.b16 %v3083, %v3082
        %v3087 = vpack.c.b16 %v3085, %v3084
        %v3091 = vsel %vm1469, %v3070, 0
        %v3094 = vsel %vm1469, %v3071, 0
        %v3097 = vsel %vm1469, %v3072, 0
        %v3100 = vsel %vm1469, %v3073, 0
        %v3103 = vsel %vm1469, %v3074, 0
        %v3106 = vsel %vm1469, %v3075, 0
        %v3109 = vsel %vm1469, %v3076, 0
        %v3112 = vsel %vm1469, %v3077, 0
        %3114 = vmatprep.subr.bf16.mxu0 0
        %3115 = vmatpush1.bf16.msra.mxu0 %v3086
        %3116 = vmatprep.subr.bf16.mxu0 0
        %3117 = vmatpush1.bf16.msra.mxu0 %v3087
        %3118 = vmatprep.subr.bf16.mxu0 0
        %3119 = vmatpush1.bf16.msra.mxu0 0
        %3120 = vmatprep.subr.bf16.mxu0 0
        %3121 = vmatpush1.bf16.msra.mxu0 0
        %3122 = vmatprep.subr.bf16.mxu0 0
        %3123 = vmatpush1.bf16.msra.mxu0 0
        %3124 = vmatprep.subr.bf16.mxu0 0
        %3125 = vmatpush1.bf16.msra.mxu0 0
        %3126 = vmatprep.subr.bf16.mxu0 0
        %3127 = vmatpush1.bf16.msra.mxu0 0
        %3128 = vmatprep.subr.bf16.mxu0 0
        %3129 = vmatpush1.bf16.msra.mxu0 0
        %3130 = vmatprep.subr.bf16.mxu0 0
        %3131 = vmatpush1.bf16.msra.mxu0 0
        %3132 = vmatprep.subr.bf16.mxu0 0
        %3133 = vmatpush1.bf16.msra.mxu0 0
        %3134 = vmatprep.subr.bf16.mxu0 0
        %3135 = vmatpush1.bf16.msra.mxu0 0
        %3136 = vmatprep.subr.bf16.mxu0 0
        %3137 = vmatpush1.bf16.msra.mxu0 0
        %3138 = vmatprep.subr.bf16.mxu0 0
        %3139 = vmatpush1.bf16.msra.mxu0 0
        %3140 = vmatprep.subr.bf16.mxu0 0
        %3141 = vmatpush1.bf16.msra.mxu0 0
        %3142 = vmatprep.subr.bf16.mxu0 0
        %3143 = vmatpush1.bf16.msra.mxu0 0
        %3144 = vmatprep.subr.bf16.mxu0 0
        %3145 = vmatpush1.bf16.msra.mxu0 0
        %3146 = vmatprep.mubr.bf16.mxu0 0
        %3147 = vmatmul.mubr.bf16.gmra.mrb[0].mxu0 %v3091
        %v3148 = vpop.f32.mrb[0].mxu0
        %v3149 = vadd.f32 0.0, %v3148
        %v3150 = vpop.f32.mrb[0].mxu0
        %v3151 = vpop.f32.mrb[0].mxu0
        %v3152 = vadd.f32 0.0, %v3151
        %v3153 = vpop.f32.mrb[0].mxu0
        %3154 = vmatprep.mubr.bf16.mxu0 0
        %3155 = vmatmul.mubr.bf16.gmra.mrb[0].mxu0 %v3094
        %v3156 = vpop.f32.mrb[0].mxu0
        %v3157 = vadd.f32 0.0, %v3156
        %v3158 = vpop.f32.mrb[0].mxu0
        %v3159 = vpop.f32.mrb[0].mxu0
        %v3160 = vadd.f32 0.0, %v3159
        %v3161 = vpop.f32.mrb[0].mxu0
        %3162 = vmatprep.mubr.bf16.mxu0 0
        %3163 = vmatmul.mubr.bf16.gmra.mrb[0].mxu0 %v3097
        %v3164 = vpop.f32.mrb[0].mxu0
        %v3165 = vadd.f32 0.0, %v3164
        %v3166 = vpop.f32.mrb[0].mxu0
        %v3167 = vpop.f32.mrb[0].mxu0
        %v3168 = vadd.f32 0.0, %v3167
        %v3169 = vpop.f32.mrb[0].mxu0
        %3170 = vmatprep.mubr.bf16.mxu0 0
        %3171 = vmatmul.mubr.bf16.gmra.mrb[0].mxu0 %v3100
        %v3172 = vpop.f32.mrb[0].mxu0
        %v3173 = vadd.f32 0.0, %v3172
        %v3174 = vpop.f32.mrb[0].mxu0
        %v3175 = vpop.f32.mrb[0].mxu0
        %v3176 = vadd.f32 0.0, %v3175
        %v3177 = vpop.f32.mrb[0].mxu0
        %3178 = vmatprep.mubr.bf16.mxu0 0
        %3179 = vmatmul.mubr.bf16.gmra.mrb[0].mxu0 %v3103
        %v3180 = vpop.f32.mrb[0].mxu0
        %v3181 = vadd.f32 0.0, %v3180
        %v3182 = vpop.f32.mrb[0].mxu0
        %v3183 = vpop.f32.mrb[0].mxu0
        %v3184 = vadd.f32 0.0, %v3183
        %v3185 = vpop.f32.mrb[0].mxu0
        %3186 = vmatprep.mubr.bf16.mxu0 0
        %3187 = vmatmul.mubr.bf16.gmra.mrb[0].mxu0 %v3106
        %v3188 = vpop.f32.mrb[0].mxu0
        %v3189 = vadd.f32 0.0, %v3188
        %v3190 = vpop.f32.mrb[0].mxu0
        %v3191 = vpop.f32.mrb[0].mxu0
        %v3192 = vadd.f32 0.0, %v3191
        %v3193 = vpop.f32.mrb[0].mxu0
        %3194 = vmatprep.mubr.bf16.mxu0 0
        %3195 = vmatmul.mubr.bf16.gmra.mrb[0].mxu0 %v3109
        %v3196 = vpop.f32.mrb[0].mxu0
        %v3197 = vadd.f32 0.0, %v3196
        %v3198 = vpop.f32.mrb[0].mxu0
        %v3199 = vpop.f32.mrb[0].mxu0
        %v3200 = vadd.f32 0.0, %v3199
        %v3201 = vpop.f32.mrb[0].mxu0
        %3202 = vmatprep.mubr.bf16.mxu0 0
        %3203 = vmatmul.mubr.bf16.gmra.mrb[0].mxu0 %v3112
        %v3204 = vpop.f32.mrb[0].mxu0
        %v3205 = vadd.f32 0.0, %v3204
        %v3206 = vpop.f32.mrb[0].mxu0
        %v3207 = vpop.f32.mrb[0].mxu0
        %v3208 = vadd.f32 0.0, %v3207
        %v3209 = vpop.f32.mrb[0].mxu0
        %3210 = vdwg.mxu0
        %v3211 = vadd.f32 %v2558, %v3149
        %v3212 = vadd.f32 %v2561, %v3152
        %v3213 = vadd.f32 %v2566, %v3157
        %v3214 = vadd.f32 %v2569, %v3160
        %v3215 = vadd.f32 %v2574, %v3165
        %v3216 = vadd.f32 %v2577, %v3168
        %v3217 = vadd.f32 %v2582, %v3173
        %v3218 = vadd.f32 %v2585, %v3176
        %v3219 = vadd.f32 %v2590, %v3181
        %v3220 = vadd.f32 %v2593, %v3184
        %v3221 = vadd.f32 %v2598, %v3189
        %v3222 = vadd.f32 %v2601, %v3192
        %v3223 = vadd.f32 %v2606, %v3197
        %v3224 = vadd.f32 %v2609, %v3200
        %v3225 = vadd.f32 %v2614, %v3205
        %v3226 = vadd.f32 %v2617, %v3208
        %3227 = vrot.lane.b32.xlu0 %v1445, 32
        %v3228 = vpop.permute.xlu0 %3227
        %3229 = vrot.lane.b32.xlu0 %v1446, 32
        %v3230 = vpop.permute.xlu0 %3229
        %3231 = vrot.lane.b32.xlu0 %v1447, 32
        %v3232 = vpop.permute.xlu0 %3231
        %3233 = vrot.lane.b32.xlu0 %v1448, 32
        %v3234 = vpop.permute.xlu0 %3233
        %3235 = vrot.lane.b32.xlu0 %v1449, 32
        %v3236 = vpop.permute.xlu0 %3235
        %3237 = vrot.lane.b32.xlu0 %v1450, 32
        %v3238 = vpop.permute.xlu0 %3237
        %3239 = vrot.lane.b32.xlu0 %v1451, 32
        %v3240 = vpop.permute.xlu0 %3239
        %3241 = vrot.lane.b32.xlu0 %v1452, 32
        %v3242 = vpop.permute.xlu0 %3241
        %3243 = vrot.lane.b32.xlu0 %v1453, 32
        %v3244 = vpop.permute.xlu0 %3243
        %3245 = vrot.lane.b32.xlu0 %v1454, 32
        %v3246 = vpop.permute.xlu0 %3245
        %3247 = vrot.lane.b32.xlu0 %v1455, 32
        %v3248 = vpop.permute.xlu0 %3247
        %3249 = vrot.lane.b32.xlu0 %v1456, 32
        %v3250 = vpop.permute.xlu0 %3249
        %3251 = vrot.lane.b32.xlu0 %v1457, 32
        %v3252 = vpop.permute.xlu0 %3251
        %3253 = vrot.lane.b32.xlu0 %v1458, 32
        %v3254 = vpop.permute.xlu0 %3253
        %3255 = vrot.lane.b32.xlu0 %v1459, 32
        %v3256 = vpop.permute.xlu0 %3255
        %3257 = vrot.lane.b32.xlu0 %v1460, 32
        %v3258 = vpop.permute.xlu0 %3257
        %v3260 = vsel %vm1469, %v3228, 0
        %v3263 = vsel %vm1469, %v3230, 0
        %v3266 = vsel %vm1469, %v3232, 0
        %v3269 = vsel %vm1469, %v3234, 0
        %v3272 = vsel %vm1469, %v3236, 0
        %v3275 = vsel %vm1469, %v3238, 0
        %v3278 = vsel %vm1469, %v3240, 0
        %v3281 = vsel %vm1469, %v3242, 0
        %v3284 = vsel %vm1469, %v3244, 0
        %v3287 = vsel %vm1469, %v3246, 0
        %v3290 = vsel %vm1469, %v3248, 0
        %v3293 = vsel %vm1469, %v3250, 0
        %v3296 = vsel %vm1469, %v3252, 0
        %v3299 = vsel %vm1469, %v3254, 0
        %v3302 = vsel %vm1469, %v3256, 0
        %v3305 = vsel %vm1469, %v3258, 0
        %3307 = vmatprep.subr.bf16.mxu0 0
        %3308 = vmatpush1.bf16.xpose.msra.mxu0 %v3284
        %3309 = vmatprep.subr.bf16.mxu0 0
        %3310 = vmatpush1.bf16.xpose.msra.mxu0 %v3287
        %3311 = vmatprep.subr.bf16.mxu0 0
        %3312 = vmatpush1.bf16.xpose.msra.mxu0 %v3290
        %3313 = vmatprep.subr.bf16.mxu0 0
        %3314 = vmatpush1.bf16.xpose.msra.mxu0 %v3293
        %3315 = vmatprep.subr.bf16.mxu0 0
        %3316 = vmatpush1.bf16.xpose.msra.mxu0 %v3296
        %3317 = vmatprep.subr.bf16.mxu0 0
        %3318 = vmatpush1.bf16.xpose.msra.mxu0 %v3299
        %3319 = vmatprep.subr.bf16.mxu0 0
        %3320 = vmatpush1.bf16.xpose.msra.mxu0 %v3302
        %3321 = vmatprep.subr.bf16.mxu0 0
        %3322 = vmatpush1.bf16.xpose.msra.mxu0 %v3305
        %3323 = vmatprep.subr.bf16.mxu0 0
        %3324 = vmatpush1.bf16.xpose.msra.mxu0 0
        %3325 = vmatprep.subr.bf16.mxu0 0
        %3326 = vmatpush1.bf16.xpose.msra.mxu0 0
        %3327 = vmatprep.subr.bf16.mxu0 0
        %3328 = vmatpush1.bf16.xpose.msra.mxu0 0
        %3329 = vmatprep.subr.bf16.mxu0 0
        %3330 = vmatpush1.bf16.xpose.msra.mxu0 0
        %3331 = vmatprep.subr.bf16.mxu0 0
        %3332 = vmatpush1.bf16.xpose.msra.mxu0 0
        %3333 = vmatprep.subr.bf16.mxu0 0
        %3334 = vmatpush1.bf16.xpose.msra.mxu0 0
        %3335 = vmatprep.subr.bf16.mxu0 0
        %3336 = vmatpush1.bf16.xpose.msra.mxu0 0
        %3337 = vmatprep.subr.bf16.mxu0 0
        %3338 = vmatpush1.bf16.xpose.msra.mxu0 0
        %3339 = vmatprep.mubr.bf16.mxu0 0
        %3340 = vmatmul.mubr.bf16.gmra.mrb[0].mxu0 %v3260
        %v3341 = vpop.f32.mrb[0].mxu0
        %v3342 = vadd.f32 0.0, %v3341
        %v3343 = vpop.f32.mrb[0].mxu0
        %v3344 = vpop.f32.mrb[0].mxu0
        %v3345 = vadd.f32 0.0, %v3344
        %v3346 = vpop.f32.mrb[0].mxu0
        %3347 = vmatprep.mubr.bf16.mxu0 0
        %3348 = vmatmul.mubr.bf16.gmra.mrb[0].mxu0 %v3263
        %v3349 = vpop.f32.mrb[0].mxu0
        %v3350 = vadd.f32 0.0, %v3349
        %v3351 = vpop.f32.mrb[0].mxu0
        %v3352 = vpop.f32.mrb[0].mxu0
        %v3353 = vadd.f32 0.0, %v3352
        %v3354 = vpop.f32.mrb[0].mxu0
        %3355 = vmatprep.mubr.bf16.mxu0 0
        %3356 = vmatmul.mubr.bf16.gmra.mrb[0].mxu0 %v3266
        %v3357 = vpop.f32.mrb[0].mxu0
        %v3358 = vadd.f32 0.0, %v3357
        %v3359 = vpop.f32.mrb[0].mxu0
        %v3360 = vpop.f32.mrb[0].mxu0
        %v3361 = vadd.f32 0.0, %v3360
        %v3362 = vpop.f32.mrb[0].mxu0
        %3363 = vmatprep.mubr.bf16.mxu0 0
        %3364 = vmatmul.mubr.bf16.gmra.mrb[0].mxu0 %v3269
        %v3365 = vpop.f32.mrb[0].mxu0
        %v3366 = vadd.f32 0.0, %v3365
        %v3367 = vpop.f32.mrb[0].mxu0
        %v3368 = vpop.f32.mrb[0].mxu0
        %v3369 = vadd.f32 0.0, %v3368
        %v3370 = vpop.f32.mrb[0].mxu0
        %3371 = vmatprep.mubr.bf16.mxu0 0
        %3372 = vmatmul.mubr.bf16.gmra.mrb[0].mxu0 %v3272
        %v3373 = vpop.f32.mrb[0].mxu0
        %v3374 = vadd.f32 0.0, %v3373
        %v3375 = vpop.f32.mrb[0].mxu0
        %v3376 = vpop.f32.mrb[0].mxu0
        %v3377 = vadd.f32 0.0, %v3376
        %v3378 = vpop.f32.mrb[0].mxu0
        %3379 = vmatprep.mubr.bf16.mxu0 0
        %3380 = vmatmul.mubr.bf16.gmra.mrb[0].mxu0 %v3275
        %v3381 = vpop.f32.mrb[0].mxu0
        %v3382 = vadd.f32 0.0, %v3381
        %v3383 = vpop.f32.mrb[0].mxu0
        %v3384 = vpop.f32.mrb[0].mxu0
        %v3385 = vadd.f32 0.0, %v3384
        %v3386 = vpop.f32.mrb[0].mxu0
        %3387 = vmatprep.mubr.bf16.mxu0 0
        %3388 = vmatmul.mubr.bf16.gmra.mrb[0].mxu0 %v3278
        %v3389 = vpop.f32.mrb[0].mxu0
        %v3390 = vadd.f32 0.0, %v3389
        %v3391 = vpop.f32.mrb[0].mxu0
        %v3392 = vpop.f32.mrb[0].mxu0
        %v3393 = vadd.f32 0.0, %v3392
        %v3394 = vpop.f32.mrb[0].mxu0
        %3395 = vmatprep.mubr.bf16.mxu0 0
        %3396 = vmatmul.mubr.bf16.gmra.mrb[0].mxu0 %v3281
        %v3397 = vpop.f32.mrb[0].mxu0
        %v3398 = vadd.f32 0.0, %v3397
        %v3399 = vpop.f32.mrb[0].mxu0
        %v3400 = vpop.f32.mrb[0].mxu0
        %v3401 = vadd.f32 0.0, %v3400
        %v3402 = vpop.f32.mrb[0].mxu0
        %3403 = vdwg.mxu0
        %3404 = vmax.xlane.f32.xlu0 %v3342
        %v3405 = vpop.xlane.xlu0 %3404
        %3406 = vmax.xlane.f32.xlu0 %v3345
        %v3407 = vpop.xlane.xlu0 %3406
        %3408 = vmax.xlane.f32.xlu0 %v3350
        %v3409 = vpop.xlane.xlu0 %3408
        %3410 = vmax.xlane.f32.xlu0 %v3353
        %v3411 = vpop.xlane.xlu0 %3410
        %3412 = vmax.xlane.f32.xlu0 %v3358
        %v3413 = vpop.xlane.xlu0 %3412
        %3414 = vmax.xlane.f32.xlu0 %v3361
        %v3415 = vpop.xlane.xlu0 %3414
        %3416 = vmax.xlane.f32.xlu0 %v3366
        %v3417 = vpop.xlane.xlu0 %3416
        %3418 = vmax.xlane.f32.xlu0 %v3369
        %v3419 = vpop.xlane.xlu0 %3418
        %3420 = vmax.xlane.f32.xlu0 %v3374
        %v3421 = vpop.xlane.xlu0 %3420
        %3422 = vmax.xlane.f32.xlu0 %v3377
        %v3423 = vpop.xlane.xlu0 %3422
        %3424 = vmax.xlane.f32.xlu0 %v3382
        %v3425 = vpop.xlane.xlu0 %3424
        %3426 = vmax.xlane.f32.xlu0 %v3385
        %v3427 = vpop.xlane.xlu0 %3426
        %3428 = vmax.xlane.f32.xlu0 %v3390
        %v3429 = vpop.xlane.xlu0 %3428
        %3430 = vmax.xlane.f32.xlu0 %v3393
        %v3431 = vpop.xlane.xlu0 %3430
        %3432 = vmax.xlane.f32.xlu0 %v3398
        %v3433 = vpop.xlane.xlu0 %3432
        %3434 = vmax.xlane.f32.xlu0 %v3401
        %v3435 = vpop.xlane.xlu0 %3434
        %v3436 = vsub.f32 %v3342, %v3405
        %v3437 = vsub.f32 %v3345, %v3407
        %v3438 = vsub.f32 %v3350, %v3409
        %v3439 = vsub.f32 %v3353, %v3411
        %v3440 = vsub.f32 %v3358, %v3413
        %v3441 = vsub.f32 %v3361, %v3415
        %v3442 = vsub.f32 %v3366, %v3417
        %v3443 = vsub.f32 %v3369, %v3419
        %v3444 = vsub.f32 %v3374, %v3421
        %v3445 = vsub.f32 %v3377, %v3423
        %v3446 = vsub.f32 %v3382, %v3425
        %v3447 = vsub.f32 %v3385, %v3427
        %v3448 = vsub.f32 %v3390, %v3429
        %v3449 = vsub.f32 %v3393, %v3431
        %v3450 = vsub.f32 %v3398, %v3433
        %v3451 = vsub.f32 %v3401, %v3435
        %v3452 = vmul.f32 %v3436, 1.442695
        %v3453 = vpow.pop %v3452
        %v3454 = vmul.f32 %v3437, 1.442695
        %v3455 = vpow.pop %v3454
        %v3456 = vmul.f32 %v3438, 1.442695
        %v3457 = vpow.pop %v3456
        %v3458 = vmul.f32 %v3439, 1.442695
        %v3459 = vpow.pop %v3458
        %v3460 = vmul.f32 %v3440, 1.442695
        %v3461 = vpow.pop %v3460
        %v3462 = vmul.f32 %v3441, 1.442695
        %v3463 = vpow.pop %v3462
        %v3464 = vmul.f32 %v3442, 1.442695
        %v3465 = vpow.pop %v3464
        %v3466 = vmul.f32 %v3443, 1.442695
        %v3467 = vpow.pop %v3466
        %v3468 = vmul.f32 %v3444, 1.442695
        %v3469 = vpow.pop %v3468
        %v3470 = vmul.f32 %v3445, 1.442695
        %v3471 = vpow.pop %v3470
        %v3472 = vmul.f32 %v3446, 1.442695
        %v3473 = vpow.pop %v3472
        %v3474 = vmul.f32 %v3447, 1.442695
        %v3475 = vpow.pop %v3474
        %v3476 = vmul.f32 %v3448, 1.442695
        %v3477 = vpow.pop %v3476
        %v3478 = vmul.f32 %v3449, 1.442695
        %v3479 = vpow.pop %v3478
        %v3480 = vmul.f32 %v3450, 1.442695
        %v3481 = vpow.pop %v3480
        %v3482 = vmul.f32 %v3451, 1.442695
        %v3483 = vpow.pop %v3482
        %3484 = vadd.xlane.f32.xlu0 %v3453
        %v3485 = vpop.xlane.xlu0 %3484
        %3486 = vadd.xlane.f32.xlu0 %v3455
        %v3487 = vpop.xlane.xlu0 %3486
        %3488 = vadd.xlane.f32.xlu0 %v3457
        %v3489 = vpop.xlane.xlu0 %3488
        %3490 = vadd.xlane.f32.xlu0 %v3459
        %v3491 = vpop.xlane.xlu0 %3490
        %3492 = vadd.xlane.f32.xlu0 %v3461
        %v3493 = vpop.xlane.xlu0 %3492
        %3494 = vadd.xlane.f32.xlu0 %v3463
        %v3495 = vpop.xlane.xlu0 %3494
        %3496 = vadd.xlane.f32.xlu0 %v3465
        %v3497 = vpop.xlane.xlu0 %3496
        %3498 = vadd.xlane.f32.xlu0 %v3467
        %v3499 = vpop.xlane.xlu0 %3498
        %3500 = vadd.xlane.f32.xlu0 %v3469
        %v3501 = vpop.xlane.xlu0 %3500
        %3502 = vadd.xlane.f32.xlu0 %v3471
        %v3503 = vpop.xlane.xlu0 %3502
        %3504 = vadd.xlane.f32.xlu0 %v3473
        %v3505 = vpop.xlane.xlu0 %3504
        %3506 = vadd.xlane.f32.xlu0 %v3475
        %v3507 = vpop.xlane.xlu0 %3506
        %3508 = vadd.xlane.f32.xlu0 %v3477
        %v3509 = vpop.xlane.xlu0 %3508
        %3510 = vadd.xlane.f32.xlu0 %v3479
        %v3511 = vpop.xlane.xlu0 %3510
        %3512 = vadd.xlane.f32.xlu0 %v3481
        %v3513 = vpop.xlane.xlu0 %3512
        %3514 = vadd.xlane.f32.xlu0 %v3483
        %v3515 = vpop.xlane.xlu0 %3514
        %v3516 = vrcp.pop %v3485
        %v3517 = vrcp.pop %v3487
        %v3518 = vrcp.pop %v3489
        %v3519 = vrcp.pop %v3491
        %v3520 = vrcp.pop %v3493
        %v3521 = vrcp.pop %v3495
        %v3522 = vrcp.pop %v3497
        %v3523 = vrcp.pop %v3499
        %v3524 = vrcp.pop %v3501
        %v3525 = vrcp.pop %v3503
        %v3526 = vrcp.pop %v3505
        %v3527 = vrcp.pop %v3507
        %v3528 = vrcp.pop %v3509
        %v3529 = vrcp.pop %v3511
        %v3530 = vrcp.pop %v3513
        %v3531 = vrcp.pop %v3515
        %v3532 = vmul.f32 %v3453, %v3516
        %v3533 = vmul.f32 %v3455, %v3517
        %v3534 = vmul.f32 %v3457, %v3518
        %v3535 = vmul.f32 %v3459, %v3519
        %v3536 = vmul.f32 %v3461, %v3520
        %v3537 = vmul.f32 %v3463, %v3521
        %v3538 = vmul.f32 %v3465, %v3522
        %v3539 = vmul.f32 %v3467, %v3523
        %v3540 = vmul.f32 %v3469, %v3524
        %v3541 = vmul.f32 %v3471, %v3525
        %v3542 = vmul.f32 %v3473, %v3526
        %v3543 = vmul.f32 %v3475, %v3527
        %v3544 = vmul.f32 %v3477, %v3528
        %v3545 = vmul.f32 %v3479, %v3529
        %v3546 = vmul.f32 %v3481, %v3530
        %v3547 = vmul.f32 %v3483, %v3531
        %v3548 = vpack.c.bf16 %v3533, %v3532
        %v3549 = vpack.c.bf16 %v3535, %v3534
        %v3550 = vpack.c.bf16 %v3537, %v3536
        %v3551 = vpack.c.bf16 %v3539, %v3538
        %v3552 = vpack.c.bf16 %v3541, %v3540
        %v3553 = vpack.c.bf16 %v3543, %v3542
        %v3554 = vpack.c.bf16 %v3545, %v3544
        %v3555 = vpack.c.bf16 %v3547, %v3546
        %3556 = vrot.lane.b32.xlu0 %v1461, 32
        %v3557 = vpop.permute.xlu0 %3556
        %3558 = vrot.lane.b32.xlu0 %v1462, 32
        %v3559 = vpop.permute.xlu0 %3558
        %3560 = vrot.lane.b32.xlu0 %v1463, 32
        %v3561 = vpop.permute.xlu0 %3560
        %3562 = vrot.lane.b32.xlu0 %v1464, 32
        %v3563 = vpop.permute.xlu0 %3562
        %3564 = vrot.lane.b32.xlu0 %v1465, 32
        %v3565 = vpop.permute.xlu0 %3564
        %3566 = vrot.lane.b32.xlu0 %v1466, 32
        %v3567 = vpop.permute.xlu0 %3566
        %3568 = vrot.lane.b32.xlu0 %v1467, 32
        %v3569 = vpop.permute.xlu0 %3568
        %3570 = vrot.lane.b32.xlu0 %v1468, 32
        %v3571 = vpop.permute.xlu0 %3570
        %3580 = vmatprep.subr.bf16.mxu0 0
        %3581 = vmatpush1.bf16.msra.mxu0 %v3557
        %3582 = vmatprep.subr.bf16.mxu0 0
        %3583 = vmatpush1.bf16.msra.mxu0 %v3559
        %3584 = vmatprep.subr.bf16.mxu0 0
        %3585 = vmatpush1.bf16.msra.mxu0 %v3561
        %3586 = vmatprep.subr.bf16.mxu0 0
        %3587 = vmatpush1.bf16.msra.mxu0 %v3563
        %3588 = vmatprep.subr.bf16.mxu0 0
        %3589 = vmatpush1.bf16.msra.mxu0 %v3565
        %3590 = vmatprep.subr.bf16.mxu0 0
        %3591 = vmatpush1.bf16.msra.mxu0 %v3567
        %3592 = vmatprep.subr.bf16.mxu0 0
        %3593 = vmatpush1.bf16.msra.mxu0 %v3569
        %3594 = vmatprep.subr.bf16.mxu0 0
        %3595 = vmatpush1.bf16.msra.mxu0 %v3571
        %3596 = vmatprep.subr.bf16.mxu0 0
        %3597 = vmatpush1.bf16.msra.mxu0 0
        %3598 = vmatprep.subr.bf16.mxu0 0
        %3599 = vmatpush1.bf16.msra.mxu0 0
        %3600 = vmatprep.subr.bf16.mxu0 0
        %3601 = vmatpush1.bf16.msra.mxu0 0
        %3602 = vmatprep.subr.bf16.mxu0 0
        %3603 = vmatpush1.bf16.msra.mxu0 0
        %3604 = vmatprep.subr.bf16.mxu0 0
        %3605 = vmatpush1.bf16.msra.mxu0 0
        %3606 = vmatprep.subr.bf16.mxu0 0
        %3607 = vmatpush1.bf16.msra.mxu0 0
        %3608 = vmatprep.subr.bf16.mxu0 0
        %3609 = vmatpush1.bf16.msra.mxu0 0
        %3610 = vmatprep.subr.bf16.mxu0 0
        %3611 = vmatpush1.bf16.msra.mxu0 0
        %3612 = vmatprep.mubr.bf16.mxu0 0
        %3613 = vmatmul.mubr.bf16.gmra.mrb[0].mxu0 %v3548
        %v3614 = vpop.f32.mrb[0].mxu0
        %v3615 = vadd.f32 0.0, %v3614
        %v3616 = vpop.f32.mrb[0].mxu0
        %v3617 = vpop.f32.mrb[0].mxu0
        %v3618 = vadd.f32 0.0, %v3617
        %v3619 = vpop.f32.mrb[0].mxu0
        %3620 = vmatprep.mubr.bf16.mxu0 0
        %3621 = vmatmul.mubr.bf16.gmra.mrb[0].mxu0 %v3549
        %v3622 = vpop.f32.mrb[0].mxu0
        %v3623 = vadd.f32 0.0, %v3622
        %v3624 = vpop.f32.mrb[0].mxu0
        %v3625 = vpop.f32.mrb[0].mxu0
        %v3626 = vadd.f32 0.0, %v3625
        %v3627 = vpop.f32.mrb[0].mxu0
        %3628 = vmatprep.mubr.bf16.mxu0 0
        %3629 = vmatmul.mubr.bf16.gmra.mrb[0].mxu0 %v3550
        %v3630 = vpop.f32.mrb[0].mxu0
        %v3631 = vadd.f32 0.0, %v3630
        %v3632 = vpop.f32.mrb[0].mxu0
        %v3633 = vpop.f32.mrb[0].mxu0
        %v3634 = vadd.f32 0.0, %v3633
        %v3635 = vpop.f32.mrb[0].mxu0
        %3636 = vmatprep.mubr.bf16.mxu0 0
        %3637 = vmatmul.mubr.bf16.gmra.mrb[0].mxu0 %v3551
        %v3638 = vpop.f32.mrb[0].mxu0
        %v3639 = vadd.f32 0.0, %v3638
        %v3640 = vpop.f32.mrb[0].mxu0
        %v3641 = vpop.f32.mrb[0].mxu0
        %v3642 = vadd.f32 0.0, %v3641
        %v3643 = vpop.f32.mrb[0].mxu0
        %3644 = vmatprep.mubr.bf16.mxu0 0
        %3645 = vmatmul.mubr.bf16.gmra.mrb[0].mxu0 %v3552
        %v3646 = vpop.f32.mrb[0].mxu0
        %v3647 = vadd.f32 0.0, %v3646
        %v3648 = vpop.f32.mrb[0].mxu0
        %v3649 = vpop.f32.mrb[0].mxu0
        %v3650 = vadd.f32 0.0, %v3649
        %v3651 = vpop.f32.mrb[0].mxu0
        %3652 = vmatprep.mubr.bf16.mxu0 0
        %3653 = vmatmul.mubr.bf16.gmra.mrb[0].mxu0 %v3553
        %v3654 = vpop.f32.mrb[0].mxu0
        %v3655 = vadd.f32 0.0, %v3654
        %v3656 = vpop.f32.mrb[0].mxu0
        %v3657 = vpop.f32.mrb[0].mxu0
        %v3658 = vadd.f32 0.0, %v3657
        %v3659 = vpop.f32.mrb[0].mxu0
        %3660 = vmatprep.mubr.bf16.mxu0 0
        %3661 = vmatmul.mubr.bf16.gmra.mrb[0].mxu0 %v3554
        %v3662 = vpop.f32.mrb[0].mxu0
        %v3663 = vadd.f32 0.0, %v3662
        %v3664 = vpop.f32.mrb[0].mxu0
        %v3665 = vpop.f32.mrb[0].mxu0
        %v3666 = vadd.f32 0.0, %v3665
        %v3667 = vpop.f32.mrb[0].mxu0
        %3668 = vmatprep.mubr.bf16.mxu0 0
        %3669 = vmatmul.mubr.bf16.gmra.mrb[0].mxu0 %v3555
        %v3670 = vpop.f32.mrb[0].mxu0
        %v3671 = vadd.f32 0.0, %v3670
        %v3672 = vpop.f32.mrb[0].mxu0
        %v3673 = vpop.f32.mrb[0].mxu0
        %v3674 = vadd.f32 0.0, %v3673
        %v3675 = vpop.f32.mrb[0].mxu0
        %3676 = vdwg.mxu0
        %v3677 = vpack.c.bf16 %v3618, %v3615
        %v3678 = vpack.c.bf16 %v3626, %v3623
        %v3679 = vpack.c.bf16 %v3634, %v3631
        %v3680 = vpack.c.bf16 %v3642, %v3639
        %v3681 = vpack.c.bf16 %v3650, %v3647
        %v3682 = vpack.c.bf16 %v3658, %v3655
        %v3683 = vpack.c.bf16 %v3666, %v3663
        %v3684 = vpack.c.bf16 %v3674, %v3671
        %v3689 = vunpack.c.l.b16 %v1441
        %v3690 = vunpack.c.l.b16 %v1442
        %v3691 = vunpack.c.l.b16 %v1443
        %v3692 = vunpack.c.l.b16 %v1444
        %v3693 = vpack.c.b16 %v3690, %v3689
        %v3694 = vpack.c.b16 %v3692, %v3691
        %v3698 = vsel %vm1469, %v3677, 0
        %v3701 = vsel %vm1469, %v3678, 0
        %v3704 = vsel %vm1469, %v3679, 0
        %v3707 = vsel %vm1469, %v3680, 0
        %v3710 = vsel %vm1469, %v3681, 0
        %v3713 = vsel %vm1469, %v3682, 0
        %v3716 = vsel %vm1469, %v3683, 0
        %v3719 = vsel %vm1469, %v3684, 0
        %3721 = vmatprep.subr.bf16.mxu0 0
        %3722 = vmatpush1.bf16.msra.mxu0 %v3693
        %3723 = vmatprep.subr.bf16.mxu0 0
        %3724 = vmatpush1.bf16.msra.mxu0 %v3694
        %3725 = vmatprep.subr.bf16.mxu0 0
        %3726 = vmatpush1.bf16.msra.mxu0 0
        %3727 = vmatprep.subr.bf16.mxu0 0
        %3728 = vmatpush1.bf16.msra.mxu0 0
        %3729 = vmatprep.subr.bf16.mxu0 0
        %3730 = vmatpush1.bf16.msra.mxu0 0
        %3731 = vmatprep.subr.bf16.mxu0 0
        %3732 = vmatpush1.bf16.msra.mxu0 0
        %3733 = vmatprep.subr.bf16.mxu0 0
        %3734 = vmatpush1.bf16.msra.mxu0 0
        %3735 = vmatprep.subr.bf16.mxu0 0
        %3736 = vmatpush1.bf16.msra.mxu0 0
        %3737 = vmatprep.subr.bf16.mxu0 0
        %3738 = vmatpush1.bf16.msra.mxu0 0
        %3739 = vmatprep.subr.bf16.mxu0 0
        %3740 = vmatpush1.bf16.msra.mxu0 0
        %3741 = vmatprep.subr.bf16.mxu0 0
        %3742 = vmatpush1.bf16.msra.mxu0 0
        %3743 = vmatprep.subr.bf16.mxu0 0
        %3744 = vmatpush1.bf16.msra.mxu0 0
        %3745 = vmatprep.subr.bf16.mxu0 0
        %3746 = vmatpush1.bf16.msra.mxu0 0
        %3747 = vmatprep.subr.bf16.mxu0 0
        %3748 = vmatpush1.bf16.msra.mxu0 0
        %3749 = vmatprep.subr.bf16.mxu0 0
        %3750 = vmatpush1.bf16.msra.mxu0 0
        %3751 = vmatprep.subr.bf16.mxu0 0
        %3752 = vmatpush1.bf16.msra.mxu0 0
        %3753 = vmatprep.mubr.bf16.mxu0 0
        %3754 = vmatmul.mubr.bf16.gmra.mrb[0].mxu0 %v3698
        %v3755 = vpop.f32.mrb[0].mxu0
        %v3756 = vadd.f32 0.0, %v3755
        %v3757 = vpop.f32.mrb[0].mxu0
        %v3758 = vpop.f32.mrb[0].mxu0
        %v3759 = vadd.f32 0.0, %v3758
        %v3760 = vpop.f32.mrb[0].mxu0
        %3761 = vmatprep.mubr.bf16.mxu0 0
        %3762 = vmatmul.mubr.bf16.gmra.mrb[0].mxu0 %v3701
        %v3763 = vpop.f32.mrb[0].mxu0
        %v3764 = vadd.f32 0.0, %v3763
        %v3765 = vpop.f32.mrb[0].mxu0
        %v3766 = vpop.f32.mrb[0].mxu0
        %v3767 = vadd.f32 0.0, %v3766
        %v3768 = vpop.f32.mrb[0].mxu0
        %3769 = vmatprep.mubr.bf16.mxu0 0
        %3770 = vmatmul.mubr.bf16.gmra.mrb[0].mxu0 %v3704
        %v3771 = vpop.f32.mrb[0].mxu0
        %v3772 = vadd.f32 0.0, %v3771
        %v3773 = vpop.f32.mrb[0].mxu0
        %v3774 = vpop.f32.mrb[0].mxu0
        %v3775 = vadd.f32 0.0, %v3774
        %v3776 = vpop.f32.mrb[0].mxu0
        %3777 = vmatprep.mubr.bf16.mxu0 0
        %3778 = vmatmul.mubr.bf16.gmra.mrb[0].mxu0 %v3707
        %v3779 = vpop.f32.mrb[0].mxu0
        %v3780 = vadd.f32 0.0, %v3779
        %v3781 = vpop.f32.mrb[0].mxu0
        %v3782 = vpop.f32.mrb[0].mxu0
        %v3783 = vadd.f32 0.0, %v3782
        %v3784 = vpop.f32.mrb[0].mxu0
        %3785 = vmatprep.mubr.bf16.mxu0 0
        %3786 = vmatmul.mubr.bf16.gmra.mrb[0].mxu0 %v3710
        %v3787 = vpop.f32.mrb[0].mxu0
        %v3788 = vadd.f32 0.0, %v3787
        %v3789 = vpop.f32.mrb[0].mxu0
        %v3790 = vpop.f32.mrb[0].mxu0
        %v3791 = vadd.f32 0.0, %v3790
        %v3792 = vpop.f32.mrb[0].mxu0
        %3793 = vmatprep.mubr.bf16.mxu0 0
        %3794 = vmatmul.mubr.bf16.gmra.mrb[0].mxu0 %v3713
        %v3795 = vpop.f32.mrb[0].mxu0
        %v3796 = vadd.f32 0.0, %v3795
        %v3797 = vpop.f32.mrb[0].mxu0
        %v3798 = vpop.f32.mrb[0].mxu0
        %v3799 = vadd.f32 0.0, %v3798
        %v3800 = vpop.f32.mrb[0].mxu0
        %3801 = vmatprep.mubr.bf16.mxu0 0
        %3802 = vmatmul.mubr.bf16.gmra.mrb[0].mxu0 %v3716
        %v3803 = vpop.f32.mrb[0].mxu0
        %v3804 = vadd.f32 0.0, %v3803
        %v3805 = vpop.f32.mrb[0].mxu0
        %v3806 = vpop.f32.mrb[0].mxu0
        %v3807 = vadd.f32 0.0, %v3806
        %v3808 = vpop.f32.mrb[0].mxu0
        %3809 = vmatprep.mubr.bf16.mxu0 0
        %3810 = vmatmul.mubr.bf16.gmra.mrb[0].mxu0 %v3719
        %v3811 = vpop.f32.mrb[0].mxu0
        %v3812 = vadd.f32 0.0, %v3811
        %v3813 = vpop.f32.mrb[0].mxu0
        %v3814 = vpop.f32.mrb[0].mxu0
        %v3815 = vadd.f32 0.0, %v3814
        %v3816 = vpop.f32.mrb[0].mxu0
        %3817 = vdwg.mxu0
        %v3818 = vadd.f32 %v3211, %v3756
        %v3819 = vadd.f32 %v3212, %v3759
        %v3820 = vadd.f32 %v3213, %v3764
        %v3821 = vadd.f32 %v3214, %v3767
        %v3822 = vadd.f32 %v3215, %v3772
        %v3823 = vadd.f32 %v3216, %v3775
        %v3824 = vadd.f32 %v3217, %v3780
        %v3825 = vadd.f32 %v3218, %v3783
        %v3826 = vadd.f32 %v3219, %v3788
        %v3827 = vadd.f32 %v3220, %v3791
        %v3828 = vadd.f32 %v3221, %v3796
        %v3829 = vadd.f32 %v3222, %v3799
        %v3830 = vadd.f32 %v3223, %v3804
        %v3831 = vadd.f32 %v3224, %v3807
        %v3832 = vadd.f32 %v3225, %v3812
        %v3833 = vadd.f32 %v3226, %v3815
        %v3834 = vadd.f32 %v795, %v3818
        %v3835 = vadd.f32 %v796, %v3819
        %v3836 = vadd.f32 %v797, %v3820
        %v3837 = vadd.f32 %v798, %v3821
        %v3838 = vadd.f32 %v799, %v3822
        %v3839 = vadd.f32 %v800, %v3823
        %v3840 = vadd.f32 %v801, %v3824
        %v3841 = vadd.f32 %v802, %v3825
        %v3842 = vadd.f32 %v803, %v3826
        %v3843 = vadd.f32 %v804, %v3827
        %v3844 = vadd.f32 %v805, %v3828
        %v3845 = vadd.f32 %v806, %v3829
        %v3846 = vadd.f32 %v807, %v3830
        %v3847 = vadd.f32 %v808, %v3831
        %v3848 = vadd.f32 %v809, %v3832
        %v3849 = vadd.f32 %v810, %v3833
        %v3850 = vld [vmem:[%s728] sm:$0x1]
        %v3852 = vlaneseq
        %v3853 = vshrl.u32 %v3852, 7
        %v3854 = vsub.s32 0, %v3853
        %v3855 = vrot.slane %v3850, %v3854
        %v3857 = vadd.f32 %v3834, %v3855
        %v3858 = vadd.f32 %v3835, %v3855
        %v3859 = vadd.f32 %v3836, %v3855
        %v3860 = vadd.f32 %v3837, %v3855
        %v3861 = vadd.f32 %v3838, %v3855
        %v3862 = vadd.f32 %v3839, %v3855
        %v3863 = vadd.f32 %v3840, %v3855
        %v3864 = vadd.f32 %v3841, %v3855
        %v3865 = vadd.f32 %v3842, %v3855
        %v3866 = vadd.f32 %v3843, %v3855
        %v3867 = vadd.f32 %v3844, %v3855
        %v3868 = vadd.f32 %v3845, %v3855
        %v3869 = vadd.f32 %v3846, %v3855
        %v3870 = vadd.f32 %v3847, %v3855
        %v3871 = vadd.f32 %v3848, %v3855
        %v3872 = vadd.f32 %v3849, %v3855
        %v3873 = vld [vmem:[%s731] sm:$0x1]
        %v3874 = vld [vmem:[%s734] sm:$0x1]
        %3875 = vadd.xlane.f32.xlu0 %v3857
        %v3876 = vpop.xlane.xlu0 %3875
        %3877 = vadd.xlane.f32.xlu0 %v3858
        %v3878 = vpop.xlane.xlu0 %3877
        %3879 = vadd.xlane.f32.xlu0 %v3859
        %v3880 = vpop.xlane.xlu0 %3879
        %3881 = vadd.xlane.f32.xlu0 %v3860
        %v3882 = vpop.xlane.xlu0 %3881
        %3883 = vadd.xlane.f32.xlu0 %v3861
        %v3884 = vpop.xlane.xlu0 %3883
        %3885 = vadd.xlane.f32.xlu0 %v3862
        %v3886 = vpop.xlane.xlu0 %3885
        %3887 = vadd.xlane.f32.xlu0 %v3863
        %v3888 = vpop.xlane.xlu0 %3887
        %3889 = vadd.xlane.f32.xlu0 %v3864
        %v3890 = vpop.xlane.xlu0 %3889
        %3891 = vadd.xlane.f32.xlu0 %v3865
        %v3892 = vpop.xlane.xlu0 %3891
        %3893 = vadd.xlane.f32.xlu0 %v3866
        %v3894 = vpop.xlane.xlu0 %3893
        %3895 = vadd.xlane.f32.xlu0 %v3867
        %v3896 = vpop.xlane.xlu0 %3895
        %3897 = vadd.xlane.f32.xlu0 %v3868
        %v3898 = vpop.xlane.xlu0 %3897
        %3899 = vadd.xlane.f32.xlu0 %v3869
        %v3900 = vpop.xlane.xlu0 %3899
        %3901 = vadd.xlane.f32.xlu0 %v3870
        %v3902 = vpop.xlane.xlu0 %3901
        %3903 = vadd.xlane.f32.xlu0 %v3871
        %v3904 = vpop.xlane.xlu0 %3903
        %3905 = vadd.xlane.f32.xlu0 %v3872
        %v3906 = vpop.xlane.xlu0 %3905
        %v3907 = vmul.f32 %v3876, %v845
        %v3908 = vmul.f32 %v3878, %v845
        %v3909 = vmul.f32 %v3880, %v845
        %v3910 = vmul.f32 %v3882, %v845
        %v3911 = vmul.f32 %v3884, %v845
        %v3912 = vmul.f32 %v3886, %v845
        %v3913 = vmul.f32 %v3888, %v845
        %v3914 = vmul.f32 %v3890, %v845
        %v3915 = vmul.f32 %v3892, %v845
        %v3916 = vmul.f32 %v3894, %v845
        %v3917 = vmul.f32 %v3896, %v845
        %v3918 = vmul.f32 %v3898, %v845
        %v3919 = vmul.f32 %v3900, %v845
        %v3920 = vmul.f32 %v3902, %v845
        %v3921 = vmul.f32 %v3904, %v845
        %v3922 = vmul.f32 %v3906, %v845
        %v3923 = vsub.f32 %v3857, %v3907
        %v3924 = vsub.f32 %v3858, %v3908
        %v3925 = vsub.f32 %v3859, %v3909
        %v3926 = vsub.f32 %v3860, %v3910
        %v3927 = vsub.f32 %v3861, %v3911
        %v3928 = vsub.f32 %v3862, %v3912
        %v3929 = vsub.f32 %v3863, %v3913
        %v3930 = vsub.f32 %v3864, %v3914
        %v3931 = vsub.f32 %v3865, %v3915
        %v3932 = vsub.f32 %v3866, %v3916
        %v3933 = vsub.f32 %v3867, %v3917
        %v3934 = vsub.f32 %v3868, %v3918
        %v3935 = vsub.f32 %v3869, %v3919
        %v3936 = vsub.f32 %v3870, %v3920
        %v3937 = vsub.f32 %v3871, %v3921
        %v3938 = vsub.f32 %v3872, %v3922
        %v3939 = vmul.f32 %v3923, %v3923
        %v3940 = vmul.f32 %v3924, %v3924
        %v3941 = vmul.f32 %v3925, %v3925
        %v3942 = vmul.f32 %v3926, %v3926
        %v3943 = vmul.f32 %v3927, %v3927
        %v3944 = vmul.f32 %v3928, %v3928
        %v3945 = vmul.f32 %v3929, %v3929
        %v3946 = vmul.f32 %v3930, %v3930
        %v3947 = vmul.f32 %v3931, %v3931
        %v3948 = vmul.f32 %v3932, %v3932
        %v3949 = vmul.f32 %v3933, %v3933
        %v3950 = vmul.f32 %v3934, %v3934
        %v3951 = vmul.f32 %v3935, %v3935
        %v3952 = vmul.f32 %v3936, %v3936
        %v3953 = vmul.f32 %v3937, %v3937
        %v3954 = vmul.f32 %v3938, %v3938
        %3955 = vadd.xlane.f32.xlu0 %v3939
        %v3956 = vpop.xlane.xlu0 %3955
        %3957 = vadd.xlane.f32.xlu0 %v3940
        %v3958 = vpop.xlane.xlu0 %3957
        %3959 = vadd.xlane.f32.xlu0 %v3941
        %v3960 = vpop.xlane.xlu0 %3959
        %3961 = vadd.xlane.f32.xlu0 %v3942
        %v3962 = vpop.xlane.xlu0 %3961
        %3963 = vadd.xlane.f32.xlu0 %v3943
        %v3964 = vpop.xlane.xlu0 %3963
        %3965 = vadd.xlane.f32.xlu0 %v3944
        %v3966 = vpop.xlane.xlu0 %3965
        %3967 = vadd.xlane.f32.xlu0 %v3945
        %v3968 = vpop.xlane.xlu0 %3967
        %3969 = vadd.xlane.f32.xlu0 %v3946
        %v3970 = vpop.xlane.xlu0 %3969
        %3971 = vadd.xlane.f32.xlu0 %v3947
        %v3972 = vpop.xlane.xlu0 %3971
        %3973 = vadd.xlane.f32.xlu0 %v3948
        %v3974 = vpop.xlane.xlu0 %3973
        %3975 = vadd.xlane.f32.xlu0 %v3949
        %v3976 = vpop.xlane.xlu0 %3975
        %3977 = vadd.xlane.f32.xlu0 %v3950
        %v3978 = vpop.xlane.xlu0 %3977
        %3979 = vadd.xlane.f32.xlu0 %v3951
        %v3980 = vpop.xlane.xlu0 %3979
        %3981 = vadd.xlane.f32.xlu0 %v3952
        %v3982 = vpop.xlane.xlu0 %3981
        %3983 = vadd.xlane.f32.xlu0 %v3953
        %v3984 = vpop.xlane.xlu0 %3983
        %3985 = vadd.xlane.f32.xlu0 %v3954
        %v3986 = vpop.xlane.xlu0 %3985
        %v3987 = vmul.f32 %v3956, %v845
        %v3988 = vmul.f32 %v3958, %v845
        %v3989 = vmul.f32 %v3960, %v845
        %v3990 = vmul.f32 %v3962, %v845
        %v3991 = vmul.f32 %v3964, %v845
        %v3992 = vmul.f32 %v3966, %v845
        %v3993 = vmul.f32 %v3968, %v845
        %v3994 = vmul.f32 %v3970, %v845
        %v3995 = vmul.f32 %v3972, %v845
        %v3996 = vmul.f32 %v3974, %v845
        %v3997 = vmul.f32 %v3976, %v845
        %v3998 = vmul.f32 %v3978, %v845
        %v3999 = vmul.f32 %v3980, %v845
        %v4000 = vmul.f32 %v3982, %v845
        %v4001 = vmul.f32 %v3984, %v845
        %v4002 = vmul.f32 %v3986, %v845
        %v4003 = vadd.f32 %v3987, 1e-05
        %v4004 = vadd.f32 %v3988, 1e-05
        %v4005 = vadd.f32 %v3989, 1e-05
        %v4006 = vadd.f32 %v3990, 1e-05
        %v4007 = vadd.f32 %v3991, 1e-05
        %v4008 = vadd.f32 %v3992, 1e-05
        %v4009 = vadd.f32 %v3993, 1e-05
        %v4010 = vadd.f32 %v3994, 1e-05
        %v4011 = vadd.f32 %v3995, 1e-05
        %v4012 = vadd.f32 %v3996, 1e-05
        %v4013 = vadd.f32 %v3997, 1e-05
        %v4014 = vadd.f32 %v3998, 1e-05
        %v4015 = vadd.f32 %v3999, 1e-05
        %v4016 = vadd.f32 %v4000, 1e-05
        %v4017 = vadd.f32 %v4001, 1e-05
        %v4018 = vadd.f32 %v4002, 1e-05
        %v4019 = vrsqrt.pop %v4003
        %v4020 = vrsqrt.pop %v4004
        %v4021 = vrsqrt.pop %v4005
        %v4022 = vrsqrt.pop %v4006
        %v4023 = vrsqrt.pop %v4007
        %v4024 = vrsqrt.pop %v4008
        %v4025 = vrsqrt.pop %v4009
        %v4026 = vrsqrt.pop %v4010
        %v4027 = vrsqrt.pop %v4011
        %v4028 = vrsqrt.pop %v4012
        %v4029 = vrsqrt.pop %v4013
        %v4030 = vrsqrt.pop %v4014
        %v4031 = vrsqrt.pop %v4015
        %v4032 = vrsqrt.pop %v4016
        %v4033 = vrsqrt.pop %v4017
        %v4034 = vrsqrt.pop %v4018
        %v4035 = vmul.f32 %v3923, %v4019
        %v4036 = vmul.f32 %v3924, %v4020
        %v4037 = vmul.f32 %v3925, %v4021
        %v4038 = vmul.f32 %v3926, %v4022
        %v4039 = vmul.f32 %v3927, %v4023
        %v4040 = vmul.f32 %v3928, %v4024
        %v4041 = vmul.f32 %v3929, %v4025
        %v4042 = vmul.f32 %v3930, %v4026
        %v4043 = vmul.f32 %v3931, %v4027
        %v4044 = vmul.f32 %v3932, %v4028
        %v4045 = vmul.f32 %v3933, %v4029
        %v4046 = vmul.f32 %v3934, %v4030
        %v4047 = vmul.f32 %v3935, %v4031
        %v4048 = vmul.f32 %v3936, %v4032
        %v4049 = vmul.f32 %v3937, %v4033
        %v4050 = vmul.f32 %v3938, %v4034
        %v4052 = vlaneseq
        %v4053 = vshrl.u32 %v4052, 7
        %v4054 = vsub.s32 0, %v4053
        %v4055 = vrot.slane %v3873, %v4054
        %v4057 = vmul.f32 %v4035, %v4055
        %v4058 = vmul.f32 %v4036, %v4055
        %v4059 = vmul.f32 %v4037, %v4055
        %v4060 = vmul.f32 %v4038, %v4055
        %v4061 = vmul.f32 %v4039, %v4055
        %v4062 = vmul.f32 %v4040, %v4055
        %v4063 = vmul.f32 %v4041, %v4055
        %v4064 = vmul.f32 %v4042, %v4055
        %v4065 = vmul.f32 %v4043, %v4055
        %v4066 = vmul.f32 %v4044, %v4055
        %v4067 = vmul.f32 %v4045, %v4055
        %v4068 = vmul.f32 %v4046, %v4055
        %v4069 = vmul.f32 %v4047, %v4055
        %v4070 = vmul.f32 %v4048, %v4055
        %v4071 = vmul.f32 %v4049, %v4055
        %v4072 = vmul.f32 %v4050, %v4055
        %v4074 = vlaneseq
        %v4075 = vshrl.u32 %v4074, 7
        %v4076 = vsub.s32 0, %v4075
        %v4077 = vrot.slane %v3874, %v4076
        %v4079 = vadd.f32 %v4057, %v4077
        %v4080 = vadd.f32 %v4058, %v4077
        %v4081 = vadd.f32 %v4059, %v4077
        %v4082 = vadd.f32 %v4060, %v4077
        %v4083 = vadd.f32 %v4061, %v4077
        %v4084 = vadd.f32 %v4062, %v4077
        %v4085 = vadd.f32 %v4063, %v4077
        %v4086 = vadd.f32 %v4064, %v4077
        %v4087 = vadd.f32 %v4065, %v4077
        %v4088 = vadd.f32 %v4066, %v4077
        %v4089 = vadd.f32 %v4067, %v4077
        %v4090 = vadd.f32 %v4068, %v4077
        %v4091 = vadd.f32 %v4069, %v4077
        %v4092 = vadd.f32 %v4070, %v4077
        %v4093 = vadd.f32 %v4071, %v4077
        %v4094 = vadd.f32 %v4072, %v4077
        %v4095 = vpack.c.bf16 %v4080, %v4079
        %v4096 = vpack.c.bf16 %v4082, %v4081
        %v4097 = vpack.c.bf16 %v4084, %v4083
        %v4098 = vpack.c.bf16 %v4086, %v4085
        %v4099 = vpack.c.bf16 %v4088, %v4087
        %v4100 = vpack.c.bf16 %v4090, %v4089
        %v4101 = vpack.c.bf16 %v4092, %v4091
        %v4102 = vpack.c.bf16 %v4094, %v4093
        %v4103 = vld [vmem:[%s600] sm:$0xff]
        %v4104 = vld [vmem:[%s600 + $0x8] sm:$0xff]
        %v4105 = vld [vmem:[%s600 + $0x10] sm:$0xff]
        %v4106 = vld [vmem:[%s600 + $0x18] sm:$0xff]
        %v4107 = vld [vmem:[%s600 + $0x20] sm:$0xff]
        %v4108 = vld [vmem:[%s600 + $0x28] sm:$0xff]
        %v4109 = vld [vmem:[%s600 + $0x30] sm:$0xff]
        %v4110 = vld [vmem:[%s600 + $0x38] sm:$0xff]
        %v4111 = vld [vmem:[%s600 + $0x40] sm:$0xff]
        %v4112 = vld [vmem:[%s600 + $0x48] sm:$0xff]
        %v4113 = vld [vmem:[%s600 + $0x50] sm:$0xff]
        %v4114 = vld [vmem:[%s600 + $0x58] sm:$0xff]
        %v4115 = vld [vmem:[%s600 + $0x60] sm:$0xff]
        %v4116 = vld [vmem:[%s600 + $0x68] sm:$0xff]
        %v4117 = vld [vmem:[%s600 + $0x70] sm:$0xff]
        %v4118 = vld [vmem:[%s600 + $0x78] sm:$0xff]
        %v4119 = vld [vmem:[%s738] sm:$0x3]
        %v4121 = vlaneseq
        %v4122 = vshrl.u32 %v4121, 7
        %v4123 = vsub.s32 0, %v4122
        %v4124 = vrot.slane %v4119, %v4123
        %v4125 = vlaneseq
        %v4126 = vshrl.u32 %v4125, 7
        %v4127 = vsub.s32 1, %v4126
        %v4128 = vrot.slane %v4119, %v4127
        %v4147 = vunpack.c.l.b16 %v4103
        %v4148 = vunpack.c.h.b16 %v4103
        %v4149 = vunpack.c.l.b16 %v4104
        %v4150 = vunpack.c.h.b16 %v4104
        %v4151 = vunpack.c.l.b16 %v4105
        %v4152 = vunpack.c.h.b16 %v4105
        %v4153 = vunpack.c.l.b16 %v4106
        %v4154 = vunpack.c.h.b16 %v4106
        %v4155 = vunpack.c.l.b16 %v4107
        %v4156 = vunpack.c.h.b16 %v4107
        %v4157 = vunpack.c.l.b16 %v4108
        %v4158 = vunpack.c.h.b16 %v4108
        %v4159 = vunpack.c.l.b16 %v4109
        %v4160 = vunpack.c.h.b16 %v4109
        %v4161 = vunpack.c.l.b16 %v4110
        %v4162 = vunpack.c.h.b16 %v4110
        %v4163 = vunpack.c.l.b16 %v4111
        %v4164 = vunpack.c.h.b16 %v4111
        %v4165 = vunpack.c.l.b16 %v4112
        %v4166 = vunpack.c.h.b16 %v4112
        %v4167 = vunpack.c.l.b16 %v4113
        %v4168 = vunpack.c.h.b16 %v4113
        %v4169 = vunpack.c.l.b16 %v4114
        %v4170 = vunpack.c.h.b16 %v4114
        %v4171 = vunpack.c.l.b16 %v4115
        %v4172 = vunpack.c.h.b16 %v4115
        %v4173 = vunpack.c.l.b16 %v4116
        %v4174 = vunpack.c.h.b16 %v4116
        %v4175 = vunpack.c.l.b16 %v4117
        %v4176 = vunpack.c.h.b16 %v4117
        %v4177 = vunpack.c.l.b16 %v4118
        %v4178 = vunpack.c.h.b16 %v4118
        %v4179 = vpack.c.b16 %v4149, %v4147
        %v4180 = vpack.c.b16 %v4150, %v4148
        %v4181 = vpack.c.b16 %v4153, %v4151
        %v4182 = vpack.c.b16 %v4154, %v4152
        %v4183 = vpack.c.b16 %v4157, %v4155
        %v4184 = vpack.c.b16 %v4158, %v4156
        %v4185 = vpack.c.b16 %v4161, %v4159
        %v4186 = vpack.c.b16 %v4162, %v4160
        %v4187 = vpack.c.b16 %v4165, %v4163
        %v4188 = vpack.c.b16 %v4166, %v4164
        %v4189 = vpack.c.b16 %v4169, %v4167
        %v4190 = vpack.c.b16 %v4170, %v4168
        %v4191 = vpack.c.b16 %v4173, %v4171
        %v4192 = vpack.c.b16 %v4174, %v4172
        %v4193 = vpack.c.b16 %v4177, %v4175
        %v4194 = vpack.c.b16 %v4178, %v4176
        %4211 = vmatprep.subr.bf16.mxu0 %v4180
        %4212 = vmatpush1.bf16.msra.mxu0 %v4179
        %4213 = vmatprep.subr.bf16.mxu0 %v4182
        %4214 = vmatpush1.bf16.msra.mxu0 %v4181
        %4215 = vmatprep.subr.bf16.mxu0 %v4184
        %4216 = vmatpush1.bf16.msra.mxu0 %v4183
        %4217 = vmatprep.subr.bf16.mxu0 %v4186
        %4218 = vmatpush1.bf16.msra.mxu0 %v4185
        %4219 = vmatprep.subr.bf16.mxu0 %v4188
        %4220 = vmatpush1.bf16.msra.mxu0 %v4187
        %4221 = vmatprep.subr.bf16.mxu0 %v4190
        %4222 = vmatpush1.bf16.msra.mxu0 %v4189
        %4223 = vmatprep.subr.bf16.mxu0 %v4192
        %4224 = vmatpush1.bf16.msra.mxu0 %v4191
        %4225 = vmatprep.subr.bf16.mxu0 %v4194
        %4226 = vmatpush1.bf16.msra.mxu0 %v4193
        %4227 = vmatprep.subr.bf16.mxu0 0
        %4228 = vmatpush1.bf16.msra.mxu0 0
        %4229 = vmatprep.subr.bf16.mxu0 0
        %4230 = vmatpush1.bf16.msra.mxu0 0
        %4231 = vmatprep.subr.bf16.mxu0 0
        %4232 = vmatpush1.bf16.msra.mxu0 0
        %4233 = vmatprep.subr.bf16.mxu0 0
        %4234 = vmatpush1.bf16.msra.mxu0 0
        %4235 = vmatprep.subr.bf16.mxu0 0
        %4236 = vmatpush1.bf16.msra.mxu0 0
        %4237 = vmatprep.subr.bf16.mxu0 0
        %4238 = vmatpush1.bf16.msra.mxu0 0
        %4239 = vmatprep.subr.bf16.mxu0 0
        %4240 = vmatpush1.bf16.msra.mxu0 0
        %4241 = vmatprep.subr.bf16.mxu0 0
        %4242 = vmatpush1.bf16.msra.mxu0 0
        %4243 = vmatprep.mubr.bf16.mxu0 0
        %4244 = vmatmul.mubr.bf16.gmra.mrb[0].mxu0 %v4095
        %v4245 = vpop.f32.mrb[0].mxu0
        %v4246 = vadd.f32 %v4124, %v4245
        %v4247 = vpop.f32.mrb[0].mxu0
        %v4248 = vadd.f32 %v4128, %v4247
        %v4249 = vpop.f32.mrb[0].mxu0
        %v4250 = vadd.f32 %v4124, %v4249
        %v4251 = vpop.f32.mrb[0].mxu0
        %v4252 = vadd.f32 %v4128, %v4251
        %4253 = vmatprep.mubr.bf16.mxu0 0
        %4254 = vmatmul.mubr.bf16.gmra.mrb[0].mxu0 %v4096
        %v4255 = vpop.f32.mrb[0].mxu0
        %v4256 = vadd.f32 %v4124, %v4255
        %v4257 = vpop.f32.mrb[0].mxu0
        %v4258 = vadd.f32 %v4128, %v4257
        %v4259 = vpop.f32.mrb[0].mxu0
        %v4260 = vadd.f32 %v4124, %v4259
        %v4261 = vpop.f32.mrb[0].mxu0
        %v4262 = vadd.f32 %v4128, %v4261
        %4263 = vmatprep.mubr.bf16.mxu0 0
        %4264 = vmatmul.mubr.bf16.gmra.mrb[0].mxu0 %v4097
        %v4265 = vpop.f32.mrb[0].mxu0
        %v4266 = vadd.f32 %v4124, %v4265
        %v4267 = vpop.f32.mrb[0].mxu0
        %v4268 = vadd.f32 %v4128, %v4267
        %v4269 = vpop.f32.mrb[0].mxu0
        %v4270 = vadd.f32 %v4124, %v4269
        %v4271 = vpop.f32.mrb[0].mxu0
        %v4272 = vadd.f32 %v4128, %v4271
        %4273 = vmatprep.mubr.bf16.mxu0 0
        %4274 = vmatmul.mubr.bf16.gmra.mrb[0].mxu0 %v4098
        %v4275 = vpop.f32.mrb[0].mxu0
        %v4276 = vadd.f32 %v4124, %v4275
        %v4277 = vpop.f32.mrb[0].mxu0
        %v4278 = vadd.f32 %v4128, %v4277
        %v4279 = vpop.f32.mrb[0].mxu0
        %v4280 = vadd.f32 %v4124, %v4279
        %v4281 = vpop.f32.mrb[0].mxu0
        %v4282 = vadd.f32 %v4128, %v4281
        %4283 = vmatprep.mubr.bf16.mxu0 0
        %4284 = vmatmul.mubr.bf16.gmra.mrb[0].mxu0 %v4099
        %v4285 = vpop.f32.mrb[0].mxu0
        %v4286 = vadd.f32 %v4124, %v4285
        %v4287 = vpop.f32.mrb[0].mxu0
        %v4288 = vadd.f32 %v4128, %v4287
        %v4289 = vpop.f32.mrb[0].mxu0
        %v4290 = vadd.f32 %v4124, %v4289
        %v4291 = vpop.f32.mrb[0].mxu0
        %v4292 = vadd.f32 %v4128, %v4291
        %4293 = vmatprep.mubr.bf16.mxu0 0
        %4294 = vmatmul.mubr.bf16.gmra.mrb[0].mxu0 %v4100
        %v4295 = vpop.f32.mrb[0].mxu0
        %v4296 = vadd.f32 %v4124, %v4295
        %v4297 = vpop.f32.mrb[0].mxu0
        %v4298 = vadd.f32 %v4128, %v4297
        %v4299 = vpop.f32.mrb[0].mxu0
        %v4300 = vadd.f32 %v4124, %v4299
        %v4301 = vpop.f32.mrb[0].mxu0
        %v4302 = vadd.f32 %v4128, %v4301
        %4303 = vmatprep.mubr.bf16.mxu0 0
        %4304 = vmatmul.mubr.bf16.gmra.mrb[0].mxu0 %v4101
        %v4305 = vpop.f32.mrb[0].mxu0
        %v4306 = vadd.f32 %v4124, %v4305
        %v4307 = vpop.f32.mrb[0].mxu0
        %v4308 = vadd.f32 %v4128, %v4307
        %v4309 = vpop.f32.mrb[0].mxu0
        %v4310 = vadd.f32 %v4124, %v4309
        %v4311 = vpop.f32.mrb[0].mxu0
        %v4312 = vadd.f32 %v4128, %v4311
        %4313 = vmatprep.mubr.bf16.mxu0 0
        %4314 = vmatmul.mubr.bf16.gmra.mrb[0].mxu0 %v4102
        %v4315 = vpop.f32.mrb[0].mxu0
        %v4316 = vadd.f32 %v4124, %v4315
        %v4317 = vpop.f32.mrb[0].mxu0
        %v4318 = vadd.f32 %v4128, %v4317
        %v4319 = vpop.f32.mrb[0].mxu0
        %v4320 = vadd.f32 %v4124, %v4319
        %v4321 = vpop.f32.mrb[0].mxu0
        %v4322 = vadd.f32 %v4128, %v4321
        %4323 = vdwg.mxu0
        %v4324 = vxor.u32 %v4246, 2147483648
        %v4325 = vxor.u32 %v4248, 2147483648
        %v4326 = vxor.u32 %v4250, 2147483648
        %v4327 = vxor.u32 %v4252, 2147483648
        %v4328 = vxor.u32 %v4256, 2147483648
        %v4329 = vxor.u32 %v4258, 2147483648
        %v4330 = vxor.u32 %v4260, 2147483648
        %v4331 = vxor.u32 %v4262, 2147483648
        %v4332 = vxor.u32 %v4266, 2147483648
        %v4333 = vxor.u32 %v4268, 2147483648
        %v4334 = vxor.u32 %v4270, 2147483648
        %v4335 = vxor.u32 %v4272, 2147483648
        %v4336 = vxor.u32 %v4276, 2147483648
        %v4337 = vxor.u32 %v4278, 2147483648
        %v4338 = vxor.u32 %v4280, 2147483648
        %v4339 = vxor.u32 %v4282, 2147483648
        %v4340 = vxor.u32 %v4286, 2147483648
        %v4341 = vxor.u32 %v4288, 2147483648
        %v4342 = vxor.u32 %v4290, 2147483648
        %v4343 = vxor.u32 %v4292, 2147483648
        %v4344 = vxor.u32 %v4296, 2147483648
        %v4345 = vxor.u32 %v4298, 2147483648
        %v4346 = vxor.u32 %v4300, 2147483648
        %v4347 = vxor.u32 %v4302, 2147483648
        %v4348 = vxor.u32 %v4306, 2147483648
        %v4349 = vxor.u32 %v4308, 2147483648
        %v4350 = vxor.u32 %v4310, 2147483648
        %v4351 = vxor.u32 %v4312, 2147483648
        %v4352 = vxor.u32 %v4316, 2147483648
        %v4353 = vxor.u32 %v4318, 2147483648
        %v4354 = vxor.u32 %v4320, 2147483648
        %v4355 = vxor.u32 %v4322, 2147483648
        %v4356 = vmul.f32 %v4324, 1.442695
        %v4357 = vpow.pop %v4356
        %v4358 = vmul.f32 %v4325, 1.442695
        %v4359 = vpow.pop %v4358
        %v4360 = vmul.f32 %v4326, 1.442695
        %v4361 = vpow.pop %v4360
        %v4362 = vmul.f32 %v4327, 1.442695
        %v4363 = vpow.pop %v4362
        %v4364 = vmul.f32 %v4328, 1.442695
        %v4365 = vpow.pop %v4364
        %v4366 = vmul.f32 %v4329, 1.442695
        %v4367 = vpow.pop %v4366
        %v4368 = vmul.f32 %v4330, 1.442695
        %v4369 = vpow.pop %v4368
        %v4370 = vmul.f32 %v4331, 1.442695
        %v4371 = vpow.pop %v4370
        %v4372 = vmul.f32 %v4332, 1.442695
        %v4373 = vpow.pop %v4372
        %v4374 = vmul.f32 %v4333, 1.442695
        %v4375 = vpow.pop %v4374
        %v4376 = vmul.f32 %v4334, 1.442695
        %v4377 = vpow.pop %v4376
        %v4378 = vmul.f32 %v4335, 1.442695
        %v4379 = vpow.pop %v4378
        %v4380 = vmul.f32 %v4336, 1.442695
        %v4381 = vpow.pop %v4380
        %v4382 = vmul.f32 %v4337, 1.442695
        %v4383 = vpow.pop %v4382
        %v4384 = vmul.f32 %v4338, 1.442695
        %v4385 = vpow.pop %v4384
        %v4386 = vmul.f32 %v4339, 1.442695
        %v4387 = vpow.pop %v4386
        %v4388 = vmul.f32 %v4340, 1.442695
        %v4389 = vpow.pop %v4388
        %v4390 = vmul.f32 %v4341, 1.442695
        %v4391 = vpow.pop %v4390
        %v4392 = vmul.f32 %v4342, 1.442695
        %v4393 = vpow.pop %v4392
        %v4394 = vmul.f32 %v4343, 1.442695
        %v4395 = vpow.pop %v4394
        %v4396 = vmul.f32 %v4344, 1.442695
        %v4397 = vpow.pop %v4396
        %v4398 = vmul.f32 %v4345, 1.442695
        %v4399 = vpow.pop %v4398
        %v4400 = vmul.f32 %v4346, 1.442695
        %v4401 = vpow.pop %v4400
        %v4402 = vmul.f32 %v4347, 1.442695
        %v4403 = vpow.pop %v4402
        %v4404 = vmul.f32 %v4348, 1.442695
        %v4405 = vpow.pop %v4404
        %v4406 = vmul.f32 %v4349, 1.442695
        %v4407 = vpow.pop %v4406
        %v4408 = vmul.f32 %v4350, 1.442695
        %v4409 = vpow.pop %v4408
        %v4410 = vmul.f32 %v4351, 1.442695
        %v4411 = vpow.pop %v4410
        %v4412 = vmul.f32 %v4352, 1.442695
        %v4413 = vpow.pop %v4412
        %v4414 = vmul.f32 %v4353, 1.442695
        %v4415 = vpow.pop %v4414
        %v4416 = vmul.f32 %v4354, 1.442695
        %v4417 = vpow.pop %v4416
        %v4418 = vmul.f32 %v4355, 1.442695
        %v4419 = vpow.pop %v4418
        %v4420 = vadd.f32 %v4357, 1.0
        %v4421 = vadd.f32 %v4359, 1.0
        %v4422 = vadd.f32 %v4361, 1.0
        %v4423 = vadd.f32 %v4363, 1.0
        %v4424 = vadd.f32 %v4365, 1.0
        %v4425 = vadd.f32 %v4367, 1.0
        %v4426 = vadd.f32 %v4369, 1.0
        %v4427 = vadd.f32 %v4371, 1.0
        %v4428 = vadd.f32 %v4373, 1.0
        %v4429 = vadd.f32 %v4375, 1.0
        %v4430 = vadd.f32 %v4377, 1.0
        %v4431 = vadd.f32 %v4379, 1.0
        %v4432 = vadd.f32 %v4381, 1.0
        %v4433 = vadd.f32 %v4383, 1.0
        %v4434 = vadd.f32 %v4385, 1.0
        %v4435 = vadd.f32 %v4387, 1.0
        %v4436 = vadd.f32 %v4389, 1.0
        %v4437 = vadd.f32 %v4391, 1.0
        %v4438 = vadd.f32 %v4393, 1.0
        %v4439 = vadd.f32 %v4395, 1.0
        %v4440 = vadd.f32 %v4397, 1.0
        %v4441 = vadd.f32 %v4399, 1.0
        %v4442 = vadd.f32 %v4401, 1.0
        %v4443 = vadd.f32 %v4403, 1.0
        %v4444 = vadd.f32 %v4405, 1.0
        %v4445 = vadd.f32 %v4407, 1.0
        %v4446 = vadd.f32 %v4409, 1.0
        %v4447 = vadd.f32 %v4411, 1.0
        %v4448 = vadd.f32 %v4413, 1.0
        %v4449 = vadd.f32 %v4415, 1.0
        %v4450 = vadd.f32 %v4417, 1.0
        %v4451 = vadd.f32 %v4419, 1.0
        %v4452 = vrcp.pop %v4420
        %v4453 = vmul.f32 1.0, %v4452
        %v4454 = vrcp.pop %v4421
        %v4455 = vmul.f32 1.0, %v4454
        %v4456 = vrcp.pop %v4422
        %v4457 = vmul.f32 1.0, %v4456
        %v4458 = vrcp.pop %v4423
        %v4459 = vmul.f32 1.0, %v4458
        %v4460 = vrcp.pop %v4424
        %v4461 = vmul.f32 1.0, %v4460
        %v4462 = vrcp.pop %v4425
        %v4463 = vmul.f32 1.0, %v4462
        %v4464 = vrcp.pop %v4426
        %v4465 = vmul.f32 1.0, %v4464
        %v4466 = vrcp.pop %v4427
        %v4467 = vmul.f32 1.0, %v4466
        %v4468 = vrcp.pop %v4428
        %v4469 = vmul.f32 1.0, %v4468
        %v4470 = vrcp.pop %v4429
        %v4471 = vmul.f32 1.0, %v4470
        %v4472 = vrcp.pop %v4430
        %v4473 = vmul.f32 1.0, %v4472
        %v4474 = vrcp.pop %v4431
        %v4475 = vmul.f32 1.0, %v4474
        %v4476 = vrcp.pop %v4432
        %v4477 = vmul.f32 1.0, %v4476
        %v4478 = vrcp.pop %v4433
        %v4479 = vmul.f32 1.0, %v4478
        %v4480 = vrcp.pop %v4434
        %v4481 = vmul.f32 1.0, %v4480
        %v4482 = vrcp.pop %v4435
        %v4483 = vmul.f32 1.0, %v4482
        %v4484 = vrcp.pop %v4436
        %v4485 = vmul.f32 1.0, %v4484
        %v4486 = vrcp.pop %v4437
        %v4487 = vmul.f32 1.0, %v4486
        %v4488 = vrcp.pop %v4438
        %v4489 = vmul.f32 1.0, %v4488
        %v4490 = vrcp.pop %v4439
        %v4491 = vmul.f32 1.0, %v4490
        %v4492 = vrcp.pop %v4440
        %v4493 = vmul.f32 1.0, %v4492
        %v4494 = vrcp.pop %v4441
        %v4495 = vmul.f32 1.0, %v4494
        %v4496 = vrcp.pop %v4442
        %v4497 = vmul.f32 1.0, %v4496
        %v4498 = vrcp.pop %v4443
        %v4499 = vmul.f32 1.0, %v4498
        %v4500 = vrcp.pop %v4444
        %v4501 = vmul.f32 1.0, %v4500
        %v4502 = vrcp.pop %v4445
        %v4503 = vmul.f32 1.0, %v4502
        %v4504 = vrcp.pop %v4446
        %v4505 = vmul.f32 1.0, %v4504
        %v4506 = vrcp.pop %v4447
        %v4507 = vmul.f32 1.0, %v4506
        %v4508 = vrcp.pop %v4448
        %v4509 = vmul.f32 1.0, %v4508
        %v4510 = vrcp.pop %v4449
        %v4511 = vmul.f32 1.0, %v4510
        %v4512 = vrcp.pop %v4450
        %v4513 = vmul.f32 1.0, %v4512
        %v4514 = vrcp.pop %v4451
        %v4515 = vmul.f32 1.0, %v4514
        %v4516 = vmul.f32 %v4246, %v4453
        %v4517 = vmul.f32 %v4248, %v4455
        %v4518 = vmul.f32 %v4250, %v4457
        %v4519 = vmul.f32 %v4252, %v4459
        %v4520 = vmul.f32 %v4256, %v4461
        %v4521 = vmul.f32 %v4258, %v4463
        %v4522 = vmul.f32 %v4260, %v4465
        %v4523 = vmul.f32 %v4262, %v4467
        %v4524 = vmul.f32 %v4266, %v4469
        %v4525 = vmul.f32 %v4268, %v4471
        %v4526 = vmul.f32 %v4270, %v4473
        %v4527 = vmul.f32 %v4272, %v4475
        %v4528 = vmul.f32 %v4276, %v4477
        %v4529 = vmul.f32 %v4278, %v4479
        %v4530 = vmul.f32 %v4280, %v4481
        %v4531 = vmul.f32 %v4282, %v4483
        %v4532 = vmul.f32 %v4286, %v4485
        %v4533 = vmul.f32 %v4288, %v4487
        %v4534 = vmul.f32 %v4290, %v4489
        %v4535 = vmul.f32 %v4292, %v4491
        %v4536 = vmul.f32 %v4296, %v4493
        %v4537 = vmul.f32 %v4298, %v4495
        %v4538 = vmul.f32 %v4300, %v4497
        %v4539 = vmul.f32 %v4302, %v4499
        %v4540 = vmul.f32 %v4306, %v4501
        %v4541 = vmul.f32 %v4308, %v4503
        %v4542 = vmul.f32 %v4310, %v4505
        %v4543 = vmul.f32 %v4312, %v4507
        %v4544 = vmul.f32 %v4316, %v4509
        %v4545 = vmul.f32 %v4318, %v4511
        %v4546 = vmul.f32 %v4320, %v4513
        %v4547 = vmul.f32 %v4322, %v4515
        %v4548 = vpack.c.bf16 %v4518, %v4516
        %v4549 = vpack.c.bf16 %v4519, %v4517
        %v4550 = vpack.c.bf16 %v4522, %v4520
        %v4551 = vpack.c.bf16 %v4523, %v4521
        %v4552 = vpack.c.bf16 %v4526, %v4524
        %v4553 = vpack.c.bf16 %v4527, %v4525
        %v4554 = vpack.c.bf16 %v4530, %v4528
        %v4555 = vpack.c.bf16 %v4531, %v4529
        %v4556 = vpack.c.bf16 %v4534, %v4532
        %v4557 = vpack.c.bf16 %v4535, %v4533
        %v4558 = vpack.c.bf16 %v4538, %v4536
        %v4559 = vpack.c.bf16 %v4539, %v4537
        %v4560 = vpack.c.bf16 %v4542, %v4540
        %v4561 = vpack.c.bf16 %v4543, %v4541
        %v4562 = vpack.c.bf16 %v4546, %v4544
        %v4563 = vpack.c.bf16 %v4547, %v4545
        %v4564 = vld [vmem:[%s609] sm:$0xf]
        %v4565 = vld [vmem:[%s609 + $0x4] sm:$0xf]
        %v4566 = vld [vmem:[%s609 + $0x8] sm:$0xf]
        %v4567 = vld [vmem:[%s609 + $0xc] sm:$0xf]
        %v4568 = vld [vmem:[%s609 + $0x10] sm:$0xf]
        %v4569 = vld [vmem:[%s609 + $0x14] sm:$0xf]
        %v4570 = vld [vmem:[%s609 + $0x18] sm:$0xf]
        %v4571 = vld [vmem:[%s609 + $0x1c] sm:$0xf]
        %v4572 = vld [vmem:[%s609 + $0x20] sm:$0xf]
        %v4573 = vld [vmem:[%s609 + $0x24] sm:$0xf]
        %v4574 = vld [vmem:[%s609 + $0x28] sm:$0xf]
        %v4575 = vld [vmem:[%s609 + $0x2c] sm:$0xf]
        %v4576 = vld [vmem:[%s609 + $0x30] sm:$0xf]
        %v4577 = vld [vmem:[%s609 + $0x34] sm:$0xf]
        %v4578 = vld [vmem:[%s609 + $0x38] sm:$0xf]
        %v4579 = vld [vmem:[%s609 + $0x3c] sm:$0xf]
        %v4580 = vld [vmem:[%s609 + $0x40] sm:$0xf]
        %v4581 = vld [vmem:[%s609 + $0x44] sm:$0xf]
        %v4582 = vld [vmem:[%s609 + $0x48] sm:$0xf]
        %v4583 = vld [vmem:[%s609 + $0x4c] sm:$0xf]
        %v4584 = vld [vmem:[%s609 + $0x50] sm:$0xf]
        %v4585 = vld [vmem:[%s609 + $0x54] sm:$0xf]
        %v4586 = vld [vmem:[%s609 + $0x58] sm:$0xf]
        %v4587 = vld [vmem:[%s609 + $0x5c] sm:$0xf]
        %v4588 = vld [vmem:[%s609 + $0x60] sm:$0xf]
        %v4589 = vld [vmem:[%s609 + $0x64] sm:$0xf]
        %v4590 = vld [vmem:[%s609 + $0x68] sm:$0xf]
        %v4591 = vld [vmem:[%s609 + $0x6c] sm:$0xf]
        %v4592 = vld [vmem:[%s609 + $0x70] sm:$0xf]
        %v4593 = vld [vmem:[%s609 + $0x74] sm:$0xf]
        %v4594 = vld [vmem:[%s609 + $0x78] sm:$0xf]
        %v4595 = vld [vmem:[%s609 + $0x7c] sm:$0xf]
        %v4596 = vld [vmem:[%s741] sm:$0x1]
        %v4598 = vlaneseq
        %v4599 = vshrl.u32 %v4598, 7
        %v4600 = vsub.s32 0, %v4599
        %v4601 = vrot.slane %v4596, %v4600
        %v4635 = vunpack.c.l.b16 %v4564
        %v4636 = vunpack.c.l.b16 %v4565
        %v4637 = vunpack.c.l.b16 %v4566
        %v4638 = vunpack.c.l.b16 %v4567
        %v4639 = vunpack.c.l.b16 %v4568
        %v4640 = vunpack.c.l.b16 %v4569
        %v4641 = vunpack.c.l.b16 %v4570
        %v4642 = vunpack.c.l.b16 %v4571
        %v4643 = vunpack.c.l.b16 %v4572
        %v4644 = vunpack.c.l.b16 %v4573
        %v4645 = vunpack.c.l.b16 %v4574
        %v4646 = vunpack.c.l.b16 %v4575
        %v4647 = vunpack.c.l.b16 %v4576
        %v4648 = vunpack.c.l.b16 %v4577
        %v4649 = vunpack.c.l.b16 %v4578
        %v4650 = vunpack.c.l.b16 %v4579
        %v4651 = vunpack.c.l.b16 %v4580
        %v4652 = vunpack.c.l.b16 %v4581
        %v4653 = vunpack.c.l.b16 %v4582
        %v4654 = vunpack.c.l.b16 %v4583
        %v4655 = vunpack.c.l.b16 %v4584
        %v4656 = vunpack.c.l.b16 %v4585
        %v4657 = vunpack.c.l.b16 %v4586
        %v4658 = vunpack.c.l.b16 %v4587
        %v4659 = vunpack.c.l.b16 %v4588
        %v4660 = vunpack.c.l.b16 %v4589
        %v4661 = vunpack.c.l.b16 %v4590
        %v4662 = vunpack.c.l.b16 %v4591
        %v4663 = vunpack.c.l.b16 %v4592
        %v4664 = vunpack.c.l.b16 %v4593
        %v4665 = vunpack.c.l.b16 %v4594
        %v4666 = vunpack.c.l.b16 %v4595
        %v4667 = vpack.c.b16 %v4636, %v4635
        %v4668 = vpack.c.b16 %v4638, %v4637
        %v4669 = vpack.c.b16 %v4640, %v4639
        %v4670 = vpack.c.b16 %v4642, %v4641
        %v4671 = vpack.c.b16 %v4644, %v4643
        %v4672 = vpack.c.b16 %v4646, %v4645
        %v4673 = vpack.c.b16 %v4648, %v4647
        %v4674 = vpack.c.b16 %v4650, %v4649
        %v4675 = vpack.c.b16 %v4652, %v4651
        %v4676 = vpack.c.b16 %v4654, %v4653
        %v4677 = vpack.c.b16 %v4656, %v4655
        %v4678 = vpack.c.b16 %v4658, %v4657
        %v4679 = vpack.c.b16 %v4660, %v4659
        %v4680 = vpack.c.b16 %v4662, %v4661
        %v4681 = vpack.c.b16 %v4664, %v4663
        %v4682 = vpack.c.b16 %v4666, %v4665
        %4699 = vmatprep.subr.bf16.mxu0 0
        %4700 = vmatpush1.bf16.msra.mxu0 %v4667
        %4701 = vmatprep.subr.bf16.mxu0 0
        %4702 = vmatpush1.bf16.msra.mxu0 %v4668
        %4703 = vmatprep.subr.bf16.mxu0 0
        %4704 = vmatpush1.bf16.msra.mxu0 %v4669
        %4705 = vmatprep.subr.bf16.mxu0 0
        %4706 = vmatpush1.bf16.msra.mxu0 %v4670
        %4707 = vmatprep.subr.bf16.mxu0 0
        %4708 = vmatpush1.bf16.msra.mxu0 %v4671
        %4709 = vmatprep.subr.bf16.mxu0 0
        %4710 = vmatpush1.bf16.msra.mxu0 %v4672
        %4711 = vmatprep.subr.bf16.mxu0 0
        %4712 = vmatpush1.bf16.msra.mxu0 %v4673
        %4713 = vmatprep.subr.bf16.mxu0 0
        %4714 = vmatpush1.bf16.msra.mxu0 %v4674
        %4715 = vmatprep.subr.bf16.mxu0 0
        %4716 = vmatpush1.bf16.msra.mxu0 %v4675
        %4717 = vmatprep.subr.bf16.mxu0 0
        %4718 = vmatpush1.bf16.msra.mxu0 %v4676
        %4719 = vmatprep.subr.bf16.mxu0 0
        %4720 = vmatpush1.bf16.msra.mxu0 %v4677
        %4721 = vmatprep.subr.bf16.mxu0 0
        %4722 = vmatpush1.bf16.msra.mxu0 %v4678
        %4723 = vmatprep.subr.bf16.mxu0 0
        %4724 = vmatpush1.bf16.msra.mxu0 %v4679
        %4725 = vmatprep.subr.bf16.mxu0 0
        %4726 = vmatpush1.bf16.msra.mxu0 %v4680
        %4727 = vmatprep.subr.bf16.mxu0 0
        %4728 = vmatpush1.bf16.msra.mxu0 %v4681
        %4729 = vmatprep.subr.bf16.mxu0 0
        %4730 = vmatpush1.bf16.msra.mxu0 %v4682
        %4731 = vmatprep.mubr.bf16.mxu0 %v4549
        %4732 = vmatmul.mubr.bf16.gmra.mrb[0].mxu0 %v4548
        %v4733 = vpop.f32.mrb[0].mxu0
        %v4734 = vadd.f32 %v4601, %v4733
        %v4735 = vpop.f32.mrb[0].mxu0
        %v4736 = vpop.f32.mrb[0].mxu0
        %v4737 = vadd.f32 %v4601, %v4736
        %v4738 = vpop.f32.mrb[0].mxu0
        %4739 = vmatprep.mubr.bf16.mxu0 %v4551
        %4740 = vmatmul.mubr.bf16.gmra.mrb[0].mxu0 %v4550
        %v4741 = vpop.f32.mrb[0].mxu0
        %v4742 = vadd.f32 %v4601, %v4741
        %v4743 = vpop.f32.mrb[0].mxu0
        %v4744 = vpop.f32.mrb[0].mxu0
        %v4745 = vadd.f32 %v4601, %v4744
        %v4746 = vpop.f32.mrb[0].mxu0
        %4747 = vmatprep.mubr.bf16.mxu0 %v4553
        %4748 = vmatmul.mubr.bf16.gmra.mrb[0].mxu0 %v4552
        %v4749 = vpop.f32.mrb[0].mxu0
        %v4750 = vadd.f32 %v4601, %v4749
        %v4751 = vpop.f32.mrb[0].mxu0
        %v4752 = vpop.f32.mrb[0].mxu0
        %v4753 = vadd.f32 %v4601, %v4752
        %v4754 = vpop.f32.mrb[0].mxu0
        %4755 = vmatprep.mubr.bf16.mxu0 %v4555
        %4756 = vmatmul.mubr.bf16.gmra.mrb[0].mxu0 %v4554
        %v4757 = vpop.f32.mrb[0].mxu0
        %v4758 = vadd.f32 %v4601, %v4757
        %v4759 = vpop.f32.mrb[0].mxu0
        %v4760 = vpop.f32.mrb[0].mxu0
        %v4761 = vadd.f32 %v4601, %v4760
        %v4762 = vpop.f32.mrb[0].mxu0
        %4763 = vmatprep.mubr.bf16.mxu0 %v4557
        %4764 = vmatmul.mubr.bf16.gmra.mrb[0].mxu0 %v4556
        %v4765 = vpop.f32.mrb[0].mxu0
        %v4766 = vadd.f32 %v4601, %v4765
        %v4767 = vpop.f32.mrb[0].mxu0
        %v4768 = vpop.f32.mrb[0].mxu0
        %v4769 = vadd.f32 %v4601, %v4768
        %v4770 = vpop.f32.mrb[0].mxu0
        %4771 = vmatprep.mubr.bf16.mxu0 %v4559
        %4772 = vmatmul.mubr.bf16.gmra.mrb[0].mxu0 %v4558
        %v4773 = vpop.f32.mrb[0].mxu0
        %v4774 = vadd.f32 %v4601, %v4773
        %v4775 = vpop.f32.mrb[0].mxu0
        %v4776 = vpop.f32.mrb[0].mxu0
        %v4777 = vadd.f32 %v4601, %v4776
        %v4778 = vpop.f32.mrb[0].mxu0
        %4779 = vmatprep.mubr.bf16.mxu0 %v4561
        %4780 = vmatmul.mubr.bf16.gmra.mrb[0].mxu0 %v4560
        %v4781 = vpop.f32.mrb[0].mxu0
        %v4782 = vadd.f32 %v4601, %v4781
        %v4783 = vpop.f32.mrb[0].mxu0
        %v4784 = vpop.f32.mrb[0].mxu0
        %v4785 = vadd.f32 %v4601, %v4784
        %v4786 = vpop.f32.mrb[0].mxu0
        %4787 = vmatprep.mubr.bf16.mxu0 %v4563
        %4788 = vmatmul.mubr.bf16.gmra.mrb[0].mxu0 %v4562
        %v4789 = vpop.f32.mrb[0].mxu0
        %v4790 = vadd.f32 %v4601, %v4789
        %v4791 = vpop.f32.mrb[0].mxu0
        %v4792 = vpop.f32.mrb[0].mxu0
        %v4793 = vadd.f32 %v4601, %v4792
        %v4794 = vpop.f32.mrb[0].mxu0
        %4795 = vdwg.mxu0
        %v4796 = vadd.f32 %v3857, %v4734
        %v4797 = vadd.f32 %v3858, %v4737
        %v4798 = vadd.f32 %v3859, %v4742
        %v4799 = vadd.f32 %v3860, %v4745
        %v4800 = vadd.f32 %v3861, %v4750
        %v4801 = vadd.f32 %v3862, %v4753
        %v4802 = vadd.f32 %v3863, %v4758
        %v4803 = vadd.f32 %v3864, %v4761
        %v4804 = vadd.f32 %v3865, %v4766
        %v4805 = vadd.f32 %v3866, %v4769
        %v4806 = vadd.f32 %v3867, %v4774
        %v4807 = vadd.f32 %v3868, %v4777
        %v4808 = vadd.f32 %v3869, %v4782
        %v4809 = vadd.f32 %v3870, %v4785
        %v4810 = vadd.f32 %v3871, %v4790
        %v4811 = vadd.f32 %v3872, %v4793
        %4812 = vst [vmem:[#allocation2] sm:$0xff] %v4796
        %4813 = vst [vmem:[#allocation2 + $0x8] sm:$0xff] %v4797
        %4814 = vst [vmem:[#allocation2 + $0x10] sm:$0xff] %v4798
        %4815 = vst [vmem:[#allocation2 + $0x18] sm:$0xff] %v4799
        %4816 = vst [vmem:[#allocation2 + $0x20] sm:$0xff] %v4800
        %4817 = vst [vmem:[#allocation2 + $0x28] sm:$0xff] %v4801
        %4818 = vst [vmem:[#allocation2 + $0x30] sm:$0xff] %v4802
        %4819 = vst [vmem:[#allocation2 + $0x38] sm:$0xff] %v4803
        %4820 = vst [vmem:[#allocation2 + $0x40] sm:$0xff] %v4804
        %4821 = vst [vmem:[#allocation2 + $0x48] sm:$0xff] %v4805
        %4822 = vst [vmem:[#allocation2 + $0x50] sm:$0xff] %v4806
        %4823 = vst [vmem:[#allocation2 + $0x58] sm:$0xff] %v4807
        %4824 = vst [vmem:[#allocation2 + $0x60] sm:$0xff] %v4808
        %4825 = vst [vmem:[#allocation2 + $0x68] sm:$0xff] %v4809
        %4826 = vst [vmem:[#allocation2 + $0x70] sm:$0xff] %v4810
        %4827 = vst [vmem:[#allocation2 + $0x78] sm:$0xff] %v4811
        %p4828 = scmp.eq.s32.totalorder %s40, 3
        // Predicated region
        $region93: #{wav2vec2bert_hybrid_forward.3} parent=79 // pred_check
          %p4829 = pneg %p4828
        $region94: #{wav2vec2bert_hybrid_forward.3} parent=79 // pred_check_branch
          %4831 = sbr.rel (%p4829) target = $region96
        $region95: #{wav2vec2bert_hybrid_forward.3} parent=79 // pred_region
          %v4832 = vld [vmem:[%s13] sm:$0x1]
          %v4833 = vld [vmem:[%s14] sm:$0x1]
          %4834 = vadd.xlane.f32.xlu0 %v4796
          %v4835 = vpop.xlane.xlu0 %4834
          %4836 = vadd.xlane.f32.xlu0 %v4797
          %v4837 = vpop.xlane.xlu0 %4836
          %4838 = vadd.xlane.f32.xlu0 %v4798
          %v4839 = vpop.xlane.xlu0 %4838
          %4840 = vadd.xlane.f32.xlu0 %v4799
          %v4841 = vpop.xlane.xlu0 %4840
          %4842 = vadd.xlane.f32.xlu0 %v4800
          %v4843 = vpop.xlane.xlu0 %4842
          %4844 = vadd.xlane.f32.xlu0 %v4801
          %v4845 = vpop.xlane.xlu0 %4844
          %4846 = vadd.xlane.f32.xlu0 %v4802
          %v4847 = vpop.xlane.xlu0 %4846
          %4848 = vadd.xlane.f32.xlu0 %v4803
          %v4849 = vpop.xlane.xlu0 %4848
          %4850 = vadd.xlane.f32.xlu0 %v4804
          %v4851 = vpop.xlane.xlu0 %4850
          %4852 = vadd.xlane.f32.xlu0 %v4805
          %v4853 = vpop.xlane.xlu0 %4852
          %4854 = vadd.xlane.f32.xlu0 %v4806
          %v4855 = vpop.xlane.xlu0 %4854
          %4856 = vadd.xlane.f32.xlu0 %v4807
          %v4857 = vpop.xlane.xlu0 %4856
          %4858 = vadd.xlane.f32.xlu0 %v4808
          %v4859 = vpop.xlane.xlu0 %4858
          %4860 = vadd.xlane.f32.xlu0 %v4809
          %v4861 = vpop.xlane.xlu0 %4860
          %4862 = vadd.xlane.f32.xlu0 %v4810
          %v4863 = vpop.xlane.xlu0 %4862
          %4864 = vadd.xlane.f32.xlu0 %v4811
          %v4865 = vpop.xlane.xlu0 %4864
          %v4866 = vmul.f32 %v4835, %v845
          %v4867 = vmul.f32 %v4837, %v845
          %v4868 = vmul.f32 %v4839, %v845
          %v4869 = vmul.f32 %v4841, %v845
          %v4870 = vmul.f32 %v4843, %v845
          %v4871 = vmul.f32 %v4845, %v845
          %v4872 = vmul.f32 %v4847, %v845
          %v4873 = vmul.f32 %v4849, %v845
          %v4874 = vmul.f32 %v4851, %v845
          %v4875 = vmul.f32 %v4853, %v845
          %v4876 = vmul.f32 %v4855, %v845
          %v4877 = vmul.f32 %v4857, %v845
          %v4878 = vmul.f32 %v4859, %v845
          %v4879 = vmul.f32 %v4861, %v845
          %v4880 = vmul.f32 %v4863, %v845
          %v4881 = vmul.f32 %v4865, %v845
          %v4882 = vsub.f32 %v4796, %v4866
          %v4883 = vsub.f32 %v4797, %v4867
          %v4884 = vsub.f32 %v4798, %v4868
          %v4885 = vsub.f32 %v4799, %v4869
          %v4886 = vsub.f32 %v4800, %v4870
          %v4887 = vsub.f32 %v4801, %v4871
          %v4888 = vsub.f32 %v4802, %v4872
          %v4889 = vsub.f32 %v4803, %v4873
          %v4890 = vsub.f32 %v4804, %v4874
          %v4891 = vsub.f32 %v4805, %v4875
          %v4892 = vsub.f32 %v4806, %v4876
          %v4893 = vsub.f32 %v4807, %v4877
          %v4894 = vsub.f32 %v4808, %v4878
          %v4895 = vsub.f32 %v4809, %v4879
          %v4896 = vsub.f32 %v4810, %v4880
          %v4897 = vsub.f32 %v4811, %v4881
          %v4898 = vmul.f32 %v4882, %v4882
          %v4899 = vmul.f32 %v4883, %v4883
          %v4900 = vmul.f32 %v4884, %v4884
          %v4901 = vmul.f32 %v4885, %v4885
          %v4902 = vmul.f32 %v4886, %v4886
          %v4903 = vmul.f32 %v4887, %v4887
          %v4904 = vmul.f32 %v4888, %v4888
          %v4905 = vmul.f32 %v4889, %v4889
          %v4906 = vmul.f32 %v4890, %v4890
          %v4907 = vmul.f32 %v4891, %v4891
          %v4908 = vmul.f32 %v4892, %v4892
          %v4909 = vmul.f32 %v4893, %v4893
          %v4910 = vmul.f32 %v4894, %v4894
          %v4911 = vmul.f32 %v4895, %v4895
          %v4912 = vmul.f32 %v4896, %v4896
          %v4913 = vmul.f32 %v4897, %v4897
          %4914 = vadd.xlane.f32.xlu0 %v4898
          %v4915 = vpop.xlane.xlu0 %4914
          %4916 = vadd.xlane.f32.xlu0 %v4899
          %v4917 = vpop.xlane.xlu0 %4916
          %4918 = vadd.xlane.f32.xlu0 %v4900
          %v4919 = vpop.xlane.xlu0 %4918
          %4920 = vadd.xlane.f32.xlu0 %v4901
          %v4921 = vpop.xlane.xlu0 %4920
          %4922 = vadd.xlane.f32.xlu0 %v4902
          %v4923 = vpop.xlane.xlu0 %4922
          %4924 = vadd.xlane.f32.xlu0 %v4903
          %v4925 = vpop.xlane.xlu0 %4924
          %4926 = vadd.xlane.f32.xlu0 %v4904
          %v4927 = vpop.xlane.xlu0 %4926
          %4928 = vadd.xlane.f32.xlu0 %v4905
          %v4929 = vpop.xlane.xlu0 %4928
          %4930 = vadd.xlane.f32.xlu0 %v4906
          %v4931 = vpop.xlane.xlu0 %4930
          %4932 = vadd.xlane.f32.xlu0 %v4907
          %v4933 = vpop.xlane.xlu0 %4932
          %4934 = vadd.xlane.f32.xlu0 %v4908
          %v4935 = vpop.xlane.xlu0 %4934
          %4936 = vadd.xlane.f32.xlu0 %v4909
          %v4937 = vpop.xlane.xlu0 %4936
          %4938 = vadd.xlane.f32.xlu0 %v4910
          %v4939 = vpop.xlane.xlu0 %4938
          %4940 = vadd.xlane.f32.xlu0 %v4911
          %v4941 = vpop.xlane.xlu0 %4940
          %4942 = vadd.xlane.f32.xlu0 %v4912
          %v4943 = vpop.xlane.xlu0 %4942
          %4944 = vadd.xlane.f32.xlu0 %v4913
          %v4945 = vpop.xlane.xlu0 %4944
          %v4946 = vmul.f32 %v4915, %v845
          %v4947 = vmul.f32 %v4917, %v845
          %v4948 = vmul.f32 %v4919, %v845
          %v4949 = vmul.f32 %v4921, %v845
          %v4950 = vmul.f32 %v4923, %v845
          %v4951 = vmul.f32 %v4925, %v845
          %v4952 = vmul.f32 %v4927, %v845
          %v4953 = vmul.f32 %v4929, %v845
          %v4954 = vmul.f32 %v4931, %v845
          %v4955 = vmul.f32 %v4933, %v845
          %v4956 = vmul.f32 %v4935, %v845
          %v4957 = vmul.f32 %v4937, %v845
          %v4958 = vmul.f32 %v4939, %v845
          %v4959 = vmul.f32 %v4941, %v845
          %v4960 = vmul.f32 %v4943, %v845
          %v4961 = vmul.f32 %v4945, %v845
          %v4962 = vadd.f32 %v4946, 1e-05
          %v4963 = vadd.f32 %v4947, 1e-05
          %v4964 = vadd.f32 %v4948, 1e-05
          %v4965 = vadd.f32 %v4949, 1e-05
          %v4966 = vadd.f32 %v4950, 1e-05
          %v4967 = vadd.f32 %v4951, 1e-05
          %v4968 = vadd.f32 %v4952, 1e-05
          %v4969 = vadd.f32 %v4953, 1e-05
          %v4970 = vadd.f32 %v4954, 1e-05
          %v4971 = vadd.f32 %v4955, 1e-05
          %v4972 = vadd.f32 %v4956, 1e-05
          %v4973 = vadd.f32 %v4957, 1e-05
          %v4974 = vadd.f32 %v4958, 1e-05
          %v4975 = vadd.f32 %v4959, 1e-05
          %v4976 = vadd.f32 %v4960, 1e-05
          %v4977 = vadd.f32 %v4961, 1e-05
          %v4978 = vrsqrt.pop %v4962
          %v4979 = vrsqrt.pop %v4963
          %v4980 = vrsqrt.pop %v4964
          %v4981 = vrsqrt.pop %v4965
          %v4982 = vrsqrt.pop %v4966
          %v4983 = vrsqrt.pop %v4967
          %v4984 = vrsqrt.pop %v4968
          %v4985 = vrsqrt.pop %v4969
          %v4986 = vrsqrt.pop %v4970
          %v4987 = vrsqrt.pop %v4971
          %v4988 = vrsqrt.pop %v4972
          %v4989 = vrsqrt.pop %v4973
          %v4990 = vrsqrt.pop %v4974
          %v4991 = vrsqrt.pop %v4975
          %v4992 = vrsqrt.pop %v4976
          %v4993 = vrsqrt.pop %v4977
          %v4994 = vmul.f32 %v4882, %v4978
          %v4995 = vmul.f32 %v4883, %v4979
          %v4996 = vmul.f32 %v4884, %v4980
          %v4997 = vmul.f32 %v4885, %v4981
          %v4998 = vmul.f32 %v4886, %v4982
          %v4999 = vmul.f32 %v4887, %v4983
          %v5000 = vmul.f32 %v4888, %v4984
          %v5001 = vmul.f32 %v4889, %v4985
          %v5002 = vmul.f32 %v4890, %v4986
          %v5003 = vmul.f32 %v4891, %v4987
          %v5004 = vmul.f32 %v4892, %v4988
          %v5005 = vmul.f32 %v4893, %v4989
          %v5006 = vmul.f32 %v4894, %v4990
          %v5007 = vmul.f32 %v4895, %v4991
          %v5008 = vmul.f32 %v4896, %v4992
          %v5009 = vmul.f32 %v4897, %v4993
          %v5011 = vlaneseq
          %v5012 = vshrl.u32 %v5011, 7
          %v5013 = vsub.s32 0, %v5012
          %v5014 = vrot.slane %v4832, %v5013
          %v5016 = vmul.f32 %v4994, %v5014
          %v5017 = vmul.f32 %v4995, %v5014
          %v5018 = vmul.f32 %v4996, %v5014
          %v5019 = vmul.f32 %v4997, %v5014
          %v5020 = vmul.f32 %v4998, %v5014
          %v5021 = vmul.f32 %v4999, %v5014
          %v5022 = vmul.f32 %v5000, %v5014
          %v5023 = vmul.f32 %v5001, %v5014
          %v5024 = vmul.f32 %v5002, %v5014
          %v5025 = vmul.f32 %v5003, %v5014
          %v5026 = vmul.f32 %v5004, %v5014
          %v5027 = vmul.f32 %v5005, %v5014
          %v5028 = vmul.f32 %v5006, %v5014
          %v5029 = vmul.f32 %v5007, %v5014
          %v5030 = vmul.f32 %v5008, %v5014
          %v5031 = vmul.f32 %v5009, %v5014
          %v5033 = vlaneseq
          %v5034 = vshrl.u32 %v5033, 7
          %v5035 = vsub.s32 0, %v5034
          %v5036 = vrot.slane %v4833, %v5035
          %v5038 = vadd.f32 %v5016, %v5036
          %v5039 = vadd.f32 %v5017, %v5036
          %v5040 = vadd.f32 %v5018, %v5036
          %v5041 = vadd.f32 %v5019, %v5036
          %v5042 = vadd.f32 %v5020, %v5036
          %v5043 = vadd.f32 %v5021, %v5036
          %v5044 = vadd.f32 %v5022, %v5036
          %v5045 = vadd.f32 %v5023, %v5036
          %v5046 = vadd.f32 %v5024, %v5036
          %v5047 = vadd.f32 %v5025, %v5036
          %v5048 = vadd.f32 %v5026, %v5036
          %v5049 = vadd.f32 %v5027, %v5036
          %v5050 = vadd.f32 %v5028, %v5036
          %v5051 = vadd.f32 %v5029, %v5036
          %v5052 = vadd.f32 %v5030, %v5036
          %v5053 = vadd.f32 %v5031, %v5036
          %v5054 = vadd.f32 %v5038, %v5039
          %v5055 = vadd.f32 %v5054, %v5040
          %v5056 = vadd.f32 %v5055, %v5041
          %v5057 = vadd.f32 %v5056, %v5042
          %v5058 = vadd.f32 %v5057, %v5043
          %v5059 = vadd.f32 %v5058, %v5044
          %v5060 = vadd.f32 %v5059, %v5045
          %v5061 = vadd.f32 %v5060, %v5046
          %v5062 = vadd.f32 %v5061, %v5047
          %v5063 = vadd.f32 %v5062, %v5048
          %v5064 = vadd.f32 %v5063, %v5049
          %v5065 = vadd.f32 %v5064, %v5050
          %v5066 = vadd.f32 %v5065, %v5051
          %v5067 = vadd.f32 %v5066, %v5052
          %v5068 = vadd.f32 %v5067, %v5053
          %v5069 = vrot.slane %v5068, 4
          %v5070 = vadd.f32 %v5068, %v5069
          %v5071 = vrot.slane %v5070, 2
          %v5072 = vadd.f32 %v5070, %v5071
          %v5073 = vrot.slane %v5072, 1
          %v5074 = vadd.f32 %v5072, %v5073
          %v5075 = vmul.f32 %v5074, %v845
          %5076 = vst [vmem:[%s700] sm:$0x1] %v5075
        $region96: #{wav2vec2bert_hybrid_forward.3} parent=79 // pred_fallthru
          _
        %s5077 = sand.u32 %s435, 1
        %s5078 = scalar_lea.sflag [#allocation5], %s5077
        %s5079 = sand.u32 %s435, 1
        %s5080 = scalar_lea.vmem [#allocation8], %s5079
        // Predicated region
        $region97: #{wav2vec2bert_hybrid_forward.3} parent=79 // pred_check
          %p5081 = pneg %p445
        $region98: #{wav2vec2bert_hybrid_forward.3} parent=79 // pred_check_branch
          %5083 = sbr.rel (%p5081) target = $region100
        $region99: #{wav2vec2bert_hybrid_forward.3} parent=79 // pred_region
          %s5085 = ssub.s32 16, 16
          %5086 = vsyncadd %s5078, %s5085
          %s5087 = smul.addr %s39, 16
          %s5088 = scalar_lea.hbm %s15, %s5087
          %s5090 = sshll.u32 %s5080, 4
          %s5091 = int_to_ptr.vmem [resolvable:$true] %s5090
          %5093 = dma.vmem_to_hbm [thread:$0]  %s5091, 16, %s5088, %s5078
        $region100: #{wav2vec2bert_hybrid_forward.3} parent=79 // pred_fallthru
          _
      $region80: #{wav2vec2bert_hybrid_forward.3} parent=5 // pred_fallthru
        _
      %p5094 = scmp.le.s32.totalorder 2, %s30
      // Predicated region
      $region101: #{wav2vec2bert_hybrid_forward.3} parent=5 // pred_check
        %p5095 = pneg %p5094
      $region102: #{wav2vec2bert_hybrid_forward.3} parent=5 // pred_check_branch
        %5097 = sbr.rel (%p5095) target = $region104
      $region103: #{wav2vec2bert_hybrid_forward.3} parent=5 // pred_region
        %s5098 = ssub.s32 %s30, 2
        // Predicated region
        $region105: #{wav2vec2bert_hybrid_forward.3} parent=103 // pred_check
          %p5099 = pneg %p451
        $region106: #{wav2vec2bert_hybrid_forward.3} parent=103 // pred_check_branch
          %5101 = sbr.rel (%p5099) target = $region108
        $region107: #{wav2vec2bert_hybrid_forward.3} parent=103 // pred_region
          %s5102 = sand.u32 %s436, 1
          %s5103 = scalar_lea.sflag [#allocation5], %s5102
          %s5104 = sand.u32 %s436, 1
          %s5105 = scalar_lea.vmem [#allocation8], %s5104
          %5106 = dma.done %s5103, 16
        $region108: #{wav2vec2bert_hybrid_forward.3} parent=103 // pred_fallthru
          _
      $region104: #{wav2vec2bert_hybrid_forward.3} parent=5 // pred_fallthru
        _
    $region6: #{wav2vec2bert_hybrid_forward.3} parent=1 // loop_footer
      %s34 = sadd.s32 1, %s30
    $region7: #{wav2vec2bert_hybrid_forward.3} parent=1 // loop_footer_branch
      %29 = sbr.rel target = $region3
    $region8: #{wav2vec2bert_hybrid_forward.3} parent=1 // loop_exit
      _
    %5107 = vsyncpa [#allocation4], 1
    %s5108 = scalar_lea.sflag [#allocation4], 1
    %5109 = vsyncpa %s5108, 1
    %5110 = vsyncpa [#allocation7], 1
    %s5111 = scalar_lea.sflag [#allocation7], 1
    %5112 = vsyncpa %s5111, 1
    %5113 = vsyncpa [#allocation5], 1
    %s5114 = scalar_lea.sflag [#allocation5], 1
    %5115 = vsyncpa %s5114, 1

</llo_original>
